<compile_context>
chip_gen: v7x
topology: tpu7x:2x2x1
jax: 0.10.0
libtpu: 0.0.40
codegen_flags: <defaults>
</compile_context>

<pallas_src>
import jax
import jax.numpy as jnp
from jax.experimental import pallas as pl
from jax.experimental.pallas import tpu as pltpu

CPAD = 128  # padded channel / lane width


# ----------------------------- Pallas kernels -----------------------------

def conv_relu_pool_kernel(p_ref, w_ref, b_ref, o_ref):
    """Fused conv (merged-quadrant im2col matmul) + bias + ReLU + 2x2 max-pool.

    p_ref: (1, 4*Np, KKCp) bf16   rows are quadrant-major (q*Np + ph*W2 + pw)
    w_ref: (KKCp, CPAD)    bf16
    b_ref: (1, CPAD)       f32
    o_ref: (1, Np, CPAD)   bf16   pooled output, rows in (ph, pw) raster order
    """
    np_ = o_ref.shape[1]
    y = jnp.dot(p_ref[0], w_ref[...], preferred_element_type=jnp.float32)
    y = jnp.maximum(y + b_ref[...], 0.0)                      # (4*Np, CPAD) f32
    pooled = jnp.maximum(jnp.maximum(y[0:np_], y[np_:2 * np_]),
                         jnp.maximum(y[2 * np_:3 * np_], y[3 * np_:4 * np_]))
    o_ref[0] = pooled.astype(o_ref.dtype)


def conv_pool_mlp_kernel(p_ref, w_ref, b_ref, vt_ref, bh_ref, wo_ref, bo_ref,
                         o_ref):
    """Fused conv2 + bias + ReLU + 2x2 max-pool + flatten-folded MLP.

    p_ref:  (1, 4*Np2, KKC2) bf16
    w_ref:  (KKC2, CPAD)     bf16
    b_ref:  (1, CPAD)        f32
    vt_ref: (hidden, Np2, CPAD) f32   vt[j, s, c] = W_hidden[j, c*Np2 + s]
    bh_ref: (hidden, 1)      f32
    wo_ref: (hidden, 10)     f32      wo[j, k] = W_out[k, j]
    bo_ref: (1, 10)          f32
    o_ref:  (1, 1, 10)       f32
    """
    np_ = vt_ref.shape[1]
    y = jnp.dot(p_ref[0], w_ref[...], preferred_element_type=jnp.float32)
    y = jnp.maximum(y + b_ref[...], 0.0)                      # (4*Np2, CPAD)
    pooled = jnp.maximum(jnp.maximum(y[0:np_], y[np_:2 * np_]),
                         jnp.maximum(y[2 * np_:3 * np_], y[3 * np_:4 * np_]))
    # hidden = sum_{s,c} pooled[s,c] * vt[j,s,c]   (flatten folded into vt)
    prod = pooled[None, :, :] * vt_ref[...]                    # (hidden, Np2, CPAD)
    h = jnp.sum(jnp.sum(prod, axis=2), axis=1, keepdims=True)  # (hidden, 1)
    hs = jax.nn.sigmoid(h + bh_ref[...])                       # (hidden, 1)
    logits = jnp.sum(hs * wo_ref[...], axis=0, keepdims=True) + bo_ref[...]
    o_ref[0] = logits                                          # (1, 10)


# ------------------------------- glue (JAX) -------------------------------

def _round_up(n, m):
    return ((n + m - 1) // m) * m


def _im2col_quadrants(x_nhwc, K, pad):
    """(B,H,W,C) -> (B, 4*(H//2)*(W//2), K*K*C); rows quadrant-major, lanes (kh,kw,c)."""
    B, H, W, C = x_nhwc.shape
    xp = jnp.pad(x_nhwc, ((0, 0), (pad, pad), (pad, pad), (0, 0)))
    cols = []
    for kh in range(K):
        for kw in range(K):
            cols.append(xp[:, kh:kh + H, kw:kw + W, :])        # (B,H,W,C)
    pat = jnp.concatenate(cols, axis=-1)                       # (B,H,W,K*K*C)
    Hp, Wp = H // 2, W // 2
    pat = pat.reshape(B, Hp, 2, Wp, 2, K * K * C)
    pat = pat.transpose(0, 2, 4, 1, 3, 5)                      # (B,dh,dw,ph,pw,KKC)
    return pat.reshape(B, 4 * Hp * Wp, K * K * C)


def _conv_weights(w_torch, cin_eff, kkc_pad, cout_pad):
    """PyTorch (Cout,Cin,K,K) -> (kkc_pad, cout_pad) bf16, rows in (kh,kw,cin) order."""
    Cout, Cin_w, K, _ = w_torch.shape
    w = jnp.transpose(w_torch, (2, 3, 1, 0))                   # (K,K,Cin_w,Cout)
    w = jnp.pad(w, ((0, 0), (0, 0), (0, cin_eff - Cin_w), (0, cout_pad - Cout)))
    w = w.reshape(K * K * cin_eff, cout_pad)
    w = jnp.pad(w, ((0, kkc_pad - K * K * cin_eff), (0, 0)))
    return w.astype(jnp.bfloat16)


def model2_forward(x_nchw, params):
    B = x_nchw.shape[0]
    hidden = params["w_hidden"].shape[0]

    # ---------------- layer 1: conv(1->40) + relu + pool ----------------
    x = jnp.transpose(x_nchw, (0, 2, 3, 1)).astype(jnp.float32)   # (B,28,28,1)
    pat1 = _im2col_quadrants(x, 5, 2)                             # (B,784,25)
    kkc1 = _round_up(pat1.shape[-1], 128)
    pat1 = jnp.pad(pat1, ((0, 0), (0, 0), (0, kkc1 - pat1.shape[-1])))
    pat1 = pat1.astype(jnp.bfloat16)
    w1 = _conv_weights(params["w_conv1"], 1, kkc1, CPAD)
    b1 = jnp.pad(params["b_conv1"].reshape(1, -1),
                 ((0, 0), (0, CPAD - 40))).astype(jnp.float32)
    Np1 = 14 * 14

    p1 = pl.pallas_call(
        conv_relu_pool_kernel,
        out_shape=jax.ShapeDtypeStruct((B, Np1, CPAD), jnp.bfloat16),
        grid=(B,),
        in_specs=[
            pl.BlockSpec((1, 4 * Np1, kkc1), lambda b: (b, 0, 0)),
            pl.BlockSpec((kkc1, CPAD), lambda b: (0, 0)),
            pl.BlockSpec((1, CPAD), lambda b: (0, 0)),
        ],
        out_specs=pl.BlockSpec((1, Np1, CPAD), lambda b: (b, 0, 0)),
        compiler_params=pltpu.CompilerParams(dimension_semantics=("parallel",)),
    )(pat1, w1, b1)                                              # (B,196,128) bf16

    # ------- layer 2: conv(40->40) + relu + pool + flatten + MLP (fused) -------
    x2 = p1.reshape(B, 14, 14, CPAD)                             # free bitcast view
    pat2 = _im2col_quadrants(x2, 5, 2)                           # (B,196,3200) bf16
    kkc2 = 25 * CPAD
    w2 = _conv_weights(params["w_conv2"], CPAD, kkc2, CPAD)
    b2 = jnp.pad(params["b_conv2"].reshape(1, -1),
                 ((0, 0), (0, CPAD - 40))).astype(jnp.float32)

    Np2 = 7 * 7
    # Fold PyTorch's (c,h,w) flatten order into the hidden weight: vt[j,s,c].
    vt = params["w_hidden"].reshape(hidden, 40, Np2).transpose(0, 2, 1)
    vt = jnp.pad(vt, ((0, 0), (0, 0), (0, CPAD - 40))).astype(jnp.float32)
    bh = params["b_hidden"].reshape(hidden, 1).astype(jnp.float32)
    wo = params["w_out"].T.astype(jnp.float32)                   # (hidden, 10)
    bo = params["b_out"].reshape(1, -1).astype(jnp.float32)      # (1, 10)

    out = pl.pallas_call(
        conv_pool_mlp_kernel,
        out_shape=jax.ShapeDtypeStruct((B, 1, 10), jnp.float32),
        grid=(B,),
        in_specs=[
            pl.BlockSpec((1, 4 * Np2, kkc2), lambda b: (b, 0, 0)),
            pl.BlockSpec((kkc2, CPAD), lambda b: (0, 0)),
            pl.BlockSpec((1, CPAD), lambda b: (0, 0)),
            pl.BlockSpec((hidden, Np2, CPAD), lambda b: (0, 0, 0)),
            pl.BlockSpec((hidden, 1), lambda b: (0, 0)),
            pl.BlockSpec((hidden, 10), lambda b: (0, 0)),
            pl.BlockSpec((1, 10), lambda b: (0, 0)),
        ],
        out_specs=pl.BlockSpec((1, 1, 10), lambda b: (b, 0, 0)),
        compiler_params=pltpu.CompilerParams(dimension_semantics=("parallel",)),
    )(pat2, w2, b2, vt, bh, wo, bo)

    return out.reshape(B, 10)


# --------------------------- pure-JAX reference ---------------------------

def reference_forward(x_nchw, params):
    def conv(x, w, b):
        y = jax.lax.conv_general_dilated(
            x, w, window_strides=(1, 1), padding=((2, 2), (2, 2)),
            dimension_numbers=("NCHW", "OIHW", "NCHW"))
        return y + b.reshape(1, -1, 1, 1)

    def pool(x):
        return jax.lax.reduce_window(x, -jnp.inf, jax.lax.max,
                                     (1, 1, 2, 2), (1, 1, 2, 2), "VALID")

    y = jax.nn.relu(conv(x_nchw, params["w_conv1"], params["b_conv1"]))
    y = pool(y)
    y = jax.nn.relu(conv(y, params["w_conv2"], params["b_conv2"]))
    y = pool(y)
    f = y.reshape(y.shape[0], -1)
    h = jax.nn.sigmoid(f @ params["w_hidden"].T + params["b_hidden"])
    return h @ params["w_out"].T + params["b_out"]


# ----------------------------------- main ----------------------------------

if __name__ == "__main__":
    HIDDEN = 32
    B = 2

    key = jax.random.PRNGKey(0)
    ks = jax.random.split(key, 9)
    params = {
        "w_conv1": 0.05 * jax.random.normal(ks[0], (40, 1, 5, 5), jnp.float32),
        "b_conv1": 0.05 * jax.random.normal(ks[1], (40,), jnp.float32),
        "w_conv2": 0.02 * jax.random.normal(ks[2], (40, 40, 5, 5), jnp.float32),
        "b_conv2": 0.02 * jax.random.normal(ks[3], (40,), jnp.float32),
        "w_hidden": 0.02 * jax.random.normal(ks[4], (HIDDEN, 1960), jnp.float32),
        "b_hidden": 0.02 * jax.random.normal(ks[5], (HIDDEN,), jnp.float32),
        "w_out": 0.05 * jax.random.normal(ks[6], (10, HIDDEN), jnp.float32),
        "b_out": 0.05 * jax.random.normal(ks[7], (10,), jnp.float32),
    }
    x = jax.random.normal(ks[8], (B, 1, 28, 28), jnp.float32)

    fwd = jax.jit(model2_forward)
    out = jax.block_until_ready(fwd(x, params))
    assert out.shape == (B, 10) and out.dtype == jnp.float32

    ref = jax.block_until_ready(reference_forward(x, params))
    max_diff = float(jnp.max(jnp.abs(out - ref)))
    assert max_diff < 0.1, f"mismatch vs reference: {max_diff}"

    print("KERNEL_OK")
</pallas_src>

<mosaic_0001>
module attributes {stable_mosaic.version = 11 : i64} {
  func.func @conv_relu_pool_kernel(%arg0: i32, %arg1: memref<1x784x128xbf16, #tpu.memory_space<vmem>>, %arg2: memref<128x128xbf16, #tpu.memory_space<vmem>>, %arg3: memref<1x128xf32, #tpu.memory_space<vmem>>, %arg4: memref<1x196x128xbf16, #tpu.memory_space<vmem>>) attributes {dimension_semantics = [#tpu.dimension_semantics<parallel>], iteration_bounds = array<i64: 2>, scalar_prefetch = 0 : i64, scratch_operands = 0 : i64, tpu.core_type = #tpu.core_type<tc>, window_params = [{transform_indices = @transform_0, window_bounds = array<i64: 1, 784, 128>}, {pipeline_mode = #tpu.pipeline_mode<synchronous>, transform_indices = @transform_1, window_bounds = array<i64: 128, 128>}, {pipeline_mode = #tpu.pipeline_mode<synchronous>, transform_indices = @transform_2, window_bounds = array<i64: 1, 128>}, {transform_indices = @transform_3, window_bounds = array<i64: 1, 196, 128>}]} {
    %c0 = arith.constant 0 : index
    %c0_0 = arith.constant 0 : index
    %c0_1 = arith.constant 0 : index
    %0 = vector.load %arg1[%c0, %c0_0, %c0_1] : memref<1x784x128xbf16, #tpu.memory_space<vmem>>, vector<1x784x128xbf16>
    %1 = vector.shape_cast %0 : vector<1x784x128xbf16> to vector<784x128xbf16>
    %c0_2 = arith.constant 0 : index
    %c0_3 = arith.constant 0 : index
    %2 = vector.load %arg2[%c0_2, %c0_3] : memref<128x128xbf16, #tpu.memory_space<vmem>>, vector<128x128xbf16>
    %cst = arith.constant dense<0.000000e+00> : vector<784x128xf32>
    %3 = tpu.matmul %1, %2, %cst {dimension_numbers = #tpu.dot_dimension_numbers<[1], [0], [0], [1], [0, 0, 1, 1], [], []>} : vector<784x128xbf16>, vector<128x128xbf16>, vector<784x128xf32> -> vector<784x128xf32>
    %c0_4 = arith.constant 0 : index
    %c0_5 = arith.constant 0 : index
    %4 = vector.load %arg3[%c0_4, %c0_5] : memref<1x128xf32, #tpu.memory_space<vmem>>, vector<1x128xf32>
    %5 = vector.broadcast %4 : vector<1x128xf32> to vector<784x128xf32>
    %6 = arith.addf %3, %5 : vector<784x128xf32>
    %cst_6 = arith.constant 0.000000e+00 : f32
    %7 = vector.broadcast %cst_6 : f32 to vector<784x128xf32>
    %8 = arith.maximumf %6, %7 : vector<784x128xf32>
    %9 = vector.extract_strided_slice %8 {offsets = [0, 0], sizes = [196, 128], strides = [1, 1]} : vector<784x128xf32> to vector<196x128xf32>
    %10 = vector.extract_strided_slice %8 {offsets = [196, 0], sizes = [196, 128], strides = [1, 1]} : vector<784x128xf32> to vector<196x128xf32>
    %11 = arith.maximumf %9, %10 : vector<196x128xf32>
    %12 = vector.extract_strided_slice %8 {offsets = [392, 0], sizes = [196, 128], strides = [1, 1]} : vector<784x128xf32> to vector<196x128xf32>
    %13 = vector.extract_strided_slice %8 {offsets = [588, 0], sizes = [196, 128], strides = [1, 1]} : vector<784x128xf32> to vector<196x128xf32>
    %14 = arith.maximumf %12, %13 : vector<196x128xf32>
    %15 = arith.maximumf %11, %14 : vector<196x128xf32>
    %16 = arith.truncf %15 : vector<196x128xf32> to vector<196x128xbf16>
    %c0_7 = arith.constant 0 : index
    %c0_8 = arith.constant 0 : index
    %c0_9 = arith.constant 0 : index
    %17 = vector.load %arg4[%c0_7, %c0_8, %c0_9] : memref<1x196x128xbf16, #tpu.memory_space<vmem>>, vector<1x196x128xbf16>
    %18 = vector.shape_cast %17 : vector<1x196x128xbf16> to vector<196x128xbf16>
    %19 = vector.shape_cast %16 : vector<196x128xbf16> to vector<1x196x128xbf16>
    tpu.vector_store %arg4[%c0_7, %c0_8, %c0_9], %19 {strides = array<i32>} : memref<1x196x128xbf16, #tpu.memory_space<vmem>>, vector<1x196x128xbf16>,
    return
  }
  func.func @transform_0(%arg0: i32) -> (i32, i32, i32) {
    %c0_i32 = arith.constant 0 : i32
    %c0_i32_0 = arith.constant 0 : i32
    %c0_i32_1 = arith.constant 0 : i32
    return %arg0, %c0_i32, %c0_i32_0 : i32, i32, i32
  }
  func.func @transform_1(%arg0: i32) -> (i32, i32) {
    %c0_i32 = arith.constant 0 : i32
    %c0_i32_0 = arith.constant 0 : i32
    %c0_i32_1 = arith.constant 0 : i32
    return %c0_i32, %c0_i32_0 : i32, i32
  }
  func.func @transform_2(%arg0: i32) -> (i32, i32) {
    %c0_i32 = arith.constant 0 : i32
    %c0_i32_0 = arith.constant 0 : i32
    %c0_i32_1 = arith.constant 0 : i32
    return %c0_i32, %c0_i32_0 : i32, i32
  }
  func.func @transform_3(%arg0: i32) -> (i32, i32, i32) {
    %c0_i32 = arith.constant 0 : i32
    %c0_i32_0 = arith.constant 0 : i32
    %c0_i32_1 = arith.constant 0 : i32
    return %arg0, %c0_i32, %c0_i32_0 : i32, i32, i32
  }
}

module attributes {stable_mosaic.version = 11 : i64} {
  func.func @conv_pool_mlp_kernel(%arg0: i32, %arg1: memref<1x196x3200xbf16, #tpu.memory_space<vmem>>, %arg2: memref<3200x128xbf16, #tpu.memory_space<vmem>>, %arg3: memref<1x128xf32, #tpu.memory_space<vmem>>, %arg4: memref<32x49x128xf32, #tpu.memory_space<vmem>>, %arg5: memref<32x1xf32, #tpu.memory_space<vmem>>, %arg6: memref<32x10xf32, #tpu.memory_space<vmem>>, %arg7: memref<1x10xf32, #tpu.memory_space<vmem>>, %arg8: memref<1x1x10xf32, #tpu.memory_space<vmem>>) attributes {dimension_semantics = [#tpu.dimension_semantics<parallel>], iteration_bounds = array<i64: 2>, scalar_prefetch = 0 : i64, scratch_operands = 0 : i64, tpu.core_type = #tpu.core_type<tc>, window_params = [{transform_indices = @transform_0, window_bounds = array<i64: 1, 196, 3200>}, {pipeline_mode = #tpu.pipeline_mode<synchronous>, transform_indices = @transform_1, window_bounds = array<i64: 3200, 128>}, {pipeline_mode = #tpu.pipeline_mode<synchronous>, transform_indices = @transform_2, window_bounds = array<i64: 1, 128>}, {pipeline_mode = #tpu.pipeline_mode<synchronous>, transform_indices = @transform_3, window_bounds = array<i64: 32, 49, 128>}, {pipeline_mode = #tpu.pipeline_mode<synchronous>, transform_indices = @transform_4, window_bounds = array<i64: 32, 1>}, {pipeline_mode = #tpu.pipeline_mode<synchronous>, transform_indices = @transform_5, window_bounds = array<i64: 32, 10>}, {pipeline_mode = #tpu.pipeline_mode<synchronous>, transform_indices = @transform_6, window_bounds = array<i64: 1, 10>}, {transform_indices = @transform_7, window_bounds = array<i64: 1, 1, 10>}]} {
    %c0 = arith.constant 0 : index
    %c0_0 = arith.constant 0 : index
    %c0_1 = arith.constant 0 : index
    %0 = vector.load %arg1[%c0, %c0_0, %c0_1] : memref<1x196x3200xbf16, #tpu.memory_space<vmem>>, vector<1x196x3200xbf16>
    %1 = vector.shape_cast %0 : vector<1x196x3200xbf16> to vector<196x3200xbf16>
    %c0_2 = arith.constant 0 : index
    %c0_3 = arith.constant 0 : index
    %2 = vector.load %arg2[%c0_2, %c0_3] : memref<3200x128xbf16, #tpu.memory_space<vmem>>, vector<3200x128xbf16>
    %cst = arith.constant dense<0.000000e+00> : vector<196x128xf32>
    %3 = tpu.matmul %1, %2, %cst {dimension_numbers = #tpu.dot_dimension_numbers<[1], [0], [0], [1], [0, 0, 1, 1], [], []>} : vector<196x3200xbf16>, vector<3200x128xbf16>, vector<196x128xf32> -> vector<196x128xf32>
    %c0_4 = arith.constant 0 : index
    %c0_5 = arith.constant 0 : index
    %4 = vector.load %arg3[%c0_4, %c0_5] : memref<1x128xf32, #tpu.memory_space<vmem>>, vector<1x128xf32>
    %5 = vector.broadcast %4 : vector<1x128xf32> to vector<196x128xf32>
    %6 = arith.addf %3, %5 : vector<196x128xf32>
    %cst_6 = arith.constant 0.000000e+00 : f32
    %7 = vector.broadcast %cst_6 : f32 to vector<196x128xf32>
    %8 = arith.maximumf %6, %7 : vector<196x128xf32>
    %9 = vector.extract_strided_slice %8 {offsets = [0, 0], sizes = [49, 128], strides = [1, 1]} : vector<196x128xf32> to vector<49x128xf32>
    %10 = vector.extract_strided_slice %8 {offsets = [49, 0], sizes = [49, 128], strides = [1, 1]} : vector<196x128xf32> to vector<49x128xf32>
    %11 = arith.maximumf %9, %10 : vector<49x128xf32>
    %12 = vector.extract_strided_slice %8 {offsets = [98, 0], sizes = [49, 128], strides = [1, 1]} : vector<196x128xf32> to vector<49x128xf32>
    %13 = vector.extract_strided_slice %8 {offsets = [147, 0], sizes = [49, 128], strides = [1, 1]} : vector<196x128xf32> to vector<49x128xf32>
    %14 = arith.maximumf %12, %13 : vector<49x128xf32>
    %15 = arith.maximumf %11, %14 : vector<49x128xf32>
    %16 = vector.shape_cast %15 : vector<49x128xf32> to vector<1x49x128xf32>
    %c0_7 = arith.constant 0 : index
    %c0_8 = arith.constant 0 : index
    %c0_9 = arith.constant 0 : index
    %17 = vector.load %arg4[%c0_7, %c0_8, %c0_9] : memref<32x49x128xf32, #tpu.memory_space<vmem>>, vector<32x49x128xf32>
    %18 = vector.broadcast %16 : vector<1x49x128xf32> to vector<32x49x128xf32>
    %19 = arith.mulf %18, %17 : vector<32x49x128xf32>
    %cst_10 = arith.constant dense<0.000000e+00> : vector<32x49xf32>
    %20 = vector.multi_reduction <add>, %19, %cst_10 [2] : vector<32x49x128xf32> to vector<32x49xf32>
    %cst_11 = arith.constant dense<0.000000e+00> : vector<32xf32>
    %21 = vector.multi_reduction <add>, %20, %cst_11 [1] : vector<32x49xf32> to vector<32xf32>
    %22 = vector.shape_cast %21 : vector<32xf32> to vector<32x1xf32>
    %c0_12 = arith.constant 0 : index
    %c0_13 = arith.constant 0 : index
    %23 = vector.load %arg5[%c0_12, %c0_13] : memref<32x1xf32, #tpu.memory_space<vmem>>, vector<32x1xf32>
    %24 = arith.addf %22, %23 : vector<32x1xf32>
    %25 = arith.negf %24 : vector<32x1xf32>
    %26 = math.exp %25 : vector<32x1xf32>
    %cst_14 = arith.constant 1.000000e+00 : f32
    %27 = vector.broadcast %cst_14 : f32 to vector<32x1xf32>
    %28 = arith.addf %27, %26 : vector<32x1xf32>
    %29 = arith.divf %27, %28 : vector<32x1xf32>
    %c0_15 = arith.constant 0 : index
    %c0_16 = arith.constant 0 : index
    %30 = vector.load %arg6[%c0_15, %c0_16] : memref<32x10xf32, #tpu.memory_space<vmem>>, vector<32x10xf32>
    %31 = vector.broadcast %29 : vector<32x1xf32> to vector<32x10xf32>
    %32 = arith.mulf %31, %30 : vector<32x10xf32>
    %cst_17 = arith.constant dense<0.000000e+00> : vector<10xf32>
    %33 = vector.multi_reduction <add>, %32, %cst_17 [0] : vector<32x10xf32> to vector<10xf32>
    %34 = vector.shape_cast %33 : vector<10xf32> to vector<1x10xf32>
    %c0_18 = arith.constant 0 : index
    %c0_19 = arith.constant 0 : index
    %35 = vector.load %arg7[%c0_18, %c0_19] : memref<1x10xf32, #tpu.memory_space<vmem>>, vector<1x10xf32>
    %36 = arith.addf %34, %35 : vector<1x10xf32>
    %c0_20 = arith.constant 0 : index
    %c0_21 = arith.constant 0 : index
    %c0_22 = arith.constant 0 : index
    %37 = vector.load %arg8[%c0_20, %c0_21, %c0_22] : memref<1x1x10xf32, #tpu.memory_space<vmem>>, vector<1x1x10xf32>
    %38 = vector.shape_cast %37 : vector<1x1x10xf32> to vector<1x10xf32>
    %39 = vector.shape_cast %36 : vector<1x10xf32> to vector<1x1x10xf32>
    tpu.vector_store %arg8[%c0_20, %c0_21, %c0_22], %39 {strides = array<i32>} : memref<1x1x10xf32, #tpu.memory_space<vmem>>, vector<1x1x10xf32>,
    return
  }
  func.func @transform_0(%arg0: i32) -> (i32, i32, i32) {
    %c0_i32 = arith.constant 0 : i32
    %c0_i32_0 = arith.constant 0 : i32
    %c0_i32_1 = arith.constant 0 : i32
    return %arg0, %c0_i32, %c0_i32_0 : i32, i32, i32
  }
  func.func @transform_1(%arg0: i32) -> (i32, i32) {
    %c0_i32 = arith.constant 0 : i32
    %c0_i32_0 = arith.constant 0 : i32
    %c0_i32_1 = arith.constant 0 : i32
    return %c0_i32, %c0_i32_0 : i32, i32
  }
  func.func @transform_2(%arg0: i32) -> (i32, i32) {
    %c0_i32 = arith.constant 0 : i32
    %c0_i32_0 = arith.constant 0 : i32
    %c0_i32_1 = arith.constant 0 : i32
    return %c0_i32, %c0_i32_0 : i32, i32
  }
  func.func @transform_3(%arg0: i32) -> (i32, i32, i32) {
    %c0_i32 = arith.constant 0 : i32
    %c0_i32_0 = arith.constant 0 : i32
    %c0_i32_1 = arith.constant 0 : i32
    %c0_i32_2 = arith.constant 0 : i32
    return %c0_i32, %c0_i32_0, %c0_i32_1 : i32, i32, i32
  }
  func.func @transform_4(%arg0: i32) -> (i32, i32) {
    %c0_i32 = arith.constant 0 : i32
    %c0_i32_0 = arith.constant 0 : i32
    %c0_i32_1 = arith.constant 0 : i32
    return %c0_i32, %c0_i32_0 : i32, i32
  }
  func.func @transform_5(%arg0: i32) -> (i32, i32) {
    %c0_i32 = arith.constant 0 : i32
    %c0_i32_0 = arith.constant 0 : i32
    %c0_i32_1 = arith.constant 0 : i32
    return %c0_i32, %c0_i32_0 : i32, i32
  }
  func.func @transform_6(%arg0: i32) -> (i32, i32) {
    %c0_i32 = arith.constant 0 : i32
    %c0_i32_0 = arith.constant 0 : i32
    %c0_i32_1 = arith.constant 0 : i32
    return %c0_i32, %c0_i32_0 : i32, i32
  }
  func.func @transform_7(%arg0: i32) -> (i32, i32, i32) {
    %c0_i32 = arith.constant 0 : i32
    %c0_i32_0 = arith.constant 0 : i32
    %c0_i32_1 = arith.constant 0 : i32
    return %arg0, %c0_i32, %c0_i32_0 : i32, i32, i32
  }
}

</mosaic_0001>

<llo_original>
// kernel: model2_forward.2
$region0: #{model2_forward.2}
  #allocation0 [shape = 'u32[]', space=smem, size = 0x4, offset = 0x4, fixed_abs, tag = 'smem constant byte address 0x4 - core index']
  #allocation1 [shape = 'u32[144,128]{1,0:T(1,128)}', space=vmem, size = 0x12000, scoped, tag = 'internal scratch']
  %s0 = inlined_call_operand.vmem [shape: bf16[2,784,128], index: 0, kind: input, shape index: {}]
  %s1 = inlined_call_operand.vmem [shape: bf16[128,128], index: 1, kind: input, shape index: {}]
  %s2 = inlined_call_operand.vmem [shape: f32[1,128], index: 2, kind: input, shape index: {}]
  %s3 = inlined_call_operand.vmem [shape: bf16[2,196,128], index: 3, kind: output, shape index: {}]
  %s4 = sld [smem:[#allocation0]]
  $region45: #{model2_forward.2} parent=0
    _
  %s6 = ssub.s32 1, %s4
  %s7 = scalar_select 0, %s6, %s4
  loop: start=0, step=1, limit=4
  $region2: #{model2_forward.2} parent=0 // loop_pre_header
    _
  $region3: #{model2_forward.2} parent=0 // loop_header
    %s9 = sphi 0, %s13
    %p10 = scmp.ge.s32.totalorder %s9, 4
    %s19 = sphi 0, %s21
    %s22 = sphi 0, %s19
    %s23 = sphi 0, %s22
    %s39 = sphi 0, %s23
    %s43 = sphi 0, %s43
    %s45 = sphi 0, %s43
    %s46 = sphi 0, %s45
    %s60 = sphi 0, %s46
    %s64 = sphi 0, %s64
    %s66 = sphi 0, %s64
    %s67 = sphi 0, %s66
    %s81 = sphi 0, %s67
    %s87 = sphi 0, %s89
    %s90 = sphi 0, %s87
    %s91 = sphi 0, %s90
    %s107 = sphi 0, %s91
  $region4: #{model2_forward.2} parent=0 // loop_header_branch
    %12 = sbr.rel (%p10) target = $region8
  $region5: #{model2_forward.2} parent=0 // loop_body
    %s14 = ssub.s32 %s9, 1
    %s15 = ssub.s32 %s9, 2
    %s16 = sadd.s32 %s9, 1
    %s17 = ssub.s32 %s9, %s16
    %p18 = scmp.eq.s32.totalorder %s17, 0
    %s20 = sadd.s32 %s19, 1
    %s21 = scalar_select %p18, %s19, %s20
    %p24 = pneg %p18
    %p25 = scmp.eq.s32.totalorder %s9, 1
    %p26 = por %p24, %p25
    %p27 = scmp.ne.s32.totalorder %s19, %s22
    %p28 = scmp.eq.s32.totalorder %s9, 0
    %p29 = por %p27, %p28
    %p30 = scmp.ne.s32.totalorder %s19, %s22
    %p31 = scmp.eq.s32.totalorder %s14, 1
    %p32 = por %p30, %p31
    %p33 = scmp.ne.s32.totalorder %s22, %s23
    %p34 = scmp.eq.s32.totalorder %s14, 0
    %p35 = por %p33, %p34
    %p36 = scmp.ne.s32.totalorder %s22, %s23
    %p37 = scmp.eq.s32.totalorder %s15, 1
    %p38 = por %p36, %p37
    %p40 = scmp.ne.s32.totalorder %s23, %s39
    %p41 = scmp.eq.s32.totalorder %s15, 0
    %p42 = por %p40, %p41
    %s44 = sadd.s32 %s43, 1
    %p47 = scmp.eq.s32.totalorder %s9, 1
    %p48 = scmp.ne.s32.totalorder %s43, %s45
    %p49 = scmp.eq.s32.totalorder %s9, 0
    %p50 = por %p48, %p49
    %p51 = scmp.ne.s32.totalorder %s43, %s45
    %p52 = scmp.eq.s32.totalorder %s14, 1
    %p53 = por %p51, %p52
    %p54 = scmp.ne.s32.totalorder %s45, %s46
    %p55 = scmp.eq.s32.totalorder %s14, 0
    %p56 = por %p54, %p55
    %p57 = scmp.ne.s32.totalorder %s45, %s46
    %p58 = scmp.eq.s32.totalorder %s15, 1
    %p59 = por %p57, %p58
    %p61 = scmp.ne.s32.totalorder %s46, %s60
    %p62 = scmp.eq.s32.totalorder %s15, 0
    %p63 = por %p61, %p62
    %s65 = sadd.s32 %s64, 1
    %p68 = scmp.eq.s32.totalorder %s9, 1
    %p69 = scmp.ne.s32.totalorder %s64, %s66
    %p70 = scmp.eq.s32.totalorder %s9, 0
    %p71 = por %p69, %p70
    %p72 = scmp.ne.s32.totalorder %s64, %s66
    %p73 = scmp.eq.s32.totalorder %s14, 1
    %p74 = por %p72, %p73
    %p75 = scmp.ne.s32.totalorder %s66, %s67
    %p76 = scmp.eq.s32.totalorder %s14, 0
    %p77 = por %p75, %p76
    %p78 = scmp.ne.s32.totalorder %s66, %s67
    %p79 = scmp.eq.s32.totalorder %s15, 1
    %p80 = por %p78, %p79
    %p82 = scmp.ne.s32.totalorder %s67, %s81
    %p83 = scmp.eq.s32.totalorder %s15, 0
    %p84 = por %p82, %p83
    %s85 = ssub.s32 %s9, %s16
    %p86 = scmp.eq.s32.totalorder %s85, 0
    %s88 = sadd.s32 %s87, 1
    %s89 = scalar_select %p86, %s87, %s88
    %p92 = pneg %p86
    %p93 = scmp.eq.s32.totalorder %s9, 1
    %p94 = por %p92, %p93
    %p95 = scmp.ne.s32.totalorder %s87, %s90
    %p96 = scmp.eq.s32.totalorder %s9, 0
    %p97 = por %p95, %p96
    %p98 = scmp.ne.s32.totalorder %s87, %s90
    %p99 = scmp.eq.s32.totalorder %s14, 1
    %p100 = por %p98, %p99
    %p101 = scmp.ne.s32.totalorder %s90, %s91
    %p102 = scmp.eq.s32.totalorder %s14, 0
    %p103 = por %p101, %p102
    %p104 = scmp.ne.s32.totalorder %s90, %s91
    %p105 = scmp.eq.s32.totalorder %s15, 1
    %p106 = por %p104, %p105
    %p108 = scmp.ne.s32.totalorder %s91, %s107
    %p109 = scmp.eq.s32.totalorder %s15, 0
    %p110 = por %p108, %p109
    %p111 = scmp.le.s32.totalorder 1, %s9
    %p112 = scmp.lt.s32.totalorder %s9, 3
    %p113 = pnand %p111, %p112
    %p114 = pneg %p113
    // Predicated region
    $region9: #{model2_forward.2} parent=5 // pred_check
      _
    $region10: #{model2_forward.2} parent=5 // pred_check_branch
      %116 = sbr.rel (%p113) target = $region12
    $region11: #{model2_forward.2} parent=5 // pred_region
      %s117 = ssub.s32 %s9, 1
      // Predicated region
      $region13: #{model2_forward.2} parent=11 // pred_check
        %p118 = pneg %p56
      $region14: #{model2_forward.2} parent=11 // pred_check_branch
        %120 = sbr.rel (%p118) target = $region16
      $region15: #{model2_forward.2} parent=11 // pred_region
        _
      $region16: #{model2_forward.2} parent=11 // pred_fallthru
        _
      // Predicated region
      $region17: #{model2_forward.2} parent=11 // pred_check
        %p121 = pneg %p77
      $region18: #{model2_forward.2} parent=11 // pred_check_branch
        %123 = sbr.rel (%p121) target = $region20
      $region19: #{model2_forward.2} parent=11 // pred_region
        _
      $region20: #{model2_forward.2} parent=11 // pred_fallthru
        _
    $region12: #{model2_forward.2} parent=5 // pred_fallthru
      _
    %p124 = scmp.lt.s32.totalorder %s9, 2
    // Predicated region
    $region21: #{model2_forward.2} parent=5 // pred_check
      %p125 = pneg %p124
    $region22: #{model2_forward.2} parent=5 // pred_check_branch
      %127 = sbr.rel (%p125) target = $region24
    $region23: #{model2_forward.2} parent=5 // pred_region
      // Predicated region
      $region25: #{model2_forward.2} parent=23 // pred_check
        %p128 = pneg %p29
      $region26: #{model2_forward.2} parent=23 // pred_check_branch
        %130 = sbr.rel (%p128) target = $region28
      $region27: #{model2_forward.2} parent=23 // pred_region
        %p131 = scmp.lt.s32.totalorder %s9, 1
        %s132 = scalar_select %p131, %s9, 1
        %s133 = smul.addr %s132, 98
        %s134 = smul.addr %s133, 4
        %s135 = scalar_lea.vmem %s0, %s134
      $region28: #{model2_forward.2} parent=23 // pred_fallthru
        _
    $region24: #{model2_forward.2} parent=5 // pred_fallthru
      _
    %p136 = scmp.le.s32.totalorder 1, %s9
    %p137 = scmp.lt.s32.totalorder %s9, 3
    %p138 = pnand %p136, %p137
    %p139 = pneg %p138
    // Predicated region
    $region29: #{model2_forward.2} parent=5 // pred_check
      _
    $region30: #{model2_forward.2} parent=5 // pred_check_branch
      %141 = sbr.rel (%p138) target = $region32
    $region31: #{model2_forward.2} parent=5 // pred_region
      %s142 = ssub.s32 %s9, 1
      %p143 = scmp.lt.s32.totalorder %s14, 1
      %s144 = scalar_select %p143, %s14, 1
      %s145 = smul.addr %s144, 98
      %s146 = smul.addr %s145, 4
      %s147 = scalar_lea.vmem %s0, %s146
      %p148 = pneg %p35
      %p149 = pneg %p32
      %p150 = pneg %p56
      %p151 = pneg %p53
      %p152 = pneg %p77
      %p153 = pneg %p74
      %p154 = pneg %p103
      %p155 = pneg %p100
      %p156 = scmp.lt.s32.totalorder %s14, 1
      %s157 = scalar_select %p156, %s14, 1
      %s158 = smul.addr %s157, 25
      %s159 = smul.addr %s158, 4
      %s160 = scalar_lea.vmem %s3, %s159
      %p161 = scmp.lt.s32.totalorder %s14, 1
      %s162 = scalar_select %p161, %s14, 1
      %s163 = smul.addr %s162, 98
      %s164 = smul.addr %s163, 4
      %s165 = scalar_lea.vmem %s0, %s164
      %p166 = scmp.lt.s32.totalorder %s14, 1
      %s167 = scalar_select %p166, %s14, 1
      %s168 = smul.addr %s167, 25
      %s169 = smul.addr %s168, 4
      %s170 = scalar_lea.vmem %s3, %s169
      %v172 = vld [vmem:[%s165] sm:$0xf]
      %v173 = vld [vmem:[%s165 + $0x4] sm:$0xf]
      %v174 = vld [vmem:[%s165 + $0x8] sm:$0xf]
      %v175 = vld [vmem:[%s165 + $0xc] sm:$0xf]
      %v176 = vld [vmem:[%s165 + $0x10] sm:$0xf]
      %v177 = vld [vmem:[%s165 + $0x14] sm:$0xf]
      %v178 = vld [vmem:[%s165 + $0x18] sm:$0xf]
      %v179 = vld [vmem:[%s165 + $0x1c] sm:$0xf]
      %v180 = vld [vmem:[%s165 + $0x20] sm:$0xf]
      %v181 = vld [vmem:[%s165 + $0x24] sm:$0xf]
      %v182 = vld [vmem:[%s165 + $0x28] sm:$0xf]
      %v183 = vld [vmem:[%s165 + $0x2c] sm:$0xf]
      %v184 = vld [vmem:[%s165 + $0x30] sm:$0xf]
      %v185 = vld [vmem:[%s165 + $0x34] sm:$0xf]
      %v186 = vld [vmem:[%s165 + $0x38] sm:$0xf]
      %v187 = vld [vmem:[%s165 + $0x3c] sm:$0xf]
      %v188 = vld [vmem:[%s165 + $0x40] sm:$0xf]
      %v189 = vld [vmem:[%s165 + $0x44] sm:$0xf]
      %v190 = vld [vmem:[%s165 + $0x48] sm:$0xf]
      %v191 = vld [vmem:[%s165 + $0x4c] sm:$0xf]
      %v192 = vld [vmem:[%s165 + $0x50] sm:$0xf]
      %v193 = vld [vmem:[%s165 + $0x54] sm:$0xf]
      %v194 = vld [vmem:[%s165 + $0x58] sm:$0xf]
      %v195 = vld [vmem:[%s165 + $0x5c] sm:$0xf]
      %v196 = vld [vmem:[%s165 + $0x60] sm:$0xf]
      %v197 = vld [vmem:[%s165 + $0x64] sm:$0xf]
      %v198 = vld [vmem:[%s165 + $0x68] sm:$0xf]
      %v199 = vld [vmem:[%s165 + $0x6c] sm:$0xf]
      %v200 = vld [vmem:[%s165 + $0x70] sm:$0xf]
      %v201 = vld [vmem:[%s165 + $0x74] sm:$0xf]
      %v202 = vld [vmem:[%s165 + $0x78] sm:$0xf]
      %v203 = vld [vmem:[%s165 + $0x7c] sm:$0xf]
      %v204 = vld [vmem:[%s165 + $0x80] sm:$0xf]
      %v205 = vld [vmem:[%s165 + $0x84] sm:$0xf]
      %v206 = vld [vmem:[%s165 + $0x88] sm:$0xf]
      %v207 = vld [vmem:[%s165 + $0x8c] sm:$0xf]
      %v208 = vld [vmem:[%s165 + $0x90] sm:$0xf]
      %v209 = vld [vmem:[%s165 + $0x94] sm:$0xf]
      %v210 = vld [vmem:[%s165 + $0x98] sm:$0xf]
      %v211 = vld [vmem:[%s165 + $0x9c] sm:$0xf]
      %v212 = vld [vmem:[%s165 + $0xa0] sm:$0xf]
      %v213 = vld [vmem:[%s165 + $0xa4] sm:$0xf]
      %v214 = vld [vmem:[%s165 + $0xa8] sm:$0xf]
      %v215 = vld [vmem:[%s165 + $0xac] sm:$0xf]
      %v216 = vld [vmem:[%s165 + $0xb0] sm:$0xf]
      %v217 = vld [vmem:[%s165 + $0xb4] sm:$0xf]
      %v218 = vld [vmem:[%s165 + $0xb8] sm:$0xf]
      %v219 = vld [vmem:[%s165 + $0xbc] sm:$0xf]
      %v220 = vld [vmem:[%s165 + $0xc0] sm:$0xf]
      %v221 = vld [vmem:[%s165 + $0xc4] sm:$0xf]
      %v222 = vld [vmem:[%s165 + $0xc8] sm:$0xf]
      %v223 = vld [vmem:[%s165 + $0xcc] sm:$0xf]
      %v224 = vld [vmem:[%s165 + $0xd0] sm:$0xf]
      %v225 = vld [vmem:[%s165 + $0xd4] sm:$0xf]
      %v226 = vld [vmem:[%s165 + $0xd8] sm:$0xf]
      %v227 = vld [vmem:[%s165 + $0xdc] sm:$0xf]
      %v228 = vld [vmem:[%s165 + $0xe0] sm:$0xf]
      %v229 = vld [vmem:[%s165 + $0xe4] sm:$0xf]
      %v230 = vld [vmem:[%s165 + $0xe8] sm:$0xf]
      %v231 = vld [vmem:[%s165 + $0xec] sm:$0xf]
      %v232 = vld [vmem:[%s165 + $0xf0] sm:$0xf]
      %v233 = vld [vmem:[%s165 + $0xf4] sm:$0xf]
      %v234 = vld [vmem:[%s165 + $0xf8] sm:$0xf]
      %v235 = vld [vmem:[%s165 + $0xfc] sm:$0xf]
      %v236 = vld [vmem:[%s165 + $0x100] sm:$0xf]
      %v237 = vld [vmem:[%s165 + $0x104] sm:$0xf]
      %v238 = vld [vmem:[%s165 + $0x108] sm:$0xf]
      %v239 = vld [vmem:[%s165 + $0x10c] sm:$0xf]
      %v240 = vld [vmem:[%s165 + $0x110] sm:$0xf]
      %v241 = vld [vmem:[%s165 + $0x114] sm:$0xf]
      %v242 = vld [vmem:[%s165 + $0x118] sm:$0xf]
      %v243 = vld [vmem:[%s165 + $0x11c] sm:$0xf]
      %v244 = vld [vmem:[%s165 + $0x120] sm:$0xf]
      %v245 = vld [vmem:[%s165 + $0x124] sm:$0xf]
      %v246 = vld [vmem:[%s165 + $0x128] sm:$0xf]
      %v247 = vld [vmem:[%s165 + $0x12c] sm:$0xf]
      %v248 = vld [vmem:[%s165 + $0x130] sm:$0xf]
      %v249 = vld [vmem:[%s165 + $0x134] sm:$0xf]
      %v250 = vld [vmem:[%s165 + $0x138] sm:$0xf]
      %v251 = vld [vmem:[%s165 + $0x13c] sm:$0xf]
      %v252 = vld [vmem:[%s165 + $0x140] sm:$0xf]
      %v253 = vld [vmem:[%s165 + $0x144] sm:$0xf]
      %v254 = vld [vmem:[%s165 + $0x148] sm:$0xf]
      %v255 = vld [vmem:[%s165 + $0x14c] sm:$0xf]
      %v256 = vld [vmem:[%s165 + $0x150] sm:$0xf]
      %v257 = vld [vmem:[%s165 + $0x154] sm:$0xf]
      %v258 = vld [vmem:[%s165 + $0x158] sm:$0xf]
      %v259 = vld [vmem:[%s165 + $0x15c] sm:$0xf]
      %v260 = vld [vmem:[%s165 + $0x160] sm:$0xf]
      %v261 = vld [vmem:[%s165 + $0x164] sm:$0xf]
      %v262 = vld [vmem:[%s165 + $0x168] sm:$0xf]
      %v263 = vld [vmem:[%s165 + $0x16c] sm:$0xf]
      %v264 = vld [vmem:[%s165 + $0x170] sm:$0xf]
      %v265 = vld [vmem:[%s165 + $0x174] sm:$0xf]
      %v266 = vld [vmem:[%s165 + $0x178] sm:$0xf]
      %v267 = vld [vmem:[%s165 + $0x17c] sm:$0xf]
      %v268 = vld [vmem:[%s165 + $0x180] sm:$0xf]
      %v269 = vld [vmem:[%s165 + $0x184] sm:$0xf]
      %v270 = vld [vmem:[%s1] sm:$0xf]
      %v271 = vld [vmem:[%s1 + $0x4] sm:$0xf]
      %v272 = vld [vmem:[%s1 + $0x8] sm:$0xf]
      %v273 = vld [vmem:[%s1 + $0xc] sm:$0xf]
      %v274 = vld [vmem:[%s1 + $0x10] sm:$0xf]
      %v275 = vld [vmem:[%s1 + $0x14] sm:$0xf]
      %v276 = vld [vmem:[%s1 + $0x18] sm:$0xf]
      %v277 = vld [vmem:[%s1 + $0x1c] sm:$0xf]
      %v278 = vld [vmem:[%s1 + $0x20] sm:$0xf]
      %v279 = vld [vmem:[%s1 + $0x24] sm:$0xf]
      %v280 = vld [vmem:[%s1 + $0x28] sm:$0xf]
      %v281 = vld [vmem:[%s1 + $0x2c] sm:$0xf]
      %v282 = vld [vmem:[%s1 + $0x30] sm:$0xf]
      %v283 = vld [vmem:[%s1 + $0x34] sm:$0xf]
      %v284 = vld [vmem:[%s1 + $0x38] sm:$0xf]
      %v285 = vld [vmem:[%s1 + $0x3c] sm:$0xf]
      %v286 = vld [vmem:[%s2] sm:$0x1]
      %v288 = vlaneseq
      %v289 = vshrl.u32 %v288, 7
      %v290 = vsub.s32 0, %v289
      %v291 = vrot.slane %v286, %v290
      %v391 = vunpack.c.l.b16 %v172
      %v392 = vunpack.c.l.b16 %v173
      %v393 = vunpack.c.l.b16 %v174
      %v394 = vunpack.c.l.b16 %v175
      %v395 = vunpack.c.l.b16 %v176
      %v396 = vunpack.c.l.b16 %v177
      %v397 = vunpack.c.l.b16 %v178
      %v398 = vunpack.c.l.b16 %v179
      %v399 = vunpack.c.l.b16 %v180
      %v400 = vunpack.c.l.b16 %v181
      %v401 = vunpack.c.l.b16 %v182
      %v402 = vunpack.c.l.b16 %v183
      %v403 = vunpack.c.l.b16 %v184
      %v404 = vunpack.c.l.b16 %v185
      %v405 = vunpack.c.l.b16 %v186
      %v406 = vunpack.c.l.b16 %v187
      %v407 = vunpack.c.l.b16 %v188
      %v408 = vunpack.c.l.b16 %v189
      %v409 = vunpack.c.l.b16 %v190
      %v410 = vunpack.c.l.b16 %v191
      %v411 = vunpack.c.l.b16 %v192
      %v412 = vunpack.c.l.b16 %v193
      %v413 = vunpack.c.l.b16 %v194
      %v414 = vunpack.c.l.b16 %v195
      %v415 = vunpack.c.l.b16 %v196
      %v416 = vunpack.c.l.b16 %v197
      %v417 = vunpack.c.l.b16 %v198
      %v418 = vunpack.c.l.b16 %v199
      %v419 = vunpack.c.l.b16 %v200
      %v420 = vunpack.c.l.b16 %v201
      %v421 = vunpack.c.l.b16 %v202
      %v422 = vunpack.c.l.b16 %v203
      %v423 = vunpack.c.l.b16 %v204
      %v424 = vunpack.c.l.b16 %v205
      %v425 = vunpack.c.l.b16 %v206
      %v426 = vunpack.c.l.b16 %v207
      %v427 = vunpack.c.l.b16 %v208
      %v428 = vunpack.c.l.b16 %v209
      %v429 = vunpack.c.l.b16 %v210
      %v430 = vunpack.c.l.b16 %v211
      %v431 = vunpack.c.l.b16 %v212
      %v432 = vunpack.c.l.b16 %v213
      %v433 = vunpack.c.l.b16 %v214
      %v434 = vunpack.c.l.b16 %v215
      %v435 = vunpack.c.l.b16 %v216
      %v436 = vunpack.c.l.b16 %v217
      %v437 = vunpack.c.l.b16 %v218
      %v438 = vunpack.c.l.b16 %v219
      %v439 = vunpack.c.l.b16 %v220
      %v440 = vunpack.c.l.b16 %v221
      %v441 = vunpack.c.l.b16 %v222
      %v442 = vunpack.c.l.b16 %v223
      %v443 = vunpack.c.l.b16 %v224
      %v444 = vunpack.c.l.b16 %v225
      %v445 = vunpack.c.l.b16 %v226
      %v446 = vunpack.c.l.b16 %v227
      %v447 = vunpack.c.l.b16 %v228
      %v448 = vunpack.c.l.b16 %v229
      %v449 = vunpack.c.l.b16 %v230
      %v450 = vunpack.c.l.b16 %v231
      %v451 = vunpack.c.l.b16 %v232
      %v452 = vunpack.c.l.b16 %v233
      %v453 = vunpack.c.l.b16 %v234
      %v454 = vunpack.c.l.b16 %v235
      %v455 = vunpack.c.l.b16 %v236
      %v456 = vunpack.c.l.b16 %v237
      %v457 = vunpack.c.l.b16 %v238
      %v458 = vunpack.c.l.b16 %v239
      %v459 = vunpack.c.l.b16 %v240
      %v460 = vunpack.c.l.b16 %v241
      %v461 = vunpack.c.l.b16 %v242
      %v462 = vunpack.c.l.b16 %v243
      %v463 = vunpack.c.l.b16 %v244
      %v464 = vunpack.c.l.b16 %v245
      %v465 = vunpack.c.l.b16 %v246
      %v466 = vunpack.c.l.b16 %v247
      %v467 = vunpack.c.l.b16 %v248
      %v468 = vunpack.c.l.b16 %v249
      %v469 = vunpack.c.l.b16 %v250
      %v470 = vunpack.c.l.b16 %v251
      %v471 = vunpack.c.l.b16 %v252
      %v472 = vunpack.c.l.b16 %v253
      %v473 = vunpack.c.l.b16 %v254
      %v474 = vunpack.c.l.b16 %v255
      %v475 = vunpack.c.l.b16 %v256
      %v476 = vunpack.c.l.b16 %v257
      %v477 = vunpack.c.l.b16 %v258
      %v478 = vunpack.c.l.b16 %v259
      %v479 = vunpack.c.l.b16 %v260
      %v480 = vunpack.c.l.b16 %v261
      %v481 = vunpack.c.l.b16 %v262
      %v482 = vunpack.c.l.b16 %v263
      %v483 = vunpack.c.l.b16 %v264
      %v484 = vunpack.c.l.b16 %v265
      %v485 = vunpack.c.l.b16 %v266
      %v486 = vunpack.c.l.b16 %v267
      %v487 = vunpack.c.l.b16 %v268
      %v488 = vunpack.c.l.b16 %v269
      %v489 = vpack.c.b16 %v392, %v391
      %v490 = vpack.c.b16 %v394, %v393
      %v491 = vpack.c.b16 %v396, %v395
      %v492 = vpack.c.b16 %v398, %v397
      %v493 = vpack.c.b16 %v400, %v399
      %v494 = vpack.c.b16 %v402, %v401
      %v495 = vpack.c.b16 %v404, %v403
      %v496 = vpack.c.b16 %v406, %v405
      %v497 = vpack.c.b16 %v408, %v407
      %v498 = vpack.c.b16 %v410, %v409
      %v499 = vpack.c.b16 %v412, %v411
      %v500 = vpack.c.b16 %v414, %v413
      %v501 = vpack.c.b16 %v416, %v415
      %v502 = vpack.c.b16 %v418, %v417
      %v503 = vpack.c.b16 %v420, %v419
      %v504 = vpack.c.b16 %v422, %v421
      %v505 = vpack.c.b16 %v424, %v423
      %v506 = vpack.c.b16 %v426, %v425
      %v507 = vpack.c.b16 %v428, %v427
      %v508 = vpack.c.b16 %v430, %v429
      %v509 = vpack.c.b16 %v432, %v431
      %v510 = vpack.c.b16 %v434, %v433
      %v511 = vpack.c.b16 %v436, %v435
      %v512 = vpack.c.b16 %v438, %v437
      %v513 = vpack.c.b16 %v440, %v439
      %v514 = vpack.c.b16 %v442, %v441
      %v515 = vpack.c.b16 %v444, %v443
      %v516 = vpack.c.b16 %v446, %v445
      %v517 = vpack.c.b16 %v448, %v447
      %v518 = vpack.c.b16 %v450, %v449
      %v519 = vpack.c.b16 %v452, %v451
      %v520 = vpack.c.b16 %v454, %v453
      %v521 = vpack.c.b16 %v456, %v455
      %v522 = vpack.c.b16 %v458, %v457
      %v523 = vpack.c.b16 %v460, %v459
      %v524 = vpack.c.b16 %v462, %v461
      %v525 = vpack.c.b16 %v464, %v463
      %v526 = vpack.c.b16 %v466, %v465
      %v527 = vpack.c.b16 %v468, %v467
      %v528 = vpack.c.b16 %v470, %v469
      %v529 = vpack.c.b16 %v472, %v471
      %v530 = vpack.c.b16 %v474, %v473
      %v531 = vpack.c.b16 %v476, %v475
      %v532 = vpack.c.b16 %v478, %v477
      %v533 = vpack.c.b16 %v480, %v479
      %v534 = vpack.c.b16 %v482, %v481
      %v535 = vpack.c.b16 %v484, %v483
      %v536 = vpack.c.b16 %v486, %v485
      %v537 = vpack.c.b16 %v488, %v487
      %v603 = vunpack.c.l.b16 %v270
      %v604 = vunpack.c.l.b16 %v271
      %v605 = vunpack.c.l.b16 %v272
      %v606 = vunpack.c.l.b16 %v273
      %v607 = vunpack.c.l.b16 %v274
      %v608 = vunpack.c.l.b16 %v275
      %v609 = vunpack.c.l.b16 %v276
      %v610 = vunpack.c.l.b16 %v277
      %v611 = vunpack.c.l.b16 %v278
      %v612 = vunpack.c.l.b16 %v279
      %v613 = vunpack.c.l.b16 %v280
      %v614 = vunpack.c.l.b16 %v281
      %v615 = vunpack.c.l.b16 %v282
      %v616 = vunpack.c.l.b16 %v283
      %v617 = vunpack.c.l.b16 %v284
      %v618 = vunpack.c.l.b16 %v285
      %v619 = vpack.c.b16 %v604, %v603
      %v620 = vpack.c.b16 %v606, %v605
      %v621 = vpack.c.b16 %v608, %v607
      %v622 = vpack.c.b16 %v610, %v609
      %v623 = vpack.c.b16 %v612, %v611
      %v624 = vpack.c.b16 %v614, %v613
      %v625 = vpack.c.b16 %v616, %v615
      %v626 = vpack.c.b16 %v618, %v617
      %635 = vmatprep.subr.bf16.mxu0 0
      %636 = vmatpush1.bf16.msra.mxu0 %v619
      %637 = vmatprep.subr.bf16.mxu0 0
      %638 = vmatpush1.bf16.msra.mxu0 %v620
      %639 = vmatprep.subr.bf16.mxu0 0
      %640 = vmatpush1.bf16.msra.mxu0 %v621
      %641 = vmatprep.subr.bf16.mxu0 0
      %642 = vmatpush1.bf16.msra.mxu0 %v622
      %643 = vmatprep.subr.bf16.mxu0 0
      %644 = vmatpush1.bf16.msra.mxu0 %v623
      %645 = vmatprep.subr.bf16.mxu0 0
      %646 = vmatpush1.bf16.msra.mxu0 %v624
      %647 = vmatprep.subr.bf16.mxu0 0
      %648 = vmatpush1.bf16.msra.mxu0 %v625
      %649 = vmatprep.subr.bf16.mxu0 0
      %650 = vmatpush1.bf16.msra.mxu0 %v626
      %651 = vmatprep.subr.bf16.mxu0 0
      %652 = vmatpush1.bf16.msra.mxu0 0
      %653 = vmatprep.subr.bf16.mxu0 0
      %654 = vmatpush1.bf16.msra.mxu0 0
      %655 = vmatprep.subr.bf16.mxu0 0
      %656 = vmatpush1.bf16.msra.mxu0 0
      %657 = vmatprep.subr.bf16.mxu0 0
      %658 = vmatpush1.bf16.msra.mxu0 0
      %659 = vmatprep.subr.bf16.mxu0 0
      %660 = vmatpush1.bf16.msra.mxu0 0
      %661 = vmatprep.subr.bf16.mxu0 0
      %662 = vmatpush1.bf16.msra.mxu0 0
      %663 = vmatprep.subr.bf16.mxu0 0
      %664 = vmatpush1.bf16.msra.mxu0 0
      %665 = vmatprep.subr.bf16.mxu0 0
      %666 = vmatpush1.bf16.msra.mxu0 0
      %667 = vmatprep.mubr.bf16.mxu0 0
      %668 = vmatmul.mubr.bf16.gmra.mrb[0].mxu0 %v489
      %v669 = vpop.f32.mrb[0].mxu0
      %v670 = vadd.f32 %v291, %v669
      %v671 = vpop.f32.mrb[0].mxu0
      %v672 = vpop.f32.mrb[0].mxu0
      %v673 = vadd.f32 %v291, %v672
      %v674 = vpop.f32.mrb[0].mxu0
      %675 = vmatprep.mubr.bf16.mxu0 0
      %676 = vmatmul.mubr.bf16.gmra.mrb[0].mxu0 %v490
      %v677 = vpop.f32.mrb[0].mxu0
      %v678 = vadd.f32 %v291, %v677
      %v679 = vpop.f32.mrb[0].mxu0
      %v680 = vpop.f32.mrb[0].mxu0
      %v681 = vadd.f32 %v291, %v680
      %v682 = vpop.f32.mrb[0].mxu0
      %683 = vmatprep.mubr.bf16.mxu0 0
      %684 = vmatmul.mubr.bf16.gmra.mrb[0].mxu0 %v491
      %v685 = vpop.f32.mrb[0].mxu0
      %v686 = vadd.f32 %v291, %v685
      %v687 = vpop.f32.mrb[0].mxu0
      %v688 = vpop.f32.mrb[0].mxu0
      %v689 = vadd.f32 %v291, %v688
      %v690 = vpop.f32.mrb[0].mxu0
      %691 = vmatprep.mubr.bf16.mxu0 0
      %692 = vmatmul.mubr.bf16.gmra.mrb[0].mxu0 %v492
      %v693 = vpop.f32.mrb[0].mxu0
      %v694 = vadd.f32 %v291, %v693
      %v695 = vpop.f32.mrb[0].mxu0
      %v696 = vpop.f32.mrb[0].mxu0
      %v697 = vadd.f32 %v291, %v696
      %v698 = vpop.f32.mrb[0].mxu0
      %699 = vmatprep.mubr.bf16.mxu0 0
      %700 = vmatmul.mubr.bf16.gmra.mrb[0].mxu0 %v493
      %v701 = vpop.f32.mrb[0].mxu0
      %v702 = vadd.f32 %v291, %v701
      %v703 = vpop.f32.mrb[0].mxu0
      %v704 = vpop.f32.mrb[0].mxu0
      %v705 = vadd.f32 %v291, %v704
      %v706 = vpop.f32.mrb[0].mxu0
      %707 = vmatprep.mubr.bf16.mxu0 0
      %708 = vmatmul.mubr.bf16.gmra.mrb[0].mxu0 %v494
      %v709 = vpop.f32.mrb[0].mxu0
      %v710 = vadd.f32 %v291, %v709
      %v711 = vpop.f32.mrb[0].mxu0
      %v712 = vpop.f32.mrb[0].mxu0
      %v713 = vadd.f32 %v291, %v712
      %v714 = vpop.f32.mrb[0].mxu0
      %715 = vmatprep.mubr.bf16.mxu0 0
      %716 = vmatmul.mubr.bf16.gmra.mrb[0].mxu0 %v495
      %v717 = vpop.f32.mrb[0].mxu0
      %v718 = vadd.f32 %v291, %v717
      %v719 = vpop.f32.mrb[0].mxu0
      %v720 = vpop.f32.mrb[0].mxu0
      %v721 = vadd.f32 %v291, %v720
      %v722 = vpop.f32.mrb[0].mxu0
      %723 = vmatprep.mubr.bf16.mxu0 0
      %724 = vmatmul.mubr.bf16.gmra.mrb[0].mxu0 %v496
      %v725 = vpop.f32.mrb[0].mxu0
      %v726 = vadd.f32 %v291, %v725
      %v727 = vpop.f32.mrb[0].mxu0
      %v728 = vpop.f32.mrb[0].mxu0
      %v729 = vadd.f32 %v291, %v728
      %v730 = vpop.f32.mrb[0].mxu0
      %731 = vmatprep.mubr.bf16.mxu0 0
      %732 = vmatmul.mubr.bf16.gmra.mrb[0].mxu0 %v497
      %v733 = vpop.f32.mrb[0].mxu0
      %v734 = vadd.f32 %v291, %v733
      %v735 = vpop.f32.mrb[0].mxu0
      %v736 = vpop.f32.mrb[0].mxu0
      %v737 = vadd.f32 %v291, %v736
      %v738 = vpop.f32.mrb[0].mxu0
      %739 = vmatprep.mubr.bf16.mxu0 0
      %740 = vmatmul.mubr.bf16.gmra.mrb[0].mxu0 %v498
      %v741 = vpop.f32.mrb[0].mxu0
      %v742 = vadd.f32 %v291, %v741
      %v743 = vpop.f32.mrb[0].mxu0
      %v744 = vpop.f32.mrb[0].mxu0
      %v745 = vadd.f32 %v291, %v744
      %v746 = vpop.f32.mrb[0].mxu0
      %747 = vmatprep.mubr.bf16.mxu0 0
      %748 = vmatmul.mubr.bf16.gmra.mrb[0].mxu0 %v499
      %v749 = vpop.f32.mrb[0].mxu0
      %v750 = vadd.f32 %v291, %v749
      %v751 = vpop.f32.mrb[0].mxu0
      %v752 = vpop.f32.mrb[0].mxu0
      %v753 = vadd.f32 %v291, %v752
      %v754 = vpop.f32.mrb[0].mxu0
      %755 = vmatprep.mubr.bf16.mxu0 0
      %756 = vmatmul.mubr.bf16.gmra.mrb[0].mxu0 %v500
      %v757 = vpop.f32.mrb[0].mxu0
      %v758 = vadd.f32 %v291, %v757
      %v759 = vpop.f32.mrb[0].mxu0
      %v760 = vpop.f32.mrb[0].mxu0
      %v761 = vadd.f32 %v291, %v760
      %v762 = vpop.f32.mrb[0].mxu0
      %763 = vmatprep.mubr.bf16.mxu0 0
      %764 = vmatmul.mubr.bf16.gmra.mrb[0].mxu0 %v501
      %v765 = vpop.f32.mrb[0].mxu0
      %v766 = vadd.f32 %v291, %v765
      %v767 = vpop.f32.mrb[0].mxu0
      %v768 = vpop.f32.mrb[0].mxu0
      %v769 = vadd.f32 %v291, %v768
      %v770 = vpop.f32.mrb[0].mxu0
      %771 = vmatprep.mubr.bf16.mxu0 0
      %772 = vmatmul.mubr.bf16.gmra.mrb[0].mxu0 %v502
      %v773 = vpop.f32.mrb[0].mxu0
      %v774 = vadd.f32 %v291, %v773
      %v775 = vpop.f32.mrb[0].mxu0
      %v776 = vpop.f32.mrb[0].mxu0
      %v777 = vadd.f32 %v291, %v776
      %v778 = vpop.f32.mrb[0].mxu0
      %779 = vmatprep.mubr.bf16.mxu0 0
      %780 = vmatmul.mubr.bf16.gmra.mrb[0].mxu0 %v503
      %v781 = vpop.f32.mrb[0].mxu0
      %v782 = vadd.f32 %v291, %v781
      %v783 = vpop.f32.mrb[0].mxu0
      %v784 = vpop.f32.mrb[0].mxu0
      %v785 = vadd.f32 %v291, %v784
      %v786 = vpop.f32.mrb[0].mxu0
      %787 = vmatprep.mubr.bf16.mxu0 0
      %788 = vmatmul.mubr.bf16.gmra.mrb[0].mxu0 %v504
      %v789 = vpop.f32.mrb[0].mxu0
      %v790 = vadd.f32 %v291, %v789
      %v791 = vpop.f32.mrb[0].mxu0
      %v792 = vpop.f32.mrb[0].mxu0
      %v793 = vadd.f32 %v291, %v792
      %v794 = vpop.f32.mrb[0].mxu0
      %795 = vmatprep.mubr.bf16.mxu0 0
      %796 = vmatmul.mubr.bf16.gmra.mrb[0].mxu0 %v505
      %v797 = vpop.f32.mrb[0].mxu0
      %v798 = vadd.f32 %v291, %v797
      %v799 = vpop.f32.mrb[0].mxu0
      %v800 = vpop.f32.mrb[0].mxu0
      %v801 = vadd.f32 %v291, %v800
      %v802 = vpop.f32.mrb[0].mxu0
      %803 = vmatprep.mubr.bf16.mxu0 0
      %804 = vmatmul.mubr.bf16.gmra.mrb[0].mxu0 %v506
      %v805 = vpop.f32.mrb[0].mxu0
      %v806 = vadd.f32 %v291, %v805
      %v807 = vpop.f32.mrb[0].mxu0
      %v808 = vpop.f32.mrb[0].mxu0
      %v809 = vadd.f32 %v291, %v808
      %v810 = vpop.f32.mrb[0].mxu0
      %811 = vmatprep.mubr.bf16.mxu0 0
      %812 = vmatmul.mubr.bf16.gmra.mrb[0].mxu0 %v507
      %v813 = vpop.f32.mrb[0].mxu0
      %v814 = vadd.f32 %v291, %v813
      %v815 = vpop.f32.mrb[0].mxu0
      %v816 = vpop.f32.mrb[0].mxu0
      %v817 = vadd.f32 %v291, %v816
      %v818 = vpop.f32.mrb[0].mxu0
      %819 = vmatprep.mubr.bf16.mxu0 0
      %820 = vmatmul.mubr.bf16.gmra.mrb[0].mxu0 %v508
      %v821 = vpop.f32.mrb[0].mxu0
      %v822 = vadd.f32 %v291, %v821
      %v823 = vpop.f32.mrb[0].mxu0
      %v824 = vpop.f32.mrb[0].mxu0
      %v825 = vadd.f32 %v291, %v824
      %v826 = vpop.f32.mrb[0].mxu0
      %827 = vmatprep.mubr.bf16.mxu0 0
      %828 = vmatmul.mubr.bf16.gmra.mrb[0].mxu0 %v509
      %v829 = vpop.f32.mrb[0].mxu0
      %v830 = vadd.f32 %v291, %v829
      %v831 = vpop.f32.mrb[0].mxu0
      %v832 = vpop.f32.mrb[0].mxu0
      %v833 = vadd.f32 %v291, %v832
      %v834 = vpop.f32.mrb[0].mxu0
      %835 = vmatprep.mubr.bf16.mxu0 0
      %836 = vmatmul.mubr.bf16.gmra.mrb[0].mxu0 %v510
      %v837 = vpop.f32.mrb[0].mxu0
      %v838 = vadd.f32 %v291, %v837
      %v839 = vpop.f32.mrb[0].mxu0
      %v840 = vpop.f32.mrb[0].mxu0
      %v841 = vadd.f32 %v291, %v840
      %v842 = vpop.f32.mrb[0].mxu0
      %843 = vmatprep.mubr.bf16.mxu0 0
      %844 = vmatmul.mubr.bf16.gmra.mrb[0].mxu0 %v511
      %v845 = vpop.f32.mrb[0].mxu0
      %v846 = vadd.f32 %v291, %v845
      %v847 = vpop.f32.mrb[0].mxu0
      %v848 = vpop.f32.mrb[0].mxu0
      %v849 = vadd.f32 %v291, %v848
      %v850 = vpop.f32.mrb[0].mxu0
      %851 = vmatprep.mubr.bf16.mxu0 0
      %852 = vmatmul.mubr.bf16.gmra.mrb[0].mxu0 %v512
      %v853 = vpop.f32.mrb[0].mxu0
      %v854 = vadd.f32 %v291, %v853
      %v855 = vpop.f32.mrb[0].mxu0
      %v856 = vpop.f32.mrb[0].mxu0
      %v857 = vadd.f32 %v291, %v856
      %v858 = vpop.f32.mrb[0].mxu0
      %859 = vmatprep.mubr.bf16.mxu0 0
      %860 = vmatmul.mubr.bf16.gmra.mrb[0].mxu0 %v513
      %v861 = vpop.f32.mrb[0].mxu0
      %v862 = vadd.f32 %v291, %v861
      %v863 = vpop.f32.mrb[0].mxu0
      %v864 = vpop.f32.mrb[0].mxu0
      %v865 = vadd.f32 %v291, %v864
      %v866 = vpop.f32.mrb[0].mxu0
      %867 = vmatprep.mubr.bf16.mxu0 0
      %868 = vmatmul.mubr.bf16.gmra.mrb[0].mxu0 %v514
      %v869 = vpop.f32.mrb[0].mxu0
      %v870 = vadd.f32 %v291, %v869
      %v871 = vpop.f32.mrb[0].mxu0
      %v872 = vpop.f32.mrb[0].mxu0
      %v873 = vadd.f32 %v291, %v872
      %v874 = vpop.f32.mrb[0].mxu0
      %875 = vmatprep.mubr.bf16.mxu0 0
      %876 = vmatmul.mubr.bf16.gmra.mrb[0].mxu0 %v515
      %v877 = vpop.f32.mrb[0].mxu0
      %v878 = vadd.f32 %v291, %v877
      %v879 = vpop.f32.mrb[0].mxu0
      %v880 = vpop.f32.mrb[0].mxu0
      %v881 = vadd.f32 %v291, %v880
      %v882 = vpop.f32.mrb[0].mxu0
      %883 = vmatprep.mubr.bf16.mxu0 0
      %884 = vmatmul.mubr.bf16.gmra.mrb[0].mxu0 %v516
      %v885 = vpop.f32.mrb[0].mxu0
      %v886 = vadd.f32 %v291, %v885
      %v887 = vpop.f32.mrb[0].mxu0
      %v888 = vpop.f32.mrb[0].mxu0
      %v889 = vadd.f32 %v291, %v888
      %v890 = vpop.f32.mrb[0].mxu0
      %891 = vmatprep.mubr.bf16.mxu0 0
      %892 = vmatmul.mubr.bf16.gmra.mrb[0].mxu0 %v517
      %v893 = vpop.f32.mrb[0].mxu0
      %v894 = vadd.f32 %v291, %v893
      %v895 = vpop.f32.mrb[0].mxu0
      %v896 = vpop.f32.mrb[0].mxu0
      %v897 = vadd.f32 %v291, %v896
      %v898 = vpop.f32.mrb[0].mxu0
      %899 = vmatprep.mubr.bf16.mxu0 0
      %900 = vmatmul.mubr.bf16.gmra.mrb[0].mxu0 %v518
      %v901 = vpop.f32.mrb[0].mxu0
      %v902 = vadd.f32 %v291, %v901
      %v903 = vpop.f32.mrb[0].mxu0
      %v904 = vpop.f32.mrb[0].mxu0
      %v905 = vadd.f32 %v291, %v904
      %v906 = vpop.f32.mrb[0].mxu0
      %907 = vmatprep.mubr.bf16.mxu0 0
      %908 = vmatmul.mubr.bf16.gmra.mrb[0].mxu0 %v519
      %v909 = vpop.f32.mrb[0].mxu0
      %v910 = vadd.f32 %v291, %v909
      %v911 = vpop.f32.mrb[0].mxu0
      %v912 = vpop.f32.mrb[0].mxu0
      %v913 = vadd.f32 %v291, %v912
      %v914 = vpop.f32.mrb[0].mxu0
      %915 = vmatprep.mubr.bf16.mxu0 0
      %916 = vmatmul.mubr.bf16.gmra.mrb[0].mxu0 %v520
      %v917 = vpop.f32.mrb[0].mxu0
      %v918 = vadd.f32 %v291, %v917
      %v919 = vpop.f32.mrb[0].mxu0
      %v920 = vpop.f32.mrb[0].mxu0
      %v921 = vadd.f32 %v291, %v920
      %v922 = vpop.f32.mrb[0].mxu0
      %923 = vmatprep.mubr.bf16.mxu0 0
      %924 = vmatmul.mubr.bf16.gmra.mrb[0].mxu0 %v521
      %v925 = vpop.f32.mrb[0].mxu0
      %v926 = vadd.f32 %v291, %v925
      %v927 = vpop.f32.mrb[0].mxu0
      %v928 = vpop.f32.mrb[0].mxu0
      %v929 = vadd.f32 %v291, %v928
      %v930 = vpop.f32.mrb[0].mxu0
      %931 = vmatprep.mubr.bf16.mxu0 0
      %932 = vmatmul.mubr.bf16.gmra.mrb[0].mxu0 %v522
      %v933 = vpop.f32.mrb[0].mxu0
      %v934 = vadd.f32 %v291, %v933
      %v935 = vpop.f32.mrb[0].mxu0
      %v936 = vpop.f32.mrb[0].mxu0
      %v937 = vadd.f32 %v291, %v936
      %v938 = vpop.f32.mrb[0].mxu0
      %939 = vmatprep.mubr.bf16.mxu0 0
      %940 = vmatmul.mubr.bf16.gmra.mrb[0].mxu0 %v523
      %v941 = vpop.f32.mrb[0].mxu0
      %v942 = vadd.f32 %v291, %v941
      %v943 = vpop.f32.mrb[0].mxu0
      %v944 = vpop.f32.mrb[0].mxu0
      %v945 = vadd.f32 %v291, %v944
      %v946 = vpop.f32.mrb[0].mxu0
      %947 = vmatprep.mubr.bf16.mxu0 0
      %948 = vmatmul.mubr.bf16.gmra.mrb[0].mxu0 %v524
      %v949 = vpop.f32.mrb[0].mxu0
      %v950 = vadd.f32 %v291, %v949
      %v951 = vpop.f32.mrb[0].mxu0
      %v952 = vpop.f32.mrb[0].mxu0
      %v953 = vadd.f32 %v291, %v952
      %v954 = vpop.f32.mrb[0].mxu0
      %955 = vmatprep.mubr.bf16.mxu0 0
      %956 = vmatmul.mubr.bf16.gmra.mrb[0].mxu0 %v525
      %v957 = vpop.f32.mrb[0].mxu0
      %v958 = vadd.f32 %v291, %v957
      %v959 = vpop.f32.mrb[0].mxu0
      %v960 = vpop.f32.mrb[0].mxu0
      %v961 = vadd.f32 %v291, %v960
      %v962 = vpop.f32.mrb[0].mxu0
      %963 = vmatprep.mubr.bf16.mxu0 0
      %964 = vmatmul.mubr.bf16.gmra.mrb[0].mxu0 %v526
      %v965 = vpop.f32.mrb[0].mxu0
      %v966 = vadd.f32 %v291, %v965
      %v967 = vpop.f32.mrb[0].mxu0
      %v968 = vpop.f32.mrb[0].mxu0
      %v969 = vadd.f32 %v291, %v968
      %v970 = vpop.f32.mrb[0].mxu0
      %971 = vmatprep.mubr.bf16.mxu0 0
      %972 = vmatmul.mubr.bf16.gmra.mrb[0].mxu0 %v527
      %v973 = vpop.f32.mrb[0].mxu0
      %v974 = vadd.f32 %v291, %v973
      %v975 = vpop.f32.mrb[0].mxu0
      %v976 = vpop.f32.mrb[0].mxu0
      %v977 = vadd.f32 %v291, %v976
      %v978 = vpop.f32.mrb[0].mxu0
      %979 = vmatprep.mubr.bf16.mxu0 0
      %980 = vmatmul.mubr.bf16.gmra.mrb[0].mxu0 %v528
      %v981 = vpop.f32.mrb[0].mxu0
      %v982 = vadd.f32 %v291, %v981
      %v983 = vpop.f32.mrb[0].mxu0
      %v984 = vpop.f32.mrb[0].mxu0
      %v985 = vadd.f32 %v291, %v984
      %v986 = vpop.f32.mrb[0].mxu0
      %987 = vmatprep.mubr.bf16.mxu0 0
      %988 = vmatmul.mubr.bf16.gmra.mrb[0].mxu0 %v529
      %v989 = vpop.f32.mrb[0].mxu0
      %v990 = vadd.f32 %v291, %v989
      %v991 = vpop.f32.mrb[0].mxu0
      %v992 = vpop.f32.mrb[0].mxu0
      %v993 = vadd.f32 %v291, %v992
      %v994 = vpop.f32.mrb[0].mxu0
      %995 = vmatprep.mubr.bf16.mxu0 0
      %996 = vmatmul.mubr.bf16.gmra.mrb[0].mxu0 %v530
      %v997 = vpop.f32.mrb[0].mxu0
      %v998 = vadd.f32 %v291, %v997
      %v999 = vpop.f32.mrb[0].mxu0
      %v1000 = vpop.f32.mrb[0].mxu0
      %v1001 = vadd.f32 %v291, %v1000
      %v1002 = vpop.f32.mrb[0].mxu0
      %1003 = vmatprep.mubr.bf16.mxu0 0
      %1004 = vmatmul.mubr.bf16.gmra.mrb[0].mxu0 %v531
      %v1005 = vpop.f32.mrb[0].mxu0
      %v1006 = vadd.f32 %v291, %v1005
      %v1007 = vpop.f32.mrb[0].mxu0
      %v1008 = vpop.f32.mrb[0].mxu0
      %v1009 = vadd.f32 %v291, %v1008
      %v1010 = vpop.f32.mrb[0].mxu0
      %1011 = vmatprep.mubr.bf16.mxu0 0
      %1012 = vmatmul.mubr.bf16.gmra.mrb[0].mxu0 %v532
      %v1013 = vpop.f32.mrb[0].mxu0
      %v1014 = vadd.f32 %v291, %v1013
      %v1015 = vpop.f32.mrb[0].mxu0
      %v1016 = vpop.f32.mrb[0].mxu0
      %v1017 = vadd.f32 %v291, %v1016
      %v1018 = vpop.f32.mrb[0].mxu0
      %1019 = vmatprep.mubr.bf16.mxu0 0
      %1020 = vmatmul.mubr.bf16.gmra.mrb[0].mxu0 %v533
      %v1021 = vpop.f32.mrb[0].mxu0
      %v1022 = vadd.f32 %v291, %v1021
      %v1023 = vpop.f32.mrb[0].mxu0
      %v1024 = vpop.f32.mrb[0].mxu0
      %v1025 = vadd.f32 %v291, %v1024
      %v1026 = vpop.f32.mrb[0].mxu0
      %1027 = vmatprep.mubr.bf16.mxu0 0
      %1028 = vmatmul.mubr.bf16.gmra.mrb[0].mxu0 %v534
      %v1029 = vpop.f32.mrb[0].mxu0
      %v1030 = vadd.f32 %v291, %v1029
      %v1031 = vpop.f32.mrb[0].mxu0
      %v1032 = vpop.f32.mrb[0].mxu0
      %v1033 = vadd.f32 %v291, %v1032
      %v1034 = vpop.f32.mrb[0].mxu0
      %1035 = vmatprep.mubr.bf16.mxu0 0
      %1036 = vmatmul.mubr.bf16.gmra.mrb[0].mxu0 %v535
      %v1037 = vpop.f32.mrb[0].mxu0
      %v1038 = vadd.f32 %v291, %v1037
      %v1039 = vpop.f32.mrb[0].mxu0
      %v1040 = vpop.f32.mrb[0].mxu0
      %v1041 = vadd.f32 %v291, %v1040
      %v1042 = vpop.f32.mrb[0].mxu0
      %1043 = vmatprep.mubr.bf16.mxu0 0
      %1044 = vmatmul.mubr.bf16.gmra.mrb[0].mxu0 %v536
      %v1045 = vpop.f32.mrb[0].mxu0
      %v1046 = vadd.f32 %v291, %v1045
      %v1047 = vpop.f32.mrb[0].mxu0
      %v1048 = vpop.f32.mrb[0].mxu0
      %v1049 = vadd.f32 %v291, %v1048
      %v1050 = vpop.f32.mrb[0].mxu0
      %1051 = vmatprep.mubr.bf16.mxu0 0
      %1052 = vmatmul.mubr.bf16.gmra.mrb[0].mxu0 %v537
      %v1053 = vpop.f32.mrb[0].mxu0
      %v1054 = vadd.f32 %v291, %v1053
      %v1055 = vpop.f32.mrb[0].mxu0
      %v1056 = vpop.f32.mrb[0].mxu0
      %v1057 = vadd.f32 %v291, %v1056
      %v1058 = vpop.f32.mrb[0].mxu0
      %1059 = vdwg.mxu0
      %v1060 = vmax.f32 %v670, 0.0
      %v1061 = vmax.f32 %v673, 0.0
      %v1062 = vmax.f32 %v678, 0.0
      %v1063 = vmax.f32 %v681, 0.0
      %v1064 = vmax.f32 %v686, 0.0
      %v1065 = vmax.f32 %v689, 0.0
      %v1066 = vmax.f32 %v694, 0.0
      %v1067 = vmax.f32 %v697, 0.0
      %v1068 = vmax.f32 %v702, 0.0
      %v1069 = vmax.f32 %v705, 0.0
      %v1070 = vmax.f32 %v710, 0.0
      %v1071 = vmax.f32 %v713, 0.0
      %v1072 = vmax.f32 %v718, 0.0
      %v1073 = vmax.f32 %v721, 0.0
      %v1074 = vmax.f32 %v726, 0.0
      %v1075 = vmax.f32 %v729, 0.0
      %v1076 = vmax.f32 %v734, 0.0
      %v1077 = vmax.f32 %v737, 0.0
      %v1078 = vmax.f32 %v742, 0.0
      %v1079 = vmax.f32 %v745, 0.0
      %v1080 = vmax.f32 %v750, 0.0
      %v1081 = vmax.f32 %v753, 0.0
      %v1082 = vmax.f32 %v758, 0.0
      %v1083 = vmax.f32 %v761, 0.0
      %v1084 = vmax.f32 %v766, 0.0
      %v1085 = vmax.f32 %v769, 0.0
      %v1086 = vmax.f32 %v774, 0.0
      %v1087 = vmax.f32 %v777, 0.0
      %v1088 = vmax.f32 %v782, 0.0
      %v1089 = vmax.f32 %v785, 0.0
      %v1090 = vmax.f32 %v790, 0.0
      %v1091 = vmax.f32 %v793, 0.0
      %v1092 = vmax.f32 %v798, 0.0
      %v1093 = vmax.f32 %v801, 0.0
      %v1094 = vmax.f32 %v806, 0.0
      %v1095 = vmax.f32 %v809, 0.0
      %v1096 = vmax.f32 %v814, 0.0
      %v1097 = vmax.f32 %v817, 0.0
      %v1098 = vmax.f32 %v822, 0.0
      %v1099 = vmax.f32 %v825, 0.0
      %v1100 = vmax.f32 %v830, 0.0
      %v1101 = vmax.f32 %v833, 0.0
      %v1102 = vmax.f32 %v838, 0.0
      %v1103 = vmax.f32 %v841, 0.0
      %v1104 = vmax.f32 %v846, 0.0
      %v1105 = vmax.f32 %v849, 0.0
      %v1106 = vmax.f32 %v854, 0.0
      %v1107 = vmax.f32 %v857, 0.0
      %v1108 = vmax.f32 %v862, 0.0
      %v1109 = vmax.f32 %v865, 0.0
      %v1110 = vmax.f32 %v870, 0.0
      %v1111 = vmax.f32 %v873, 0.0
      %v1112 = vmax.f32 %v878, 0.0
      %v1113 = vmax.f32 %v881, 0.0
      %v1114 = vmax.f32 %v886, 0.0
      %v1115 = vmax.f32 %v889, 0.0
      %v1116 = vmax.f32 %v894, 0.0
      %v1117 = vmax.f32 %v897, 0.0
      %v1118 = vmax.f32 %v902, 0.0
      %v1119 = vmax.f32 %v905, 0.0
      %v1120 = vmax.f32 %v910, 0.0
      %v1121 = vmax.f32 %v913, 0.0
      %v1122 = vmax.f32 %v918, 0.0
      %v1123 = vmax.f32 %v921, 0.0
      %v1124 = vmax.f32 %v926, 0.0
      %v1125 = vmax.f32 %v929, 0.0
      %v1126 = vmax.f32 %v934, 0.0
      %v1127 = vmax.f32 %v937, 0.0
      %v1128 = vmax.f32 %v942, 0.0
      %v1129 = vmax.f32 %v945, 0.0
      %v1130 = vmax.f32 %v950, 0.0
      %v1131 = vmax.f32 %v953, 0.0
      %v1132 = vmax.f32 %v958, 0.0
      %v1133 = vmax.f32 %v961, 0.0
      %v1134 = vmax.f32 %v966, 0.0
      %v1135 = vmax.f32 %v969, 0.0
      %v1136 = vmax.f32 %v974, 0.0
      %v1137 = vmax.f32 %v977, 0.0
      %v1138 = vmax.f32 %v982, 0.0
      %v1139 = vmax.f32 %v985, 0.0
      %v1140 = vmax.f32 %v990, 0.0
      %v1141 = vmax.f32 %v993, 0.0
      %v1142 = vmax.f32 %v998, 0.0
      %v1143 = vmax.f32 %v1001, 0.0
      %v1144 = vmax.f32 %v1006, 0.0
      %v1145 = vmax.f32 %v1009, 0.0
      %v1146 = vmax.f32 %v1014, 0.0
      %v1147 = vmax.f32 %v1017, 0.0
      %v1148 = vmax.f32 %v1022, 0.0
      %v1149 = vmax.f32 %v1025, 0.0
      %v1150 = vmax.f32 %v1030, 0.0
      %v1151 = vmax.f32 %v1033, 0.0
      %v1152 = vmax.f32 %v1038, 0.0
      %v1153 = vmax.f32 %v1041, 0.0
      %v1154 = vmax.f32 %v1046, 0.0
      %v1155 = vmax.f32 %v1049, 0.0
      %v1156 = vmax.f32 %v1054, 0.0
      %v1157 = vmax.f32 %v1057, 0.0
      %vm1183 = vcmask 1043456
      %v1184 = vrot.slane %v1084, 4
      %v1185 = vrot.slane %v1085, 4
      %v1186 = vsel %vm1183, %v1184, %v1185
      %v1187 = vrot.slane %v1086, 4
      %v1188 = vsel %vm1183, %v1185, %v1187
      %v1189 = vrot.slane %v1087, 4
      %v1190 = vsel %vm1183, %v1187, %v1189
      %v1191 = vrot.slane %v1088, 4
      %v1192 = vsel %vm1183, %v1189, %v1191
      %v1193 = vrot.slane %v1089, 4
      %v1194 = vsel %vm1183, %v1191, %v1193
      %v1195 = vrot.slane %v1090, 4
      %v1196 = vsel %vm1183, %v1193, %v1195
      %v1197 = vrot.slane %v1091, 4
      %v1198 = vsel %vm1183, %v1195, %v1197
      %v1199 = vrot.slane %v1092, 4
      %v1200 = vsel %vm1183, %v1197, %v1199
      %v1201 = vrot.slane %v1093, 4
      %v1202 = vsel %vm1183, %v1199, %v1201
      %v1203 = vrot.slane %v1094, 4
      %v1204 = vsel %vm1183, %v1201, %v1203
      %v1205 = vrot.slane %v1095, 4
      %v1206 = vsel %vm1183, %v1203, %v1205
      %v1207 = vrot.slane %v1096, 4
      %v1208 = vsel %vm1183, %v1205, %v1207
      %v1209 = vrot.slane %v1097, 4
      %v1210 = vsel %vm1183, %v1207, %v1209
      %v1211 = vrot.slane %v1098, 4
      %v1212 = vsel %vm1183, %v1209, %v1211
      %v1213 = vrot.slane %v1099, 4
      %v1214 = vsel %vm1183, %v1211, %v1213
      %v1215 = vrot.slane %v1100, 4
      %v1216 = vsel %vm1183, %v1213, %v1215
      %v1217 = vrot.slane %v1101, 4
      %v1218 = vsel %vm1183, %v1215, %v1217
      %v1219 = vrot.slane %v1102, 4
      %v1220 = vsel %vm1183, %v1217, %v1219
      %v1221 = vrot.slane %v1103, 4
      %v1222 = vsel %vm1183, %v1219, %v1221
      %v1223 = vrot.slane %v1104, 4
      %v1224 = vsel %vm1183, %v1221, %v1223
      %v1225 = vrot.slane %v1105, 4
      %v1226 = vsel %vm1183, %v1223, %v1225
      %v1227 = vrot.slane %v1106, 4
      %v1228 = vsel %vm1183, %v1225, %v1227
      %v1229 = vrot.slane %v1107, 4
      %v1230 = vsel %vm1183, %v1227, %v1229
      %v1231 = vrot.slane %v1108, 4
      %v1232 = vsel %vm1183, %v1229, %v1231
      %v1258 = vmax.f32 %v1060, %v1186
      %v1259 = vmax.f32 %v1061, %v1188
      %v1260 = vmax.f32 %v1062, %v1190
      %v1261 = vmax.f32 %v1063, %v1192
      %v1262 = vmax.f32 %v1064, %v1194
      %v1263 = vmax.f32 %v1065, %v1196
      %v1264 = vmax.f32 %v1066, %v1198
      %v1265 = vmax.f32 %v1067, %v1200
      %v1266 = vmax.f32 %v1068, %v1202
      %v1267 = vmax.f32 %v1069, %v1204
      %v1268 = vmax.f32 %v1070, %v1206
      %v1269 = vmax.f32 %v1071, %v1208
      %v1270 = vmax.f32 %v1072, %v1210
      %v1271 = vmax.f32 %v1073, %v1212
      %v1272 = vmax.f32 %v1074, %v1214
      %v1273 = vmax.f32 %v1075, %v1216
      %v1274 = vmax.f32 %v1076, %v1218
      %v1275 = vmax.f32 %v1077, %v1220
      %v1276 = vmax.f32 %v1078, %v1222
      %v1277 = vmax.f32 %v1079, %v1224
      %v1278 = vmax.f32 %v1080, %v1226
      %v1279 = vmax.f32 %v1081, %v1228
      %v1280 = vmax.f32 %v1082, %v1230
      %v1281 = vmax.f32 %v1083, %v1232
      %v1282 = vmax.f32 %v1084, %v1231
      %v1308 = vrot.slane %v1133, 4
      %v1309 = vrot.slane %v1134, 4
      %v1310 = vsel %vm1183, %v1308, %v1309
      %v1311 = vrot.slane %v1135, 4
      %v1312 = vsel %vm1183, %v1309, %v1311
      %v1313 = vrot.slane %v1136, 4
      %v1314 = vsel %vm1183, %v1311, %v1313
      %v1315 = vrot.slane %v1137, 4
      %v1316 = vsel %vm1183, %v1313, %v1315
      %v1317 = vrot.slane %v1138, 4
      %v1318 = vsel %vm1183, %v1315, %v1317
      %v1319 = vrot.slane %v1139, 4
      %v1320 = vsel %vm1183, %v1317, %v1319
      %v1321 = vrot.slane %v1140, 4
      %v1322 = vsel %vm1183, %v1319, %v1321
      %v1323 = vrot.slane %v1141, 4
      %v1324 = vsel %vm1183, %v1321, %v1323
      %v1325 = vrot.slane %v1142, 4
      %v1326 = vsel %vm1183, %v1323, %v1325
      %v1327 = vrot.slane %v1143, 4
      %v1328 = vsel %vm1183, %v1325, %v1327
      %v1329 = vrot.slane %v1144, 4
      %v1330 = vsel %vm1183, %v1327, %v1329
      %v1331 = vrot.slane %v1145, 4
      %v1332 = vsel %vm1183, %v1329, %v1331
      %v1333 = vrot.slane %v1146, 4
      %v1334 = vsel %vm1183, %v1331, %v1333
      %v1335 = vrot.slane %v1147, 4
      %v1336 = vsel %vm1183, %v1333, %v1335
      %v1337 = vrot.slane %v1148, 4
      %v1338 = vsel %vm1183, %v1335, %v1337
      %v1339 = vrot.slane %v1149, 4
      %v1340 = vsel %vm1183, %v1337, %v1339
      %v1341 = vrot.slane %v1150, 4
      %v1342 = vsel %vm1183, %v1339, %v1341
      %v1343 = vrot.slane %v1151, 4
      %v1344 = vsel %vm1183, %v1341, %v1343
      %v1345 = vrot.slane %v1152, 4
      %v1346 = vsel %vm1183, %v1343, %v1345
      %v1347 = vrot.slane %v1153, 4
      %v1348 = vsel %vm1183, %v1345, %v1347
      %v1349 = vrot.slane %v1154, 4
      %v1350 = vsel %vm1183, %v1347, %v1349
      %v1351 = vrot.slane %v1155, 4
      %v1352 = vsel %vm1183, %v1349, %v1351
      %v1353 = vrot.slane %v1156, 4
      %v1354 = vsel %vm1183, %v1351, %v1353
      %v1355 = vrot.slane %v1157, 4
      %v1356 = vsel %vm1183, %v1353, %v1355
      %v1382 = vmax.f32 %v1109, %v1310
      %v1383 = vmax.f32 %v1110, %v1312
      %v1384 = vmax.f32 %v1111, %v1314
      %v1385 = vmax.f32 %v1112, %v1316
      %v1386 = vmax.f32 %v1113, %v1318
      %v1387 = vmax.f32 %v1114, %v1320
      %v1388 = vmax.f32 %v1115, %v1322
      %v1389 = vmax.f32 %v1116, %v1324
      %v1390 = vmax.f32 %v1117, %v1326
      %v1391 = vmax.f32 %v1118, %v1328
      %v1392 = vmax.f32 %v1119, %v1330
      %v1393 = vmax.f32 %v1120, %v1332
      %v1394 = vmax.f32 %v1121, %v1334
      %v1395 = vmax.f32 %v1122, %v1336
      %v1396 = vmax.f32 %v1123, %v1338
      %v1397 = vmax.f32 %v1124, %v1340
      %v1398 = vmax.f32 %v1125, %v1342
      %v1399 = vmax.f32 %v1126, %v1344
      %v1400 = vmax.f32 %v1127, %v1346
      %v1401 = vmax.f32 %v1128, %v1348
      %v1402 = vmax.f32 %v1129, %v1350
      %v1403 = vmax.f32 %v1130, %v1352
      %v1404 = vmax.f32 %v1131, %v1354
      %v1405 = vmax.f32 %v1132, %v1356
      %v1406 = vmax.f32 %v1133, %v1355
      %v1407 = vmax.f32 %v1258, %v1382
      %v1408 = vmax.f32 %v1259, %v1383
      %v1409 = vmax.f32 %v1260, %v1384
      %v1410 = vmax.f32 %v1261, %v1385
      %v1411 = vmax.f32 %v1262, %v1386
      %v1412 = vmax.f32 %v1263, %v1387
      %v1413 = vmax.f32 %v1264, %v1388
      %v1414 = vmax.f32 %v1265, %v1389
      %v1415 = vmax.f32 %v1266, %v1390
      %v1416 = vmax.f32 %v1267, %v1391
      %v1417 = vmax.f32 %v1268, %v1392
      %v1418 = vmax.f32 %v1269, %v1393
      %v1419 = vmax.f32 %v1270, %v1394
      %v1420 = vmax.f32 %v1271, %v1395
      %v1421 = vmax.f32 %v1272, %v1396
      %v1422 = vmax.f32 %v1273, %v1397
      %v1423 = vmax.f32 %v1274, %v1398
      %v1424 = vmax.f32 %v1275, %v1399
      %v1425 = vmax.f32 %v1276, %v1400
      %v1426 = vmax.f32 %v1277, %v1401
      %v1427 = vmax.f32 %v1278, %v1402
      %v1428 = vmax.f32 %v1279, %v1403
      %v1429 = vmax.f32 %v1280, %v1404
      %v1430 = vmax.f32 %v1281, %v1405
      %v1431 = vmax.f32 %v1282, %v1406
      %v1432 = vpack.c.bf16 %v1408, %v1407
      %v1433 = vpack.c.bf16 %v1410, %v1409
      %v1434 = vpack.c.bf16 %v1412, %v1411
      %v1435 = vpack.c.bf16 %v1414, %v1413
      %v1436 = vpack.c.bf16 %v1416, %v1415
      %v1437 = vpack.c.bf16 %v1418, %v1417
      %v1438 = vpack.c.bf16 %v1420, %v1419
      %v1439 = vpack.c.bf16 %v1422, %v1421
      %v1440 = vpack.c.bf16 %v1424, %v1423
      %v1441 = vpack.c.bf16 %v1426, %v1425
      %v1442 = vpack.c.bf16 %v1428, %v1427
      %v1443 = vpack.c.bf16 %v1430, %v1429
      %v1444 = vpack.c.bf16 %v1431, %v1431
      %v1458 = vunpack.c.l.b16 %v1432
      %v1459 = vunpack.c.h.b16 %v1432
      %v1460 = vunpack.c.l.b16 %v1433
      %v1461 = vunpack.c.h.b16 %v1433
      %v1462 = vunpack.c.l.b16 %v1434
      %v1463 = vunpack.c.h.b16 %v1434
      %v1464 = vunpack.c.l.b16 %v1435
      %v1465 = vunpack.c.h.b16 %v1435
      %v1466 = vunpack.c.l.b16 %v1436
      %v1467 = vunpack.c.h.b16 %v1436
      %v1468 = vunpack.c.l.b16 %v1437
      %v1469 = vunpack.c.h.b16 %v1437
      %v1470 = vunpack.c.l.b16 %v1438
      %v1471 = vunpack.c.h.b16 %v1438
      %v1472 = vunpack.c.l.b16 %v1439
      %v1473 = vunpack.c.h.b16 %v1439
      %v1474 = vunpack.c.l.b16 %v1440
      %v1475 = vunpack.c.h.b16 %v1440
      %v1476 = vunpack.c.l.b16 %v1441
      %v1477 = vunpack.c.h.b16 %v1441
      %v1478 = vunpack.c.l.b16 %v1442
      %v1479 = vunpack.c.h.b16 %v1442
      %v1480 = vunpack.c.l.b16 %v1443
      %v1481 = vunpack.c.h.b16 %v1443
      %v1482 = vunpack.c.l.b16 %v1444
      %v1483 = vpack.c.b16 %v1458, %v1458
      %v1484 = vpack.c.b16 %v1459, %v1459
      %v1485 = vpack.c.b16 %v1460, %v1460
      %v1486 = vpack.c.b16 %v1461, %v1461
      %v1487 = vpack.c.b16 %v1462, %v1462
      %v1488 = vpack.c.b16 %v1463, %v1463
      %v1489 = vpack.c.b16 %v1464, %v1464
      %v1490 = vpack.c.b16 %v1465, %v1465
      %v1491 = vpack.c.b16 %v1466, %v1466
      %v1492 = vpack.c.b16 %v1467, %v1467
      %v1493 = vpack.c.b16 %v1468, %v1468
      %v1494 = vpack.c.b16 %v1469, %v1469
      %v1495 = vpack.c.b16 %v1470, %v1470
      %v1496 = vpack.c.b16 %v1471, %v1471
      %v1497 = vpack.c.b16 %v1472, %v1472
      %v1498 = vpack.c.b16 %v1473, %v1473
      %v1499 = vpack.c.b16 %v1474, %v1474
      %v1500 = vpack.c.b16 %v1475, %v1475
      %v1501 = vpack.c.b16 %v1476, %v1476
      %v1502 = vpack.c.b16 %v1477, %v1477
      %v1503 = vpack.c.b16 %v1478, %v1478
      %v1504 = vpack.c.b16 %v1479, %v1479
      %v1505 = vpack.c.b16 %v1480, %v1480
      %v1506 = vpack.c.b16 %v1481, %v1481
      %v1507 = vpack.c.b16 %v1482, %v1482
      %1533 = vst [vmem:[%s170] sm:$0xf] %v1483
      %1534 = vst [vmem:[%s170 + $0x4] sm:$0xf] %v1484
      %1535 = vst [vmem:[%s170 + $0x8] sm:$0xf] %v1485
      %1536 = vst [vmem:[%s170 + $0xc] sm:$0xf] %v1486
      %1537 = vst [vmem:[%s170 + $0x10] sm:$0xf] %v1487
      %1538 = vst [vmem:[%s170 + $0x14] sm:$0xf] %v1488
      %1539 = vst [vmem:[%s170 + $0x18] sm:$0xf] %v1489
      %1540 = vst [vmem:[%s170 + $0x1c] sm:$0xf] %v1490
      %1541 = vst [vmem:[%s170 + $0x20] sm:$0xf] %v1491
      %1542 = vst [vmem:[%s170 + $0x24] sm:$0xf] %v1492
      %1543 = vst [vmem:[%s170 + $0x28] sm:$0xf] %v1493
      %1544 = vst [vmem:[%s170 + $0x2c] sm:$0xf] %v1494
      %1545 = vst [vmem:[%s170 + $0x30] sm:$0xf] %v1495
      %1546 = vst [vmem:[%s170 + $0x34] sm:$0xf] %v1496
      %1547 = vst [vmem:[%s170 + $0x38] sm:$0xf] %v1497
      %1548 = vst [vmem:[%s170 + $0x3c] sm:$0xf] %v1498
      %1549 = vst [vmem:[%s170 + $0x40] sm:$0xf] %v1499
      %1550 = vst [vmem:[%s170 + $0x44] sm:$0xf] %v1500
      %1551 = vst [vmem:[%s170 + $0x48] sm:$0xf] %v1501
      %1552 = vst [vmem:[%s170 + $0x4c] sm:$0xf] %v1502
      %1553 = vst [vmem:[%s170 + $0x50] sm:$0xf] %v1503
      %1554 = vst [vmem:[%s170 + $0x54] sm:$0xf] %v1504
      %1555 = vst [vmem:[%s170 + $0x58] sm:$0xf] %v1505
      %1556 = vst [vmem:[%s170 + $0x5c] sm:$0xf] %v1506
      %1557 = vst [vmem:[%s170 + $0x60] sm:$0x3] %v1507
      %p1558 = scmp.lt.s32.totalorder %s14, 1
      %s1559 = scalar_select %p1558, %s14, 1
      %s1560 = smul.addr %s1559, 25
      %s1561 = smul.addr %s1560, 4
      %s1562 = scalar_lea.vmem %s3, %s1561
      // Predicated region
      $region33: #{model2_forward.2} parent=31 // pred_check
        %p1563 = pneg %p100
      $region34: #{model2_forward.2} parent=31 // pred_check_branch
        %1565 = sbr.rel (%p1563) target = $region36
      $region35: #{model2_forward.2} parent=31 // pred_region
        _
      $region36: #{model2_forward.2} parent=31 // pred_fallthru
        _
    $region32: #{model2_forward.2} parent=5 // pred_fallthru
      _
    %p1566 = scmp.le.s32.totalorder 2, %s9
    // Predicated region
    $region37: #{model2_forward.2} parent=5 // pred_check
      %p1567 = pneg %p1566
    $region38: #{model2_forward.2} parent=5 // pred_check_branch
      %1569 = sbr.rel (%p1567) target = $region40
    $region39: #{model2_forward.2} parent=5 // pred_region
      %s1570 = ssub.s32 %s9, 2
      // Predicated region
      $region41: #{model2_forward.2} parent=39 // pred_check
        %p1571 = pneg %p106
      $region42: #{model2_forward.2} parent=39 // pred_check_branch
        %1573 = sbr.rel (%p1571) target = $region44
      $region43: #{model2_forward.2} parent=39 // pred_region
        %p1574 = scmp.lt.s32.totalorder %s15, 1
        %s1575 = scalar_select %p1574, %s15, 1
        %s1576 = smul.addr %s1575, 25
        %s1577 = smul.addr %s1576, 4
        %s1578 = scalar_lea.vmem %s3, %s1577
      $region44: #{model2_forward.2} parent=39 // pred_fallthru
        _
    $region40: #{model2_forward.2} parent=5 // pred_fallthru
      _
  $region6: #{model2_forward.2} parent=0 // loop_footer
    %s13 = sadd.s32 1, %s9
  $region7: #{model2_forward.2} parent=0 // loop_footer_branch
    %8 = sbr.rel target = $region3
  $region8: #{model2_forward.2} parent=0 // loop_exit
    _

// kernel: model2_forward.3
$region0: #{model2_forward.3}
  #allocation0 [shape = 'u32[]', space=smem, size = 0x4, offset = 0x4, fixed_abs, tag = 'smem constant byte address 0x4 - core index']
  #allocation1 [shape = 'u32[144,128]{1,0:T(1,128)}', space=vmem, size = 0x12000, scoped, tag = 'internal scratch']
  %s0 = inlined_call_operand.vmem [shape: bf16[2,196,3200], index: 0, kind: input, shape index: {}]
  %s1 = inlined_call_operand.vmem [shape: bf16[3200,128], index: 1, kind: input, shape index: {}]
  %s2 = inlined_call_operand.vmem [shape: f32[1,128], index: 2, kind: input, shape index: {}]
  %s3 = inlined_call_operand.vmem [shape: f32[32,49,128], index: 3, kind: input, shape index: {}]
  %s4 = inlined_call_operand.vmem [shape: f32[32,1], index: 4, kind: input, shape index: {}]
  %s5 = inlined_call_operand.vmem [shape: f32[32,10], index: 5, kind: input, shape index: {}]
  %s6 = inlined_call_operand.vmem [shape: f32[1,10], index: 6, kind: input, shape index: {}]
  %s7 = inlined_call_operand.hbm [shape: f32[2,1,10], index: 7, kind: output, shape index: {}]
  %s8 = sld [smem:[#allocation0]]
  $region61: #{model2_forward.3} parent=0
    _
  %s10 = ssub.s32 1, %s8
  %s11 = scalar_select 0, %s10, %s8
  $region1: #{model2_forward.3} parent=0
    #allocation2 [shape = 'u8[1024]{0}', space=vmem, size = 0x400, scoped, tag = 'output window, operand 0']
    #allocation3 [shape = 's32[2]{0}', space=sflag, size = 0x8, scoped, tag = 'scoped memory for model2_forward.3']
    %12 = vsyncpa [#allocation3], 0
    %s13 = scalar_lea.sflag [#allocation3], 1
    %14 = vsyncpa %s13, 0
    loop: start=0, step=1, limit=4
    $region2: #{model2_forward.3} parent=1 // loop_pre_header
      _
    $region3: #{model2_forward.3} parent=1 // loop_header
      %s16 = sphi 0, %s20
      %p17 = scmp.ge.s32.totalorder %s16, 4
      %s26 = sphi 0, %s28
      %s29 = sphi 0, %s26
      %s30 = sphi 0, %s29
      %s46 = sphi 0, %s30
      %s50 = sphi 0, %s50
      %s52 = sphi 0, %s50
      %s53 = sphi 0, %s52
      %s67 = sphi 0, %s53
      %s71 = sphi 0, %s71
      %s73 = sphi 0, %s71
      %s74 = sphi 0, %s73
      %s88 = sphi 0, %s74
      %s92 = sphi 0, %s92
      %s94 = sphi 0, %s92
      %s95 = sphi 0, %s94
      %s109 = sphi 0, %s95
      %s113 = sphi 0, %s113
      %s115 = sphi 0, %s113
      %s116 = sphi 0, %s115
      %s130 = sphi 0, %s116
      %s134 = sphi 0, %s134
      %s136 = sphi 0, %s134
      %s137 = sphi 0, %s136
      %s151 = sphi 0, %s137
      %s155 = sphi 0, %s155
      %s157 = sphi 0, %s155
      %s158 = sphi 0, %s157
      %s172 = sphi 0, %s158
      %s178 = sphi 0, %s180
      %s181 = sphi 0, %s178
      %s182 = sphi 0, %s181
      %s198 = sphi 0, %s182
    $region4: #{model2_forward.3} parent=1 // loop_header_branch
      %19 = sbr.rel (%p17) target = $region8
    $region5: #{model2_forward.3} parent=1 // loop_body
      %s21 = ssub.s32 %s16, 1
      %s22 = ssub.s32 %s16, 2
      %s23 = sadd.s32 %s16, 1
      %s24 = ssub.s32 %s16, %s23
      %p25 = scmp.eq.s32.totalorder %s24, 0
      %s27 = sadd.s32 %s26, 1
      %s28 = scalar_select %p25, %s26, %s27
      %p31 = pneg %p25
      %p32 = scmp.eq.s32.totalorder %s16, 1
      %p33 = por %p31, %p32
      %p34 = scmp.ne.s32.totalorder %s26, %s29
      %p35 = scmp.eq.s32.totalorder %s16, 0
      %p36 = por %p34, %p35
      %p37 = scmp.ne.s32.totalorder %s26, %s29
      %p38 = scmp.eq.s32.totalorder %s21, 1
      %p39 = por %p37, %p38
      %p40 = scmp.ne.s32.totalorder %s29, %s30
      %p41 = scmp.eq.s32.totalorder %s21, 0
      %p42 = por %p40, %p41
      %p43 = scmp.ne.s32.totalorder %s29, %s30
      %p44 = scmp.eq.s32.totalorder %s22, 1
      %p45 = por %p43, %p44
      %p47 = scmp.ne.s32.totalorder %s30, %s46
      %p48 = scmp.eq.s32.totalorder %s22, 0
      %p49 = por %p47, %p48
      %s51 = sadd.s32 %s50, 1
      %p54 = scmp.eq.s32.totalorder %s16, 1
      %p55 = scmp.ne.s32.totalorder %s50, %s52
      %p56 = scmp.eq.s32.totalorder %s16, 0
      %p57 = por %p55, %p56
      %p58 = scmp.ne.s32.totalorder %s50, %s52
      %p59 = scmp.eq.s32.totalorder %s21, 1
      %p60 = por %p58, %p59
      %p61 = scmp.ne.s32.totalorder %s52, %s53
      %p62 = scmp.eq.s32.totalorder %s21, 0
      %p63 = por %p61, %p62
      %p64 = scmp.ne.s32.totalorder %s52, %s53
      %p65 = scmp.eq.s32.totalorder %s22, 1
      %p66 = por %p64, %p65
      %p68 = scmp.ne.s32.totalorder %s53, %s67
      %p69 = scmp.eq.s32.totalorder %s22, 0
      %p70 = por %p68, %p69
      %s72 = sadd.s32 %s71, 1
      %p75 = scmp.eq.s32.totalorder %s16, 1
      %p76 = scmp.ne.s32.totalorder %s71, %s73
      %p77 = scmp.eq.s32.totalorder %s16, 0
      %p78 = por %p76, %p77
      %p79 = scmp.ne.s32.totalorder %s71, %s73
      %p80 = scmp.eq.s32.totalorder %s21, 1
      %p81 = por %p79, %p80
      %p82 = scmp.ne.s32.totalorder %s73, %s74
      %p83 = scmp.eq.s32.totalorder %s21, 0
      %p84 = por %p82, %p83
      %p85 = scmp.ne.s32.totalorder %s73, %s74
      %p86 = scmp.eq.s32.totalorder %s22, 1
      %p87 = por %p85, %p86
      %p89 = scmp.ne.s32.totalorder %s74, %s88
      %p90 = scmp.eq.s32.totalorder %s22, 0
      %p91 = por %p89, %p90
      %s93 = sadd.s32 %s92, 1
      %p96 = scmp.eq.s32.totalorder %s16, 1
      %p97 = scmp.ne.s32.totalorder %s92, %s94
      %p98 = scmp.eq.s32.totalorder %s16, 0
      %p99 = por %p97, %p98
      %p100 = scmp.ne.s32.totalorder %s92, %s94
      %p101 = scmp.eq.s32.totalorder %s21, 1
      %p102 = por %p100, %p101
      %p103 = scmp.ne.s32.totalorder %s94, %s95
      %p104 = scmp.eq.s32.totalorder %s21, 0
      %p105 = por %p103, %p104
      %p106 = scmp.ne.s32.totalorder %s94, %s95
      %p107 = scmp.eq.s32.totalorder %s22, 1
      %p108 = por %p106, %p107
      %p110 = scmp.ne.s32.totalorder %s95, %s109
      %p111 = scmp.eq.s32.totalorder %s22, 0
      %p112 = por %p110, %p111
      %s114 = sadd.s32 %s113, 1
      %p117 = scmp.eq.s32.totalorder %s16, 1
      %p118 = scmp.ne.s32.totalorder %s113, %s115
      %p119 = scmp.eq.s32.totalorder %s16, 0
      %p120 = por %p118, %p119
      %p121 = scmp.ne.s32.totalorder %s113, %s115
      %p122 = scmp.eq.s32.totalorder %s21, 1
      %p123 = por %p121, %p122
      %p124 = scmp.ne.s32.totalorder %s115, %s116
      %p125 = scmp.eq.s32.totalorder %s21, 0
      %p126 = por %p124, %p125
      %p127 = scmp.ne.s32.totalorder %s115, %s116
      %p128 = scmp.eq.s32.totalorder %s22, 1
      %p129 = por %p127, %p128
      %p131 = scmp.ne.s32.totalorder %s116, %s130
      %p132 = scmp.eq.s32.totalorder %s22, 0
      %p133 = por %p131, %p132
      %s135 = sadd.s32 %s134, 1
      %p138 = scmp.eq.s32.totalorder %s16, 1
      %p139 = scmp.ne.s32.totalorder %s134, %s136
      %p140 = scmp.eq.s32.totalorder %s16, 0
      %p141 = por %p139, %p140
      %p142 = scmp.ne.s32.totalorder %s134, %s136
      %p143 = scmp.eq.s32.totalorder %s21, 1
      %p144 = por %p142, %p143
      %p145 = scmp.ne.s32.totalorder %s136, %s137
      %p146 = scmp.eq.s32.totalorder %s21, 0
      %p147 = por %p145, %p146
      %p148 = scmp.ne.s32.totalorder %s136, %s137
      %p149 = scmp.eq.s32.totalorder %s22, 1
      %p150 = por %p148, %p149
      %p152 = scmp.ne.s32.totalorder %s137, %s151
      %p153 = scmp.eq.s32.totalorder %s22, 0
      %p154 = por %p152, %p153
      %s156 = sadd.s32 %s155, 1
      %p159 = scmp.eq.s32.totalorder %s16, 1
      %p160 = scmp.ne.s32.totalorder %s155, %s157
      %p161 = scmp.eq.s32.totalorder %s16, 0
      %p162 = por %p160, %p161
      %p163 = scmp.ne.s32.totalorder %s155, %s157
      %p164 = scmp.eq.s32.totalorder %s21, 1
      %p165 = por %p163, %p164
      %p166 = scmp.ne.s32.totalorder %s157, %s158
      %p167 = scmp.eq.s32.totalorder %s21, 0
      %p168 = por %p166, %p167
      %p169 = scmp.ne.s32.totalorder %s157, %s158
      %p170 = scmp.eq.s32.totalorder %s22, 1
      %p171 = por %p169, %p170
      %p173 = scmp.ne.s32.totalorder %s158, %s172
      %p174 = scmp.eq.s32.totalorder %s22, 0
      %p175 = por %p173, %p174
      %s176 = ssub.s32 %s16, %s23
      %p177 = scmp.eq.s32.totalorder %s176, 0
      %s179 = sadd.s32 %s178, 1
      %s180 = scalar_select %p177, %s178, %s179
      %p183 = pneg %p177
      %p184 = scmp.eq.s32.totalorder %s16, 1
      %p185 = por %p183, %p184
      %p186 = scmp.ne.s32.totalorder %s178, %s181
      %p187 = scmp.eq.s32.totalorder %s16, 0
      %p188 = por %p186, %p187
      %p189 = scmp.ne.s32.totalorder %s178, %s181
      %p190 = scmp.eq.s32.totalorder %s21, 1
      %p191 = por %p189, %p190
      %p192 = scmp.ne.s32.totalorder %s181, %s182
      %p193 = scmp.eq.s32.totalorder %s21, 0
      %p194 = por %p192, %p193
      %p195 = scmp.ne.s32.totalorder %s181, %s182
      %p196 = scmp.eq.s32.totalorder %s22, 1
      %p197 = por %p195, %p196
      %p199 = scmp.ne.s32.totalorder %s182, %s198
      %p200 = scmp.eq.s32.totalorder %s22, 0
      %p201 = por %p199, %p200
      %p202 = scmp.le.s32.totalorder 1, %s16
      %p203 = scmp.lt.s32.totalorder %s16, 3
      %p204 = pnand %p202, %p203
      %p205 = pneg %p204
      // Predicated region
      $region9: #{model2_forward.3} parent=5 // pred_check
        _
      $region10: #{model2_forward.3} parent=5 // pred_check_branch
        %207 = sbr.rel (%p204) target = $region12
      $region11: #{model2_forward.3} parent=5 // pred_region
        %s208 = ssub.s32 %s16, 1
        // Predicated region
        $region13: #{model2_forward.3} parent=11 // pred_check
          %p209 = pneg %p63
        $region14: #{model2_forward.3} parent=11 // pred_check_branch
          %211 = sbr.rel (%p209) target = $region16
        $region15: #{model2_forward.3} parent=11 // pred_region
          _
        $region16: #{model2_forward.3} parent=11 // pred_fallthru
          _
        // Predicated region
        $region17: #{model2_forward.3} parent=11 // pred_check
          %p212 = pneg %p84
        $region18: #{model2_forward.3} parent=11 // pred_check_branch
          %214 = sbr.rel (%p212) target = $region20
        $region19: #{model2_forward.3} parent=11 // pred_region
          _
        $region20: #{model2_forward.3} parent=11 // pred_fallthru
          _
        // Predicated region
        $region21: #{model2_forward.3} parent=11 // pred_check
          %p215 = pneg %p105
        $region22: #{model2_forward.3} parent=11 // pred_check_branch
          %217 = sbr.rel (%p215) target = $region24
        $region23: #{model2_forward.3} parent=11 // pred_region
          _
        $region24: #{model2_forward.3} parent=11 // pred_fallthru
          _
        // Predicated region
        $region25: #{model2_forward.3} parent=11 // pred_check
          %p218 = pneg %p126
        $region26: #{model2_forward.3} parent=11 // pred_check_branch
          %220 = sbr.rel (%p218) target = $region28
        $region27: #{model2_forward.3} parent=11 // pred_region
          _
        $region28: #{model2_forward.3} parent=11 // pred_fallthru
          _
        // Predicated region
        $region29: #{model2_forward.3} parent=11 // pred_check
          %p221 = pneg %p147
        $region30: #{model2_forward.3} parent=11 // pred_check_branch
          %223 = sbr.rel (%p221) target = $region32
        $region31: #{model2_forward.3} parent=11 // pred_region
          _
        $region32: #{model2_forward.3} parent=11 // pred_fallthru
          _
        // Predicated region
        $region33: #{model2_forward.3} parent=11 // pred_check
          %p224 = pneg %p168
        $region34: #{model2_forward.3} parent=11 // pred_check_branch
          %226 = sbr.rel (%p224) target = $region36
        $region35: #{model2_forward.3} parent=11 // pred_region
          _
        $region36: #{model2_forward.3} parent=11 // pred_fallthru
          _
      $region12: #{model2_forward.3} parent=5 // pred_fallthru
        _
      %p227 = scmp.lt.s32.totalorder %s16, 2
      // Predicated region
      $region37: #{model2_forward.3} parent=5 // pred_check
        %p228 = pneg %p227
      $region38: #{model2_forward.3} parent=5 // pred_check_branch
        %230 = sbr.rel (%p228) target = $region40
      $region39: #{model2_forward.3} parent=5 // pred_region
        // Predicated region
        $region41: #{model2_forward.3} parent=39 // pred_check
          %p231 = pneg %p36
        $region42: #{model2_forward.3} parent=39 // pred_check_branch
          %233 = sbr.rel (%p231) target = $region44
        $region43: #{model2_forward.3} parent=39 // pred_region
          %p234 = scmp.lt.s32.totalorder %s16, 1
          %s235 = scalar_select %p234, %s16, 1
          %s236 = smul.addr %s235, 625
          %s237 = smul.addr %s236, 4
          %s238 = scalar_lea.vmem %s0, %s237
        $region44: #{model2_forward.3} parent=39 // pred_fallthru
          _
      $region40: #{model2_forward.3} parent=5 // pred_fallthru
        _
      %p239 = scmp.le.s32.totalorder 1, %s16
      %p240 = scmp.lt.s32.totalorder %s16, 3
      %p241 = pnand %p239, %p240
      %p242 = pneg %p241
      // Predicated region
      $region45: #{model2_forward.3} parent=5 // pred_check
        _
      $region46: #{model2_forward.3} parent=5 // pred_check_branch
        %244 = sbr.rel (%p241) target = $region48
      $region47: #{model2_forward.3} parent=5 // pred_region
        %s245 = ssub.s32 %s16, 1
        %p246 = scmp.lt.s32.totalorder %s21, 1
        %s247 = scalar_select %p246, %s21, 1
        %s248 = smul.addr %s247, 625
        %s249 = smul.addr %s248, 4
        %s250 = scalar_lea.vmem %s0, %s249
        %p251 = pneg %p42
        %p252 = pneg %p39
        %p253 = pneg %p63
        %p254 = pneg %p60
        %p255 = pneg %p84
        %p256 = pneg %p81
        %p257 = pneg %p105
        %p258 = pneg %p102
        %p259 = pneg %p126
        %p260 = pneg %p123
        %p261 = pneg %p147
        %p262 = pneg %p144
        %p263 = pneg %p168
        %p264 = pneg %p165
        %p265 = pneg %p194
        %p266 = pneg %p191
        %s267 = sand.u32 %s181, 1
        %s268 = scalar_lea.sflag [#allocation3], %s267
        %s269 = sand.u32 %s181, 1
        %s270 = scalar_lea.vmem [#allocation2], %s269
        %p271 = scmp.lt.s32.totalorder %s21, 1
        %s272 = scalar_select %p271, %s21, 1
        %s273 = smul.addr %s272, 625
        %s274 = smul.addr %s273, 4
        %s275 = scalar_lea.vmem %s0, %s274
        %v277 = vld [vmem:[%s275] sm:$0xff]
        %v278 = vld [vmem:[%s275 + $0x8] sm:$0xff]
        %v279 = vld [vmem:[%s275 + $0x10] sm:$0xff]
        %v280 = vld [vmem:[%s275 + $0x18] sm:$0xff]
        %v281 = vld [vmem:[%s275 + $0x20] sm:$0xff]
        %v282 = vld [vmem:[%s275 + $0x28] sm:$0xff]
        %v283 = vld [vmem:[%s275 + $0x30] sm:$0xff]
        %v284 = vld [vmem:[%s275 + $0x38] sm:$0xff]
        %v285 = vld [vmem:[%s275 + $0x40] sm:$0xff]
        %v286 = vld [vmem:[%s275 + $0x48] sm:$0xff]
        %v287 = vld [vmem:[%s275 + $0x50] sm:$0xff]
        %v288 = vld [vmem:[%s275 + $0x58] sm:$0xff]
        %v289 = vld [vmem:[%s275 + $0x60] sm:$0xf]
        %v290 = vld [vmem:[%s275 + $0x64] sm:$0xff]
        %v291 = vld [vmem:[%s275 + $0x6c] sm:$0xff]
        %v292 = vld [vmem:[%s275 + $0x74] sm:$0xff]
        %v293 = vld [vmem:[%s275 + $0x7c] sm:$0xff]
        %v294 = vld [vmem:[%s275 + $0x84] sm:$0xff]
        %v295 = vld [vmem:[%s275 + $0x8c] sm:$0xff]
        %v296 = vld [vmem:[%s275 + $0x94] sm:$0xff]
        %v297 = vld [vmem:[%s275 + $0x9c] sm:$0xff]
        %v298 = vld [vmem:[%s275 + $0xa4] sm:$0xff]
        %v299 = vld [vmem:[%s275 + $0xac] sm:$0xff]
        %v300 = vld [vmem:[%s275 + $0xb4] sm:$0xff]
        %v301 = vld [vmem:[%s275 + $0xbc] sm:$0xff]
        %v302 = vld [vmem:[%s275 + $0xc4] sm:$0xf]
        %v303 = vld [vmem:[%s275 + $0xc8] sm:$0xff]
        %v304 = vld [vmem:[%s275 + $0xd0] sm:$0xff]
        %v305 = vld [vmem:[%s275 + $0xd8] sm:$0xff]
        %v306 = vld [vmem:[%s275 + $0xe0] sm:$0xff]
        %v307 = vld [vmem:[%s275 + $0xe8] sm:$0xff]
        %v308 = vld [vmem:[%s275 + $0xf0] sm:$0xff]
        %v309 = vld [vmem:[%s275 + $0xf8] sm:$0xff]
        %v310 = vld [vmem:[%s275 + $0x100] sm:$0xff]
        %v311 = vld [vmem:[%s275 + $0x108] sm:$0xff]
        %v312 = vld [vmem:[%s275 + $0x110] sm:$0xff]
        %v313 = vld [vmem:[%s275 + $0x118] sm:$0xff]
        %v314 = vld [vmem:[%s275 + $0x120] sm:$0xff]
        %v315 = vld [vmem:[%s275 + $0x128] sm:$0xf]
        %v316 = vld [vmem:[%s275 + $0x12c] sm:$0xff]
        %v317 = vld [vmem:[%s275 + $0x134] sm:$0xff]
        %v318 = vld [vmem:[%s275 + $0x13c] sm:$0xff]
        %v319 = vld [vmem:[%s275 + $0x144] sm:$0xff]
        %v320 = vld [vmem:[%s275 + $0x14c] sm:$0xff]
        %v321 = vld [vmem:[%s275 + $0x154] sm:$0xff]
        %v322 = vld [vmem:[%s275 + $0x15c] sm:$0xff]
        %v323 = vld [vmem:[%s275 + $0x164] sm:$0xff]
        %v324 = vld [vmem:[%s275 + $0x16c] sm:$0xff]
        %v325 = vld [vmem:[%s275 + $0x174] sm:$0xff]
        %v326 = vld [vmem:[%s275 + $0x17c] sm:$0xff]
        %v327 = vld [vmem:[%s275 + $0x184] sm:$0xff]
        %v328 = vld [vmem:[%s275 + $0x18c] sm:$0xf]
        %v329 = vld [vmem:[%s275 + $0x190] sm:$0xff]
        %v330 = vld [vmem:[%s275 + $0x198] sm:$0xff]
        %v331 = vld [vmem:[%s275 + $0x1a0] sm:$0xff]
        %v332 = vld [vmem:[%s275 + $0x1a8] sm:$0xff]
        %v333 = vld [vmem:[%s275 + $0x1b0] sm:$0xff]
        %v334 = vld [vmem:[%s275 + $0x1b8] sm:$0xff]
        %v335 = vld [vmem:[%s275 + $0x1c0] sm:$0xff]
        %v336 = vld [vmem:[%s275 + $0x1c8] sm:$0xff]
        %v337 = vld [vmem:[%s275 + $0x1d0] sm:$0xff]
        %v338 = vld [vmem:[%s275 + $0x1d8] sm:$0xff]
        %v339 = vld [vmem:[%s275 + $0x1e0] sm:$0xff]
        %v340 = vld [vmem:[%s275 + $0x1e8] sm:$0xff]
        %v341 = vld [vmem:[%s275 + $0x1f0] sm:$0xf]
        %v342 = vld [vmem:[%s275 + $0x1f4] sm:$0xff]
        %v343 = vld [vmem:[%s275 + $0x1fc] sm:$0xff]
        %v344 = vld [vmem:[%s275 + $0x204] sm:$0xff]
        %v345 = vld [vmem:[%s275 + $0x20c] sm:$0xff]
        %v346 = vld [vmem:[%s275 + $0x214] sm:$0xff]
        %v347 = vld [vmem:[%s275 + $0x21c] sm:$0xff]
        %v348 = vld [vmem:[%s275 + $0x224] sm:$0xff]
        %v349 = vld [vmem:[%s275 + $0x22c] sm:$0xff]
        %v350 = vld [vmem:[%s275 + $0x234] sm:$0xff]
        %v351 = vld [vmem:[%s275 + $0x23c] sm:$0xff]
        %v352 = vld [vmem:[%s275 + $0x244] sm:$0xff]
        %v353 = vld [vmem:[%s275 + $0x24c] sm:$0xff]
        %v354 = vld [vmem:[%s275 + $0x254] sm:$0xf]
        %v355 = vld [vmem:[%s275 + $0x258] sm:$0xff]
        %v356 = vld [vmem:[%s275 + $0x260] sm:$0xff]
        %v357 = vld [vmem:[%s275 + $0x268] sm:$0xff]
        %v358 = vld [vmem:[%s275 + $0x270] sm:$0xff]
        %v359 = vld [vmem:[%s275 + $0x278] sm:$0xff]
        %v360 = vld [vmem:[%s275 + $0x280] sm:$0xff]
        %v361 = vld [vmem:[%s275 + $0x288] sm:$0xff]
        %v362 = vld [vmem:[%s275 + $0x290] sm:$0xff]
        %v363 = vld [vmem:[%s275 + $0x298] sm:$0xff]
        %v364 = vld [vmem:[%s275 + $0x2a0] sm:$0xff]
        %v365 = vld [vmem:[%s275 + $0x2a8] sm:$0xff]
        %v366 = vld [vmem:[%s275 + $0x2b0] sm:$0xff]
        %v367 = vld [vmem:[%s275 + $0x2b8] sm:$0xf]
        %v368 = vld [vmem:[%s275 + $0x2bc] sm:$0xff]
        %v369 = vld [vmem:[%s275 + $0x2c4] sm:$0xff]
        %v370 = vld [vmem:[%s275 + $0x2cc] sm:$0xff]
        %v371 = vld [vmem:[%s275 + $0x2d4] sm:$0xff]
        %v372 = vld [vmem:[%s275 + $0x2dc] sm:$0xff]
        %v373 = vld [vmem:[%s275 + $0x2e4] sm:$0xff]
        %v374 = vld [vmem:[%s275 + $0x2ec] sm:$0xff]
        %v375 = vld [vmem:[%s275 + $0x2f4] sm:$0xff]
        %v376 = vld [vmem:[%s275 + $0x2fc] sm:$0xff]
        %v377 = vld [vmem:[%s275 + $0x304] sm:$0xff]
        %v378 = vld [vmem:[%s275 + $0x30c] sm:$0xff]
        %v379 = vld [vmem:[%s275 + $0x314] sm:$0xff]
        %v380 = vld [vmem:[%s275 + $0x31c] sm:$0xf]
        %v381 = vld [vmem:[%s275 + $0x320] sm:$0xff]
        %v382 = vld [vmem:[%s275 + $0x328] sm:$0xff]
        %v383 = vld [vmem:[%s275 + $0x330] sm:$0xff]
        %v384 = vld [vmem:[%s275 + $0x338] sm:$0xff]
        %v385 = vld [vmem:[%s275 + $0x340] sm:$0xff]
        %v386 = vld [vmem:[%s275 + $0x348] sm:$0xff]
        %v387 = vld [vmem:[%s275 + $0x350] sm:$0xff]
        %v388 = vld [vmem:[%s275 + $0x358] sm:$0xff]
        %v389 = vld [vmem:[%s275 + $0x360] sm:$0xff]
        %v390 = vld [vmem:[%s275 + $0x368] sm:$0xff]
        %v391 = vld [vmem:[%s275 + $0x370] sm:$0xff]
        %v392 = vld [vmem:[%s275 + $0x378] sm:$0xff]
        %v393 = vld [vmem:[%s275 + $0x380] sm:$0xf]
        %v394 = vld [vmem:[%s275 + $0x384] sm:$0xff]
        %v395 = vld [vmem:[%s275 + $0x38c] sm:$0xff]
        %v396 = vld [vmem:[%s275 + $0x394] sm:$0xff]
        %v397 = vld [vmem:[%s275 + $0x39c] sm:$0xff]
        %v398 = vld [vmem:[%s275 + $0x3a4] sm:$0xff]
        %v399 = vld [vmem:[%s275 + $0x3ac] sm:$0xff]
        %v400 = vld [vmem:[%s275 + $0x3b4] sm:$0xff]
        %v401 = vld [vmem:[%s275 + $0x3bc] sm:$0xff]
        %v402 = vld [vmem:[%s275 + $0x3c4] sm:$0xff]
        %v403 = vld [vmem:[%s275 + $0x3cc] sm:$0xff]
        %v404 = vld [vmem:[%s275 + $0x3d4] sm:$0xff]
        %v405 = vld [vmem:[%s275 + $0x3dc] sm:$0xff]
        %v406 = vld [vmem:[%s275 + $0x3e4] sm:$0xf]
        %v407 = vld [vmem:[%s275 + $0x3e8] sm:$0xff]
        %v408 = vld [vmem:[%s275 + $0x3f0] sm:$0xff]
        %v409 = vld [vmem:[%s275 + $0x3f8] sm:$0xff]
        %v410 = vld [vmem:[%s275 + $0x400] sm:$0xff]
        %v411 = vld [vmem:[%s275 + $0x408] sm:$0xff]
        %v412 = vld [vmem:[%s275 + $0x410] sm:$0xff]
        %v413 = vld [vmem:[%s275 + $0x418] sm:$0xff]
        %v414 = vld [vmem:[%s275 + $0x420] sm:$0xff]
        %v415 = vld [vmem:[%s275 + $0x428] sm:$0xff]
        %v416 = vld [vmem:[%s275 + $0x430] sm:$0xff]
        %v417 = vld [vmem:[%s275 + $0x438] sm:$0xff]
        %v418 = vld [vmem:[%s275 + $0x440] sm:$0xff]
        %v419 = vld [vmem:[%s275 + $0x448] sm:$0xf]
        %v420 = vld [vmem:[%s275 + $0x44c] sm:$0xff]
        %v421 = vld [vmem:[%s275 + $0x454] sm:$0xff]
        %v422 = vld [vmem:[%s275 + $0x45c] sm:$0xff]
        %v423 = vld [vmem:[%s275 + $0x464] sm:$0xff]
        %v424 = vld [vmem:[%s275 + $0x46c] sm:$0xff]
        %v425 = vld [vmem:[%s275 + $0x474] sm:$0xff]
        %v426 = vld [vmem:[%s275 + $0x47c] sm:$0xff]
        %v427 = vld [vmem:[%s275 + $0x484] sm:$0xff]
        %v428 = vld [vmem:[%s275 + $0x48c] sm:$0xff]
        %v429 = vld [vmem:[%s275 + $0x494] sm:$0xff]
        %v430 = vld [vmem:[%s275 + $0x49c] sm:$0xff]
        %v431 = vld [vmem:[%s275 + $0x4a4] sm:$0xff]
        %v432 = vld [vmem:[%s275 + $0x4ac] sm:$0xf]
        %v433 = vld [vmem:[%s275 + $0x4b0] sm:$0xff]
        %v434 = vld [vmem:[%s275 + $0x4b8] sm:$0xff]
        %v435 = vld [vmem:[%s275 + $0x4c0] sm:$0xff]
        %v436 = vld [vmem:[%s275 + $0x4c8] sm:$0xff]
        %v437 = vld [vmem:[%s275 + $0x4d0] sm:$0xff]
        %v438 = vld [vmem:[%s275 + $0x4d8] sm:$0xff]
        %v439 = vld [vmem:[%s275 + $0x4e0] sm:$0xff]
        %v440 = vld [vmem:[%s275 + $0x4e8] sm:$0xff]
        %v441 = vld [vmem:[%s275 + $0x4f0] sm:$0xff]
        %v442 = vld [vmem:[%s275 + $0x4f8] sm:$0xff]
        %v443 = vld [vmem:[%s275 + $0x500] sm:$0xff]
        %v444 = vld [vmem:[%s275 + $0x508] sm:$0xff]
        %v445 = vld [vmem:[%s275 + $0x510] sm:$0xf]
        %v446 = vld [vmem:[%s275 + $0x514] sm:$0xff]
        %v447 = vld [vmem:[%s275 + $0x51c] sm:$0xff]
        %v448 = vld [vmem:[%s275 + $0x524] sm:$0xff]
        %v449 = vld [vmem:[%s275 + $0x52c] sm:$0xff]
        %v450 = vld [vmem:[%s275 + $0x534] sm:$0xff]
        %v451 = vld [vmem:[%s275 + $0x53c] sm:$0xff]
        %v452 = vld [vmem:[%s275 + $0x544] sm:$0xff]
        %v453 = vld [vmem:[%s275 + $0x54c] sm:$0xff]
        %v454 = vld [vmem:[%s275 + $0x554] sm:$0xff]
        %v455 = vld [vmem:[%s275 + $0x55c] sm:$0xff]
        %v456 = vld [vmem:[%s275 + $0x564] sm:$0xff]
        %v457 = vld [vmem:[%s275 + $0x56c] sm:$0xff]
        %v458 = vld [vmem:[%s275 + $0x574] sm:$0xf]
        %v459 = vld [vmem:[%s275 + $0x578] sm:$0xff]
        %v460 = vld [vmem:[%s275 + $0x580] sm:$0xff]
        %v461 = vld [vmem:[%s275 + $0x588] sm:$0xff]
        %v462 = vld [vmem:[%s275 + $0x590] sm:$0xff]
        %v463 = vld [vmem:[%s275 + $0x598] sm:$0xff]
        %v464 = vld [vmem:[%s275 + $0x5a0] sm:$0xff]
        %v465 = vld [vmem:[%s275 + $0x5a8] sm:$0xff]
        %v466 = vld [vmem:[%s275 + $0x5b0] sm:$0xff]
        %v467 = vld [vmem:[%s275 + $0x5b8] sm:$0xff]
        %v468 = vld [vmem:[%s275 + $0x5c0] sm:$0xff]
        %v469 = vld [vmem:[%s275 + $0x5c8] sm:$0xff]
        %v470 = vld [vmem:[%s275 + $0x5d0] sm:$0xff]
        %v471 = vld [vmem:[%s275 + $0x5d8] sm:$0xf]
        %v472 = vld [vmem:[%s275 + $0x5dc] sm:$0xff]
        %v473 = vld [vmem:[%s275 + $0x5e4] sm:$0xff]
        %v474 = vld [vmem:[%s275 + $0x5ec] sm:$0xff]
        %v475 = vld [vmem:[%s275 + $0x5f4] sm:$0xff]
        %v476 = vld [vmem:[%s275 + $0x5fc] sm:$0xff]
        %v477 = vld [vmem:[%s275 + $0x604] sm:$0xff]
        %v478 = vld [vmem:[%s275 + $0x60c] sm:$0xff]
        %v479 = vld [vmem:[%s275 + $0x614] sm:$0xff]
        %v480 = vld [vmem:[%s275 + $0x61c] sm:$0xff]
        %v481 = vld [vmem:[%s275 + $0x624] sm:$0xff]
        %v482 = vld [vmem:[%s275 + $0x62c] sm:$0xff]
        %v483 = vld [vmem:[%s275 + $0x634] sm:$0xff]
        %v484 = vld [vmem:[%s275 + $0x63c] sm:$0xf]
        %v485 = vld [vmem:[%s275 + $0x640] sm:$0xff]
        %v486 = vld [vmem:[%s275 + $0x648] sm:$0xff]
        %v487 = vld [vmem:[%s275 + $0x650] sm:$0xff]
        %v488 = vld [vmem:[%s275 + $0x658] sm:$0xff]
        %v489 = vld [vmem:[%s275 + $0x660] sm:$0xff]
        %v490 = vld [vmem:[%s275 + $0x668] sm:$0xff]
        %v491 = vld [vmem:[%s275 + $0x670] sm:$0xff]
        %v492 = vld [vmem:[%s275 + $0x678] sm:$0xff]
        %v493 = vld [vmem:[%s275 + $0x680] sm:$0xff]
        %v494 = vld [vmem:[%s275 + $0x688] sm:$0xff]
        %v495 = vld [vmem:[%s275 + $0x690] sm:$0xff]
        %v496 = vld [vmem:[%s275 + $0x698] sm:$0xff]
        %v497 = vld [vmem:[%s275 + $0x6a0] sm:$0xf]
        %v498 = vld [vmem:[%s275 + $0x6a4] sm:$0xff]
        %v499 = vld [vmem:[%s275 + $0x6ac] sm:$0xff]
        %v500 = vld [vmem:[%s275 + $0x6b4] sm:$0xff]
        %v501 = vld [vmem:[%s275 + $0x6bc] sm:$0xff]
        %v502 = vld [vmem:[%s275 + $0x6c4] sm:$0xff]
        %v503 = vld [vmem:[%s275 + $0x6cc] sm:$0xff]
        %v504 = vld [vmem:[%s275 + $0x6d4] sm:$0xff]
        %v505 = vld [vmem:[%s275 + $0x6dc] sm:$0xff]
        %v506 = vld [vmem:[%s275 + $0x6e4] sm:$0xff]
        %v507 = vld [vmem:[%s275 + $0x6ec] sm:$0xff]
        %v508 = vld [vmem:[%s275 + $0x6f4] sm:$0xff]
        %v509 = vld [vmem:[%s275 + $0x6fc] sm:$0xff]
        %v510 = vld [vmem:[%s275 + $0x704] sm:$0xf]
        %v511 = vld [vmem:[%s275 + $0x708] sm:$0xff]
        %v512 = vld [vmem:[%s275 + $0x710] sm:$0xff]
        %v513 = vld [vmem:[%s275 + $0x718] sm:$0xff]
        %v514 = vld [vmem:[%s275 + $0x720] sm:$0xff]
        %v515 = vld [vmem:[%s275 + $0x728] sm:$0xff]
        %v516 = vld [vmem:[%s275 + $0x730] sm:$0xff]
        %v517 = vld [vmem:[%s275 + $0x738] sm:$0xff]
        %v518 = vld [vmem:[%s275 + $0x740] sm:$0xff]
        %v519 = vld [vmem:[%s275 + $0x748] sm:$0xff]
        %v520 = vld [vmem:[%s275 + $0x750] sm:$0xff]
        %v521 = vld [vmem:[%s275 + $0x758] sm:$0xff]
        %v522 = vld [vmem:[%s275 + $0x760] sm:$0xff]
        %v523 = vld [vmem:[%s275 + $0x768] sm:$0xf]
        %v524 = vld [vmem:[%s275 + $0x76c] sm:$0xff]
        %v525 = vld [vmem:[%s275 + $0x774] sm:$0xff]
        %v526 = vld [vmem:[%s275 + $0x77c] sm:$0xff]
        %v527 = vld [vmem:[%s275 + $0x784] sm:$0xff]
        %v528 = vld [vmem:[%s275 + $0x78c] sm:$0xff]
        %v529 = vld [vmem:[%s275 + $0x794] sm:$0xff]
        %v530 = vld [vmem:[%s275 + $0x79c] sm:$0xff]
        %v531 = vld [vmem:[%s275 + $0x7a4] sm:$0xff]
        %v532 = vld [vmem:[%s275 + $0x7ac] sm:$0xff]
        %v533 = vld [vmem:[%s275 + $0x7b4] sm:$0xff]
        %v534 = vld [vmem:[%s275 + $0x7bc] sm:$0xff]
        %v535 = vld [vmem:[%s275 + $0x7c4] sm:$0xff]
        %v536 = vld [vmem:[%s275 + $0x7cc] sm:$0xf]
        %v537 = vld [vmem:[%s275 + $0x7d0] sm:$0xff]
        %v538 = vld [vmem:[%s275 + $0x7d8] sm:$0xff]
        %v539 = vld [vmem:[%s275 + $0x7e0] sm:$0xff]
        %v540 = vld [vmem:[%s275 + $0x7e8] sm:$0xff]
        %v541 = vld [vmem:[%s275 + $0x7f0] sm:$0xff]
        %v542 = vld [vmem:[%s275 + $0x7f8] sm:$0xff]
        %v543 = vld [vmem:[%s275 + $0x800] sm:$0xff]
        %v544 = vld [vmem:[%s275 + $0x808] sm:$0xff]
        %v545 = vld [vmem:[%s275 + $0x810] sm:$0xff]
        %v546 = vld [vmem:[%s275 + $0x818] sm:$0xff]
        %v547 = vld [vmem:[%s275 + $0x820] sm:$0xff]
        %v548 = vld [vmem:[%s275 + $0x828] sm:$0xff]
        %v549 = vld [vmem:[%s275 + $0x830] sm:$0xf]
        %v550 = vld [vmem:[%s275 + $0x834] sm:$0xff]
        %v551 = vld [vmem:[%s275 + $0x83c] sm:$0xff]
        %v552 = vld [vmem:[%s275 + $0x844] sm:$0xff]
        %v553 = vld [vmem:[%s275 + $0x84c] sm:$0xff]
        %v554 = vld [vmem:[%s275 + $0x854] sm:$0xff]
        %v555 = vld [vmem:[%s275 + $0x85c] sm:$0xff]
        %v556 = vld [vmem:[%s275 + $0x864] sm:$0xff]
        %v557 = vld [vmem:[%s275 + $0x86c] sm:$0xff]
        %v558 = vld [vmem:[%s275 + $0x874] sm:$0xff]
        %v559 = vld [vmem:[%s275 + $0x87c] sm:$0xff]
        %v560 = vld [vmem:[%s275 + $0x884] sm:$0xff]
        %v561 = vld [vmem:[%s275 + $0x88c] sm:$0xff]
        %v562 = vld [vmem:[%s275 + $0x894] sm:$0xf]
        %v563 = vld [vmem:[%s275 + $0x898] sm:$0xff]
        %v564 = vld [vmem:[%s275 + $0x8a0] sm:$0xff]
        %v565 = vld [vmem:[%s275 + $0x8a8] sm:$0xff]
        %v566 = vld [vmem:[%s275 + $0x8b0] sm:$0xff]
        %v567 = vld [vmem:[%s275 + $0x8b8] sm:$0xff]
        %v568 = vld [vmem:[%s275 + $0x8c0] sm:$0xff]
        %v569 = vld [vmem:[%s275 + $0x8c8] sm:$0xff]
        %v570 = vld [vmem:[%s275 + $0x8d0] sm:$0xff]
        %v571 = vld [vmem:[%s275 + $0x8d8] sm:$0xff]
        %v572 = vld [vmem:[%s275 + $0x8e0] sm:$0xff]
        %v573 = vld [vmem:[%s275 + $0x8e8] sm:$0xff]
        %v574 = vld [vmem:[%s275 + $0x8f0] sm:$0xff]
        %v575 = vld [vmem:[%s275 + $0x8f8] sm:$0xf]
        %v576 = vld [vmem:[%s275 + $0x8fc] sm:$0xff]
        %v577 = vld [vmem:[%s275 + $0x904] sm:$0xff]
        %v578 = vld [vmem:[%s275 + $0x90c] sm:$0xff]
        %v579 = vld [vmem:[%s275 + $0x914] sm:$0xff]
        %v580 = vld [vmem:[%s275 + $0x91c] sm:$0xff]
        %v581 = vld [vmem:[%s275 + $0x924] sm:$0xff]
        %v582 = vld [vmem:[%s275 + $0x92c] sm:$0xff]
        %v583 = vld [vmem:[%s275 + $0x934] sm:$0xff]
        %v584 = vld [vmem:[%s275 + $0x93c] sm:$0xff]
        %v585 = vld [vmem:[%s275 + $0x944] sm:$0xff]
        %v586 = vld [vmem:[%s275 + $0x94c] sm:$0xff]
        %v587 = vld [vmem:[%s275 + $0x954] sm:$0xff]
        %v588 = vld [vmem:[%s275 + $0x95c] sm:$0xf]
        %v589 = vld [vmem:[%s275 + $0x960] sm:$0x33]
        %v590 = vld [vmem:[%s275 + $0x968] sm:$0x33]
        %v591 = vld [vmem:[%s275 + $0x970] sm:$0x33]
        %v592 = vld [vmem:[%s275 + $0x978] sm:$0x33]
        %v593 = vld [vmem:[%s275 + $0x980] sm:$0x33]
        %v594 = vld [vmem:[%s275 + $0x988] sm:$0x33]
        %v595 = vld [vmem:[%s275 + $0x990] sm:$0x33]
        %v596 = vld [vmem:[%s275 + $0x998] sm:$0x33]
        %v597 = vld [vmem:[%s275 + $0x9a0] sm:$0x33]
        %v598 = vld [vmem:[%s275 + $0x9a8] sm:$0x33]
        %v599 = vld [vmem:[%s275 + $0x9b0] sm:$0x33]
        %v600 = vld [vmem:[%s275 + $0x9b8] sm:$0x33]
        %v601 = vld [vmem:[%s275 + $0x9c0] sm:$0x3]
        %v602 = vld [vmem:[%s1] sm:$0xf]
        %v603 = vld [vmem:[%s1 + $0x4] sm:$0xf]
        %v604 = vld [vmem:[%s1 + $0x8] sm:$0xf]
        %v605 = vld [vmem:[%s1 + $0xc] sm:$0xf]
        %v606 = vld [vmem:[%s1 + $0x10] sm:$0xf]
        %v607 = vld [vmem:[%s1 + $0x14] sm:$0xf]
        %v608 = vld [vmem:[%s1 + $0x18] sm:$0xf]
        %v609 = vld [vmem:[%s1 + $0x1c] sm:$0xf]
        %v610 = vld [vmem:[%s1 + $0x20] sm:$0xf]
        %v611 = vld [vmem:[%s1 + $0x24] sm:$0xf]
        %v612 = vld [vmem:[%s1 + $0x28] sm:$0xf]
        %v613 = vld [vmem:[%s1 + $0x2c] sm:$0xf]
        %v614 = vld [vmem:[%s1 + $0x30] sm:$0xf]
        %v615 = vld [vmem:[%s1 + $0x34] sm:$0xf]
        %v616 = vld [vmem:[%s1 + $0x38] sm:$0xf]
        %v617 = vld [vmem:[%s1 + $0x3c] sm:$0xf]
        %v618 = vld [vmem:[%s1 + $0x40] sm:$0xf]
        %v619 = vld [vmem:[%s1 + $0x44] sm:$0xf]
        %v620 = vld [vmem:[%s1 + $0x48] sm:$0xf]
        %v621 = vld [vmem:[%s1 + $0x4c] sm:$0xf]
        %v622 = vld [vmem:[%s1 + $0x50] sm:$0xf]
        %v623 = vld [vmem:[%s1 + $0x54] sm:$0xf]
        %v624 = vld [vmem:[%s1 + $0x58] sm:$0xf]
        %v625 = vld [vmem:[%s1 + $0x5c] sm:$0xf]
        %v626 = vld [vmem:[%s1 + $0x60] sm:$0xf]
        %v627 = vld [vmem:[%s1 + $0x64] sm:$0xf]
        %v628 = vld [vmem:[%s1 + $0x68] sm:$0xf]
        %v629 = vld [vmem:[%s1 + $0x6c] sm:$0xf]
        %v630 = vld [vmem:[%s1 + $0x70] sm:$0xf]
        %v631 = vld [vmem:[%s1 + $0x74] sm:$0xf]
        %v632 = vld [vmem:[%s1 + $0x78] sm:$0xf]
        %v633 = vld [vmem:[%s1 + $0x7c] sm:$0xf]
        %v634 = vld [vmem:[%s1 + $0x80] sm:$0xf]
        %v635 = vld [vmem:[%s1 + $0x84] sm:$0xf]
        %v636 = vld [vmem:[%s1 + $0x88] sm:$0xf]
        %v637 = vld [vmem:[%s1 + $0x8c] sm:$0xf]
        %v638 = vld [vmem:[%s1 + $0x90] sm:$0xf]
        %v639 = vld [vmem:[%s1 + $0x94] sm:$0xf]
        %v640 = vld [vmem:[%s1 + $0x98] sm:$0xf]
        %v641 = vld [vmem:[%s1 + $0x9c] sm:$0xf]
        %v642 = vld [vmem:[%s1 + $0xa0] sm:$0xf]
        %v643 = vld [vmem:[%s1 + $0xa4] sm:$0xf]
        %v644 = vld [vmem:[%s1 + $0xa8] sm:$0xf]
        %v645 = vld [vmem:[%s1 + $0xac] sm:$0xf]
        %v646 = vld [vmem:[%s1 + $0xb0] sm:$0xf]
        %v647 = vld [vmem:[%s1 + $0xb4] sm:$0xf]
        %v648 = vld [vmem:[%s1 + $0xb8] sm:$0xf]
        %v649 = vld [vmem:[%s1 + $0xbc] sm:$0xf]
        %v650 = vld [vmem:[%s1 + $0xc0] sm:$0xf]
        %v651 = vld [vmem:[%s1 + $0xc4] sm:$0xf]
        %v652 = vld [vmem:[%s1 + $0xc8] sm:$0xf]
        %v653 = vld [vmem:[%s1 + $0xcc] sm:$0xf]
        %v654 = vld [vmem:[%s1 + $0xd0] sm:$0xf]
        %v655 = vld [vmem:[%s1 + $0xd4] sm:$0xf]
        %v656 = vld [vmem:[%s1 + $0xd8] sm:$0xf]
        %v657 = vld [vmem:[%s1 + $0xdc] sm:$0xf]
        %v658 = vld [vmem:[%s1 + $0xe0] sm:$0xf]
        %v659 = vld [vmem:[%s1 + $0xe4] sm:$0xf]
        %v660 = vld [vmem:[%s1 + $0xe8] sm:$0xf]
        %v661 = vld [vmem:[%s1 + $0xec] sm:$0xf]
        %v662 = vld [vmem:[%s1 + $0xf0] sm:$0xf]
        %v663 = vld [vmem:[%s1 + $0xf4] sm:$0xf]
        %v664 = vld [vmem:[%s1 + $0xf8] sm:$0xf]
        %v665 = vld [vmem:[%s1 + $0xfc] sm:$0xf]
        %v666 = vld [vmem:[%s1 + $0x100] sm:$0xf]
        %v667 = vld [vmem:[%s1 + $0x104] sm:$0xf]
        %v668 = vld [vmem:[%s1 + $0x108] sm:$0xf]
        %v669 = vld [vmem:[%s1 + $0x10c] sm:$0xf]
        %v670 = vld [vmem:[%s1 + $0x110] sm:$0xf]
        %v671 = vld [vmem:[%s1 + $0x114] sm:$0xf]
        %v672 = vld [vmem:[%s1 + $0x118] sm:$0xf]
        %v673 = vld [vmem:[%s1 + $0x11c] sm:$0xf]
        %v674 = vld [vmem:[%s1 + $0x120] sm:$0xf]
        %v675 = vld [vmem:[%s1 + $0x124] sm:$0xf]
        %v676 = vld [vmem:[%s1 + $0x128] sm:$0xf]
        %v677 = vld [vmem:[%s1 + $0x12c] sm:$0xf]
        %v678 = vld [vmem:[%s1 + $0x130] sm:$0xf]
        %v679 = vld [vmem:[%s1 + $0x134] sm:$0xf]
        %v680 = vld [vmem:[%s1 + $0x138] sm:$0xf]
        %v681 = vld [vmem:[%s1 + $0x13c] sm:$0xf]
        %v682 = vld [vmem:[%s1 + $0x140] sm:$0xf]
        %v683 = vld [vmem:[%s1 + $0x144] sm:$0xf]
        %v684 = vld [vmem:[%s1 + $0x148] sm:$0xf]
        %v685 = vld [vmem:[%s1 + $0x14c] sm:$0xf]
        %v686 = vld [vmem:[%s1 + $0x150] sm:$0xf]
        %v687 = vld [vmem:[%s1 + $0x154] sm:$0xf]
        %v688 = vld [vmem:[%s1 + $0x158] sm:$0xf]
        %v689 = vld [vmem:[%s1 + $0x15c] sm:$0xf]
        %v690 = vld [vmem:[%s1 + $0x160] sm:$0xf]
        %v691 = vld [vmem:[%s1 + $0x164] sm:$0xf]
        %v692 = vld [vmem:[%s1 + $0x168] sm:$0xf]
        %v693 = vld [vmem:[%s1 + $0x16c] sm:$0xf]
        %v694 = vld [vmem:[%s1 + $0x170] sm:$0xf]
        %v695 = vld [vmem:[%s1 + $0x174] sm:$0xf]
        %v696 = vld [vmem:[%s1 + $0x178] sm:$0xf]
        %v697 = vld [vmem:[%s1 + $0x17c] sm:$0xf]
        %v698 = vld [vmem:[%s1 + $0x180] sm:$0xf]
        %v699 = vld [vmem:[%s1 + $0x184] sm:$0xf]
        %v700 = vld [vmem:[%s1 + $0x188] sm:$0xf]
        %v701 = vld [vmem:[%s1 + $0x18c] sm:$0xf]
        %v702 = vld [vmem:[%s1 + $0x190] sm:$0xf]
        %v703 = vld [vmem:[%s1 + $0x194] sm:$0xf]
        %v704 = vld [vmem:[%s1 + $0x198] sm:$0xf]
        %v705 = vld [vmem:[%s1 + $0x19c] sm:$0xf]
        %v706 = vld [vmem:[%s1 + $0x1a0] sm:$0xf]
        %v707 = vld [vmem:[%s1 + $0x1a4] sm:$0xf]
        %v708 = vld [vmem:[%s1 + $0x1a8] sm:$0xf]
        %v709 = vld [vmem:[%s1 + $0x1ac] sm:$0xf]
        %v710 = vld [vmem:[%s1 + $0x1b0] sm:$0xf]
        %v711 = vld [vmem:[%s1 + $0x1b4] sm:$0xf]
        %v712 = vld [vmem:[%s1 + $0x1b8] sm:$0xf]
        %v713 = vld [vmem:[%s1 + $0x1bc] sm:$0xf]
        %v714 = vld [vmem:[%s1 + $0x1c0] sm:$0xf]
        %v715 = vld [vmem:[%s1 + $0x1c4] sm:$0xf]
        %v716 = vld [vmem:[%s1 + $0x1c8] sm:$0xf]
        %v717 = vld [vmem:[%s1 + $0x1cc] sm:$0xf]
        %v718 = vld [vmem:[%s1 + $0x1d0] sm:$0xf]
        %v719 = vld [vmem:[%s1 + $0x1d4] sm:$0xf]
        %v720 = vld [vmem:[%s1 + $0x1d8] sm:$0xf]
        %v721 = vld [vmem:[%s1 + $0x1dc] sm:$0xf]
        %v722 = vld [vmem:[%s1 + $0x1e0] sm:$0xf]
        %v723 = vld [vmem:[%s1 + $0x1e4] sm:$0xf]
        %v724 = vld [vmem:[%s1 + $0x1e8] sm:$0xf]
        %v725 = vld [vmem:[%s1 + $0x1ec] sm:$0xf]
        %v726 = vld [vmem:[%s1 + $0x1f0] sm:$0xf]
        %v727 = vld [vmem:[%s1 + $0x1f4] sm:$0xf]
        %v728 = vld [vmem:[%s1 + $0x1f8] sm:$0xf]
        %v729 = vld [vmem:[%s1 + $0x1fc] sm:$0xf]
        %v730 = vld [vmem:[%s1 + $0x200] sm:$0xf]
        %v731 = vld [vmem:[%s1 + $0x204] sm:$0xf]
        %v732 = vld [vmem:[%s1 + $0x208] sm:$0xf]
        %v733 = vld [vmem:[%s1 + $0x20c] sm:$0xf]
        %v734 = vld [vmem:[%s1 + $0x210] sm:$0xf]
        %v735 = vld [vmem:[%s1 + $0x214] sm:$0xf]
        %v736 = vld [vmem:[%s1 + $0x218] sm:$0xf]
        %v737 = vld [vmem:[%s1 + $0x21c] sm:$0xf]
        %v738 = vld [vmem:[%s1 + $0x220] sm:$0xf]
        %v739 = vld [vmem:[%s1 + $0x224] sm:$0xf]
        %v740 = vld [vmem:[%s1 + $0x228] sm:$0xf]
        %v741 = vld [vmem:[%s1 + $0x22c] sm:$0xf]
        %v742 = vld [vmem:[%s1 + $0x230] sm:$0xf]
        %v743 = vld [vmem:[%s1 + $0x234] sm:$0xf]
        %v744 = vld [vmem:[%s1 + $0x238] sm:$0xf]
        %v745 = vld [vmem:[%s1 + $0x23c] sm:$0xf]
        %v746 = vld [vmem:[%s1 + $0x240] sm:$0xf]
        %v747 = vld [vmem:[%s1 + $0x244] sm:$0xf]
        %v748 = vld [vmem:[%s1 + $0x248] sm:$0xf]
        %v749 = vld [vmem:[%s1 + $0x24c] sm:$0xf]
        %v750 = vld [vmem:[%s1 + $0x250] sm:$0xf]
        %v751 = vld [vmem:[%s1 + $0x254] sm:$0xf]
        %v752 = vld [vmem:[%s1 + $0x258] sm:$0xf]
        %v753 = vld [vmem:[%s1 + $0x25c] sm:$0xf]
        %v754 = vld [vmem:[%s1 + $0x260] sm:$0xf]
        %v755 = vld [vmem:[%s1 + $0x264] sm:$0xf]
        %v756 = vld [vmem:[%s1 + $0x268] sm:$0xf]
        %v757 = vld [vmem:[%s1 + $0x26c] sm:$0xf]
        %v758 = vld [vmem:[%s1 + $0x270] sm:$0xf]
        %v759 = vld [vmem:[%s1 + $0x274] sm:$0xf]
        %v760 = vld [vmem:[%s1 + $0x278] sm:$0xf]
        %v761 = vld [vmem:[%s1 + $0x27c] sm:$0xf]
        %v762 = vld [vmem:[%s1 + $0x280] sm:$0xf]
        %v763 = vld [vmem:[%s1 + $0x284] sm:$0xf]
        %v764 = vld [vmem:[%s1 + $0x288] sm:$0xf]
        %v765 = vld [vmem:[%s1 + $0x28c] sm:$0xf]
        %v766 = vld [vmem:[%s1 + $0x290] sm:$0xf]
        %v767 = vld [vmem:[%s1 + $0x294] sm:$0xf]
        %v768 = vld [vmem:[%s1 + $0x298] sm:$0xf]
        %v769 = vld [vmem:[%s1 + $0x29c] sm:$0xf]
        %v770 = vld [vmem:[%s1 + $0x2a0] sm:$0xf]
        %v771 = vld [vmem:[%s1 + $0x2a4] sm:$0xf]
        %v772 = vld [vmem:[%s1 + $0x2a8] sm:$0xf]
        %v773 = vld [vmem:[%s1 + $0x2ac] sm:$0xf]
        %v774 = vld [vmem:[%s1 + $0x2b0] sm:$0xf]
        %v775 = vld [vmem:[%s1 + $0x2b4] sm:$0xf]
        %v776 = vld [vmem:[%s1 + $0x2b8] sm:$0xf]
        %v777 = vld [vmem:[%s1 + $0x2bc] sm:$0xf]
        %v778 = vld [vmem:[%s1 + $0x2c0] sm:$0xf]
        %v779 = vld [vmem:[%s1 + $0x2c4] sm:$0xf]
        %v780 = vld [vmem:[%s1 + $0x2c8] sm:$0xf]
        %v781 = vld [vmem:[%s1 + $0x2cc] sm:$0xf]
        %v782 = vld [vmem:[%s1 + $0x2d0] sm:$0xf]
        %v783 = vld [vmem:[%s1 + $0x2d4] sm:$0xf]
        %v784 = vld [vmem:[%s1 + $0x2d8] sm:$0xf]
        %v785 = vld [vmem:[%s1 + $0x2dc] sm:$0xf]
        %v786 = vld [vmem:[%s1 + $0x2e0] sm:$0xf]
        %v787 = vld [vmem:[%s1 + $0x2e4] sm:$0xf]
        %v788 = vld [vmem:[%s1 + $0x2e8] sm:$0xf]
        %v789 = vld [vmem:[%s1 + $0x2ec] sm:$0xf]
        %v790 = vld [vmem:[%s1 + $0x2f0] sm:$0xf]
        %v791 = vld [vmem:[%s1 + $0x2f4] sm:$0xf]
        %v792 = vld [vmem:[%s1 + $0x2f8] sm:$0xf]
        %v793 = vld [vmem:[%s1 + $0x2fc] sm:$0xf]
        %v794 = vld [vmem:[%s1 + $0x300] sm:$0xf]
        %v795 = vld [vmem:[%s1 + $0x304] sm:$0xf]
        %v796 = vld [vmem:[%s1 + $0x308] sm:$0xf]
        %v797 = vld [vmem:[%s1 + $0x30c] sm:$0xf]
        %v798 = vld [vmem:[%s1 + $0x310] sm:$0xf]
        %v799 = vld [vmem:[%s1 + $0x314] sm:$0xf]
        %v800 = vld [vmem:[%s1 + $0x318] sm:$0xf]
        %v801 = vld [vmem:[%s1 + $0x31c] sm:$0xf]
        %v802 = vld [vmem:[%s1 + $0x320] sm:$0xf]
        %v803 = vld [vmem:[%s1 + $0x324] sm:$0xf]
        %v804 = vld [vmem:[%s1 + $0x328] sm:$0xf]
        %v805 = vld [vmem:[%s1 + $0x32c] sm:$0xf]
        %v806 = vld [vmem:[%s1 + $0x330] sm:$0xf]
        %v807 = vld [vmem:[%s1 + $0x334] sm:$0xf]
        %v808 = vld [vmem:[%s1 + $0x338] sm:$0xf]
        %v809 = vld [vmem:[%s1 + $0x33c] sm:$0xf]
        %v810 = vld [vmem:[%s1 + $0x340] sm:$0xf]
        %v811 = vld [vmem:[%s1 + $0x344] sm:$0xf]
        %v812 = vld [vmem:[%s1 + $0x348] sm:$0xf]
        %v813 = vld [vmem:[%s1 + $0x34c] sm:$0xf]
        %v814 = vld [vmem:[%s1 + $0x350] sm:$0xf]
        %v815 = vld [vmem:[%s1 + $0x354] sm:$0xf]
        %v816 = vld [vmem:[%s1 + $0x358] sm:$0xf]
        %v817 = vld [vmem:[%s1 + $0x35c] sm:$0xf]
        %v818 = vld [vmem:[%s1 + $0x360] sm:$0xf]
        %v819 = vld [vmem:[%s1 + $0x364] sm:$0xf]
        %v820 = vld [vmem:[%s1 + $0x368] sm:$0xf]
        %v821 = vld [vmem:[%s1 + $0x36c] sm:$0xf]
        %v822 = vld [vmem:[%s1 + $0x370] sm:$0xf]
        %v823 = vld [vmem:[%s1 + $0x374] sm:$0xf]
        %v824 = vld [vmem:[%s1 + $0x378] sm:$0xf]
        %v825 = vld [vmem:[%s1 + $0x37c] sm:$0xf]
        %v826 = vld [vmem:[%s1 + $0x380] sm:$0xf]
        %v827 = vld [vmem:[%s1 + $0x384] sm:$0xf]
        %v828 = vld [vmem:[%s1 + $0x388] sm:$0xf]
        %v829 = vld [vmem:[%s1 + $0x38c] sm:$0xf]
        %v830 = vld [vmem:[%s1 + $0x390] sm:$0xf]
        %v831 = vld [vmem:[%s1 + $0x394] sm:$0xf]
        %v832 = vld [vmem:[%s1 + $0x398] sm:$0xf]
        %v833 = vld [vmem:[%s1 + $0x39c] sm:$0xf]
        %v834 = vld [vmem:[%s1 + $0x3a0] sm:$0xf]
        %v835 = vld [vmem:[%s1 + $0x3a4] sm:$0xf]
        %v836 = vld [vmem:[%s1 + $0x3a8] sm:$0xf]
        %v837 = vld [vmem:[%s1 + $0x3ac] sm:$0xf]
        %v838 = vld [vmem:[%s1 + $0x3b0] sm:$0xf]
        %v839 = vld [vmem:[%s1 + $0x3b4] sm:$0xf]
        %v840 = vld [vmem:[%s1 + $0x3b8] sm:$0xf]
        %v841 = vld [vmem:[%s1 + $0x3bc] sm:$0xf]
        %v842 = vld [vmem:[%s1 + $0x3c0] sm:$0xf]
        %v843 = vld [vmem:[%s1 + $0x3c4] sm:$0xf]
        %v844 = vld [vmem:[%s1 + $0x3c8] sm:$0xf]
        %v845 = vld [vmem:[%s1 + $0x3cc] sm:$0xf]
        %v846 = vld [vmem:[%s1 + $0x3d0] sm:$0xf]
        %v847 = vld [vmem:[%s1 + $0x3d4] sm:$0xf]
        %v848 = vld [vmem:[%s1 + $0x3d8] sm:$0xf]
        %v849 = vld [vmem:[%s1 + $0x3dc] sm:$0xf]
        %v850 = vld [vmem:[%s1 + $0x3e0] sm:$0xf]
        %v851 = vld [vmem:[%s1 + $0x3e4] sm:$0xf]
        %v852 = vld [vmem:[%s1 + $0x3e8] sm:$0xf]
        %v853 = vld [vmem:[%s1 + $0x3ec] sm:$0xf]
        %v854 = vld [vmem:[%s1 + $0x3f0] sm:$0xf]
        %v855 = vld [vmem:[%s1 + $0x3f4] sm:$0xf]
        %v856 = vld [vmem:[%s1 + $0x3f8] sm:$0xf]
        %v857 = vld [vmem:[%s1 + $0x3fc] sm:$0xf]
        %v858 = vld [vmem:[%s1 + $0x400] sm:$0xf]
        %v859 = vld [vmem:[%s1 + $0x404] sm:$0xf]
        %v860 = vld [vmem:[%s1 + $0x408] sm:$0xf]
        %v861 = vld [vmem:[%s1 + $0x40c] sm:$0xf]
        %v862 = vld [vmem:[%s1 + $0x410] sm:$0xf]
        %v863 = vld [vmem:[%s1 + $0x414] sm:$0xf]
        %v864 = vld [vmem:[%s1 + $0x418] sm:$0xf]
        %v865 = vld [vmem:[%s1 + $0x41c] sm:$0xf]
        %v866 = vld [vmem:[%s1 + $0x420] sm:$0xf]
        %v867 = vld [vmem:[%s1 + $0x424] sm:$0xf]
        %v868 = vld [vmem:[%s1 + $0x428] sm:$0xf]
        %v869 = vld [vmem:[%s1 + $0x42c] sm:$0xf]
        %v870 = vld [vmem:[%s1 + $0x430] sm:$0xf]
        %v871 = vld [vmem:[%s1 + $0x434] sm:$0xf]
        %v872 = vld [vmem:[%s1 + $0x438] sm:$0xf]
        %v873 = vld [vmem:[%s1 + $0x43c] sm:$0xf]
        %v874 = vld [vmem:[%s1 + $0x440] sm:$0xf]
        %v875 = vld [vmem:[%s1 + $0x444] sm:$0xf]
        %v876 = vld [vmem:[%s1 + $0x448] sm:$0xf]
        %v877 = vld [vmem:[%s1 + $0x44c] sm:$0xf]
        %v878 = vld [vmem:[%s1 + $0x450] sm:$0xf]
        %v879 = vld [vmem:[%s1 + $0x454] sm:$0xf]
        %v880 = vld [vmem:[%s1 + $0x458] sm:$0xf]
        %v881 = vld [vmem:[%s1 + $0x45c] sm:$0xf]
        %v882 = vld [vmem:[%s1 + $0x460] sm:$0xf]
        %v883 = vld [vmem:[%s1 + $0x464] sm:$0xf]
        %v884 = vld [vmem:[%s1 + $0x468] sm:$0xf]
        %v885 = vld [vmem:[%s1 + $0x46c] sm:$0xf]
        %v886 = vld [vmem:[%s1 + $0x470] sm:$0xf]
        %v887 = vld [vmem:[%s1 + $0x474] sm:$0xf]
        %v888 = vld [vmem:[%s1 + $0x478] sm:$0xf]
        %v889 = vld [vmem:[%s1 + $0x47c] sm:$0xf]
        %v890 = vld [vmem:[%s1 + $0x480] sm:$0xf]
        %v891 = vld [vmem:[%s1 + $0x484] sm:$0xf]
        %v892 = vld [vmem:[%s1 + $0x488] sm:$0xf]
        %v893 = vld [vmem:[%s1 + $0x48c] sm:$0xf]
        %v894 = vld [vmem:[%s1 + $0x490] sm:$0xf]
        %v895 = vld [vmem:[%s1 + $0x494] sm:$0xf]
        %v896 = vld [vmem:[%s1 + $0x498] sm:$0xf]
        %v897 = vld [vmem:[%s1 + $0x49c] sm:$0xf]
        %v898 = vld [vmem:[%s1 + $0x4a0] sm:$0xf]
        %v899 = vld [vmem:[%s1 + $0x4a4] sm:$0xf]
        %v900 = vld [vmem:[%s1 + $0x4a8] sm:$0xf]
        %v901 = vld [vmem:[%s1 + $0x4ac] sm:$0xf]
        %v902 = vld [vmem:[%s1 + $0x4b0] sm:$0xf]
        %v903 = vld [vmem:[%s1 + $0x4b4] sm:$0xf]
        %v904 = vld [vmem:[%s1 + $0x4b8] sm:$0xf]
        %v905 = vld [vmem:[%s1 + $0x4bc] sm:$0xf]
        %v906 = vld [vmem:[%s1 + $0x4c0] sm:$0xf]
        %v907 = vld [vmem:[%s1 + $0x4c4] sm:$0xf]
        %v908 = vld [vmem:[%s1 + $0x4c8] sm:$0xf]
        %v909 = vld [vmem:[%s1 + $0x4cc] sm:$0xf]
        %v910 = vld [vmem:[%s1 + $0x4d0] sm:$0xf]
        %v911 = vld [vmem:[%s1 + $0x4d4] sm:$0xf]
        %v912 = vld [vmem:[%s1 + $0x4d8] sm:$0xf]
        %v913 = vld [vmem:[%s1 + $0x4dc] sm:$0xf]
        %v914 = vld [vmem:[%s1 + $0x4e0] sm:$0xf]
        %v915 = vld [vmem:[%s1 + $0x4e4] sm:$0xf]
        %v916 = vld [vmem:[%s1 + $0x4e8] sm:$0xf]
        %v917 = vld [vmem:[%s1 + $0x4ec] sm:$0xf]
        %v918 = vld [vmem:[%s1 + $0x4f0] sm:$0xf]
        %v919 = vld [vmem:[%s1 + $0x4f4] sm:$0xf]
        %v920 = vld [vmem:[%s1 + $0x4f8] sm:$0xf]
        %v921 = vld [vmem:[%s1 + $0x4fc] sm:$0xf]
        %v922 = vld [vmem:[%s1 + $0x500] sm:$0xf]
        %v923 = vld [vmem:[%s1 + $0x504] sm:$0xf]
        %v924 = vld [vmem:[%s1 + $0x508] sm:$0xf]
        %v925 = vld [vmem:[%s1 + $0x50c] sm:$0xf]
        %v926 = vld [vmem:[%s1 + $0x510] sm:$0xf]
        %v927 = vld [vmem:[%s1 + $0x514] sm:$0xf]
        %v928 = vld [vmem:[%s1 + $0x518] sm:$0xf]
        %v929 = vld [vmem:[%s1 + $0x51c] sm:$0xf]
        %v930 = vld [vmem:[%s1 + $0x520] sm:$0xf]
        %v931 = vld [vmem:[%s1 + $0x524] sm:$0xf]
        %v932 = vld [vmem:[%s1 + $0x528] sm:$0xf]
        %v933 = vld [vmem:[%s1 + $0x52c] sm:$0xf]
        %v934 = vld [vmem:[%s1 + $0x530] sm:$0xf]
        %v935 = vld [vmem:[%s1 + $0x534] sm:$0xf]
        %v936 = vld [vmem:[%s1 + $0x538] sm:$0xf]
        %v937 = vld [vmem:[%s1 + $0x53c] sm:$0xf]
        %v938 = vld [vmem:[%s1 + $0x540] sm:$0xf]
        %v939 = vld [vmem:[%s1 + $0x544] sm:$0xf]
        %v940 = vld [vmem:[%s1 + $0x548] sm:$0xf]
        %v941 = vld [vmem:[%s1 + $0x54c] sm:$0xf]
        %v942 = vld [vmem:[%s1 + $0x550] sm:$0xf]
        %v943 = vld [vmem:[%s1 + $0x554] sm:$0xf]
        %v944 = vld [vmem:[%s1 + $0x558] sm:$0xf]
        %v945 = vld [vmem:[%s1 + $0x55c] sm:$0xf]
        %v946 = vld [vmem:[%s1 + $0x560] sm:$0xf]
        %v947 = vld [vmem:[%s1 + $0x564] sm:$0xf]
        %v948 = vld [vmem:[%s1 + $0x568] sm:$0xf]
        %v949 = vld [vmem:[%s1 + $0x56c] sm:$0xf]
        %v950 = vld [vmem:[%s1 + $0x570] sm:$0xf]
        %v951 = vld [vmem:[%s1 + $0x574] sm:$0xf]
        %v952 = vld [vmem:[%s1 + $0x578] sm:$0xf]
        %v953 = vld [vmem:[%s1 + $0x57c] sm:$0xf]
        %v954 = vld [vmem:[%s1 + $0x580] sm:$0xf]
        %v955 = vld [vmem:[%s1 + $0x584] sm:$0xf]
        %v956 = vld [vmem:[%s1 + $0x588] sm:$0xf]
        %v957 = vld [vmem:[%s1 + $0x58c] sm:$0xf]
        %v958 = vld [vmem:[%s1 + $0x590] sm:$0xf]
        %v959 = vld [vmem:[%s1 + $0x594] sm:$0xf]
        %v960 = vld [vmem:[%s1 + $0x598] sm:$0xf]
        %v961 = vld [vmem:[%s1 + $0x59c] sm:$0xf]
        %v962 = vld [vmem:[%s1 + $0x5a0] sm:$0xf]
        %v963 = vld [vmem:[%s1 + $0x5a4] sm:$0xf]
        %v964 = vld [vmem:[%s1 + $0x5a8] sm:$0xf]
        %v965 = vld [vmem:[%s1 + $0x5ac] sm:$0xf]
        %v966 = vld [vmem:[%s1 + $0x5b0] sm:$0xf]
        %v967 = vld [vmem:[%s1 + $0x5b4] sm:$0xf]
        %v968 = vld [vmem:[%s1 + $0x5b8] sm:$0xf]
        %v969 = vld [vmem:[%s1 + $0x5bc] sm:$0xf]
        %v970 = vld [vmem:[%s1 + $0x5c0] sm:$0xf]
        %v971 = vld [vmem:[%s1 + $0x5c4] sm:$0xf]
        %v972 = vld [vmem:[%s1 + $0x5c8] sm:$0xf]
        %v973 = vld [vmem:[%s1 + $0x5cc] sm:$0xf]
        %v974 = vld [vmem:[%s1 + $0x5d0] sm:$0xf]
        %v975 = vld [vmem:[%s1 + $0x5d4] sm:$0xf]
        %v976 = vld [vmem:[%s1 + $0x5d8] sm:$0xf]
        %v977 = vld [vmem:[%s1 + $0x5dc] sm:$0xf]
        %v978 = vld [vmem:[%s1 + $0x5e0] sm:$0xf]
        %v979 = vld [vmem:[%s1 + $0x5e4] sm:$0xf]
        %v980 = vld [vmem:[%s1 + $0x5e8] sm:$0xf]
        %v981 = vld [vmem:[%s1 + $0x5ec] sm:$0xf]
        %v982 = vld [vmem:[%s1 + $0x5f0] sm:$0xf]
        %v983 = vld [vmem:[%s1 + $0x5f4] sm:$0xf]
        %v984 = vld [vmem:[%s1 + $0x5f8] sm:$0xf]
        %v985 = vld [vmem:[%s1 + $0x5fc] sm:$0xf]
        %v986 = vld [vmem:[%s1 + $0x600] sm:$0xf]
        %v987 = vld [vmem:[%s1 + $0x604] sm:$0xf]
        %v988 = vld [vmem:[%s1 + $0x608] sm:$0xf]
        %v989 = vld [vmem:[%s1 + $0x60c] sm:$0xf]
        %v990 = vld [vmem:[%s1 + $0x610] sm:$0xf]
        %v991 = vld [vmem:[%s1 + $0x614] sm:$0xf]
        %v992 = vld [vmem:[%s1 + $0x618] sm:$0xf]
        %v993 = vld [vmem:[%s1 + $0x61c] sm:$0xf]
        %v994 = vld [vmem:[%s1 + $0x620] sm:$0xf]
        %v995 = vld [vmem:[%s1 + $0x624] sm:$0xf]
        %v996 = vld [vmem:[%s1 + $0x628] sm:$0xf]
        %v997 = vld [vmem:[%s1 + $0x62c] sm:$0xf]
        %v998 = vld [vmem:[%s1 + $0x630] sm:$0xf]
        %v999 = vld [vmem:[%s1 + $0x634] sm:$0xf]
        %v1000 = vld [vmem:[%s1 + $0x638] sm:$0xf]
        %v1001 = vld [vmem:[%s1 + $0x63c] sm:$0xf]
        %v1002 = vld [vmem:[%s2] sm:$0x1]
        %v1004 = vlaneseq
        %v1005 = vshrl.u32 %v1004, 7
        %v1006 = vsub.s32 0, %v1005
        %v1007 = vrot.slane %v1002, %v1006
        %v1334 = vunpack.c.l.b16 %v277
        %v1335 = vunpack.c.h.b16 %v277
        %v1336 = vunpack.c.l.b16 %v278
        %v1337 = vunpack.c.h.b16 %v278
        %v1338 = vunpack.c.l.b16 %v279
        %v1339 = vunpack.c.h.b16 %v279
        %v1340 = vunpack.c.l.b16 %v280
        %v1341 = vunpack.c.h.b16 %v280
        %v1342 = vunpack.c.l.b16 %v281
        %v1343 = vunpack.c.h.b16 %v281
        %v1344 = vunpack.c.l.b16 %v282
        %v1345 = vunpack.c.h.b16 %v282
        %v1346 = vunpack.c.l.b16 %v283
        %v1347 = vunpack.c.h.b16 %v283
        %v1348 = vunpack.c.l.b16 %v284
        %v1349 = vunpack.c.h.b16 %v284
        %v1350 = vunpack.c.l.b16 %v285
        %v1351 = vunpack.c.h.b16 %v285
        %v1352 = vunpack.c.l.b16 %v286
        %v1353 = vunpack.c.h.b16 %v286
        %v1354 = vunpack.c.l.b16 %v287
        %v1355 = vunpack.c.h.b16 %v287
        %v1356 = vunpack.c.l.b16 %v288
        %v1357 = vunpack.c.h.b16 %v288
        %v1358 = vunpack.c.l.b16 %v289
        %v1359 = vunpack.c.l.b16 %v290
        %v1360 = vunpack.c.h.b16 %v290
        %v1361 = vunpack.c.l.b16 %v291
        %v1362 = vunpack.c.h.b16 %v291
        %v1363 = vunpack.c.l.b16 %v292
        %v1364 = vunpack.c.h.b16 %v292
        %v1365 = vunpack.c.l.b16 %v293
        %v1366 = vunpack.c.h.b16 %v293
        %v1367 = vunpack.c.l.b16 %v294
        %v1368 = vunpack.c.h.b16 %v294
        %v1369 = vunpack.c.l.b16 %v295
        %v1370 = vunpack.c.h.b16 %v295
        %v1371 = vunpack.c.l.b16 %v296
        %v1372 = vunpack.c.h.b16 %v296
        %v1373 = vunpack.c.l.b16 %v297
        %v1374 = vunpack.c.h.b16 %v297
        %v1375 = vunpack.c.l.b16 %v298
        %v1376 = vunpack.c.h.b16 %v298
        %v1377 = vunpack.c.l.b16 %v299
        %v1378 = vunpack.c.h.b16 %v299
        %v1379 = vunpack.c.l.b16 %v300
        %v1380 = vunpack.c.h.b16 %v300
        %v1381 = vunpack.c.l.b16 %v301
        %v1382 = vunpack.c.h.b16 %v301
        %v1383 = vunpack.c.l.b16 %v302
        %v1384 = vunpack.c.l.b16 %v303
        %v1385 = vunpack.c.h.b16 %v303
        %v1386 = vunpack.c.l.b16 %v304
        %v1387 = vunpack.c.h.b16 %v304
        %v1388 = vunpack.c.l.b16 %v305
        %v1389 = vunpack.c.h.b16 %v305
        %v1390 = vunpack.c.l.b16 %v306
        %v1391 = vunpack.c.h.b16 %v306
        %v1392 = vunpack.c.l.b16 %v307
        %v1393 = vunpack.c.h.b16 %v307
        %v1394 = vunpack.c.l.b16 %v308
        %v1395 = vunpack.c.h.b16 %v308
        %v1396 = vunpack.c.l.b16 %v309
        %v1397 = vunpack.c.h.b16 %v309
        %v1398 = vunpack.c.l.b16 %v310
        %v1399 = vunpack.c.h.b16 %v310
        %v1400 = vunpack.c.l.b16 %v311
        %v1401 = vunpack.c.h.b16 %v311
        %v1402 = vunpack.c.l.b16 %v312
        %v1403 = vunpack.c.h.b16 %v312
        %v1404 = vunpack.c.l.b16 %v313
        %v1405 = vunpack.c.h.b16 %v313
        %v1406 = vunpack.c.l.b16 %v314
        %v1407 = vunpack.c.h.b16 %v314
        %v1408 = vunpack.c.l.b16 %v315
        %v1409 = vunpack.c.l.b16 %v316
        %v1410 = vunpack.c.h.b16 %v316
        %v1411 = vunpack.c.l.b16 %v317
        %v1412 = vunpack.c.h.b16 %v317
        %v1413 = vunpack.c.l.b16 %v318
        %v1414 = vunpack.c.h.b16 %v318
        %v1415 = vunpack.c.l.b16 %v319
        %v1416 = vunpack.c.h.b16 %v319
        %v1417 = vunpack.c.l.b16 %v320
        %v1418 = vunpack.c.h.b16 %v320
        %v1419 = vunpack.c.l.b16 %v321
        %v1420 = vunpack.c.h.b16 %v321
        %v1421 = vunpack.c.l.b16 %v322
        %v1422 = vunpack.c.h.b16 %v322
        %v1423 = vunpack.c.l.b16 %v323
        %v1424 = vunpack.c.h.b16 %v323
        %v1425 = vunpack.c.l.b16 %v324
        %v1426 = vunpack.c.h.b16 %v324
        %v1427 = vunpack.c.l.b16 %v325
        %v1428 = vunpack.c.h.b16 %v325
        %v1429 = vunpack.c.l.b16 %v326
        %v1430 = vunpack.c.h.b16 %v326
        %v1431 = vunpack.c.l.b16 %v327
        %v1432 = vunpack.c.h.b16 %v327
        %v1433 = vunpack.c.l.b16 %v328
        %v1434 = vunpack.c.l.b16 %v329
        %v1435 = vunpack.c.h.b16 %v329
        %v1436 = vunpack.c.l.b16 %v330
        %v1437 = vunpack.c.h.b16 %v330
        %v1438 = vunpack.c.l.b16 %v331
        %v1439 = vunpack.c.h.b16 %v331
        %v1440 = vunpack.c.l.b16 %v332
        %v1441 = vunpack.c.h.b16 %v332
        %v1442 = vunpack.c.l.b16 %v333
        %v1443 = vunpack.c.h.b16 %v333
        %v1444 = vunpack.c.l.b16 %v334
        %v1445 = vunpack.c.h.b16 %v334
        %v1446 = vunpack.c.l.b16 %v335
        %v1447 = vunpack.c.h.b16 %v335
        %v1448 = vunpack.c.l.b16 %v336
        %v1449 = vunpack.c.h.b16 %v336
        %v1450 = vunpack.c.l.b16 %v337
        %v1451 = vunpack.c.h.b16 %v337
        %v1452 = vunpack.c.l.b16 %v338
        %v1453 = vunpack.c.h.b16 %v338
        %v1454 = vunpack.c.l.b16 %v339
        %v1455 = vunpack.c.h.b16 %v339
        %v1456 = vunpack.c.l.b16 %v340
        %v1457 = vunpack.c.h.b16 %v340
        %v1458 = vunpack.c.l.b16 %v341
        %v1459 = vunpack.c.l.b16 %v342
        %v1460 = vunpack.c.h.b16 %v342
        %v1461 = vunpack.c.l.b16 %v343
        %v1462 = vunpack.c.h.b16 %v343
        %v1463 = vunpack.c.l.b16 %v344
        %v1464 = vunpack.c.h.b16 %v344
        %v1465 = vunpack.c.l.b16 %v345
        %v1466 = vunpack.c.h.b16 %v345
        %v1467 = vunpack.c.l.b16 %v346
        %v1468 = vunpack.c.h.b16 %v346
        %v1469 = vunpack.c.l.b16 %v347
        %v1470 = vunpack.c.h.b16 %v347
        %v1471 = vunpack.c.l.b16 %v348
        %v1472 = vunpack.c.h.b16 %v348
        %v1473 = vunpack.c.l.b16 %v349
        %v1474 = vunpack.c.h.b16 %v349
        %v1475 = vunpack.c.l.b16 %v350
        %v1476 = vunpack.c.h.b16 %v350
        %v1477 = vunpack.c.l.b16 %v351
        %v1478 = vunpack.c.h.b16 %v351
        %v1479 = vunpack.c.l.b16 %v352
        %v1480 = vunpack.c.h.b16 %v352
        %v1481 = vunpack.c.l.b16 %v353
        %v1482 = vunpack.c.h.b16 %v353
        %v1483 = vunpack.c.l.b16 %v354
        %v1484 = vunpack.c.l.b16 %v355
        %v1485 = vunpack.c.h.b16 %v355
        %v1486 = vunpack.c.l.b16 %v356
        %v1487 = vunpack.c.h.b16 %v356
        %v1488 = vunpack.c.l.b16 %v357
        %v1489 = vunpack.c.h.b16 %v357
        %v1490 = vunpack.c.l.b16 %v358
        %v1491 = vunpack.c.h.b16 %v358
        %v1492 = vunpack.c.l.b16 %v359
        %v1493 = vunpack.c.h.b16 %v359
        %v1494 = vunpack.c.l.b16 %v360
        %v1495 = vunpack.c.h.b16 %v360
        %v1496 = vunpack.c.l.b16 %v361
        %v1497 = vunpack.c.h.b16 %v361
        %v1498 = vunpack.c.l.b16 %v362
        %v1499 = vunpack.c.h.b16 %v362
        %v1500 = vunpack.c.l.b16 %v363
        %v1501 = vunpack.c.h.b16 %v363
        %v1502 = vunpack.c.l.b16 %v364
        %v1503 = vunpack.c.h.b16 %v364
        %v1504 = vunpack.c.l.b16 %v365
        %v1505 = vunpack.c.h.b16 %v365
        %v1506 = vunpack.c.l.b16 %v366
        %v1507 = vunpack.c.h.b16 %v366
        %v1508 = vunpack.c.l.b16 %v367
        %v1509 = vunpack.c.l.b16 %v368
        %v1510 = vunpack.c.h.b16 %v368
        %v1511 = vunpack.c.l.b16 %v369
        %v1512 = vunpack.c.h.b16 %v369
        %v1513 = vunpack.c.l.b16 %v370
        %v1514 = vunpack.c.h.b16 %v370
        %v1515 = vunpack.c.l.b16 %v371
        %v1516 = vunpack.c.h.b16 %v371
        %v1517 = vunpack.c.l.b16 %v372
        %v1518 = vunpack.c.h.b16 %v372
        %v1519 = vunpack.c.l.b16 %v373
        %v1520 = vunpack.c.h.b16 %v373
        %v1521 = vunpack.c.l.b16 %v374
        %v1522 = vunpack.c.h.b16 %v374
        %v1523 = vunpack.c.l.b16 %v375
        %v1524 = vunpack.c.h.b16 %v375
        %v1525 = vunpack.c.l.b16 %v376
        %v1526 = vunpack.c.h.b16 %v376
        %v1527 = vunpack.c.l.b16 %v377
        %v1528 = vunpack.c.h.b16 %v377
        %v1529 = vunpack.c.l.b16 %v378
        %v1530 = vunpack.c.h.b16 %v378
        %v1531 = vunpack.c.l.b16 %v379
        %v1532 = vunpack.c.h.b16 %v379
        %v1533 = vunpack.c.l.b16 %v380
        %v1534 = vunpack.c.l.b16 %v381
        %v1535 = vunpack.c.h.b16 %v381
        %v1536 = vunpack.c.l.b16 %v382
        %v1537 = vunpack.c.h.b16 %v382
        %v1538 = vunpack.c.l.b16 %v383
        %v1539 = vunpack.c.h.b16 %v383
        %v1540 = vunpack.c.l.b16 %v384
        %v1541 = vunpack.c.h.b16 %v384
        %v1542 = vunpack.c.l.b16 %v385
        %v1543 = vunpack.c.h.b16 %v385
        %v1544 = vunpack.c.l.b16 %v386
        %v1545 = vunpack.c.h.b16 %v386
        %v1546 = vunpack.c.l.b16 %v387
        %v1547 = vunpack.c.h.b16 %v387
        %v1548 = vunpack.c.l.b16 %v388
        %v1549 = vunpack.c.h.b16 %v388
        %v1550 = vunpack.c.l.b16 %v389
        %v1551 = vunpack.c.h.b16 %v389
        %v1552 = vunpack.c.l.b16 %v390
        %v1553 = vunpack.c.h.b16 %v390
        %v1554 = vunpack.c.l.b16 %v391
        %v1555 = vunpack.c.h.b16 %v391
        %v1556 = vunpack.c.l.b16 %v392
        %v1557 = vunpack.c.h.b16 %v392
        %v1558 = vunpack.c.l.b16 %v393
        %v1559 = vunpack.c.l.b16 %v394
        %v1560 = vunpack.c.h.b16 %v394
        %v1561 = vunpack.c.l.b16 %v395
        %v1562 = vunpack.c.h.b16 %v395
        %v1563 = vunpack.c.l.b16 %v396
        %v1564 = vunpack.c.h.b16 %v396
        %v1565 = vunpack.c.l.b16 %v397
        %v1566 = vunpack.c.h.b16 %v397
        %v1567 = vunpack.c.l.b16 %v398
        %v1568 = vunpack.c.h.b16 %v398
        %v1569 = vunpack.c.l.b16 %v399
        %v1570 = vunpack.c.h.b16 %v399
        %v1571 = vunpack.c.l.b16 %v400
        %v1572 = vunpack.c.h.b16 %v400
        %v1573 = vunpack.c.l.b16 %v401
        %v1574 = vunpack.c.h.b16 %v401
        %v1575 = vunpack.c.l.b16 %v402
        %v1576 = vunpack.c.h.b16 %v402
        %v1577 = vunpack.c.l.b16 %v403
        %v1578 = vunpack.c.h.b16 %v403
        %v1579 = vunpack.c.l.b16 %v404
        %v1580 = vunpack.c.h.b16 %v404
        %v1581 = vunpack.c.l.b16 %v405
        %v1582 = vunpack.c.h.b16 %v405
        %v1583 = vunpack.c.l.b16 %v406
        %v1584 = vunpack.c.l.b16 %v407
        %v1585 = vunpack.c.h.b16 %v407
        %v1586 = vunpack.c.l.b16 %v408
        %v1587 = vunpack.c.h.b16 %v408
        %v1588 = vunpack.c.l.b16 %v409
        %v1589 = vunpack.c.h.b16 %v409
        %v1590 = vunpack.c.l.b16 %v410
        %v1591 = vunpack.c.h.b16 %v410
        %v1592 = vunpack.c.l.b16 %v411
        %v1593 = vunpack.c.h.b16 %v411
        %v1594 = vunpack.c.l.b16 %v412
        %v1595 = vunpack.c.h.b16 %v412
        %v1596 = vunpack.c.l.b16 %v413
        %v1597 = vunpack.c.h.b16 %v413
        %v1598 = vunpack.c.l.b16 %v414
        %v1599 = vunpack.c.h.b16 %v414
        %v1600 = vunpack.c.l.b16 %v415
        %v1601 = vunpack.c.h.b16 %v415
        %v1602 = vunpack.c.l.b16 %v416
        %v1603 = vunpack.c.h.b16 %v416
        %v1604 = vunpack.c.l.b16 %v417
        %v1605 = vunpack.c.h.b16 %v417
        %v1606 = vunpack.c.l.b16 %v418
        %v1607 = vunpack.c.h.b16 %v418
        %v1608 = vunpack.c.l.b16 %v419
        %v1609 = vunpack.c.l.b16 %v420
        %v1610 = vunpack.c.h.b16 %v420
        %v1611 = vunpack.c.l.b16 %v421
        %v1612 = vunpack.c.h.b16 %v421
        %v1613 = vunpack.c.l.b16 %v422
        %v1614 = vunpack.c.h.b16 %v422
        %v1615 = vunpack.c.l.b16 %v423
        %v1616 = vunpack.c.h.b16 %v423
        %v1617 = vunpack.c.l.b16 %v424
        %v1618 = vunpack.c.h.b16 %v424
        %v1619 = vunpack.c.l.b16 %v425
        %v1620 = vunpack.c.h.b16 %v425
        %v1621 = vunpack.c.l.b16 %v426
        %v1622 = vunpack.c.h.b16 %v426
        %v1623 = vunpack.c.l.b16 %v427
        %v1624 = vunpack.c.h.b16 %v427
        %v1625 = vunpack.c.l.b16 %v428
        %v1626 = vunpack.c.h.b16 %v428
        %v1627 = vunpack.c.l.b16 %v429
        %v1628 = vunpack.c.h.b16 %v429
        %v1629 = vunpack.c.l.b16 %v430
        %v1630 = vunpack.c.h.b16 %v430
        %v1631 = vunpack.c.l.b16 %v431
        %v1632 = vunpack.c.h.b16 %v431
        %v1633 = vunpack.c.l.b16 %v432
        %v1634 = vunpack.c.l.b16 %v433
        %v1635 = vunpack.c.h.b16 %v433
        %v1636 = vunpack.c.l.b16 %v434
        %v1637 = vunpack.c.h.b16 %v434
        %v1638 = vunpack.c.l.b16 %v435
        %v1639 = vunpack.c.h.b16 %v435
        %v1640 = vunpack.c.l.b16 %v436
        %v1641 = vunpack.c.h.b16 %v436
        %v1642 = vunpack.c.l.b16 %v437
        %v1643 = vunpack.c.h.b16 %v437
        %v1644 = vunpack.c.l.b16 %v438
        %v1645 = vunpack.c.h.b16 %v438
        %v1646 = vunpack.c.l.b16 %v439
        %v1647 = vunpack.c.h.b16 %v439
        %v1648 = vunpack.c.l.b16 %v440
        %v1649 = vunpack.c.h.b16 %v440
        %v1650 = vunpack.c.l.b16 %v441
        %v1651 = vunpack.c.h.b16 %v441
        %v1652 = vunpack.c.l.b16 %v442
        %v1653 = vunpack.c.h.b16 %v442
        %v1654 = vunpack.c.l.b16 %v443
        %v1655 = vunpack.c.h.b16 %v443
        %v1656 = vunpack.c.l.b16 %v444
        %v1657 = vunpack.c.h.b16 %v444
        %v1658 = vunpack.c.l.b16 %v445
        %v1659 = vunpack.c.l.b16 %v446
        %v1660 = vunpack.c.h.b16 %v446
        %v1661 = vunpack.c.l.b16 %v447
        %v1662 = vunpack.c.h.b16 %v447
        %v1663 = vunpack.c.l.b16 %v448
        %v1664 = vunpack.c.h.b16 %v448
        %v1665 = vunpack.c.l.b16 %v449
        %v1666 = vunpack.c.h.b16 %v449
        %v1667 = vunpack.c.l.b16 %v450
        %v1668 = vunpack.c.h.b16 %v450
        %v1669 = vunpack.c.l.b16 %v451
        %v1670 = vunpack.c.h.b16 %v451
        %v1671 = vunpack.c.l.b16 %v452
        %v1672 = vunpack.c.h.b16 %v452
        %v1673 = vunpack.c.l.b16 %v453
        %v1674 = vunpack.c.h.b16 %v453
        %v1675 = vunpack.c.l.b16 %v454
        %v1676 = vunpack.c.h.b16 %v454
        %v1677 = vunpack.c.l.b16 %v455
        %v1678 = vunpack.c.h.b16 %v455
        %v1679 = vunpack.c.l.b16 %v456
        %v1680 = vunpack.c.h.b16 %v456
        %v1681 = vunpack.c.l.b16 %v457
        %v1682 = vunpack.c.h.b16 %v457
        %v1683 = vunpack.c.l.b16 %v458
        %v1684 = vunpack.c.l.b16 %v459
        %v1685 = vunpack.c.h.b16 %v459
        %v1686 = vunpack.c.l.b16 %v460
        %v1687 = vunpack.c.h.b16 %v460
        %v1688 = vunpack.c.l.b16 %v461
        %v1689 = vunpack.c.h.b16 %v461
        %v1690 = vunpack.c.l.b16 %v462
        %v1691 = vunpack.c.h.b16 %v462
        %v1692 = vunpack.c.l.b16 %v463
        %v1693 = vunpack.c.h.b16 %v463
        %v1694 = vunpack.c.l.b16 %v464
        %v1695 = vunpack.c.h.b16 %v464
        %v1696 = vunpack.c.l.b16 %v465
        %v1697 = vunpack.c.h.b16 %v465
        %v1698 = vunpack.c.l.b16 %v466
        %v1699 = vunpack.c.h.b16 %v466
        %v1700 = vunpack.c.l.b16 %v467
        %v1701 = vunpack.c.h.b16 %v467
        %v1702 = vunpack.c.l.b16 %v468
        %v1703 = vunpack.c.h.b16 %v468
        %v1704 = vunpack.c.l.b16 %v469
        %v1705 = vunpack.c.h.b16 %v469
        %v1706 = vunpack.c.l.b16 %v470
        %v1707 = vunpack.c.h.b16 %v470
        %v1708 = vunpack.c.l.b16 %v471
        %v1709 = vunpack.c.l.b16 %v472
        %v1710 = vunpack.c.h.b16 %v472
        %v1711 = vunpack.c.l.b16 %v473
        %v1712 = vunpack.c.h.b16 %v473
        %v1713 = vunpack.c.l.b16 %v474
        %v1714 = vunpack.c.h.b16 %v474
        %v1715 = vunpack.c.l.b16 %v475
        %v1716 = vunpack.c.h.b16 %v475
        %v1717 = vunpack.c.l.b16 %v476
        %v1718 = vunpack.c.h.b16 %v476
        %v1719 = vunpack.c.l.b16 %v477
        %v1720 = vunpack.c.h.b16 %v477
        %v1721 = vunpack.c.l.b16 %v478
        %v1722 = vunpack.c.h.b16 %v478
        %v1723 = vunpack.c.l.b16 %v479
        %v1724 = vunpack.c.h.b16 %v479
        %v1725 = vunpack.c.l.b16 %v480
        %v1726 = vunpack.c.h.b16 %v480
        %v1727 = vunpack.c.l.b16 %v481
        %v1728 = vunpack.c.h.b16 %v481
        %v1729 = vunpack.c.l.b16 %v482
        %v1730 = vunpack.c.h.b16 %v482
        %v1731 = vunpack.c.l.b16 %v483
        %v1732 = vunpack.c.h.b16 %v483
        %v1733 = vunpack.c.l.b16 %v484
        %v1734 = vunpack.c.l.b16 %v485
        %v1735 = vunpack.c.h.b16 %v485
        %v1736 = vunpack.c.l.b16 %v486
        %v1737 = vunpack.c.h.b16 %v486
        %v1738 = vunpack.c.l.b16 %v487
        %v1739 = vunpack.c.h.b16 %v487
        %v1740 = vunpack.c.l.b16 %v488
        %v1741 = vunpack.c.h.b16 %v488
        %v1742 = vunpack.c.l.b16 %v489
        %v1743 = vunpack.c.h.b16 %v489
        %v1744 = vunpack.c.l.b16 %v490
        %v1745 = vunpack.c.h.b16 %v490
        %v1746 = vunpack.c.l.b16 %v491
        %v1747 = vunpack.c.h.b16 %v491
        %v1748 = vunpack.c.l.b16 %v492
        %v1749 = vunpack.c.h.b16 %v492
        %v1750 = vunpack.c.l.b16 %v493
        %v1751 = vunpack.c.h.b16 %v493
        %v1752 = vunpack.c.l.b16 %v494
        %v1753 = vunpack.c.h.b16 %v494
        %v1754 = vunpack.c.l.b16 %v495
        %v1755 = vunpack.c.h.b16 %v495
        %v1756 = vunpack.c.l.b16 %v496
        %v1757 = vunpack.c.h.b16 %v496
        %v1758 = vunpack.c.l.b16 %v497
        %v1759 = vunpack.c.l.b16 %v498
        %v1760 = vunpack.c.h.b16 %v498
        %v1761 = vunpack.c.l.b16 %v499
        %v1762 = vunpack.c.h.b16 %v499
        %v1763 = vunpack.c.l.b16 %v500
        %v1764 = vunpack.c.h.b16 %v500
        %v1765 = vunpack.c.l.b16 %v501
        %v1766 = vunpack.c.h.b16 %v501
        %v1767 = vunpack.c.l.b16 %v502
        %v1768 = vunpack.c.h.b16 %v502
        %v1769 = vunpack.c.l.b16 %v503
        %v1770 = vunpack.c.h.b16 %v503
        %v1771 = vunpack.c.l.b16 %v504
        %v1772 = vunpack.c.h.b16 %v504
        %v1773 = vunpack.c.l.b16 %v505
        %v1774 = vunpack.c.h.b16 %v505
        %v1775 = vunpack.c.l.b16 %v506
        %v1776 = vunpack.c.h.b16 %v506
        %v1777 = vunpack.c.l.b16 %v507
        %v1778 = vunpack.c.h.b16 %v507
        %v1779 = vunpack.c.l.b16 %v508
        %v1780 = vunpack.c.h.b16 %v508
        %v1781 = vunpack.c.l.b16 %v509
        %v1782 = vunpack.c.h.b16 %v509
        %v1783 = vunpack.c.l.b16 %v510
        %v1784 = vunpack.c.l.b16 %v511
        %v1785 = vunpack.c.h.b16 %v511
        %v1786 = vunpack.c.l.b16 %v512
        %v1787 = vunpack.c.h.b16 %v512
        %v1788 = vunpack.c.l.b16 %v513
        %v1789 = vunpack.c.h.b16 %v513
        %v1790 = vunpack.c.l.b16 %v514
        %v1791 = vunpack.c.h.b16 %v514
        %v1792 = vunpack.c.l.b16 %v515
        %v1793 = vunpack.c.h.b16 %v515
        %v1794 = vunpack.c.l.b16 %v516
        %v1795 = vunpack.c.h.b16 %v516
        %v1796 = vunpack.c.l.b16 %v517
        %v1797 = vunpack.c.h.b16 %v517
        %v1798 = vunpack.c.l.b16 %v518
        %v1799 = vunpack.c.h.b16 %v518
        %v1800 = vunpack.c.l.b16 %v519
        %v1801 = vunpack.c.h.b16 %v519
        %v1802 = vunpack.c.l.b16 %v520
        %v1803 = vunpack.c.h.b16 %v520
        %v1804 = vunpack.c.l.b16 %v521
        %v1805 = vunpack.c.h.b16 %v521
        %v1806 = vunpack.c.l.b16 %v522
        %v1807 = vunpack.c.h.b16 %v522
        %v1808 = vunpack.c.l.b16 %v523
        %v1809 = vunpack.c.l.b16 %v524
        %v1810 = vunpack.c.h.b16 %v524
        %v1811 = vunpack.c.l.b16 %v525
        %v1812 = vunpack.c.h.b16 %v525
        %v1813 = vunpack.c.l.b16 %v526
        %v1814 = vunpack.c.h.b16 %v526
        %v1815 = vunpack.c.l.b16 %v527
        %v1816 = vunpack.c.h.b16 %v527
        %v1817 = vunpack.c.l.b16 %v528
        %v1818 = vunpack.c.h.b16 %v528
        %v1819 = vunpack.c.l.b16 %v529
        %v1820 = vunpack.c.h.b16 %v529
        %v1821 = vunpack.c.l.b16 %v530
        %v1822 = vunpack.c.h.b16 %v530
        %v1823 = vunpack.c.l.b16 %v531
        %v1824 = vunpack.c.h.b16 %v531
        %v1825 = vunpack.c.l.b16 %v532
        %v1826 = vunpack.c.h.b16 %v532
        %v1827 = vunpack.c.l.b16 %v533
        %v1828 = vunpack.c.h.b16 %v533
        %v1829 = vunpack.c.l.b16 %v534
        %v1830 = vunpack.c.h.b16 %v534
        %v1831 = vunpack.c.l.b16 %v535
        %v1832 = vunpack.c.h.b16 %v535
        %v1833 = vunpack.c.l.b16 %v536
        %v1834 = vunpack.c.l.b16 %v537
        %v1835 = vunpack.c.h.b16 %v537
        %v1836 = vunpack.c.l.b16 %v538
        %v1837 = vunpack.c.h.b16 %v538
        %v1838 = vunpack.c.l.b16 %v539
        %v1839 = vunpack.c.h.b16 %v539
        %v1840 = vunpack.c.l.b16 %v540
        %v1841 = vunpack.c.h.b16 %v540
        %v1842 = vunpack.c.l.b16 %v541
        %v1843 = vunpack.c.h.b16 %v541
        %v1844 = vunpack.c.l.b16 %v542
        %v1845 = vunpack.c.h.b16 %v542
        %v1846 = vunpack.c.l.b16 %v543
        %v1847 = vunpack.c.h.b16 %v543
        %v1848 = vunpack.c.l.b16 %v544
        %v1849 = vunpack.c.h.b16 %v544
        %v1850 = vunpack.c.l.b16 %v545
        %v1851 = vunpack.c.h.b16 %v545
        %v1852 = vunpack.c.l.b16 %v546
        %v1853 = vunpack.c.h.b16 %v546
        %v1854 = vunpack.c.l.b16 %v547
        %v1855 = vunpack.c.h.b16 %v547
        %v1856 = vunpack.c.l.b16 %v548
        %v1857 = vunpack.c.h.b16 %v548
        %v1858 = vunpack.c.l.b16 %v549
        %v1859 = vunpack.c.l.b16 %v550
        %v1860 = vunpack.c.h.b16 %v550
        %v1861 = vunpack.c.l.b16 %v551
        %v1862 = vunpack.c.h.b16 %v551
        %v1863 = vunpack.c.l.b16 %v552
        %v1864 = vunpack.c.h.b16 %v552
        %v1865 = vunpack.c.l.b16 %v553
        %v1866 = vunpack.c.h.b16 %v553
        %v1867 = vunpack.c.l.b16 %v554
        %v1868 = vunpack.c.h.b16 %v554
        %v1869 = vunpack.c.l.b16 %v555
        %v1870 = vunpack.c.h.b16 %v555
        %v1871 = vunpack.c.l.b16 %v556
        %v1872 = vunpack.c.h.b16 %v556
        %v1873 = vunpack.c.l.b16 %v557
        %v1874 = vunpack.c.h.b16 %v557
        %v1875 = vunpack.c.l.b16 %v558
        %v1876 = vunpack.c.h.b16 %v558
        %v1877 = vunpack.c.l.b16 %v559
        %v1878 = vunpack.c.h.b16 %v559
        %v1879 = vunpack.c.l.b16 %v560
        %v1880 = vunpack.c.h.b16 %v560
        %v1881 = vunpack.c.l.b16 %v561
        %v1882 = vunpack.c.h.b16 %v561
        %v1883 = vunpack.c.l.b16 %v562
        %v1884 = vunpack.c.l.b16 %v563
        %v1885 = vunpack.c.h.b16 %v563
        %v1886 = vunpack.c.l.b16 %v564
        %v1887 = vunpack.c.h.b16 %v564
        %v1888 = vunpack.c.l.b16 %v565
        %v1889 = vunpack.c.h.b16 %v565
        %v1890 = vunpack.c.l.b16 %v566
        %v1891 = vunpack.c.h.b16 %v566
        %v1892 = vunpack.c.l.b16 %v567
        %v1893 = vunpack.c.h.b16 %v567
        %v1894 = vunpack.c.l.b16 %v568
        %v1895 = vunpack.c.h.b16 %v568
        %v1896 = vunpack.c.l.b16 %v569
        %v1897 = vunpack.c.h.b16 %v569
        %v1898 = vunpack.c.l.b16 %v570
        %v1899 = vunpack.c.h.b16 %v570
        %v1900 = vunpack.c.l.b16 %v571
        %v1901 = vunpack.c.h.b16 %v571
        %v1902 = vunpack.c.l.b16 %v572
        %v1903 = vunpack.c.h.b16 %v572
        %v1904 = vunpack.c.l.b16 %v573
        %v1905 = vunpack.c.h.b16 %v573
        %v1906 = vunpack.c.l.b16 %v574
        %v1907 = vunpack.c.h.b16 %v574
        %v1908 = vunpack.c.l.b16 %v575
        %v1909 = vunpack.c.l.b16 %v576
        %v1910 = vunpack.c.h.b16 %v576
        %v1911 = vunpack.c.l.b16 %v577
        %v1912 = vunpack.c.h.b16 %v577
        %v1913 = vunpack.c.l.b16 %v578
        %v1914 = vunpack.c.h.b16 %v578
        %v1915 = vunpack.c.l.b16 %v579
        %v1916 = vunpack.c.h.b16 %v579
        %v1917 = vunpack.c.l.b16 %v580
        %v1918 = vunpack.c.h.b16 %v580
        %v1919 = vunpack.c.l.b16 %v581
        %v1920 = vunpack.c.h.b16 %v581
        %v1921 = vunpack.c.l.b16 %v582
        %v1922 = vunpack.c.h.b16 %v582
        %v1923 = vunpack.c.l.b16 %v583
        %v1924 = vunpack.c.h.b16 %v583
        %v1925 = vunpack.c.l.b16 %v584
        %v1926 = vunpack.c.h.b16 %v584
        %v1927 = vunpack.c.l.b16 %v585
        %v1928 = vunpack.c.h.b16 %v585
        %v1929 = vunpack.c.l.b16 %v586
        %v1930 = vunpack.c.h.b16 %v586
        %v1931 = vunpack.c.l.b16 %v587
        %v1932 = vunpack.c.h.b16 %v587
        %v1933 = vunpack.c.l.b16 %v588
        %v1934 = vunpack.c.l.b16 %v589
        %v1935 = vunpack.c.h.b16 %v589
        %v1936 = vunpack.c.l.b16 %v590
        %v1937 = vunpack.c.h.b16 %v590
        %v1938 = vunpack.c.l.b16 %v591
        %v1939 = vunpack.c.h.b16 %v591
        %v1940 = vunpack.c.l.b16 %v592
        %v1941 = vunpack.c.h.b16 %v592
        %v1942 = vunpack.c.l.b16 %v593
        %v1943 = vunpack.c.h.b16 %v593
        %v1944 = vunpack.c.l.b16 %v594
        %v1945 = vunpack.c.h.b16 %v594
        %v1946 = vunpack.c.l.b16 %v595
        %v1947 = vunpack.c.h.b16 %v595
        %v1948 = vunpack.c.l.b16 %v596
        %v1949 = vunpack.c.h.b16 %v596
        %v1950 = vunpack.c.l.b16 %v597
        %v1951 = vunpack.c.h.b16 %v597
        %v1952 = vunpack.c.l.b16 %v598
        %v1953 = vunpack.c.h.b16 %v598
        %v1954 = vunpack.c.l.b16 %v599
        %v1955 = vunpack.c.h.b16 %v599
        %v1956 = vunpack.c.l.b16 %v600
        %v1957 = vunpack.c.h.b16 %v600
        %v1958 = vunpack.c.l.b16 %v601
        %v1959 = vpack.c.b16 %v1359, %v1334
        %v1960 = vpack.c.b16 %v1360, %v1335
        %v1961 = vpack.c.b16 %v1361, %v1336
        %v1962 = vpack.c.b16 %v1362, %v1337
        %v1963 = vpack.c.b16 %v1363, %v1338
        %v1964 = vpack.c.b16 %v1364, %v1339
        %v1965 = vpack.c.b16 %v1365, %v1340
        %v1966 = vpack.c.b16 %v1366, %v1341
        %v1967 = vpack.c.b16 %v1367, %v1342
        %v1968 = vpack.c.b16 %v1368, %v1343
        %v1969 = vpack.c.b16 %v1369, %v1344
        %v1970 = vpack.c.b16 %v1370, %v1345
        %v1971 = vpack.c.b16 %v1371, %v1346
        %v1972 = vpack.c.b16 %v1372, %v1347
        %v1973 = vpack.c.b16 %v1373, %v1348
        %v1974 = vpack.c.b16 %v1374, %v1349
        %v1975 = vpack.c.b16 %v1375, %v1350
        %v1976 = vpack.c.b16 %v1376, %v1351
        %v1977 = vpack.c.b16 %v1377, %v1352
        %v1978 = vpack.c.b16 %v1378, %v1353
        %v1979 = vpack.c.b16 %v1379, %v1354
        %v1980 = vpack.c.b16 %v1380, %v1355
        %v1981 = vpack.c.b16 %v1381, %v1356
        %v1982 = vpack.c.b16 %v1382, %v1357
        %v1983 = vpack.c.b16 %v1383, %v1358
        %v1984 = vpack.c.b16 %v1409, %v1384
        %v1985 = vpack.c.b16 %v1410, %v1385
        %v1986 = vpack.c.b16 %v1411, %v1386
        %v1987 = vpack.c.b16 %v1412, %v1387
        %v1988 = vpack.c.b16 %v1413, %v1388
        %v1989 = vpack.c.b16 %v1414, %v1389
        %v1990 = vpack.c.b16 %v1415, %v1390
        %v1991 = vpack.c.b16 %v1416, %v1391
        %v1992 = vpack.c.b16 %v1417, %v1392
        %v1993 = vpack.c.b16 %v1418, %v1393
        %v1994 = vpack.c.b16 %v1419, %v1394
        %v1995 = vpack.c.b16 %v1420, %v1395
        %v1996 = vpack.c.b16 %v1421, %v1396
        %v1997 = vpack.c.b16 %v1422, %v1397
        %v1998 = vpack.c.b16 %v1423, %v1398
        %v1999 = vpack.c.b16 %v1424, %v1399
        %v2000 = vpack.c.b16 %v1425, %v1400
        %v2001 = vpack.c.b16 %v1426, %v1401
        %v2002 = vpack.c.b16 %v1427, %v1402
        %v2003 = vpack.c.b16 %v1428, %v1403
        %v2004 = vpack.c.b16 %v1429, %v1404
        %v2005 = vpack.c.b16 %v1430, %v1405
        %v2006 = vpack.c.b16 %v1431, %v1406
        %v2007 = vpack.c.b16 %v1432, %v1407
        %v2008 = vpack.c.b16 %v1433, %v1408
        %v2009 = vpack.c.b16 %v1459, %v1434
        %v2010 = vpack.c.b16 %v1460, %v1435
        %v2011 = vpack.c.b16 %v1461, %v1436
        %v2012 = vpack.c.b16 %v1462, %v1437
        %v2013 = vpack.c.b16 %v1463, %v1438
        %v2014 = vpack.c.b16 %v1464, %v1439
        %v2015 = vpack.c.b16 %v1465, %v1440
        %v2016 = vpack.c.b16 %v1466, %v1441
        %v2017 = vpack.c.b16 %v1467, %v1442
        %v2018 = vpack.c.b16 %v1468, %v1443
        %v2019 = vpack.c.b16 %v1469, %v1444
        %v2020 = vpack.c.b16 %v1470, %v1445
        %v2021 = vpack.c.b16 %v1471, %v1446
        %v2022 = vpack.c.b16 %v1472, %v1447
        %v2023 = vpack.c.b16 %v1473, %v1448
        %v2024 = vpack.c.b16 %v1474, %v1449
        %v2025 = vpack.c.b16 %v1475, %v1450
        %v2026 = vpack.c.b16 %v1476, %v1451
        %v2027 = vpack.c.b16 %v1477, %v1452
        %v2028 = vpack.c.b16 %v1478, %v1453
        %v2029 = vpack.c.b16 %v1479, %v1454
        %v2030 = vpack.c.b16 %v1480, %v1455
        %v2031 = vpack.c.b16 %v1481, %v1456
        %v2032 = vpack.c.b16 %v1482, %v1457
        %v2033 = vpack.c.b16 %v1483, %v1458
        %v2034 = vpack.c.b16 %v1509, %v1484
        %v2035 = vpack.c.b16 %v1510, %v1485
        %v2036 = vpack.c.b16 %v1511, %v1486
        %v2037 = vpack.c.b16 %v1512, %v1487
        %v2038 = vpack.c.b16 %v1513, %v1488
        %v2039 = vpack.c.b16 %v1514, %v1489
        %v2040 = vpack.c.b16 %v1515, %v1490
        %v2041 = vpack.c.b16 %v1516, %v1491
        %v2042 = vpack.c.b16 %v1517, %v1492
        %v2043 = vpack.c.b16 %v1518, %v1493
        %v2044 = vpack.c.b16 %v1519, %v1494
        %v2045 = vpack.c.b16 %v1520, %v1495
        %v2046 = vpack.c.b16 %v1521, %v1496
        %v2047 = vpack.c.b16 %v1522, %v1497
        %v2048 = vpack.c.b16 %v1523, %v1498
        %v2049 = vpack.c.b16 %v1524, %v1499
        %v2050 = vpack.c.b16 %v1525, %v1500
        %v2051 = vpack.c.b16 %v1526, %v1501
        %v2052 = vpack.c.b16 %v1527, %v1502
        %v2053 = vpack.c.b16 %v1528, %v1503
        %v2054 = vpack.c.b16 %v1529, %v1504
        %v2055 = vpack.c.b16 %v1530, %v1505
        %v2056 = vpack.c.b16 %v1531, %v1506
        %v2057 = vpack.c.b16 %v1532, %v1507
        %v2058 = vpack.c.b16 %v1533, %v1508
        %v2059 = vpack.c.b16 %v1559, %v1534
        %v2060 = vpack.c.b16 %v1560, %v1535
        %v2061 = vpack.c.b16 %v1561, %v1536
        %v2062 = vpack.c.b16 %v1562, %v1537
        %v2063 = vpack.c.b16 %v1563, %v1538
        %v2064 = vpack.c.b16 %v1564, %v1539
        %v2065 = vpack.c.b16 %v1565, %v1540
        %v2066 = vpack.c.b16 %v1566, %v1541
        %v2067 = vpack.c.b16 %v1567, %v1542
        %v2068 = vpack.c.b16 %v1568, %v1543
        %v2069 = vpack.c.b16 %v1569, %v1544
        %v2070 = vpack.c.b16 %v1570, %v1545
        %v2071 = vpack.c.b16 %v1571, %v1546
        %v2072 = vpack.c.b16 %v1572, %v1547
        %v2073 = vpack.c.b16 %v1573, %v1548
        %v2074 = vpack.c.b16 %v1574, %v1549
        %v2075 = vpack.c.b16 %v1575, %v1550
        %v2076 = vpack.c.b16 %v1576, %v1551
        %v2077 = vpack.c.b16 %v1577, %v1552
        %v2078 = vpack.c.b16 %v1578, %v1553
        %v2079 = vpack.c.b16 %v1579, %v1554
        %v2080 = vpack.c.b16 %v1580, %v1555
        %v2081 = vpack.c.b16 %v1581, %v1556
        %v2082 = vpack.c.b16 %v1582, %v1557
        %v2083 = vpack.c.b16 %v1583, %v1558
        %v2084 = vpack.c.b16 %v1609, %v1584
        %v2085 = vpack.c.b16 %v1610, %v1585
        %v2086 = vpack.c.b16 %v1611, %v1586
        %v2087 = vpack.c.b16 %v1612, %v1587
        %v2088 = vpack.c.b16 %v1613, %v1588
        %v2089 = vpack.c.b16 %v1614, %v1589
        %v2090 = vpack.c.b16 %v1615, %v1590
        %v2091 = vpack.c.b16 %v1616, %v1591
        %v2092 = vpack.c.b16 %v1617, %v1592
        %v2093 = vpack.c.b16 %v1618, %v1593
        %v2094 = vpack.c.b16 %v1619, %v1594
        %v2095 = vpack.c.b16 %v1620, %v1595
        %v2096 = vpack.c.b16 %v1621, %v1596
        %v2097 = vpack.c.b16 %v1622, %v1597
        %v2098 = vpack.c.b16 %v1623, %v1598
        %v2099 = vpack.c.b16 %v1624, %v1599
        %v2100 = vpack.c.b16 %v1625, %v1600
        %v2101 = vpack.c.b16 %v1626, %v1601
        %v2102 = vpack.c.b16 %v1627, %v1602
        %v2103 = vpack.c.b16 %v1628, %v1603
        %v2104 = vpack.c.b16 %v1629, %v1604
        %v2105 = vpack.c.b16 %v1630, %v1605
        %v2106 = vpack.c.b16 %v1631, %v1606
        %v2107 = vpack.c.b16 %v1632, %v1607
        %v2108 = vpack.c.b16 %v1633, %v1608
        %v2109 = vpack.c.b16 %v1659, %v1634
        %v2110 = vpack.c.b16 %v1660, %v1635
        %v2111 = vpack.c.b16 %v1661, %v1636
        %v2112 = vpack.c.b16 %v1662, %v1637
        %v2113 = vpack.c.b16 %v1663, %v1638
        %v2114 = vpack.c.b16 %v1664, %v1639
        %v2115 = vpack.c.b16 %v1665, %v1640
        %v2116 = vpack.c.b16 %v1666, %v1641
        %v2117 = vpack.c.b16 %v1667, %v1642
        %v2118 = vpack.c.b16 %v1668, %v1643
        %v2119 = vpack.c.b16 %v1669, %v1644
        %v2120 = vpack.c.b16 %v1670, %v1645
        %v2121 = vpack.c.b16 %v1671, %v1646
        %v2122 = vpack.c.b16 %v1672, %v1647
        %v2123 = vpack.c.b16 %v1673, %v1648
        %v2124 = vpack.c.b16 %v1674, %v1649
        %v2125 = vpack.c.b16 %v1675, %v1650
        %v2126 = vpack.c.b16 %v1676, %v1651
        %v2127 = vpack.c.b16 %v1677, %v1652
        %v2128 = vpack.c.b16 %v1678, %v1653
        %v2129 = vpack.c.b16 %v1679, %v1654
        %v2130 = vpack.c.b16 %v1680, %v1655
        %v2131 = vpack.c.b16 %v1681, %v1656
        %v2132 = vpack.c.b16 %v1682, %v1657
        %v2133 = vpack.c.b16 %v1683, %v1658
        %v2134 = vpack.c.b16 %v1709, %v1684
        %v2135 = vpack.c.b16 %v1710, %v1685
        %v2136 = vpack.c.b16 %v1711, %v1686
        %v2137 = vpack.c.b16 %v1712, %v1687
        %v2138 = vpack.c.b16 %v1713, %v1688
        %v2139 = vpack.c.b16 %v1714, %v1689
        %v2140 = vpack.c.b16 %v1715, %v1690
        %v2141 = vpack.c.b16 %v1716, %v1691
        %v2142 = vpack.c.b16 %v1717, %v1692
        %v2143 = vpack.c.b16 %v1718, %v1693
        %v2144 = vpack.c.b16 %v1719, %v1694
        %v2145 = vpack.c.b16 %v1720, %v1695
        %v2146 = vpack.c.b16 %v1721, %v1696
        %v2147 = vpack.c.b16 %v1722, %v1697
        %v2148 = vpack.c.b16 %v1723, %v1698
        %v2149 = vpack.c.b16 %v1724, %v1699
        %v2150 = vpack.c.b16 %v1725, %v1700
        %v2151 = vpack.c.b16 %v1726, %v1701
        %v2152 = vpack.c.b16 %v1727, %v1702
        %v2153 = vpack.c.b16 %v1728, %v1703
        %v2154 = vpack.c.b16 %v1729, %v1704
        %v2155 = vpack.c.b16 %v1730, %v1705
        %v2156 = vpack.c.b16 %v1731, %v1706
        %v2157 = vpack.c.b16 %v1732, %v1707
        %v2158 = vpack.c.b16 %v1733, %v1708
        %v2159 = vpack.c.b16 %v1759, %v1734
        %v2160 = vpack.c.b16 %v1760, %v1735
        %v2161 = vpack.c.b16 %v1761, %v1736
        %v2162 = vpack.c.b16 %v1762, %v1737
        %v2163 = vpack.c.b16 %v1763, %v1738
        %v2164 = vpack.c.b16 %v1764, %v1739
        %v2165 = vpack.c.b16 %v1765, %v1740
        %v2166 = vpack.c.b16 %v1766, %v1741
        %v2167 = vpack.c.b16 %v1767, %v1742
        %v2168 = vpack.c.b16 %v1768, %v1743
        %v2169 = vpack.c.b16 %v1769, %v1744
        %v2170 = vpack.c.b16 %v1770, %v1745
        %v2171 = vpack.c.b16 %v1771, %v1746
        %v2172 = vpack.c.b16 %v1772, %v1747
        %v2173 = vpack.c.b16 %v1773, %v1748
        %v2174 = vpack.c.b16 %v1774, %v1749
        %v2175 = vpack.c.b16 %v1775, %v1750
        %v2176 = vpack.c.b16 %v1776, %v1751
        %v2177 = vpack.c.b16 %v1777, %v1752
        %v2178 = vpack.c.b16 %v1778, %v1753
        %v2179 = vpack.c.b16 %v1779, %v1754
        %v2180 = vpack.c.b16 %v1780, %v1755
        %v2181 = vpack.c.b16 %v1781, %v1756
        %v2182 = vpack.c.b16 %v1782, %v1757
        %v2183 = vpack.c.b16 %v1783, %v1758
        %v2184 = vpack.c.b16 %v1809, %v1784
        %v2185 = vpack.c.b16 %v1810, %v1785
        %v2186 = vpack.c.b16 %v1811, %v1786
        %v2187 = vpack.c.b16 %v1812, %v1787
        %v2188 = vpack.c.b16 %v1813, %v1788
        %v2189 = vpack.c.b16 %v1814, %v1789
        %v2190 = vpack.c.b16 %v1815, %v1790
        %v2191 = vpack.c.b16 %v1816, %v1791
        %v2192 = vpack.c.b16 %v1817, %v1792
        %v2193 = vpack.c.b16 %v1818, %v1793
        %v2194 = vpack.c.b16 %v1819, %v1794
        %v2195 = vpack.c.b16 %v1820, %v1795
        %v2196 = vpack.c.b16 %v1821, %v1796
        %v2197 = vpack.c.b16 %v1822, %v1797
        %v2198 = vpack.c.b16 %v1823, %v1798
        %v2199 = vpack.c.b16 %v1824, %v1799
        %v2200 = vpack.c.b16 %v1825, %v1800
        %v2201 = vpack.c.b16 %v1826, %v1801
        %v2202 = vpack.c.b16 %v1827, %v1802
        %v2203 = vpack.c.b16 %v1828, %v1803
        %v2204 = vpack.c.b16 %v1829, %v1804
        %v2205 = vpack.c.b16 %v1830, %v1805
        %v2206 = vpack.c.b16 %v1831, %v1806
        %v2207 = vpack.c.b16 %v1832, %v1807
        %v2208 = vpack.c.b16 %v1833, %v1808
        %v2209 = vpack.c.b16 %v1859, %v1834
        %v2210 = vpack.c.b16 %v1860, %v1835
        %v2211 = vpack.c.b16 %v1861, %v1836
        %v2212 = vpack.c.b16 %v1862, %v1837
        %v2213 = vpack.c.b16 %v1863, %v1838
        %v2214 = vpack.c.b16 %v1864, %v1839
        %v2215 = vpack.c.b16 %v1865, %v1840
        %v2216 = vpack.c.b16 %v1866, %v1841
        %v2217 = vpack.c.b16 %v1867, %v1842
        %v2218 = vpack.c.b16 %v1868, %v1843
        %v2219 = vpack.c.b16 %v1869, %v1844
        %v2220 = vpack.c.b16 %v1870, %v1845
        %v2221 = vpack.c.b16 %v1871, %v1846
        %v2222 = vpack.c.b16 %v1872, %v1847
        %v2223 = vpack.c.b16 %v1873, %v1848
        %v2224 = vpack.c.b16 %v1874, %v1849
        %v2225 = vpack.c.b16 %v1875, %v1850
        %v2226 = vpack.c.b16 %v1876, %v1851
        %v2227 = vpack.c.b16 %v1877, %v1852
        %v2228 = vpack.c.b16 %v1878, %v1853
        %v2229 = vpack.c.b16 %v1879, %v1854
        %v2230 = vpack.c.b16 %v1880, %v1855
        %v2231 = vpack.c.b16 %v1881, %v1856
        %v2232 = vpack.c.b16 %v1882, %v1857
        %v2233 = vpack.c.b16 %v1883, %v1858
        %v2234 = vpack.c.b16 %v1909, %v1884
        %v2235 = vpack.c.b16 %v1910, %v1885
        %v2236 = vpack.c.b16 %v1911, %v1886
        %v2237 = vpack.c.b16 %v1912, %v1887
        %v2238 = vpack.c.b16 %v1913, %v1888
        %v2239 = vpack.c.b16 %v1914, %v1889
        %v2240 = vpack.c.b16 %v1915, %v1890
        %v2241 = vpack.c.b16 %v1916, %v1891
        %v2242 = vpack.c.b16 %v1917, %v1892
        %v2243 = vpack.c.b16 %v1918, %v1893
        %v2244 = vpack.c.b16 %v1919, %v1894
        %v2245 = vpack.c.b16 %v1920, %v1895
        %v2246 = vpack.c.b16 %v1921, %v1896
        %v2247 = vpack.c.b16 %v1922, %v1897
        %v2248 = vpack.c.b16 %v1923, %v1898
        %v2249 = vpack.c.b16 %v1924, %v1899
        %v2250 = vpack.c.b16 %v1925, %v1900
        %v2251 = vpack.c.b16 %v1926, %v1901
        %v2252 = vpack.c.b16 %v1927, %v1902
        %v2253 = vpack.c.b16 %v1928, %v1903
        %v2254 = vpack.c.b16 %v1929, %v1904
        %v2255 = vpack.c.b16 %v1930, %v1905
        %v2256 = vpack.c.b16 %v1931, %v1906
        %v2257 = vpack.c.b16 %v1932, %v1907
        %v2258 = vpack.c.b16 %v1933, %v1908
        %v2259 = vpack.c.b16 %v1934, %v1934
        %v2260 = vpack.c.b16 %v1935, %v1935
        %v2261 = vpack.c.b16 %v1936, %v1936
        %v2262 = vpack.c.b16 %v1937, %v1937
        %v2263 = vpack.c.b16 %v1938, %v1938
        %v2264 = vpack.c.b16 %v1939, %v1939
        %v2265 = vpack.c.b16 %v1940, %v1940
        %v2266 = vpack.c.b16 %v1941, %v1941
        %v2267 = vpack.c.b16 %v1942, %v1942
        %v2268 = vpack.c.b16 %v1943, %v1943
        %v2269 = vpack.c.b16 %v1944, %v1944
        %v2270 = vpack.c.b16 %v1945, %v1945
        %v2271 = vpack.c.b16 %v1946, %v1946
        %v2272 = vpack.c.b16 %v1947, %v1947
        %v2273 = vpack.c.b16 %v1948, %v1948
        %v2274 = vpack.c.b16 %v1949, %v1949
        %v2275 = vpack.c.b16 %v1950, %v1950
        %v2276 = vpack.c.b16 %v1951, %v1951
        %v2277 = vpack.c.b16 %v1952, %v1952
        %v2278 = vpack.c.b16 %v1953, %v1953
        %v2279 = vpack.c.b16 %v1954, %v1954
        %v2280 = vpack.c.b16 %v1955, %v1955
        %v2281 = vpack.c.b16 %v1956, %v1956
        %v2282 = vpack.c.b16 %v1957, %v1957
        %v2283 = vpack.c.b16 %v1958, %v1958
        %v3009 = vunpack.c.l.b16 %v602
        %v3010 = vunpack.c.l.b16 %v603
        %v3011 = vunpack.c.l.b16 %v604
        %v3012 = vunpack.c.l.b16 %v605
        %v3013 = vunpack.c.l.b16 %v606
        %v3014 = vunpack.c.l.b16 %v607
        %v3015 = vunpack.c.l.b16 %v608
        %v3016 = vunpack.c.l.b16 %v609
        %v3017 = vunpack.c.l.b16 %v610
        %v3018 = vunpack.c.l.b16 %v611
        %v3019 = vunpack.c.l.b16 %v612
        %v3020 = vunpack.c.l.b16 %v613
        %v3021 = vunpack.c.l.b16 %v614
        %v3022 = vunpack.c.l.b16 %v615
        %v3023 = vunpack.c.l.b16 %v616
        %v3024 = vunpack.c.l.b16 %v617
        %v3025 = vunpack.c.l.b16 %v618
        %v3026 = vunpack.c.l.b16 %v619
        %v3027 = vunpack.c.l.b16 %v620
        %v3028 = vunpack.c.l.b16 %v621
        %v3029 = vunpack.c.l.b16 %v622
        %v3030 = vunpack.c.l.b16 %v623
        %v3031 = vunpack.c.l.b16 %v624
        %v3032 = vunpack.c.l.b16 %v625
        %v3033 = vunpack.c.l.b16 %v626
        %v3034 = vunpack.c.l.b16 %v627
        %v3035 = vunpack.c.l.b16 %v628
        %v3036 = vunpack.c.l.b16 %v629
        %v3037 = vunpack.c.l.b16 %v630
        %v3038 = vunpack.c.l.b16 %v631
        %v3039 = vunpack.c.l.b16 %v632
        %v3040 = vunpack.c.l.b16 %v633
        %v3041 = vunpack.c.l.b16 %v634
        %v3042 = vunpack.c.l.b16 %v635
        %v3043 = vunpack.c.l.b16 %v636
        %v3044 = vunpack.c.l.b16 %v637
        %v3045 = vunpack.c.l.b16 %v638
        %v3046 = vunpack.c.l.b16 %v639
        %v3047 = vunpack.c.l.b16 %v640
        %v3048 = vunpack.c.l.b16 %v641
        %v3049 = vunpack.c.l.b16 %v642
        %v3050 = vunpack.c.l.b16 %v643
        %v3051 = vunpack.c.l.b16 %v644
        %v3052 = vunpack.c.l.b16 %v645
        %v3053 = vunpack.c.l.b16 %v646
        %v3054 = vunpack.c.l.b16 %v647
        %v3055 = vunpack.c.l.b16 %v648
        %v3056 = vunpack.c.l.b16 %v649
        %v3057 = vunpack.c.l.b16 %v650
        %v3058 = vunpack.c.l.b16 %v651
        %v3059 = vunpack.c.l.b16 %v652
        %v3060 = vunpack.c.l.b16 %v653
        %v3061 = vunpack.c.l.b16 %v654
        %v3062 = vunpack.c.l.b16 %v655
        %v3063 = vunpack.c.l.b16 %v656
        %v3064 = vunpack.c.l.b16 %v657
        %v3065 = vunpack.c.l.b16 %v658
        %v3066 = vunpack.c.l.b16 %v659
        %v3067 = vunpack.c.l.b16 %v660
        %v3068 = vunpack.c.l.b16 %v661
        %v3069 = vunpack.c.l.b16 %v662
        %v3070 = vunpack.c.l.b16 %v663
        %v3071 = vunpack.c.l.b16 %v664
        %v3072 = vunpack.c.l.b16 %v665
        %v3073 = vunpack.c.l.b16 %v666
        %v3074 = vunpack.c.l.b16 %v667
        %v3075 = vunpack.c.l.b16 %v668
        %v3076 = vunpack.c.l.b16 %v669
        %v3077 = vunpack.c.l.b16 %v670
        %v3078 = vunpack.c.l.b16 %v671
        %v3079 = vunpack.c.l.b16 %v672
        %v3080 = vunpack.c.l.b16 %v673
        %v3081 = vunpack.c.l.b16 %v674
        %v3082 = vunpack.c.l.b16 %v675
        %v3083 = vunpack.c.l.b16 %v676
        %v3084 = vunpack.c.l.b16 %v677
        %v3085 = vunpack.c.l.b16 %v678
        %v3086 = vunpack.c.l.b16 %v679
        %v3087 = vunpack.c.l.b16 %v680
        %v3088 = vunpack.c.l.b16 %v681
        %v3089 = vunpack.c.l.b16 %v682
        %v3090 = vunpack.c.l.b16 %v683
        %v3091 = vunpack.c.l.b16 %v684
        %v3092 = vunpack.c.l.b16 %v685
        %v3093 = vunpack.c.l.b16 %v686
        %v3094 = vunpack.c.l.b16 %v687
        %v3095 = vunpack.c.l.b16 %v688
        %v3096 = vunpack.c.l.b16 %v689
        %v3097 = vunpack.c.l.b16 %v690
        %v3098 = vunpack.c.l.b16 %v691
        %v3099 = vunpack.c.l.b16 %v692
        %v3100 = vunpack.c.l.b16 %v693
        %v3101 = vunpack.c.l.b16 %v694
        %v3102 = vunpack.c.l.b16 %v695
        %v3103 = vunpack.c.l.b16 %v696
        %v3104 = vunpack.c.l.b16 %v697
        %v3105 = vunpack.c.l.b16 %v698
        %v3106 = vunpack.c.l.b16 %v699
        %v3107 = vunpack.c.l.b16 %v700
        %v3108 = vunpack.c.l.b16 %v701
        %v3109 = vunpack.c.l.b16 %v702
        %v3110 = vunpack.c.l.b16 %v703
        %v3111 = vunpack.c.l.b16 %v704
        %v3112 = vunpack.c.l.b16 %v705
        %v3113 = vunpack.c.l.b16 %v706
        %v3114 = vunpack.c.l.b16 %v707
        %v3115 = vunpack.c.l.b16 %v708
        %v3116 = vunpack.c.l.b16 %v709
        %v3117 = vunpack.c.l.b16 %v710
        %v3118 = vunpack.c.l.b16 %v711
        %v3119 = vunpack.c.l.b16 %v712
        %v3120 = vunpack.c.l.b16 %v713
        %v3121 = vunpack.c.l.b16 %v714
        %v3122 = vunpack.c.l.b16 %v715
        %v3123 = vunpack.c.l.b16 %v716
        %v3124 = vunpack.c.l.b16 %v717
        %v3125 = vunpack.c.l.b16 %v718
        %v3126 = vunpack.c.l.b16 %v719
        %v3127 = vunpack.c.l.b16 %v720
        %v3128 = vunpack.c.l.b16 %v721
        %v3129 = vunpack.c.l.b16 %v722
        %v3130 = vunpack.c.l.b16 %v723
        %v3131 = vunpack.c.l.b16 %v724
        %v3132 = vunpack.c.l.b16 %v725
        %v3133 = vunpack.c.l.b16 %v726
        %v3134 = vunpack.c.l.b16 %v727
        %v3135 = vunpack.c.l.b16 %v728
        %v3136 = vunpack.c.l.b16 %v729
        %v3137 = vunpack.c.l.b16 %v730
        %v3138 = vunpack.c.l.b16 %v731
        %v3139 = vunpack.c.l.b16 %v732
        %v3140 = vunpack.c.l.b16 %v733
        %v3141 = vunpack.c.l.b16 %v734
        %v3142 = vunpack.c.l.b16 %v735
        %v3143 = vunpack.c.l.b16 %v736
        %v3144 = vunpack.c.l.b16 %v737
        %v3145 = vunpack.c.l.b16 %v738
        %v3146 = vunpack.c.l.b16 %v739
        %v3147 = vunpack.c.l.b16 %v740
        %v3148 = vunpack.c.l.b16 %v741
        %v3149 = vunpack.c.l.b16 %v742
        %v3150 = vunpack.c.l.b16 %v743
        %v3151 = vunpack.c.l.b16 %v744
        %v3152 = vunpack.c.l.b16 %v745
        %v3153 = vunpack.c.l.b16 %v746
        %v3154 = vunpack.c.l.b16 %v747
        %v3155 = vunpack.c.l.b16 %v748
        %v3156 = vunpack.c.l.b16 %v749
        %v3157 = vunpack.c.l.b16 %v750
        %v3158 = vunpack.c.l.b16 %v751
        %v3159 = vunpack.c.l.b16 %v752
        %v3160 = vunpack.c.l.b16 %v753
        %v3161 = vunpack.c.l.b16 %v754
        %v3162 = vunpack.c.l.b16 %v755
        %v3163 = vunpack.c.l.b16 %v756
        %v3164 = vunpack.c.l.b16 %v757
        %v3165 = vunpack.c.l.b16 %v758
        %v3166 = vunpack.c.l.b16 %v759
        %v3167 = vunpack.c.l.b16 %v760
        %v3168 = vunpack.c.l.b16 %v761
        %v3169 = vunpack.c.l.b16 %v762
        %v3170 = vunpack.c.l.b16 %v763
        %v3171 = vunpack.c.l.b16 %v764
        %v3172 = vunpack.c.l.b16 %v765
        %v3173 = vunpack.c.l.b16 %v766
        %v3174 = vunpack.c.l.b16 %v767
        %v3175 = vunpack.c.l.b16 %v768
        %v3176 = vunpack.c.l.b16 %v769
        %v3177 = vunpack.c.l.b16 %v770
        %v3178 = vunpack.c.l.b16 %v771
        %v3179 = vunpack.c.l.b16 %v772
        %v3180 = vunpack.c.l.b16 %v773
        %v3181 = vunpack.c.l.b16 %v774
        %v3182 = vunpack.c.l.b16 %v775
        %v3183 = vunpack.c.l.b16 %v776
        %v3184 = vunpack.c.l.b16 %v777
        %v3185 = vunpack.c.l.b16 %v778
        %v3186 = vunpack.c.l.b16 %v779
        %v3187 = vunpack.c.l.b16 %v780
        %v3188 = vunpack.c.l.b16 %v781
        %v3189 = vunpack.c.l.b16 %v782
        %v3190 = vunpack.c.l.b16 %v783
        %v3191 = vunpack.c.l.b16 %v784
        %v3192 = vunpack.c.l.b16 %v785
        %v3193 = vunpack.c.l.b16 %v786
        %v3194 = vunpack.c.l.b16 %v787
        %v3195 = vunpack.c.l.b16 %v788
        %v3196 = vunpack.c.l.b16 %v789
        %v3197 = vunpack.c.l.b16 %v790
        %v3198 = vunpack.c.l.b16 %v791
        %v3199 = vunpack.c.l.b16 %v792
        %v3200 = vunpack.c.l.b16 %v793
        %v3201 = vunpack.c.l.b16 %v794
        %v3202 = vunpack.c.l.b16 %v795
        %v3203 = vunpack.c.l.b16 %v796
        %v3204 = vunpack.c.l.b16 %v797
        %v3205 = vunpack.c.l.b16 %v798
        %v3206 = vunpack.c.l.b16 %v799
        %v3207 = vunpack.c.l.b16 %v800
        %v3208 = vunpack.c.l.b16 %v801
        %v3209 = vunpack.c.l.b16 %v802
        %v3210 = vunpack.c.l.b16 %v803
        %v3211 = vunpack.c.l.b16 %v804
        %v3212 = vunpack.c.l.b16 %v805
        %v3213 = vunpack.c.l.b16 %v806
        %v3214 = vunpack.c.l.b16 %v807
        %v3215 = vunpack.c.l.b16 %v808
        %v3216 = vunpack.c.l.b16 %v809
        %v3217 = vunpack.c.l.b16 %v810
        %v3218 = vunpack.c.l.b16 %v811
        %v3219 = vunpack.c.l.b16 %v812
        %v3220 = vunpack.c.l.b16 %v813
        %v3221 = vunpack.c.l.b16 %v814
        %v3222 = vunpack.c.l.b16 %v815
        %v3223 = vunpack.c.l.b16 %v816
        %v3224 = vunpack.c.l.b16 %v817
        %v3225 = vunpack.c.l.b16 %v818
        %v3226 = vunpack.c.l.b16 %v819
        %v3227 = vunpack.c.l.b16 %v820
        %v3228 = vunpack.c.l.b16 %v821
        %v3229 = vunpack.c.l.b16 %v822
        %v3230 = vunpack.c.l.b16 %v823
        %v3231 = vunpack.c.l.b16 %v824
        %v3232 = vunpack.c.l.b16 %v825
        %v3233 = vunpack.c.l.b16 %v826
        %v3234 = vunpack.c.l.b16 %v827
        %v3235 = vunpack.c.l.b16 %v828
        %v3236 = vunpack.c.l.b16 %v829
        %v3237 = vunpack.c.l.b16 %v830
        %v3238 = vunpack.c.l.b16 %v831
        %v3239 = vunpack.c.l.b16 %v832
        %v3240 = vunpack.c.l.b16 %v833
        %v3241 = vunpack.c.l.b16 %v834
        %v3242 = vunpack.c.l.b16 %v835
        %v3243 = vunpack.c.l.b16 %v836
        %v3244 = vunpack.c.l.b16 %v837
        %v3245 = vunpack.c.l.b16 %v838
        %v3246 = vunpack.c.l.b16 %v839
        %v3247 = vunpack.c.l.b16 %v840
        %v3248 = vunpack.c.l.b16 %v841
        %v3249 = vunpack.c.l.b16 %v842
        %v3250 = vunpack.c.l.b16 %v843
        %v3251 = vunpack.c.l.b16 %v844
        %v3252 = vunpack.c.l.b16 %v845
        %v3253 = vunpack.c.l.b16 %v846
        %v3254 = vunpack.c.l.b16 %v847
        %v3255 = vunpack.c.l.b16 %v848
        %v3256 = vunpack.c.l.b16 %v849
        %v3257 = vunpack.c.l.b16 %v850
        %v3258 = vunpack.c.l.b16 %v851
        %v3259 = vunpack.c.l.b16 %v852
        %v3260 = vunpack.c.l.b16 %v853
        %v3261 = vunpack.c.l.b16 %v854
        %v3262 = vunpack.c.l.b16 %v855
        %v3263 = vunpack.c.l.b16 %v856
        %v3264 = vunpack.c.l.b16 %v857
        %v3265 = vunpack.c.l.b16 %v858
        %v3266 = vunpack.c.l.b16 %v859
        %v3267 = vunpack.c.l.b16 %v860
        %v3268 = vunpack.c.l.b16 %v861
        %v3269 = vunpack.c.l.b16 %v862
        %v3270 = vunpack.c.l.b16 %v863
        %v3271 = vunpack.c.l.b16 %v864
        %v3272 = vunpack.c.l.b16 %v865
        %v3273 = vunpack.c.l.b16 %v866
        %v3274 = vunpack.c.l.b16 %v867
        %v3275 = vunpack.c.l.b16 %v868
        %v3276 = vunpack.c.l.b16 %v869
        %v3277 = vunpack.c.l.b16 %v870
        %v3278 = vunpack.c.l.b16 %v871
        %v3279 = vunpack.c.l.b16 %v872
        %v3280 = vunpack.c.l.b16 %v873
        %v3281 = vunpack.c.l.b16 %v874
        %v3282 = vunpack.c.l.b16 %v875
        %v3283 = vunpack.c.l.b16 %v876
        %v3284 = vunpack.c.l.b16 %v877
        %v3285 = vunpack.c.l.b16 %v878
        %v3286 = vunpack.c.l.b16 %v879
        %v3287 = vunpack.c.l.b16 %v880
        %v3288 = vunpack.c.l.b16 %v881
        %v3289 = vunpack.c.l.b16 %v882
        %v3290 = vunpack.c.l.b16 %v883
        %v3291 = vunpack.c.l.b16 %v884
        %v3292 = vunpack.c.l.b16 %v885
        %v3293 = vunpack.c.l.b16 %v886
        %v3294 = vunpack.c.l.b16 %v887
        %v3295 = vunpack.c.l.b16 %v888
        %v3296 = vunpack.c.l.b16 %v889
        %v3297 = vunpack.c.l.b16 %v890
        %v3298 = vunpack.c.l.b16 %v891
        %v3299 = vunpack.c.l.b16 %v892
        %v3300 = vunpack.c.l.b16 %v893
        %v3301 = vunpack.c.l.b16 %v894
        %v3302 = vunpack.c.l.b16 %v895
        %v3303 = vunpack.c.l.b16 %v896
        %v3304 = vunpack.c.l.b16 %v897
        %v3305 = vunpack.c.l.b16 %v898
        %v3306 = vunpack.c.l.b16 %v899
        %v3307 = vunpack.c.l.b16 %v900
        %v3308 = vunpack.c.l.b16 %v901
        %v3309 = vunpack.c.l.b16 %v902
        %v3310 = vunpack.c.l.b16 %v903
        %v3311 = vunpack.c.l.b16 %v904
        %v3312 = vunpack.c.l.b16 %v905
        %v3313 = vunpack.c.l.b16 %v906
        %v3314 = vunpack.c.l.b16 %v907
        %v3315 = vunpack.c.l.b16 %v908
        %v3316 = vunpack.c.l.b16 %v909
        %v3317 = vunpack.c.l.b16 %v910
        %v3318 = vunpack.c.l.b16 %v911
        %v3319 = vunpack.c.l.b16 %v912
        %v3320 = vunpack.c.l.b16 %v913
        %v3321 = vunpack.c.l.b16 %v914
        %v3322 = vunpack.c.l.b16 %v915
        %v3323 = vunpack.c.l.b16 %v916
        %v3324 = vunpack.c.l.b16 %v917
        %v3325 = vunpack.c.l.b16 %v918
        %v3326 = vunpack.c.l.b16 %v919
        %v3327 = vunpack.c.l.b16 %v920
        %v3328 = vunpack.c.l.b16 %v921
        %v3329 = vunpack.c.l.b16 %v922
        %v3330 = vunpack.c.l.b16 %v923
        %v3331 = vunpack.c.l.b16 %v924
        %v3332 = vunpack.c.l.b16 %v925
        %v3333 = vunpack.c.l.b16 %v926
        %v3334 = vunpack.c.l.b16 %v927
        %v3335 = vunpack.c.l.b16 %v928
        %v3336 = vunpack.c.l.b16 %v929
        %v3337 = vunpack.c.l.b16 %v930
        %v3338 = vunpack.c.l.b16 %v931
        %v3339 = vunpack.c.l.b16 %v932
        %v3340 = vunpack.c.l.b16 %v933
        %v3341 = vunpack.c.l.b16 %v934
        %v3342 = vunpack.c.l.b16 %v935
        %v3343 = vunpack.c.l.b16 %v936
        %v3344 = vunpack.c.l.b16 %v937
        %v3345 = vunpack.c.l.b16 %v938
        %v3346 = vunpack.c.l.b16 %v939
        %v3347 = vunpack.c.l.b16 %v940
        %v3348 = vunpack.c.l.b16 %v941
        %v3349 = vunpack.c.l.b16 %v942
        %v3350 = vunpack.c.l.b16 %v943
        %v3351 = vunpack.c.l.b16 %v944
        %v3352 = vunpack.c.l.b16 %v945
        %v3353 = vunpack.c.l.b16 %v946
        %v3354 = vunpack.c.l.b16 %v947
        %v3355 = vunpack.c.l.b16 %v948
        %v3356 = vunpack.c.l.b16 %v949
        %v3357 = vunpack.c.l.b16 %v950
        %v3358 = vunpack.c.l.b16 %v951
        %v3359 = vunpack.c.l.b16 %v952
        %v3360 = vunpack.c.l.b16 %v953
        %v3361 = vunpack.c.l.b16 %v954
        %v3362 = vunpack.c.l.b16 %v955
        %v3363 = vunpack.c.l.b16 %v956
        %v3364 = vunpack.c.l.b16 %v957
        %v3365 = vunpack.c.l.b16 %v958
        %v3366 = vunpack.c.l.b16 %v959
        %v3367 = vunpack.c.l.b16 %v960
        %v3368 = vunpack.c.l.b16 %v961
        %v3369 = vunpack.c.l.b16 %v962
        %v3370 = vunpack.c.l.b16 %v963
        %v3371 = vunpack.c.l.b16 %v964
        %v3372 = vunpack.c.l.b16 %v965
        %v3373 = vunpack.c.l.b16 %v966
        %v3374 = vunpack.c.l.b16 %v967
        %v3375 = vunpack.c.l.b16 %v968
        %v3376 = vunpack.c.l.b16 %v969
        %v3377 = vunpack.c.l.b16 %v970
        %v3378 = vunpack.c.l.b16 %v971
        %v3379 = vunpack.c.l.b16 %v972
        %v3380 = vunpack.c.l.b16 %v973
        %v3381 = vunpack.c.l.b16 %v974
        %v3382 = vunpack.c.l.b16 %v975
        %v3383 = vunpack.c.l.b16 %v976
        %v3384 = vunpack.c.l.b16 %v977
        %v3385 = vunpack.c.l.b16 %v978
        %v3386 = vunpack.c.l.b16 %v979
        %v3387 = vunpack.c.l.b16 %v980
        %v3388 = vunpack.c.l.b16 %v981
        %v3389 = vunpack.c.l.b16 %v982
        %v3390 = vunpack.c.l.b16 %v983
        %v3391 = vunpack.c.l.b16 %v984
        %v3392 = vunpack.c.l.b16 %v985
        %v3393 = vunpack.c.l.b16 %v986
        %v3394 = vunpack.c.l.b16 %v987
        %v3395 = vunpack.c.l.b16 %v988
        %v3396 = vunpack.c.l.b16 %v989
        %v3397 = vunpack.c.l.b16 %v990
        %v3398 = vunpack.c.l.b16 %v991
        %v3399 = vunpack.c.l.b16 %v992
        %v3400 = vunpack.c.l.b16 %v993
        %v3401 = vunpack.c.l.b16 %v994
        %v3402 = vunpack.c.l.b16 %v995
        %v3403 = vunpack.c.l.b16 %v996
        %v3404 = vunpack.c.l.b16 %v997
        %v3405 = vunpack.c.l.b16 %v998
        %v3406 = vunpack.c.l.b16 %v999
        %v3407 = vunpack.c.l.b16 %v1000
        %v3408 = vunpack.c.l.b16 %v1001
        %v3409 = vpack.c.b16 %v3010, %v3009
        %v3410 = vpack.c.b16 %v3012, %v3011
        %v3411 = vpack.c.b16 %v3014, %v3013
        %v3412 = vpack.c.b16 %v3016, %v3015
        %v3413 = vpack.c.b16 %v3018, %v3017
        %v3414 = vpack.c.b16 %v3020, %v3019
        %v3415 = vpack.c.b16 %v3022, %v3021
        %v3416 = vpack.c.b16 %v3024, %v3023
        %v3417 = vpack.c.b16 %v3026, %v3025
        %v3418 = vpack.c.b16 %v3028, %v3027
        %v3419 = vpack.c.b16 %v3030, %v3029
        %v3420 = vpack.c.b16 %v3032, %v3031
        %v3421 = vpack.c.b16 %v3034, %v3033
        %v3422 = vpack.c.b16 %v3036, %v3035
        %v3423 = vpack.c.b16 %v3038, %v3037
        %v3424 = vpack.c.b16 %v3040, %v3039
        %v3425 = vpack.c.b16 %v3042, %v3041
        %v3426 = vpack.c.b16 %v3044, %v3043
        %v3427 = vpack.c.b16 %v3046, %v3045
        %v3428 = vpack.c.b16 %v3048, %v3047
        %v3429 = vpack.c.b16 %v3050, %v3049
        %v3430 = vpack.c.b16 %v3052, %v3051
        %v3431 = vpack.c.b16 %v3054, %v3053
        %v3432 = vpack.c.b16 %v3056, %v3055
        %v3433 = vpack.c.b16 %v3058, %v3057
        %v3434 = vpack.c.b16 %v3060, %v3059
        %v3435 = vpack.c.b16 %v3062, %v3061
        %v3436 = vpack.c.b16 %v3064, %v3063
        %v3437 = vpack.c.b16 %v3066, %v3065
        %v3438 = vpack.c.b16 %v3068, %v3067
        %v3439 = vpack.c.b16 %v3070, %v3069
        %v3440 = vpack.c.b16 %v3072, %v3071
        %v3441 = vpack.c.b16 %v3074, %v3073
        %v3442 = vpack.c.b16 %v3076, %v3075
        %v3443 = vpack.c.b16 %v3078, %v3077
        %v3444 = vpack.c.b16 %v3080, %v3079
        %v3445 = vpack.c.b16 %v3082, %v3081
        %v3446 = vpack.c.b16 %v3084, %v3083
        %v3447 = vpack.c.b16 %v3086, %v3085
        %v3448 = vpack.c.b16 %v3088, %v3087
        %v3449 = vpack.c.b16 %v3090, %v3089
        %v3450 = vpack.c.b16 %v3092, %v3091
        %v3451 = vpack.c.b16 %v3094, %v3093
        %v3452 = vpack.c.b16 %v3096, %v3095
        %v3453 = vpack.c.b16 %v3098, %v3097
        %v3454 = vpack.c.b16 %v3100, %v3099
        %v3455 = vpack.c.b16 %v3102, %v3101
        %v3456 = vpack.c.b16 %v3104, %v3103
        %v3457 = vpack.c.b16 %v3106, %v3105
        %v3458 = vpack.c.b16 %v3108, %v3107
        %v3459 = vpack.c.b16 %v3110, %v3109
        %v3460 = vpack.c.b16 %v3112, %v3111
        %v3461 = vpack.c.b16 %v3114, %v3113
        %v3462 = vpack.c.b16 %v3116, %v3115
        %v3463 = vpack.c.b16 %v3118, %v3117
        %v3464 = vpack.c.b16 %v3120, %v3119
        %v3465 = vpack.c.b16 %v3122, %v3121
        %v3466 = vpack.c.b16 %v3124, %v3123
        %v3467 = vpack.c.b16 %v3126, %v3125
        %v3468 = vpack.c.b16 %v3128, %v3127
        %v3469 = vpack.c.b16 %v3130, %v3129
        %v3470 = vpack.c.b16 %v3132, %v3131
        %v3471 = vpack.c.b16 %v3134, %v3133
        %v3472 = vpack.c.b16 %v3136, %v3135
        %v3473 = vpack.c.b16 %v3138, %v3137
        %v3474 = vpack.c.b16 %v3140, %v3139
        %v3475 = vpack.c.b16 %v3142, %v3141
        %v3476 = vpack.c.b16 %v3144, %v3143
        %v3477 = vpack.c.b16 %v3146, %v3145
        %v3478 = vpack.c.b16 %v3148, %v3147
        %v3479 = vpack.c.b16 %v3150, %v3149
        %v3480 = vpack.c.b16 %v3152, %v3151
        %v3481 = vpack.c.b16 %v3154, %v3153
        %v3482 = vpack.c.b16 %v3156, %v3155
        %v3483 = vpack.c.b16 %v3158, %v3157
        %v3484 = vpack.c.b16 %v3160, %v3159
        %v3485 = vpack.c.b16 %v3162, %v3161
        %v3486 = vpack.c.b16 %v3164, %v3163
        %v3487 = vpack.c.b16 %v3166, %v3165
        %v3488 = vpack.c.b16 %v3168, %v3167
        %v3489 = vpack.c.b16 %v3170, %v3169
        %v3490 = vpack.c.b16 %v3172, %v3171
        %v3491 = vpack.c.b16 %v3174, %v3173
        %v3492 = vpack.c.b16 %v3176, %v3175
        %v3493 = vpack.c.b16 %v3178, %v3177
        %v3494 = vpack.c.b16 %v3180, %v3179
        %v3495 = vpack.c.b16 %v3182, %v3181
        %v3496 = vpack.c.b16 %v3184, %v3183
        %v3497 = vpack.c.b16 %v3186, %v3185
        %v3498 = vpack.c.b16 %v3188, %v3187
        %v3499 = vpack.c.b16 %v3190, %v3189
        %v3500 = vpack.c.b16 %v3192, %v3191
        %v3501 = vpack.c.b16 %v3194, %v3193
        %v3502 = vpack.c.b16 %v3196, %v3195
        %v3503 = vpack.c.b16 %v3198, %v3197
        %v3504 = vpack.c.b16 %v3200, %v3199
        %v3505 = vpack.c.b16 %v3202, %v3201
        %v3506 = vpack.c.b16 %v3204, %v3203
        %v3507 = vpack.c.b16 %v3206, %v3205
        %v3508 = vpack.c.b16 %v3208, %v3207
        %v3509 = vpack.c.b16 %v3210, %v3209
        %v3510 = vpack.c.b16 %v3212, %v3211
        %v3511 = vpack.c.b16 %v3214, %v3213
        %v3512 = vpack.c.b16 %v3216, %v3215
        %v3513 = vpack.c.b16 %v3218, %v3217
        %v3514 = vpack.c.b16 %v3220, %v3219
        %v3515 = vpack.c.b16 %v3222, %v3221
        %v3516 = vpack.c.b16 %v3224, %v3223
        %v3517 = vpack.c.b16 %v3226, %v3225
        %v3518 = vpack.c.b16 %v3228, %v3227
        %v3519 = vpack.c.b16 %v3230, %v3229
        %v3520 = vpack.c.b16 %v3232, %v3231
        %v3521 = vpack.c.b16 %v3234, %v3233
        %v3522 = vpack.c.b16 %v3236, %v3235
        %v3523 = vpack.c.b16 %v3238, %v3237
        %v3524 = vpack.c.b16 %v3240, %v3239
        %v3525 = vpack.c.b16 %v3242, %v3241
        %v3526 = vpack.c.b16 %v3244, %v3243
        %v3527 = vpack.c.b16 %v3246, %v3245
        %v3528 = vpack.c.b16 %v3248, %v3247
        %v3529 = vpack.c.b16 %v3250, %v3249
        %v3530 = vpack.c.b16 %v3252, %v3251
        %v3531 = vpack.c.b16 %v3254, %v3253
        %v3532 = vpack.c.b16 %v3256, %v3255
        %v3533 = vpack.c.b16 %v3258, %v3257
        %v3534 = vpack.c.b16 %v3260, %v3259
        %v3535 = vpack.c.b16 %v3262, %v3261
        %v3536 = vpack.c.b16 %v3264, %v3263
        %v3537 = vpack.c.b16 %v3266, %v3265
        %v3538 = vpack.c.b16 %v3268, %v3267
        %v3539 = vpack.c.b16 %v3270, %v3269
        %v3540 = vpack.c.b16 %v3272, %v3271
        %v3541 = vpack.c.b16 %v3274, %v3273
        %v3542 = vpack.c.b16 %v3276, %v3275
        %v3543 = vpack.c.b16 %v3278, %v3277
        %v3544 = vpack.c.b16 %v3280, %v3279
        %v3545 = vpack.c.b16 %v3282, %v3281
        %v3546 = vpack.c.b16 %v3284, %v3283
        %v3547 = vpack.c.b16 %v3286, %v3285
        %v3548 = vpack.c.b16 %v3288, %v3287
        %v3549 = vpack.c.b16 %v3290, %v3289
        %v3550 = vpack.c.b16 %v3292, %v3291
        %v3551 = vpack.c.b16 %v3294, %v3293
        %v3552 = vpack.c.b16 %v3296, %v3295
        %v3553 = vpack.c.b16 %v3298, %v3297
        %v3554 = vpack.c.b16 %v3300, %v3299
        %v3555 = vpack.c.b16 %v3302, %v3301
        %v3556 = vpack.c.b16 %v3304, %v3303
        %v3557 = vpack.c.b16 %v3306, %v3305
        %v3558 = vpack.c.b16 %v3308, %v3307
        %v3559 = vpack.c.b16 %v3310, %v3309
        %v3560 = vpack.c.b16 %v3312, %v3311
        %v3561 = vpack.c.b16 %v3314, %v3313
        %v3562 = vpack.c.b16 %v3316, %v3315
        %v3563 = vpack.c.b16 %v3318, %v3317
        %v3564 = vpack.c.b16 %v3320, %v3319
        %v3565 = vpack.c.b16 %v3322, %v3321
        %v3566 = vpack.c.b16 %v3324, %v3323
        %v3567 = vpack.c.b16 %v3326, %v3325
        %v3568 = vpack.c.b16 %v3328, %v3327
        %v3569 = vpack.c.b16 %v3330, %v3329
        %v3570 = vpack.c.b16 %v3332, %v3331
        %v3571 = vpack.c.b16 %v3334, %v3333
        %v3572 = vpack.c.b16 %v3336, %v3335
        %v3573 = vpack.c.b16 %v3338, %v3337
        %v3574 = vpack.c.b16 %v3340, %v3339
        %v3575 = vpack.c.b16 %v3342, %v3341
        %v3576 = vpack.c.b16 %v3344, %v3343
        %v3577 = vpack.c.b16 %v3346, %v3345
        %v3578 = vpack.c.b16 %v3348, %v3347
        %v3579 = vpack.c.b16 %v3350, %v3349
        %v3580 = vpack.c.b16 %v3352, %v3351
        %v3581 = vpack.c.b16 %v3354, %v3353
        %v3582 = vpack.c.b16 %v3356, %v3355
        %v3583 = vpack.c.b16 %v3358, %v3357
        %v3584 = vpack.c.b16 %v3360, %v3359
        %v3585 = vpack.c.b16 %v3362, %v3361
        %v3586 = vpack.c.b16 %v3364, %v3363
        %v3587 = vpack.c.b16 %v3366, %v3365
        %v3588 = vpack.c.b16 %v3368, %v3367
        %v3589 = vpack.c.b16 %v3370, %v3369
        %v3590 = vpack.c.b16 %v3372, %v3371
        %v3591 = vpack.c.b16 %v3374, %v3373
        %v3592 = vpack.c.b16 %v3376, %v3375
        %v3593 = vpack.c.b16 %v3378, %v3377
        %v3594 = vpack.c.b16 %v3380, %v3379
        %v3595 = vpack.c.b16 %v3382, %v3381
        %v3596 = vpack.c.b16 %v3384, %v3383
        %v3597 = vpack.c.b16 %v3386, %v3385
        %v3598 = vpack.c.b16 %v3388, %v3387
        %v3599 = vpack.c.b16 %v3390, %v3389
        %v3600 = vpack.c.b16 %v3392, %v3391
        %v3601 = vpack.c.b16 %v3394, %v3393
        %v3602 = vpack.c.b16 %v3396, %v3395
        %v3603 = vpack.c.b16 %v3398, %v3397
        %v3604 = vpack.c.b16 %v3400, %v3399
        %v3605 = vpack.c.b16 %v3402, %v3401
        %v3606 = vpack.c.b16 %v3404, %v3403
        %v3607 = vpack.c.b16 %v3406, %v3405
        %v3608 = vpack.c.b16 %v3408, %v3407
        %3809 = vmatprep.subr.bf16.mxu0 0
        %3810 = vmatpush1.bf16.msra.mxu0 %v3409
        %3811 = vmatprep.subr.bf16.mxu0 0
        %3812 = vmatpush1.bf16.msra.mxu0 %v3410
        %3813 = vmatprep.subr.bf16.mxu0 0
        %3814 = vmatpush1.bf16.msra.mxu0 %v3411
        %3815 = vmatprep.subr.bf16.mxu0 0
        %3816 = vmatpush1.bf16.msra.mxu0 %v3412
        %3817 = vmatprep.subr.bf16.mxu0 0
        %3818 = vmatpush1.bf16.msra.mxu0 %v3413
        %3819 = vmatprep.subr.bf16.mxu0 0
        %3820 = vmatpush1.bf16.msra.mxu0 %v3414
        %3821 = vmatprep.subr.bf16.mxu0 0
        %3822 = vmatpush1.bf16.msra.mxu0 %v3415
        %3823 = vmatprep.subr.bf16.mxu0 0
        %3824 = vmatpush1.bf16.msra.mxu0 %v3416
        %3825 = vmatprep.subr.bf16.mxu0 0
        %3826 = vmatpush1.bf16.msra.mxu0 %v3417
        %3827 = vmatprep.subr.bf16.mxu0 0
        %3828 = vmatpush1.bf16.msra.mxu0 %v3418
        %3829 = vmatprep.subr.bf16.mxu0 0
        %3830 = vmatpush1.bf16.msra.mxu0 %v3419
        %3831 = vmatprep.subr.bf16.mxu0 0
        %3832 = vmatpush1.bf16.msra.mxu0 %v3420
        %3833 = vmatprep.subr.bf16.mxu0 0
        %3834 = vmatpush1.bf16.msra.mxu0 %v3421
        %3835 = vmatprep.subr.bf16.mxu0 0
        %3836 = vmatpush1.bf16.msra.mxu0 %v3422
        %3837 = vmatprep.subr.bf16.mxu0 0
        %3838 = vmatpush1.bf16.msra.mxu0 %v3423
        %3839 = vmatprep.subr.bf16.mxu0 0
        %3840 = vmatpush1.bf16.msra.mxu0 %v3424
        %3841 = vmatprep.mubr.bf16.mxu0 %v1960
        %3842 = vmatmul.mubr.bf16.gmra.mrb[0].mxu0 %v1959
        %v3843 = vpop.f32.mrb[0].mxu0
        %v3844 = vadd.f32 %v1007, %v3843
        %v3845 = vpop.f32.mrb[0].mxu0
        %v3846 = vpop.f32.mrb[0].mxu0
        %v3847 = vadd.f32 %v1007, %v3846
        %v3848 = vpop.f32.mrb[0].mxu0
        %3849 = vmatprep.mubr.bf16.mxu0 %v1985
        %3850 = vmatmul.mubr.bf16.gmra.mrb[0].mxu0 %v1984
        %v3851 = vpop.f32.mrb[0].mxu0
        %v3852 = vadd.f32 %v1007, %v3851
        %v3853 = vpop.f32.mrb[0].mxu0
        %v3854 = vpop.f32.mrb[0].mxu0
        %v3855 = vadd.f32 %v1007, %v3854
        %v3856 = vpop.f32.mrb[0].mxu0
        %3857 = vmatprep.mubr.bf16.mxu0 %v2010
        %3858 = vmatmul.mubr.bf16.gmra.mrb[0].mxu0 %v2009
        %v3859 = vpop.f32.mrb[0].mxu0
        %v3860 = vadd.f32 %v1007, %v3859
        %v3861 = vpop.f32.mrb[0].mxu0
        %v3862 = vpop.f32.mrb[0].mxu0
        %v3863 = vadd.f32 %v1007, %v3862
        %v3864 = vpop.f32.mrb[0].mxu0
        %3865 = vmatprep.mubr.bf16.mxu0 %v2035
        %3866 = vmatmul.mubr.bf16.gmra.mrb[0].mxu0 %v2034
        %v3867 = vpop.f32.mrb[0].mxu0
        %v3868 = vadd.f32 %v1007, %v3867
        %v3869 = vpop.f32.mrb[0].mxu0
        %v3870 = vpop.f32.mrb[0].mxu0
        %v3871 = vadd.f32 %v1007, %v3870
        %v3872 = vpop.f32.mrb[0].mxu0
        %3873 = vmatprep.mubr.bf16.mxu0 %v2060
        %3874 = vmatmul.mubr.bf16.gmra.mrb[0].mxu0 %v2059
        %v3875 = vpop.f32.mrb[0].mxu0
        %v3876 = vadd.f32 %v1007, %v3875
        %v3877 = vpop.f32.mrb[0].mxu0
        %v3878 = vpop.f32.mrb[0].mxu0
        %v3879 = vadd.f32 %v1007, %v3878
        %v3880 = vpop.f32.mrb[0].mxu0
        %3881 = vmatprep.mubr.bf16.mxu0 %v2085
        %3882 = vmatmul.mubr.bf16.gmra.mrb[0].mxu0 %v2084
        %v3883 = vpop.f32.mrb[0].mxu0
        %v3884 = vadd.f32 %v1007, %v3883
        %v3885 = vpop.f32.mrb[0].mxu0
        %v3886 = vpop.f32.mrb[0].mxu0
        %v3887 = vadd.f32 %v1007, %v3886
        %v3888 = vpop.f32.mrb[0].mxu0
        %3889 = vmatprep.mubr.bf16.mxu0 %v2110
        %3890 = vmatmul.mubr.bf16.gmra.mrb[0].mxu0 %v2109
        %v3891 = vpop.f32.mrb[0].mxu0
        %v3892 = vadd.f32 %v1007, %v3891
        %v3893 = vpop.f32.mrb[0].mxu0
        %v3894 = vpop.f32.mrb[0].mxu0
        %v3895 = vadd.f32 %v1007, %v3894
        %v3896 = vpop.f32.mrb[0].mxu0
        %3897 = vmatprep.mubr.bf16.mxu0 %v2135
        %3898 = vmatmul.mubr.bf16.gmra.mrb[0].mxu0 %v2134
        %v3899 = vpop.f32.mrb[0].mxu0
        %v3900 = vadd.f32 %v1007, %v3899
        %v3901 = vpop.f32.mrb[0].mxu0
        %v3902 = vpop.f32.mrb[0].mxu0
        %v3903 = vadd.f32 %v1007, %v3902
        %v3904 = vpop.f32.mrb[0].mxu0
        %3905 = vmatprep.mubr.bf16.mxu0 %v2160
        %3906 = vmatmul.mubr.bf16.gmra.mrb[0].mxu0 %v2159
        %v3907 = vpop.f32.mrb[0].mxu0
        %v3908 = vadd.f32 %v1007, %v3907
        %v3909 = vpop.f32.mrb[0].mxu0
        %v3910 = vpop.f32.mrb[0].mxu0
        %v3911 = vadd.f32 %v1007, %v3910
        %v3912 = vpop.f32.mrb[0].mxu0
        %3913 = vmatprep.mubr.bf16.mxu0 %v2185
        %3914 = vmatmul.mubr.bf16.gmra.mrb[0].mxu0 %v2184
        %v3915 = vpop.f32.mrb[0].mxu0
        %v3916 = vadd.f32 %v1007, %v3915
        %v3917 = vpop.f32.mrb[0].mxu0
        %v3918 = vpop.f32.mrb[0].mxu0
        %v3919 = vadd.f32 %v1007, %v3918
        %v3920 = vpop.f32.mrb[0].mxu0
        %3921 = vmatprep.mubr.bf16.mxu0 %v2210
        %3922 = vmatmul.mubr.bf16.gmra.mrb[0].mxu0 %v2209
        %v3923 = vpop.f32.mrb[0].mxu0
        %v3924 = vadd.f32 %v1007, %v3923
        %v3925 = vpop.f32.mrb[0].mxu0
        %v3926 = vpop.f32.mrb[0].mxu0
        %v3927 = vadd.f32 %v1007, %v3926
        %v3928 = vpop.f32.mrb[0].mxu0
        %3929 = vmatprep.mubr.bf16.mxu0 %v2235
        %3930 = vmatmul.mubr.bf16.gmra.mrb[0].mxu0 %v2234
        %v3931 = vpop.f32.mrb[0].mxu0
        %v3932 = vadd.f32 %v1007, %v3931
        %v3933 = vpop.f32.mrb[0].mxu0
        %v3934 = vpop.f32.mrb[0].mxu0
        %v3935 = vadd.f32 %v1007, %v3934
        %v3936 = vpop.f32.mrb[0].mxu0
        %3937 = vmatprep.mubr.bf16.mxu0 %v2260
        %3938 = vmatmul.mubr.bf16.gmra.mrb[0].mxu0 %v2259
        %v3939 = vpop.f32.mrb[0].mxu0
        %v3940 = vadd.f32 %v1007, %v3939
        %v3941 = vpop.f32.mrb[0].mxu0
        %v3942 = vpop.f32.mrb[0].mxu0
        %v3943 = vpop.f32.mrb[0].mxu0
        %3944 = vdwg.mxu0
        %3945 = vmatprep.subr.bf16.mxu0 0
        %3946 = vmatpush1.bf16.msra.mxu0 %v3425
        %3947 = vmatprep.subr.bf16.mxu0 0
        %3948 = vmatpush1.bf16.msra.mxu0 %v3426
        %3949 = vmatprep.subr.bf16.mxu0 0
        %3950 = vmatpush1.bf16.msra.mxu0 %v3427
        %3951 = vmatprep.subr.bf16.mxu0 0
        %3952 = vmatpush1.bf16.msra.mxu0 %v3428
        %3953 = vmatprep.subr.bf16.mxu0 0
        %3954 = vmatpush1.bf16.msra.mxu0 %v3429
        %3955 = vmatprep.subr.bf16.mxu0 0
        %3956 = vmatpush1.bf16.msra.mxu0 %v3430
        %3957 = vmatprep.subr.bf16.mxu0 0
        %3958 = vmatpush1.bf16.msra.mxu0 %v3431
        %3959 = vmatprep.subr.bf16.mxu0 0
        %3960 = vmatpush1.bf16.msra.mxu0 %v3432
        %3961 = vmatprep.subr.bf16.mxu0 0
        %3962 = vmatpush1.bf16.msra.mxu0 %v3433
        %3963 = vmatprep.subr.bf16.mxu0 0
        %3964 = vmatpush1.bf16.msra.mxu0 %v3434
        %3965 = vmatprep.subr.bf16.mxu0 0
        %3966 = vmatpush1.bf16.msra.mxu0 %v3435
        %3967 = vmatprep.subr.bf16.mxu0 0
        %3968 = vmatpush1.bf16.msra.mxu0 %v3436
        %3969 = vmatprep.subr.bf16.mxu0 0
        %3970 = vmatpush1.bf16.msra.mxu0 %v3437
        %3971 = vmatprep.subr.bf16.mxu0 0
        %3972 = vmatpush1.bf16.msra.mxu0 %v3438
        %3973 = vmatprep.subr.bf16.mxu0 0
        %3974 = vmatpush1.bf16.msra.mxu0 %v3439
        %3975 = vmatprep.subr.bf16.mxu0 0
        %3976 = vmatpush1.bf16.msra.mxu0 %v3440
        %3977 = vmatprep.mubr.bf16.mxu0 %v1962
        %3978 = vmatmul.mubr.bf16.gmra.mrb[0].mxu0 %v1961
        %v3979 = vpop.f32.mrb[0].mxu0
        %v3980 = vadd.f32 %v3844, %v3979
        %v3981 = vpop.f32.mrb[0].mxu0
        %v3982 = vpop.f32.mrb[0].mxu0
        %v3983 = vadd.f32 %v3847, %v3982
        %v3984 = vpop.f32.mrb[0].mxu0
        %3985 = vmatprep.mubr.bf16.mxu0 %v1987
        %3986 = vmatmul.mubr.bf16.gmra.mrb[0].mxu0 %v1986
        %v3987 = vpop.f32.mrb[0].mxu0
        %v3988 = vadd.f32 %v3852, %v3987
        %v3989 = vpop.f32.mrb[0].mxu0
        %v3990 = vpop.f32.mrb[0].mxu0
        %v3991 = vadd.f32 %v3855, %v3990
        %v3992 = vpop.f32.mrb[0].mxu0
        %3993 = vmatprep.mubr.bf16.mxu0 %v2012
        %3994 = vmatmul.mubr.bf16.gmra.mrb[0].mxu0 %v2011
        %v3995 = vpop.f32.mrb[0].mxu0
        %v3996 = vadd.f32 %v3860, %v3995
        %v3997 = vpop.f32.mrb[0].mxu0
        %v3998 = vpop.f32.mrb[0].mxu0
        %v3999 = vadd.f32 %v3863, %v3998
        %v4000 = vpop.f32.mrb[0].mxu0
        %4001 = vmatprep.mubr.bf16.mxu0 %v2037
        %4002 = vmatmul.mubr.bf16.gmra.mrb[0].mxu0 %v2036
        %v4003 = vpop.f32.mrb[0].mxu0
        %v4004 = vadd.f32 %v3868, %v4003
        %v4005 = vpop.f32.mrb[0].mxu0
        %v4006 = vpop.f32.mrb[0].mxu0
        %v4007 = vadd.f32 %v3871, %v4006
        %v4008 = vpop.f32.mrb[0].mxu0
        %4009 = vmatprep.mubr.bf16.mxu0 %v2062
        %4010 = vmatmul.mubr.bf16.gmra.mrb[0].mxu0 %v2061
        %v4011 = vpop.f32.mrb[0].mxu0
        %v4012 = vadd.f32 %v3876, %v4011
        %v4013 = vpop.f32.mrb[0].mxu0
        %v4014 = vpop.f32.mrb[0].mxu0
        %v4015 = vadd.f32 %v3879, %v4014
        %v4016 = vpop.f32.mrb[0].mxu0
        %4017 = vmatprep.mubr.bf16.mxu0 %v2087
        %4018 = vmatmul.mubr.bf16.gmra.mrb[0].mxu0 %v2086
        %v4019 = vpop.f32.mrb[0].mxu0
        %v4020 = vadd.f32 %v3884, %v4019
        %v4021 = vpop.f32.mrb[0].mxu0
        %v4022 = vpop.f32.mrb[0].mxu0
        %v4023 = vadd.f32 %v3887, %v4022
        %v4024 = vpop.f32.mrb[0].mxu0
        %4025 = vmatprep.mubr.bf16.mxu0 %v2112
        %4026 = vmatmul.mubr.bf16.gmra.mrb[0].mxu0 %v2111
        %v4027 = vpop.f32.mrb[0].mxu0
        %v4028 = vadd.f32 %v3892, %v4027
        %v4029 = vpop.f32.mrb[0].mxu0
        %v4030 = vpop.f32.mrb[0].mxu0
        %v4031 = vadd.f32 %v3895, %v4030
        %v4032 = vpop.f32.mrb[0].mxu0
        %4033 = vmatprep.mubr.bf16.mxu0 %v2137
        %4034 = vmatmul.mubr.bf16.gmra.mrb[0].mxu0 %v2136
        %v4035 = vpop.f32.mrb[0].mxu0
        %v4036 = vadd.f32 %v3900, %v4035
        %v4037 = vpop.f32.mrb[0].mxu0
        %v4038 = vpop.f32.mrb[0].mxu0
        %v4039 = vadd.f32 %v3903, %v4038
        %v4040 = vpop.f32.mrb[0].mxu0
        %4041 = vmatprep.mubr.bf16.mxu0 %v2162
        %4042 = vmatmul.mubr.bf16.gmra.mrb[0].mxu0 %v2161
        %v4043 = vpop.f32.mrb[0].mxu0
        %v4044 = vadd.f32 %v3908, %v4043
        %v4045 = vpop.f32.mrb[0].mxu0
        %v4046 = vpop.f32.mrb[0].mxu0
        %v4047 = vadd.f32 %v3911, %v4046
        %v4048 = vpop.f32.mrb[0].mxu0
        %4049 = vmatprep.mubr.bf16.mxu0 %v2187
        %4050 = vmatmul.mubr.bf16.gmra.mrb[0].mxu0 %v2186
        %v4051 = vpop.f32.mrb[0].mxu0
        %v4052 = vadd.f32 %v3916, %v4051
        %v4053 = vpop.f32.mrb[0].mxu0
        %v4054 = vpop.f32.mrb[0].mxu0
        %v4055 = vadd.f32 %v3919, %v4054
        %v4056 = vpop.f32.mrb[0].mxu0
        %4057 = vmatprep.mubr.bf16.mxu0 %v2212
        %4058 = vmatmul.mubr.bf16.gmra.mrb[0].mxu0 %v2211
        %v4059 = vpop.f32.mrb[0].mxu0
        %v4060 = vadd.f32 %v3924, %v4059
        %v4061 = vpop.f32.mrb[0].mxu0
        %v4062 = vpop.f32.mrb[0].mxu0
        %v4063 = vadd.f32 %v3927, %v4062
        %v4064 = vpop.f32.mrb[0].mxu0
        %4065 = vmatprep.mubr.bf16.mxu0 %v2237
        %4066 = vmatmul.mubr.bf16.gmra.mrb[0].mxu0 %v2236
        %v4067 = vpop.f32.mrb[0].mxu0
        %v4068 = vadd.f32 %v3932, %v4067
        %v4069 = vpop.f32.mrb[0].mxu0
        %v4070 = vpop.f32.mrb[0].mxu0
        %v4071 = vadd.f32 %v3935, %v4070
        %v4072 = vpop.f32.mrb[0].mxu0
        %4073 = vmatprep.mubr.bf16.mxu0 %v2262
        %4074 = vmatmul.mubr.bf16.gmra.mrb[0].mxu0 %v2261
        %v4075 = vpop.f32.mrb[0].mxu0
        %v4076 = vadd.f32 %v3940, %v4075
        %v4077 = vpop.f32.mrb[0].mxu0
        %v4078 = vpop.f32.mrb[0].mxu0
        %v4079 = vpop.f32.mrb[0].mxu0
        %4080 = vdwg.mxu0
        %4081 = vmatprep.subr.bf16.mxu0 0
        %4082 = vmatpush1.bf16.msra.mxu0 %v3441
        %4083 = vmatprep.subr.bf16.mxu0 0
        %4084 = vmatpush1.bf16.msra.mxu0 %v3442
        %4085 = vmatprep.subr.bf16.mxu0 0
        %4086 = vmatpush1.bf16.msra.mxu0 %v3443
        %4087 = vmatprep.subr.bf16.mxu0 0
        %4088 = vmatpush1.bf16.msra.mxu0 %v3444
        %4089 = vmatprep.subr.bf16.mxu0 0
        %4090 = vmatpush1.bf16.msra.mxu0 %v3445
        %4091 = vmatprep.subr.bf16.mxu0 0
        %4092 = vmatpush1.bf16.msra.mxu0 %v3446
        %4093 = vmatprep.subr.bf16.mxu0 0
        %4094 = vmatpush1.bf16.msra.mxu0 %v3447
        %4095 = vmatprep.subr.bf16.mxu0 0
        %4096 = vmatpush1.bf16.msra.mxu0 %v3448
        %4097 = vmatprep.subr.bf16.mxu0 0
        %4098 = vmatpush1.bf16.msra.mxu0 %v3449
        %4099 = vmatprep.subr.bf16.mxu0 0
        %4100 = vmatpush1.bf16.msra.mxu0 %v3450
        %4101 = vmatprep.subr.bf16.mxu0 0
        %4102 = vmatpush1.bf16.msra.mxu0 %v3451
        %4103 = vmatprep.subr.bf16.mxu0 0
        %4104 = vmatpush1.bf16.msra.mxu0 %v3452
        %4105 = vmatprep.subr.bf16.mxu0 0
        %4106 = vmatpush1.bf16.msra.mxu0 %v3453
        %4107 = vmatprep.subr.bf16.mxu0 0
        %4108 = vmatpush1.bf16.msra.mxu0 %v3454
        %4109 = vmatprep.subr.bf16.mxu0 0
        %4110 = vmatpush1.bf16.msra.mxu0 %v3455
        %4111 = vmatprep.subr.bf16.mxu0 0
        %4112 = vmatpush1.bf16.msra.mxu0 %v3456
        %4113 = vmatprep.mubr.bf16.mxu0 %v1964
        %4114 = vmatmul.mubr.bf16.gmra.mrb[0].mxu0 %v1963
        %v4115 = vpop.f32.mrb[0].mxu0
        %v4116 = vadd.f32 %v3980, %v4115
        %v4117 = vpop.f32.mrb[0].mxu0
        %v4118 = vpop.f32.mrb[0].mxu0
        %v4119 = vadd.f32 %v3983, %v4118
        %v4120 = vpop.f32.mrb[0].mxu0
        %4121 = vmatprep.mubr.bf16.mxu0 %v1989
        %4122 = vmatmul.mubr.bf16.gmra.mrb[0].mxu0 %v1988
        %v4123 = vpop.f32.mrb[0].mxu0
        %v4124 = vadd.f32 %v3988, %v4123
        %v4125 = vpop.f32.mrb[0].mxu0
        %v4126 = vpop.f32.mrb[0].mxu0
        %v4127 = vadd.f32 %v3991, %v4126
        %v4128 = vpop.f32.mrb[0].mxu0
        %4129 = vmatprep.mubr.bf16.mxu0 %v2014
        %4130 = vmatmul.mubr.bf16.gmra.mrb[0].mxu0 %v2013
        %v4131 = vpop.f32.mrb[0].mxu0
        %v4132 = vadd.f32 %v3996, %v4131
        %v4133 = vpop.f32.mrb[0].mxu0
        %v4134 = vpop.f32.mrb[0].mxu0
        %v4135 = vadd.f32 %v3999, %v4134
        %v4136 = vpop.f32.mrb[0].mxu0
        %4137 = vmatprep.mubr.bf16.mxu0 %v2039
        %4138 = vmatmul.mubr.bf16.gmra.mrb[0].mxu0 %v2038
        %v4139 = vpop.f32.mrb[0].mxu0
        %v4140 = vadd.f32 %v4004, %v4139
        %v4141 = vpop.f32.mrb[0].mxu0
        %v4142 = vpop.f32.mrb[0].mxu0
        %v4143 = vadd.f32 %v4007, %v4142
        %v4144 = vpop.f32.mrb[0].mxu0
        %4145 = vmatprep.mubr.bf16.mxu0 %v2064
        %4146 = vmatmul.mubr.bf16.gmra.mrb[0].mxu0 %v2063
        %v4147 = vpop.f32.mrb[0].mxu0
        %v4148 = vadd.f32 %v4012, %v4147
        %v4149 = vpop.f32.mrb[0].mxu0
        %v4150 = vpop.f32.mrb[0].mxu0
        %v4151 = vadd.f32 %v4015, %v4150
        %v4152 = vpop.f32.mrb[0].mxu0
        %4153 = vmatprep.mubr.bf16.mxu0 %v2089
        %4154 = vmatmul.mubr.bf16.gmra.mrb[0].mxu0 %v2088
        %v4155 = vpop.f32.mrb[0].mxu0
        %v4156 = vadd.f32 %v4020, %v4155
        %v4157 = vpop.f32.mrb[0].mxu0
        %v4158 = vpop.f32.mrb[0].mxu0
        %v4159 = vadd.f32 %v4023, %v4158
        %v4160 = vpop.f32.mrb[0].mxu0
        %4161 = vmatprep.mubr.bf16.mxu0 %v2114
        %4162 = vmatmul.mubr.bf16.gmra.mrb[0].mxu0 %v2113
        %v4163 = vpop.f32.mrb[0].mxu0
        %v4164 = vadd.f32 %v4028, %v4163
        %v4165 = vpop.f32.mrb[0].mxu0
        %v4166 = vpop.f32.mrb[0].mxu0
        %v4167 = vadd.f32 %v4031, %v4166
        %v4168 = vpop.f32.mrb[0].mxu0
        %4169 = vmatprep.mubr.bf16.mxu0 %v2139
        %4170 = vmatmul.mubr.bf16.gmra.mrb[0].mxu0 %v2138
        %v4171 = vpop.f32.mrb[0].mxu0
        %v4172 = vadd.f32 %v4036, %v4171
        %v4173 = vpop.f32.mrb[0].mxu0
        %v4174 = vpop.f32.mrb[0].mxu0
        %v4175 = vadd.f32 %v4039, %v4174
        %v4176 = vpop.f32.mrb[0].mxu0
        %4177 = vmatprep.mubr.bf16.mxu0 %v2164
        %4178 = vmatmul.mubr.bf16.gmra.mrb[0].mxu0 %v2163
        %v4179 = vpop.f32.mrb[0].mxu0
        %v4180 = vadd.f32 %v4044, %v4179
        %v4181 = vpop.f32.mrb[0].mxu0
        %v4182 = vpop.f32.mrb[0].mxu0
        %v4183 = vadd.f32 %v4047, %v4182
        %v4184 = vpop.f32.mrb[0].mxu0
        %4185 = vmatprep.mubr.bf16.mxu0 %v2189
        %4186 = vmatmul.mubr.bf16.gmra.mrb[0].mxu0 %v2188
        %v4187 = vpop.f32.mrb[0].mxu0
        %v4188 = vadd.f32 %v4052, %v4187
        %v4189 = vpop.f32.mrb[0].mxu0
        %v4190 = vpop.f32.mrb[0].mxu0
        %v4191 = vadd.f32 %v4055, %v4190
        %v4192 = vpop.f32.mrb[0].mxu0
        %4193 = vmatprep.mubr.bf16.mxu0 %v2214
        %4194 = vmatmul.mubr.bf16.gmra.mrb[0].mxu0 %v2213
        %v4195 = vpop.f32.mrb[0].mxu0
        %v4196 = vadd.f32 %v4060, %v4195
        %v4197 = vpop.f32.mrb[0].mxu0
        %v4198 = vpop.f32.mrb[0].mxu0
        %v4199 = vadd.f32 %v4063, %v4198
        %v4200 = vpop.f32.mrb[0].mxu0
        %4201 = vmatprep.mubr.bf16.mxu0 %v2239
        %4202 = vmatmul.mubr.bf16.gmra.mrb[0].mxu0 %v2238
        %v4203 = vpop.f32.mrb[0].mxu0
        %v4204 = vadd.f32 %v4068, %v4203
        %v4205 = vpop.f32.mrb[0].mxu0
        %v4206 = vpop.f32.mrb[0].mxu0
        %v4207 = vadd.f32 %v4071, %v4206
        %v4208 = vpop.f32.mrb[0].mxu0
        %4209 = vmatprep.mubr.bf16.mxu0 %v2264
        %4210 = vmatmul.mubr.bf16.gmra.mrb[0].mxu0 %v2263
        %v4211 = vpop.f32.mrb[0].mxu0
        %v4212 = vadd.f32 %v4076, %v4211
        %v4213 = vpop.f32.mrb[0].mxu0
        %v4214 = vpop.f32.mrb[0].mxu0
        %v4215 = vpop.f32.mrb[0].mxu0
        %4216 = vdwg.mxu0
        %4217 = vmatprep.subr.bf16.mxu0 0
        %4218 = vmatpush1.bf16.msra.mxu0 %v3457
        %4219 = vmatprep.subr.bf16.mxu0 0
        %4220 = vmatpush1.bf16.msra.mxu0 %v3458
        %4221 = vmatprep.subr.bf16.mxu0 0
        %4222 = vmatpush1.bf16.msra.mxu0 %v3459
        %4223 = vmatprep.subr.bf16.mxu0 0
        %4224 = vmatpush1.bf16.msra.mxu0 %v3460
        %4225 = vmatprep.subr.bf16.mxu0 0
        %4226 = vmatpush1.bf16.msra.mxu0 %v3461
        %4227 = vmatprep.subr.bf16.mxu0 0
        %4228 = vmatpush1.bf16.msra.mxu0 %v3462
        %4229 = vmatprep.subr.bf16.mxu0 0
        %4230 = vmatpush1.bf16.msra.mxu0 %v3463
        %4231 = vmatprep.subr.bf16.mxu0 0
        %4232 = vmatpush1.bf16.msra.mxu0 %v3464
        %4233 = vmatprep.subr.bf16.mxu0 0
        %4234 = vmatpush1.bf16.msra.mxu0 %v3465
        %4235 = vmatprep.subr.bf16.mxu0 0
        %4236 = vmatpush1.bf16.msra.mxu0 %v3466
        %4237 = vmatprep.subr.bf16.mxu0 0
        %4238 = vmatpush1.bf16.msra.mxu0 %v3467
        %4239 = vmatprep.subr.bf16.mxu0 0
        %4240 = vmatpush1.bf16.msra.mxu0 %v3468
        %4241 = vmatprep.subr.bf16.mxu0 0
        %4242 = vmatpush1.bf16.msra.mxu0 %v3469
        %4243 = vmatprep.subr.bf16.mxu0 0
        %4244 = vmatpush1.bf16.msra.mxu0 %v3470
        %4245 = vmatprep.subr.bf16.mxu0 0
        %4246 = vmatpush1.bf16.msra.mxu0 %v3471
        %4247 = vmatprep.subr.bf16.mxu0 0
        %4248 = vmatpush1.bf16.msra.mxu0 %v3472
        %4249 = vmatprep.mubr.bf16.mxu0 %v1966
        %4250 = vmatmul.mubr.bf16.gmra.mrb[0].mxu0 %v1965
        %v4251 = vpop.f32.mrb[0].mxu0
        %v4252 = vadd.f32 %v4116, %v4251
        %v4253 = vpop.f32.mrb[0].mxu0
        %v4254 = vpop.f32.mrb[0].mxu0
        %v4255 = vadd.f32 %v4119, %v4254
        %v4256 = vpop.f32.mrb[0].mxu0
        %4257 = vmatprep.mubr.bf16.mxu0 %v1991
        %4258 = vmatmul.mubr.bf16.gmra.mrb[0].mxu0 %v1990
        %v4259 = vpop.f32.mrb[0].mxu0
        %v4260 = vadd.f32 %v4124, %v4259
        %v4261 = vpop.f32.mrb[0].mxu0
        %v4262 = vpop.f32.mrb[0].mxu0
        %v4263 = vadd.f32 %v4127, %v4262
        %v4264 = vpop.f32.mrb[0].mxu0
        %4265 = vmatprep.mubr.bf16.mxu0 %v2016
        %4266 = vmatmul.mubr.bf16.gmra.mrb[0].mxu0 %v2015
        %v4267 = vpop.f32.mrb[0].mxu0
        %v4268 = vadd.f32 %v4132, %v4267
        %v4269 = vpop.f32.mrb[0].mxu0
        %v4270 = vpop.f32.mrb[0].mxu0
        %v4271 = vadd.f32 %v4135, %v4270
        %v4272 = vpop.f32.mrb[0].mxu0
        %4273 = vmatprep.mubr.bf16.mxu0 %v2041
        %4274 = vmatmul.mubr.bf16.gmra.mrb[0].mxu0 %v2040
        %v4275 = vpop.f32.mrb[0].mxu0
        %v4276 = vadd.f32 %v4140, %v4275
        %v4277 = vpop.f32.mrb[0].mxu0
        %v4278 = vpop.f32.mrb[0].mxu0
        %v4279 = vadd.f32 %v4143, %v4278
        %v4280 = vpop.f32.mrb[0].mxu0
        %4281 = vmatprep.mubr.bf16.mxu0 %v2066
        %4282 = vmatmul.mubr.bf16.gmra.mrb[0].mxu0 %v2065
        %v4283 = vpop.f32.mrb[0].mxu0
        %v4284 = vadd.f32 %v4148, %v4283
        %v4285 = vpop.f32.mrb[0].mxu0
        %v4286 = vpop.f32.mrb[0].mxu0
        %v4287 = vadd.f32 %v4151, %v4286
        %v4288 = vpop.f32.mrb[0].mxu0
        %4289 = vmatprep.mubr.bf16.mxu0 %v2091
        %4290 = vmatmul.mubr.bf16.gmra.mrb[0].mxu0 %v2090
        %v4291 = vpop.f32.mrb[0].mxu0
        %v4292 = vadd.f32 %v4156, %v4291
        %v4293 = vpop.f32.mrb[0].mxu0
        %v4294 = vpop.f32.mrb[0].mxu0
        %v4295 = vadd.f32 %v4159, %v4294
        %v4296 = vpop.f32.mrb[0].mxu0
        %4297 = vmatprep.mubr.bf16.mxu0 %v2116
        %4298 = vmatmul.mubr.bf16.gmra.mrb[0].mxu0 %v2115
        %v4299 = vpop.f32.mrb[0].mxu0
        %v4300 = vadd.f32 %v4164, %v4299
        %v4301 = vpop.f32.mrb[0].mxu0
        %v4302 = vpop.f32.mrb[0].mxu0
        %v4303 = vadd.f32 %v4167, %v4302
        %v4304 = vpop.f32.mrb[0].mxu0
        %4305 = vmatprep.mubr.bf16.mxu0 %v2141
        %4306 = vmatmul.mubr.bf16.gmra.mrb[0].mxu0 %v2140
        %v4307 = vpop.f32.mrb[0].mxu0
        %v4308 = vadd.f32 %v4172, %v4307
        %v4309 = vpop.f32.mrb[0].mxu0
        %v4310 = vpop.f32.mrb[0].mxu0
        %v4311 = vadd.f32 %v4175, %v4310
        %v4312 = vpop.f32.mrb[0].mxu0
        %4313 = vmatprep.mubr.bf16.mxu0 %v2166
        %4314 = vmatmul.mubr.bf16.gmra.mrb[0].mxu0 %v2165
        %v4315 = vpop.f32.mrb[0].mxu0
        %v4316 = vadd.f32 %v4180, %v4315
        %v4317 = vpop.f32.mrb[0].mxu0
        %v4318 = vpop.f32.mrb[0].mxu0
        %v4319 = vadd.f32 %v4183, %v4318
        %v4320 = vpop.f32.mrb[0].mxu0
        %4321 = vmatprep.mubr.bf16.mxu0 %v2191
        %4322 = vmatmul.mubr.bf16.gmra.mrb[0].mxu0 %v2190
        %v4323 = vpop.f32.mrb[0].mxu0
        %v4324 = vadd.f32 %v4188, %v4323
        %v4325 = vpop.f32.mrb[0].mxu0
        %v4326 = vpop.f32.mrb[0].mxu0
        %v4327 = vadd.f32 %v4191, %v4326
        %v4328 = vpop.f32.mrb[0].mxu0
        %4329 = vmatprep.mubr.bf16.mxu0 %v2216
        %4330 = vmatmul.mubr.bf16.gmra.mrb[0].mxu0 %v2215
        %v4331 = vpop.f32.mrb[0].mxu0
        %v4332 = vadd.f32 %v4196, %v4331
        %v4333 = vpop.f32.mrb[0].mxu0
        %v4334 = vpop.f32.mrb[0].mxu0
        %v4335 = vadd.f32 %v4199, %v4334
        %v4336 = vpop.f32.mrb[0].mxu0
        %4337 = vmatprep.mubr.bf16.mxu0 %v2241
        %4338 = vmatmul.mubr.bf16.gmra.mrb[0].mxu0 %v2240
        %v4339 = vpop.f32.mrb[0].mxu0
        %v4340 = vadd.f32 %v4204, %v4339
        %v4341 = vpop.f32.mrb[0].mxu0
        %v4342 = vpop.f32.mrb[0].mxu0
        %v4343 = vadd.f32 %v4207, %v4342
        %v4344 = vpop.f32.mrb[0].mxu0
        %4345 = vmatprep.mubr.bf16.mxu0 %v2266
        %4346 = vmatmul.mubr.bf16.gmra.mrb[0].mxu0 %v2265
        %v4347 = vpop.f32.mrb[0].mxu0
        %v4348 = vadd.f32 %v4212, %v4347
        %v4349 = vpop.f32.mrb[0].mxu0
        %v4350 = vpop.f32.mrb[0].mxu0
        %v4351 = vpop.f32.mrb[0].mxu0
        %4352 = vdwg.mxu0
        %4353 = vmatprep.subr.bf16.mxu0 0
        %4354 = vmatpush1.bf16.msra.mxu0 %v3473
        %4355 = vmatprep.subr.bf16.mxu0 0
        %4356 = vmatpush1.bf16.msra.mxu0 %v3474
        %4357 = vmatprep.subr.bf16.mxu0 0
        %4358 = vmatpush1.bf16.msra.mxu0 %v3475
        %4359 = vmatprep.subr.bf16.mxu0 0
        %4360 = vmatpush1.bf16.msra.mxu0 %v3476
        %4361 = vmatprep.subr.bf16.mxu0 0
        %4362 = vmatpush1.bf16.msra.mxu0 %v3477
        %4363 = vmatprep.subr.bf16.mxu0 0
        %4364 = vmatpush1.bf16.msra.mxu0 %v3478
        %4365 = vmatprep.subr.bf16.mxu0 0
        %4366 = vmatpush1.bf16.msra.mxu0 %v3479
        %4367 = vmatprep.subr.bf16.mxu0 0
        %4368 = vmatpush1.bf16.msra.mxu0 %v3480
        %4369 = vmatprep.subr.bf16.mxu0 0
        %4370 = vmatpush1.bf16.msra.mxu0 %v3481
        %4371 = vmatprep.subr.bf16.mxu0 0
        %4372 = vmatpush1.bf16.msra.mxu0 %v3482
        %4373 = vmatprep.subr.bf16.mxu0 0
        %4374 = vmatpush1.bf16.msra.mxu0 %v3483
        %4375 = vmatprep.subr.bf16.mxu0 0
        %4376 = vmatpush1.bf16.msra.mxu0 %v3484
        %4377 = vmatprep.subr.bf16.mxu0 0
        %4378 = vmatpush1.bf16.msra.mxu0 %v3485
        %4379 = vmatprep.subr.bf16.mxu0 0
        %4380 = vmatpush1.bf16.msra.mxu0 %v3486
        %4381 = vmatprep.subr.bf16.mxu0 0
        %4382 = vmatpush1.bf16.msra.mxu0 %v3487
        %4383 = vmatprep.subr.bf16.mxu0 0
        %4384 = vmatpush1.bf16.msra.mxu0 %v3488
        %4385 = vmatprep.mubr.bf16.mxu0 %v1968
        %4386 = vmatmul.mubr.bf16.gmra.mrb[0].mxu0 %v1967
        %v4387 = vpop.f32.mrb[0].mxu0
        %v4388 = vadd.f32 %v4252, %v4387
        %v4389 = vpop.f32.mrb[0].mxu0
        %v4390 = vpop.f32.mrb[0].mxu0
        %v4391 = vadd.f32 %v4255, %v4390
        %v4392 = vpop.f32.mrb[0].mxu0
        %4393 = vmatprep.mubr.bf16.mxu0 %v1993
        %4394 = vmatmul.mubr.bf16.gmra.mrb[0].mxu0 %v1992
        %v4395 = vpop.f32.mrb[0].mxu0
        %v4396 = vadd.f32 %v4260, %v4395
        %v4397 = vpop.f32.mrb[0].mxu0
        %v4398 = vpop.f32.mrb[0].mxu0
        %v4399 = vadd.f32 %v4263, %v4398
        %v4400 = vpop.f32.mrb[0].mxu0
        %4401 = vmatprep.mubr.bf16.mxu0 %v2018
        %4402 = vmatmul.mubr.bf16.gmra.mrb[0].mxu0 %v2017
        %v4403 = vpop.f32.mrb[0].mxu0
        %v4404 = vadd.f32 %v4268, %v4403
        %v4405 = vpop.f32.mrb[0].mxu0
        %v4406 = vpop.f32.mrb[0].mxu0
        %v4407 = vadd.f32 %v4271, %v4406
        %v4408 = vpop.f32.mrb[0].mxu0
        %4409 = vmatprep.mubr.bf16.mxu0 %v2043
        %4410 = vmatmul.mubr.bf16.gmra.mrb[0].mxu0 %v2042
        %v4411 = vpop.f32.mrb[0].mxu0
        %v4412 = vadd.f32 %v4276, %v4411
        %v4413 = vpop.f32.mrb[0].mxu0
        %v4414 = vpop.f32.mrb[0].mxu0
        %v4415 = vadd.f32 %v4279, %v4414
        %v4416 = vpop.f32.mrb[0].mxu0
        %4417 = vmatprep.mubr.bf16.mxu0 %v2068
        %4418 = vmatmul.mubr.bf16.gmra.mrb[0].mxu0 %v2067
        %v4419 = vpop.f32.mrb[0].mxu0
        %v4420 = vadd.f32 %v4284, %v4419
        %v4421 = vpop.f32.mrb[0].mxu0
        %v4422 = vpop.f32.mrb[0].mxu0
        %v4423 = vadd.f32 %v4287, %v4422
        %v4424 = vpop.f32.mrb[0].mxu0
        %4425 = vmatprep.mubr.bf16.mxu0 %v2093
        %4426 = vmatmul.mubr.bf16.gmra.mrb[0].mxu0 %v2092
        %v4427 = vpop.f32.mrb[0].mxu0
        %v4428 = vadd.f32 %v4292, %v4427
        %v4429 = vpop.f32.mrb[0].mxu0
        %v4430 = vpop.f32.mrb[0].mxu0
        %v4431 = vadd.f32 %v4295, %v4430
        %v4432 = vpop.f32.mrb[0].mxu0
        %4433 = vmatprep.mubr.bf16.mxu0 %v2118
        %4434 = vmatmul.mubr.bf16.gmra.mrb[0].mxu0 %v2117
        %v4435 = vpop.f32.mrb[0].mxu0
        %v4436 = vadd.f32 %v4300, %v4435
        %v4437 = vpop.f32.mrb[0].mxu0
        %v4438 = vpop.f32.mrb[0].mxu0
        %v4439 = vadd.f32 %v4303, %v4438
        %v4440 = vpop.f32.mrb[0].mxu0
        %4441 = vmatprep.mubr.bf16.mxu0 %v2143
        %4442 = vmatmul.mubr.bf16.gmra.mrb[0].mxu0 %v2142
        %v4443 = vpop.f32.mrb[0].mxu0
        %v4444 = vadd.f32 %v4308, %v4443
        %v4445 = vpop.f32.mrb[0].mxu0
        %v4446 = vpop.f32.mrb[0].mxu0
        %v4447 = vadd.f32 %v4311, %v4446
        %v4448 = vpop.f32.mrb[0].mxu0
        %4449 = vmatprep.mubr.bf16.mxu0 %v2168
        %4450 = vmatmul.mubr.bf16.gmra.mrb[0].mxu0 %v2167
        %v4451 = vpop.f32.mrb[0].mxu0
        %v4452 = vadd.f32 %v4316, %v4451
        %v4453 = vpop.f32.mrb[0].mxu0
        %v4454 = vpop.f32.mrb[0].mxu0
        %v4455 = vadd.f32 %v4319, %v4454
        %v4456 = vpop.f32.mrb[0].mxu0
        %4457 = vmatprep.mubr.bf16.mxu0 %v2193
        %4458 = vmatmul.mubr.bf16.gmra.mrb[0].mxu0 %v2192
        %v4459 = vpop.f32.mrb[0].mxu0
        %v4460 = vadd.f32 %v4324, %v4459
        %v4461 = vpop.f32.mrb[0].mxu0
        %v4462 = vpop.f32.mrb[0].mxu0
        %v4463 = vadd.f32 %v4327, %v4462
        %v4464 = vpop.f32.mrb[0].mxu0
        %4465 = vmatprep.mubr.bf16.mxu0 %v2218
        %4466 = vmatmul.mubr.bf16.gmra.mrb[0].mxu0 %v2217
        %v4467 = vpop.f32.mrb[0].mxu0
        %v4468 = vadd.f32 %v4332, %v4467
        %v4469 = vpop.f32.mrb[0].mxu0
        %v4470 = vpop.f32.mrb[0].mxu0
        %v4471 = vadd.f32 %v4335, %v4470
        %v4472 = vpop.f32.mrb[0].mxu0
        %4473 = vmatprep.mubr.bf16.mxu0 %v2243
        %4474 = vmatmul.mubr.bf16.gmra.mrb[0].mxu0 %v2242
        %v4475 = vpop.f32.mrb[0].mxu0
        %v4476 = vadd.f32 %v4340, %v4475
        %v4477 = vpop.f32.mrb[0].mxu0
        %v4478 = vpop.f32.mrb[0].mxu0
        %v4479 = vadd.f32 %v4343, %v4478
        %v4480 = vpop.f32.mrb[0].mxu0
        %4481 = vmatprep.mubr.bf16.mxu0 %v2268
        %4482 = vmatmul.mubr.bf16.gmra.mrb[0].mxu0 %v2267
        %v4483 = vpop.f32.mrb[0].mxu0
        %v4484 = vadd.f32 %v4348, %v4483
        %v4485 = vpop.f32.mrb[0].mxu0
        %v4486 = vpop.f32.mrb[0].mxu0
        %v4487 = vpop.f32.mrb[0].mxu0
        %4488 = vdwg.mxu0
        %4489 = vmatprep.subr.bf16.mxu0 0
        %4490 = vmatpush1.bf16.msra.mxu0 %v3489
        %4491 = vmatprep.subr.bf16.mxu0 0
        %4492 = vmatpush1.bf16.msra.mxu0 %v3490
        %4493 = vmatprep.subr.bf16.mxu0 0
        %4494 = vmatpush1.bf16.msra.mxu0 %v3491
        %4495 = vmatprep.subr.bf16.mxu0 0
        %4496 = vmatpush1.bf16.msra.mxu0 %v3492
        %4497 = vmatprep.subr.bf16.mxu0 0
        %4498 = vmatpush1.bf16.msra.mxu0 %v3493
        %4499 = vmatprep.subr.bf16.mxu0 0
        %4500 = vmatpush1.bf16.msra.mxu0 %v3494
        %4501 = vmatprep.subr.bf16.mxu0 0
        %4502 = vmatpush1.bf16.msra.mxu0 %v3495
        %4503 = vmatprep.subr.bf16.mxu0 0
        %4504 = vmatpush1.bf16.msra.mxu0 %v3496
        %4505 = vmatprep.subr.bf16.mxu0 0
        %4506 = vmatpush1.bf16.msra.mxu0 %v3497
        %4507 = vmatprep.subr.bf16.mxu0 0
        %4508 = vmatpush1.bf16.msra.mxu0 %v3498
        %4509 = vmatprep.subr.bf16.mxu0 0
        %4510 = vmatpush1.bf16.msra.mxu0 %v3499
        %4511 = vmatprep.subr.bf16.mxu0 0
        %4512 = vmatpush1.bf16.msra.mxu0 %v3500
        %4513 = vmatprep.subr.bf16.mxu0 0
        %4514 = vmatpush1.bf16.msra.mxu0 %v3501
        %4515 = vmatprep.subr.bf16.mxu0 0
        %4516 = vmatpush1.bf16.msra.mxu0 %v3502
        %4517 = vmatprep.subr.bf16.mxu0 0
        %4518 = vmatpush1.bf16.msra.mxu0 %v3503
        %4519 = vmatprep.subr.bf16.mxu0 0
        %4520 = vmatpush1.bf16.msra.mxu0 %v3504
        %4521 = vmatprep.mubr.bf16.mxu0 %v1970
        %4522 = vmatmul.mubr.bf16.gmra.mrb[0].mxu0 %v1969
        %v4523 = vpop.f32.mrb[0].mxu0
        %v4524 = vadd.f32 %v4388, %v4523
        %v4525 = vpop.f32.mrb[0].mxu0
        %v4526 = vpop.f32.mrb[0].mxu0
        %v4527 = vadd.f32 %v4391, %v4526
        %v4528 = vpop.f32.mrb[0].mxu0
        %4529 = vmatprep.mubr.bf16.mxu0 %v1995
        %4530 = vmatmul.mubr.bf16.gmra.mrb[0].mxu0 %v1994
        %v4531 = vpop.f32.mrb[0].mxu0
        %v4532 = vadd.f32 %v4396, %v4531
        %v4533 = vpop.f32.mrb[0].mxu0
        %v4534 = vpop.f32.mrb[0].mxu0
        %v4535 = vadd.f32 %v4399, %v4534
        %v4536 = vpop.f32.mrb[0].mxu0
        %4537 = vmatprep.mubr.bf16.mxu0 %v2020
        %4538 = vmatmul.mubr.bf16.gmra.mrb[0].mxu0 %v2019
        %v4539 = vpop.f32.mrb[0].mxu0
        %v4540 = vadd.f32 %v4404, %v4539
        %v4541 = vpop.f32.mrb[0].mxu0
        %v4542 = vpop.f32.mrb[0].mxu0
        %v4543 = vadd.f32 %v4407, %v4542
        %v4544 = vpop.f32.mrb[0].mxu0
        %4545 = vmatprep.mubr.bf16.mxu0 %v2045
        %4546 = vmatmul.mubr.bf16.gmra.mrb[0].mxu0 %v2044
        %v4547 = vpop.f32.mrb[0].mxu0
        %v4548 = vadd.f32 %v4412, %v4547
        %v4549 = vpop.f32.mrb[0].mxu0
        %v4550 = vpop.f32.mrb[0].mxu0
        %v4551 = vadd.f32 %v4415, %v4550
        %v4552 = vpop.f32.mrb[0].mxu0
        %4553 = vmatprep.mubr.bf16.mxu0 %v2070
        %4554 = vmatmul.mubr.bf16.gmra.mrb[0].mxu0 %v2069
        %v4555 = vpop.f32.mrb[0].mxu0
        %v4556 = vadd.f32 %v4420, %v4555
        %v4557 = vpop.f32.mrb[0].mxu0
        %v4558 = vpop.f32.mrb[0].mxu0
        %v4559 = vadd.f32 %v4423, %v4558
        %v4560 = vpop.f32.mrb[0].mxu0
        %4561 = vmatprep.mubr.bf16.mxu0 %v2095
        %4562 = vmatmul.mubr.bf16.gmra.mrb[0].mxu0 %v2094
        %v4563 = vpop.f32.mrb[0].mxu0
        %v4564 = vadd.f32 %v4428, %v4563
        %v4565 = vpop.f32.mrb[0].mxu0
        %v4566 = vpop.f32.mrb[0].mxu0
        %v4567 = vadd.f32 %v4431, %v4566
        %v4568 = vpop.f32.mrb[0].mxu0
        %4569 = vmatprep.mubr.bf16.mxu0 %v2120
        %4570 = vmatmul.mubr.bf16.gmra.mrb[0].mxu0 %v2119
        %v4571 = vpop.f32.mrb[0].mxu0
        %v4572 = vadd.f32 %v4436, %v4571
        %v4573 = vpop.f32.mrb[0].mxu0
        %v4574 = vpop.f32.mrb[0].mxu0
        %v4575 = vadd.f32 %v4439, %v4574
        %v4576 = vpop.f32.mrb[0].mxu0
        %4577 = vmatprep.mubr.bf16.mxu0 %v2145
        %4578 = vmatmul.mubr.bf16.gmra.mrb[0].mxu0 %v2144
        %v4579 = vpop.f32.mrb[0].mxu0
        %v4580 = vadd.f32 %v4444, %v4579
        %v4581 = vpop.f32.mrb[0].mxu0
        %v4582 = vpop.f32.mrb[0].mxu0
        %v4583 = vadd.f32 %v4447, %v4582
        %v4584 = vpop.f32.mrb[0].mxu0
        %4585 = vmatprep.mubr.bf16.mxu0 %v2170
        %4586 = vmatmul.mubr.bf16.gmra.mrb[0].mxu0 %v2169
        %v4587 = vpop.f32.mrb[0].mxu0
        %v4588 = vadd.f32 %v4452, %v4587
        %v4589 = vpop.f32.mrb[0].mxu0
        %v4590 = vpop.f32.mrb[0].mxu0
        %v4591 = vadd.f32 %v4455, %v4590
        %v4592 = vpop.f32.mrb[0].mxu0
        %4593 = vmatprep.mubr.bf16.mxu0 %v2195
        %4594 = vmatmul.mubr.bf16.gmra.mrb[0].mxu0 %v2194
        %v4595 = vpop.f32.mrb[0].mxu0
        %v4596 = vadd.f32 %v4460, %v4595
        %v4597 = vpop.f32.mrb[0].mxu0
        %v4598 = vpop.f32.mrb[0].mxu0
        %v4599 = vadd.f32 %v4463, %v4598
        %v4600 = vpop.f32.mrb[0].mxu0
        %4601 = vmatprep.mubr.bf16.mxu0 %v2220
        %4602 = vmatmul.mubr.bf16.gmra.mrb[0].mxu0 %v2219
        %v4603 = vpop.f32.mrb[0].mxu0
        %v4604 = vadd.f32 %v4468, %v4603
        %v4605 = vpop.f32.mrb[0].mxu0
        %v4606 = vpop.f32.mrb[0].mxu0
        %v4607 = vadd.f32 %v4471, %v4606
        %v4608 = vpop.f32.mrb[0].mxu0
        %4609 = vmatprep.mubr.bf16.mxu0 %v2245
        %4610 = vmatmul.mubr.bf16.gmra.mrb[0].mxu0 %v2244
        %v4611 = vpop.f32.mrb[0].mxu0
        %v4612 = vadd.f32 %v4476, %v4611
        %v4613 = vpop.f32.mrb[0].mxu0
        %v4614 = vpop.f32.mrb[0].mxu0
        %v4615 = vadd.f32 %v4479, %v4614
        %v4616 = vpop.f32.mrb[0].mxu0
        %4617 = vmatprep.mubr.bf16.mxu0 %v2270
        %4618 = vmatmul.mubr.bf16.gmra.mrb[0].mxu0 %v2269
        %v4619 = vpop.f32.mrb[0].mxu0
        %v4620 = vadd.f32 %v4484, %v4619
        %v4621 = vpop.f32.mrb[0].mxu0
        %v4622 = vpop.f32.mrb[0].mxu0
        %v4623 = vpop.f32.mrb[0].mxu0
        %4624 = vdwg.mxu0
        %4625 = vmatprep.subr.bf16.mxu0 0
        %4626 = vmatpush1.bf16.msra.mxu0 %v3505
        %4627 = vmatprep.subr.bf16.mxu0 0
        %4628 = vmatpush1.bf16.msra.mxu0 %v3506
        %4629 = vmatprep.subr.bf16.mxu0 0
        %4630 = vmatpush1.bf16.msra.mxu0 %v3507
        %4631 = vmatprep.subr.bf16.mxu0 0
        %4632 = vmatpush1.bf16.msra.mxu0 %v3508
        %4633 = vmatprep.subr.bf16.mxu0 0
        %4634 = vmatpush1.bf16.msra.mxu0 %v3509
        %4635 = vmatprep.subr.bf16.mxu0 0
        %4636 = vmatpush1.bf16.msra.mxu0 %v3510
        %4637 = vmatprep.subr.bf16.mxu0 0
        %4638 = vmatpush1.bf16.msra.mxu0 %v3511
        %4639 = vmatprep.subr.bf16.mxu0 0
        %4640 = vmatpush1.bf16.msra.mxu0 %v3512
        %4641 = vmatprep.subr.bf16.mxu0 0
        %4642 = vmatpush1.bf16.msra.mxu0 %v3513
        %4643 = vmatprep.subr.bf16.mxu0 0
        %4644 = vmatpush1.bf16.msra.mxu0 %v3514
        %4645 = vmatprep.subr.bf16.mxu0 0
        %4646 = vmatpush1.bf16.msra.mxu0 %v3515
        %4647 = vmatprep.subr.bf16.mxu0 0
        %4648 = vmatpush1.bf16.msra.mxu0 %v3516
        %4649 = vmatprep.subr.bf16.mxu0 0
        %4650 = vmatpush1.bf16.msra.mxu0 %v3517
        %4651 = vmatprep.subr.bf16.mxu0 0
        %4652 = vmatpush1.bf16.msra.mxu0 %v3518
        %4653 = vmatprep.subr.bf16.mxu0 0
        %4654 = vmatpush1.bf16.msra.mxu0 %v3519
        %4655 = vmatprep.subr.bf16.mxu0 0
        %4656 = vmatpush1.bf16.msra.mxu0 %v3520
        %4657 = vmatprep.mubr.bf16.mxu0 %v1972
        %4658 = vmatmul.mubr.bf16.gmra.mrb[0].mxu0 %v1971
        %v4659 = vpop.f32.mrb[0].mxu0
        %v4660 = vadd.f32 %v4524, %v4659
        %v4661 = vpop.f32.mrb[0].mxu0
        %v4662 = vpop.f32.mrb[0].mxu0
        %v4663 = vadd.f32 %v4527, %v4662
        %v4664 = vpop.f32.mrb[0].mxu0
        %4665 = vmatprep.mubr.bf16.mxu0 %v1997
        %4666 = vmatmul.mubr.bf16.gmra.mrb[0].mxu0 %v1996
        %v4667 = vpop.f32.mrb[0].mxu0
        %v4668 = vadd.f32 %v4532, %v4667
        %v4669 = vpop.f32.mrb[0].mxu0
        %v4670 = vpop.f32.mrb[0].mxu0
        %v4671 = vadd.f32 %v4535, %v4670
        %v4672 = vpop.f32.mrb[0].mxu0
        %4673 = vmatprep.mubr.bf16.mxu0 %v2022
        %4674 = vmatmul.mubr.bf16.gmra.mrb[0].mxu0 %v2021
        %v4675 = vpop.f32.mrb[0].mxu0
        %v4676 = vadd.f32 %v4540, %v4675
        %v4677 = vpop.f32.mrb[0].mxu0
        %v4678 = vpop.f32.mrb[0].mxu0
        %v4679 = vadd.f32 %v4543, %v4678
        %v4680 = vpop.f32.mrb[0].mxu0
        %4681 = vmatprep.mubr.bf16.mxu0 %v2047
        %4682 = vmatmul.mubr.bf16.gmra.mrb[0].mxu0 %v2046
        %v4683 = vpop.f32.mrb[0].mxu0
        %v4684 = vadd.f32 %v4548, %v4683
        %v4685 = vpop.f32.mrb[0].mxu0
        %v4686 = vpop.f32.mrb[0].mxu0
        %v4687 = vadd.f32 %v4551, %v4686
        %v4688 = vpop.f32.mrb[0].mxu0
        %4689 = vmatprep.mubr.bf16.mxu0 %v2072
        %4690 = vmatmul.mubr.bf16.gmra.mrb[0].mxu0 %v2071
        %v4691 = vpop.f32.mrb[0].mxu0
        %v4692 = vadd.f32 %v4556, %v4691
        %v4693 = vpop.f32.mrb[0].mxu0
        %v4694 = vpop.f32.mrb[0].mxu0
        %v4695 = vadd.f32 %v4559, %v4694
        %v4696 = vpop.f32.mrb[0].mxu0
        %4697 = vmatprep.mubr.bf16.mxu0 %v2097
        %4698 = vmatmul.mubr.bf16.gmra.mrb[0].mxu0 %v2096
        %v4699 = vpop.f32.mrb[0].mxu0
        %v4700 = vadd.f32 %v4564, %v4699
        %v4701 = vpop.f32.mrb[0].mxu0
        %v4702 = vpop.f32.mrb[0].mxu0
        %v4703 = vadd.f32 %v4567, %v4702
        %v4704 = vpop.f32.mrb[0].mxu0
        %4705 = vmatprep.mubr.bf16.mxu0 %v2122
        %4706 = vmatmul.mubr.bf16.gmra.mrb[0].mxu0 %v2121
        %v4707 = vpop.f32.mrb[0].mxu0
        %v4708 = vadd.f32 %v4572, %v4707
        %v4709 = vpop.f32.mrb[0].mxu0
        %v4710 = vpop.f32.mrb[0].mxu0
        %v4711 = vadd.f32 %v4575, %v4710
        %v4712 = vpop.f32.mrb[0].mxu0
        %4713 = vmatprep.mubr.bf16.mxu0 %v2147
        %4714 = vmatmul.mubr.bf16.gmra.mrb[0].mxu0 %v2146
        %v4715 = vpop.f32.mrb[0].mxu0
        %v4716 = vadd.f32 %v4580, %v4715
        %v4717 = vpop.f32.mrb[0].mxu0
        %v4718 = vpop.f32.mrb[0].mxu0
        %v4719 = vadd.f32 %v4583, %v4718
        %v4720 = vpop.f32.mrb[0].mxu0
        %4721 = vmatprep.mubr.bf16.mxu0 %v2172
        %4722 = vmatmul.mubr.bf16.gmra.mrb[0].mxu0 %v2171
        %v4723 = vpop.f32.mrb[0].mxu0
        %v4724 = vadd.f32 %v4588, %v4723
        %v4725 = vpop.f32.mrb[0].mxu0
        %v4726 = vpop.f32.mrb[0].mxu0
        %v4727 = vadd.f32 %v4591, %v4726
        %v4728 = vpop.f32.mrb[0].mxu0
        %4729 = vmatprep.mubr.bf16.mxu0 %v2197
        %4730 = vmatmul.mubr.bf16.gmra.mrb[0].mxu0 %v2196
        %v4731 = vpop.f32.mrb[0].mxu0
        %v4732 = vadd.f32 %v4596, %v4731
        %v4733 = vpop.f32.mrb[0].mxu0
        %v4734 = vpop.f32.mrb[0].mxu0
        %v4735 = vadd.f32 %v4599, %v4734
        %v4736 = vpop.f32.mrb[0].mxu0
        %4737 = vmatprep.mubr.bf16.mxu0 %v2222
        %4738 = vmatmul.mubr.bf16.gmra.mrb[0].mxu0 %v2221
        %v4739 = vpop.f32.mrb[0].mxu0
        %v4740 = vadd.f32 %v4604, %v4739
        %v4741 = vpop.f32.mrb[0].mxu0
        %v4742 = vpop.f32.mrb[0].mxu0
        %v4743 = vadd.f32 %v4607, %v4742
        %v4744 = vpop.f32.mrb[0].mxu0
        %4745 = vmatprep.mubr.bf16.mxu0 %v2247
        %4746 = vmatmul.mubr.bf16.gmra.mrb[0].mxu0 %v2246
        %v4747 = vpop.f32.mrb[0].mxu0
        %v4748 = vadd.f32 %v4612, %v4747
        %v4749 = vpop.f32.mrb[0].mxu0
        %v4750 = vpop.f32.mrb[0].mxu0
        %v4751 = vadd.f32 %v4615, %v4750
        %v4752 = vpop.f32.mrb[0].mxu0
        %4753 = vmatprep.mubr.bf16.mxu0 %v2272
        %4754 = vmatmul.mubr.bf16.gmra.mrb[0].mxu0 %v2271
        %v4755 = vpop.f32.mrb[0].mxu0
        %v4756 = vadd.f32 %v4620, %v4755
        %v4757 = vpop.f32.mrb[0].mxu0
        %v4758 = vpop.f32.mrb[0].mxu0
        %v4759 = vpop.f32.mrb[0].mxu0
        %4760 = vdwg.mxu0
        %4761 = vmatprep.subr.bf16.mxu0 0
        %4762 = vmatpush1.bf16.msra.mxu0 %v3521
        %4763 = vmatprep.subr.bf16.mxu0 0
        %4764 = vmatpush1.bf16.msra.mxu0 %v3522
        %4765 = vmatprep.subr.bf16.mxu0 0
        %4766 = vmatpush1.bf16.msra.mxu0 %v3523
        %4767 = vmatprep.subr.bf16.mxu0 0
        %4768 = vmatpush1.bf16.msra.mxu0 %v3524
        %4769 = vmatprep.subr.bf16.mxu0 0
        %4770 = vmatpush1.bf16.msra.mxu0 %v3525
        %4771 = vmatprep.subr.bf16.mxu0 0
        %4772 = vmatpush1.bf16.msra.mxu0 %v3526
        %4773 = vmatprep.subr.bf16.mxu0 0
        %4774 = vmatpush1.bf16.msra.mxu0 %v3527
        %4775 = vmatprep.subr.bf16.mxu0 0
        %4776 = vmatpush1.bf16.msra.mxu0 %v3528
        %4777 = vmatprep.subr.bf16.mxu0 0
        %4778 = vmatpush1.bf16.msra.mxu0 %v3529
        %4779 = vmatprep.subr.bf16.mxu0 0
        %4780 = vmatpush1.bf16.msra.mxu0 %v3530
        %4781 = vmatprep.subr.bf16.mxu0 0
        %4782 = vmatpush1.bf16.msra.mxu0 %v3531
        %4783 = vmatprep.subr.bf16.mxu0 0
        %4784 = vmatpush1.bf16.msra.mxu0 %v3532
        %4785 = vmatprep.subr.bf16.mxu0 0
        %4786 = vmatpush1.bf16.msra.mxu0 %v3533
        %4787 = vmatprep.subr.bf16.mxu0 0
        %4788 = vmatpush1.bf16.msra.mxu0 %v3534
        %4789 = vmatprep.subr.bf16.mxu0 0
        %4790 = vmatpush1.bf16.msra.mxu0 %v3535
        %4791 = vmatprep.subr.bf16.mxu0 0
        %4792 = vmatpush1.bf16.msra.mxu0 %v3536
        %4793 = vmatprep.mubr.bf16.mxu0 %v1974
        %4794 = vmatmul.mubr.bf16.gmra.mrb[0].mxu0 %v1973
        %v4795 = vpop.f32.mrb[0].mxu0
        %v4796 = vadd.f32 %v4660, %v4795
        %v4797 = vpop.f32.mrb[0].mxu0
        %v4798 = vpop.f32.mrb[0].mxu0
        %v4799 = vadd.f32 %v4663, %v4798
        %v4800 = vpop.f32.mrb[0].mxu0
        %4801 = vmatprep.mubr.bf16.mxu0 %v1999
        %4802 = vmatmul.mubr.bf16.gmra.mrb[0].mxu0 %v1998
        %v4803 = vpop.f32.mrb[0].mxu0
        %v4804 = vadd.f32 %v4668, %v4803
        %v4805 = vpop.f32.mrb[0].mxu0
        %v4806 = vpop.f32.mrb[0].mxu0
        %v4807 = vadd.f32 %v4671, %v4806
        %v4808 = vpop.f32.mrb[0].mxu0
        %4809 = vmatprep.mubr.bf16.mxu0 %v2024
        %4810 = vmatmul.mubr.bf16.gmra.mrb[0].mxu0 %v2023
        %v4811 = vpop.f32.mrb[0].mxu0
        %v4812 = vadd.f32 %v4676, %v4811
        %v4813 = vpop.f32.mrb[0].mxu0
        %v4814 = vpop.f32.mrb[0].mxu0
        %v4815 = vadd.f32 %v4679, %v4814
        %v4816 = vpop.f32.mrb[0].mxu0
        %4817 = vmatprep.mubr.bf16.mxu0 %v2049
        %4818 = vmatmul.mubr.bf16.gmra.mrb[0].mxu0 %v2048
        %v4819 = vpop.f32.mrb[0].mxu0
        %v4820 = vadd.f32 %v4684, %v4819
        %v4821 = vpop.f32.mrb[0].mxu0
        %v4822 = vpop.f32.mrb[0].mxu0
        %v4823 = vadd.f32 %v4687, %v4822
        %v4824 = vpop.f32.mrb[0].mxu0
        %4825 = vmatprep.mubr.bf16.mxu0 %v2074
        %4826 = vmatmul.mubr.bf16.gmra.mrb[0].mxu0 %v2073
        %v4827 = vpop.f32.mrb[0].mxu0
        %v4828 = vadd.f32 %v4692, %v4827
        %v4829 = vpop.f32.mrb[0].mxu0
        %v4830 = vpop.f32.mrb[0].mxu0
        %v4831 = vadd.f32 %v4695, %v4830
        %v4832 = vpop.f32.mrb[0].mxu0
        %4833 = vmatprep.mubr.bf16.mxu0 %v2099
        %4834 = vmatmul.mubr.bf16.gmra.mrb[0].mxu0 %v2098
        %v4835 = vpop.f32.mrb[0].mxu0
        %v4836 = vadd.f32 %v4700, %v4835
        %v4837 = vpop.f32.mrb[0].mxu0
        %v4838 = vpop.f32.mrb[0].mxu0
        %v4839 = vadd.f32 %v4703, %v4838
        %v4840 = vpop.f32.mrb[0].mxu0
        %4841 = vmatprep.mubr.bf16.mxu0 %v2124
        %4842 = vmatmul.mubr.bf16.gmra.mrb[0].mxu0 %v2123
        %v4843 = vpop.f32.mrb[0].mxu0
        %v4844 = vadd.f32 %v4708, %v4843
        %v4845 = vpop.f32.mrb[0].mxu0
        %v4846 = vpop.f32.mrb[0].mxu0
        %v4847 = vadd.f32 %v4711, %v4846
        %v4848 = vpop.f32.mrb[0].mxu0
        %4849 = vmatprep.mubr.bf16.mxu0 %v2149
        %4850 = vmatmul.mubr.bf16.gmra.mrb[0].mxu0 %v2148
        %v4851 = vpop.f32.mrb[0].mxu0
        %v4852 = vadd.f32 %v4716, %v4851
        %v4853 = vpop.f32.mrb[0].mxu0
        %v4854 = vpop.f32.mrb[0].mxu0
        %v4855 = vadd.f32 %v4719, %v4854
        %v4856 = vpop.f32.mrb[0].mxu0
        %4857 = vmatprep.mubr.bf16.mxu0 %v2174
        %4858 = vmatmul.mubr.bf16.gmra.mrb[0].mxu0 %v2173
        %v4859 = vpop.f32.mrb[0].mxu0
        %v4860 = vadd.f32 %v4724, %v4859
        %v4861 = vpop.f32.mrb[0].mxu0
        %v4862 = vpop.f32.mrb[0].mxu0
        %v4863 = vadd.f32 %v4727, %v4862
        %v4864 = vpop.f32.mrb[0].mxu0
        %4865 = vmatprep.mubr.bf16.mxu0 %v2199
        %4866 = vmatmul.mubr.bf16.gmra.mrb[0].mxu0 %v2198
        %v4867 = vpop.f32.mrb[0].mxu0
        %v4868 = vadd.f32 %v4732, %v4867
        %v4869 = vpop.f32.mrb[0].mxu0
        %v4870 = vpop.f32.mrb[0].mxu0
        %v4871 = vadd.f32 %v4735, %v4870
        %v4872 = vpop.f32.mrb[0].mxu0
        %4873 = vmatprep.mubr.bf16.mxu0 %v2224
        %4874 = vmatmul.mubr.bf16.gmra.mrb[0].mxu0 %v2223
        %v4875 = vpop.f32.mrb[0].mxu0
        %v4876 = vadd.f32 %v4740, %v4875
        %v4877 = vpop.f32.mrb[0].mxu0
        %v4878 = vpop.f32.mrb[0].mxu0
        %v4879 = vadd.f32 %v4743, %v4878
        %v4880 = vpop.f32.mrb[0].mxu0
        %4881 = vmatprep.mubr.bf16.mxu0 %v2249
        %4882 = vmatmul.mubr.bf16.gmra.mrb[0].mxu0 %v2248
        %v4883 = vpop.f32.mrb[0].mxu0
        %v4884 = vadd.f32 %v4748, %v4883
        %v4885 = vpop.f32.mrb[0].mxu0
        %v4886 = vpop.f32.mrb[0].mxu0
        %v4887 = vadd.f32 %v4751, %v4886
        %v4888 = vpop.f32.mrb[0].mxu0
        %4889 = vmatprep.mubr.bf16.mxu0 %v2274
        %4890 = vmatmul.mubr.bf16.gmra.mrb[0].mxu0 %v2273
        %v4891 = vpop.f32.mrb[0].mxu0
        %v4892 = vadd.f32 %v4756, %v4891
        %v4893 = vpop.f32.mrb[0].mxu0
        %v4894 = vpop.f32.mrb[0].mxu0
        %v4895 = vpop.f32.mrb[0].mxu0
        %4896 = vdwg.mxu0
        %4897 = vmatprep.subr.bf16.mxu0 0
        %4898 = vmatpush1.bf16.msra.mxu0 %v3537
        %4899 = vmatprep.subr.bf16.mxu0 0
        %4900 = vmatpush1.bf16.msra.mxu0 %v3538
        %4901 = vmatprep.subr.bf16.mxu0 0
        %4902 = vmatpush1.bf16.msra.mxu0 %v3539
        %4903 = vmatprep.subr.bf16.mxu0 0
        %4904 = vmatpush1.bf16.msra.mxu0 %v3540
        %4905 = vmatprep.subr.bf16.mxu0 0
        %4906 = vmatpush1.bf16.msra.mxu0 %v3541
        %4907 = vmatprep.subr.bf16.mxu0 0
        %4908 = vmatpush1.bf16.msra.mxu0 %v3542
        %4909 = vmatprep.subr.bf16.mxu0 0
        %4910 = vmatpush1.bf16.msra.mxu0 %v3543
        %4911 = vmatprep.subr.bf16.mxu0 0
        %4912 = vmatpush1.bf16.msra.mxu0 %v3544
        %4913 = vmatprep.subr.bf16.mxu0 0
        %4914 = vmatpush1.bf16.msra.mxu0 %v3545
        %4915 = vmatprep.subr.bf16.mxu0 0
        %4916 = vmatpush1.bf16.msra.mxu0 %v3546
        %4917 = vmatprep.subr.bf16.mxu0 0
        %4918 = vmatpush1.bf16.msra.mxu0 %v3547
        %4919 = vmatprep.subr.bf16.mxu0 0
        %4920 = vmatpush1.bf16.msra.mxu0 %v3548
        %4921 = vmatprep.subr.bf16.mxu0 0
        %4922 = vmatpush1.bf16.msra.mxu0 %v3549
        %4923 = vmatprep.subr.bf16.mxu0 0
        %4924 = vmatpush1.bf16.msra.mxu0 %v3550
        %4925 = vmatprep.subr.bf16.mxu0 0
        %4926 = vmatpush1.bf16.msra.mxu0 %v3551
        %4927 = vmatprep.subr.bf16.mxu0 0
        %4928 = vmatpush1.bf16.msra.mxu0 %v3552
        %4929 = vmatprep.mubr.bf16.mxu0 %v1976
        %4930 = vmatmul.mubr.bf16.gmra.mrb[0].mxu0 %v1975
        %v4931 = vpop.f32.mrb[0].mxu0
        %v4932 = vadd.f32 %v4796, %v4931
        %v4933 = vpop.f32.mrb[0].mxu0
        %v4934 = vpop.f32.mrb[0].mxu0
        %v4935 = vadd.f32 %v4799, %v4934
        %v4936 = vpop.f32.mrb[0].mxu0
        %4937 = vmatprep.mubr.bf16.mxu0 %v2001
        %4938 = vmatmul.mubr.bf16.gmra.mrb[0].mxu0 %v2000
        %v4939 = vpop.f32.mrb[0].mxu0
        %v4940 = vadd.f32 %v4804, %v4939
        %v4941 = vpop.f32.mrb[0].mxu0
        %v4942 = vpop.f32.mrb[0].mxu0
        %v4943 = vadd.f32 %v4807, %v4942
        %v4944 = vpop.f32.mrb[0].mxu0
        %4945 = vmatprep.mubr.bf16.mxu0 %v2026
        %4946 = vmatmul.mubr.bf16.gmra.mrb[0].mxu0 %v2025
        %v4947 = vpop.f32.mrb[0].mxu0
        %v4948 = vadd.f32 %v4812, %v4947
        %v4949 = vpop.f32.mrb[0].mxu0
        %v4950 = vpop.f32.mrb[0].mxu0
        %v4951 = vadd.f32 %v4815, %v4950
        %v4952 = vpop.f32.mrb[0].mxu0
        %4953 = vmatprep.mubr.bf16.mxu0 %v2051
        %4954 = vmatmul.mubr.bf16.gmra.mrb[0].mxu0 %v2050
        %v4955 = vpop.f32.mrb[0].mxu0
        %v4956 = vadd.f32 %v4820, %v4955
        %v4957 = vpop.f32.mrb[0].mxu0
        %v4958 = vpop.f32.mrb[0].mxu0
        %v4959 = vadd.f32 %v4823, %v4958
        %v4960 = vpop.f32.mrb[0].mxu0
        %4961 = vmatprep.mubr.bf16.mxu0 %v2076
        %4962 = vmatmul.mubr.bf16.gmra.mrb[0].mxu0 %v2075
        %v4963 = vpop.f32.mrb[0].mxu0
        %v4964 = vadd.f32 %v4828, %v4963
        %v4965 = vpop.f32.mrb[0].mxu0
        %v4966 = vpop.f32.mrb[0].mxu0
        %v4967 = vadd.f32 %v4831, %v4966
        %v4968 = vpop.f32.mrb[0].mxu0
        %4969 = vmatprep.mubr.bf16.mxu0 %v2101
        %4970 = vmatmul.mubr.bf16.gmra.mrb[0].mxu0 %v2100
        %v4971 = vpop.f32.mrb[0].mxu0
        %v4972 = vadd.f32 %v4836, %v4971
        %v4973 = vpop.f32.mrb[0].mxu0
        %v4974 = vpop.f32.mrb[0].mxu0
        %v4975 = vadd.f32 %v4839, %v4974
        %v4976 = vpop.f32.mrb[0].mxu0
        %4977 = vmatprep.mubr.bf16.mxu0 %v2126
        %4978 = vmatmul.mubr.bf16.gmra.mrb[0].mxu0 %v2125
        %v4979 = vpop.f32.mrb[0].mxu0
        %v4980 = vadd.f32 %v4844, %v4979
        %v4981 = vpop.f32.mrb[0].mxu0
        %v4982 = vpop.f32.mrb[0].mxu0
        %v4983 = vadd.f32 %v4847, %v4982
        %v4984 = vpop.f32.mrb[0].mxu0
        %4985 = vmatprep.mubr.bf16.mxu0 %v2151
        %4986 = vmatmul.mubr.bf16.gmra.mrb[0].mxu0 %v2150
        %v4987 = vpop.f32.mrb[0].mxu0
        %v4988 = vadd.f32 %v4852, %v4987
        %v4989 = vpop.f32.mrb[0].mxu0
        %v4990 = vpop.f32.mrb[0].mxu0
        %v4991 = vadd.f32 %v4855, %v4990
        %v4992 = vpop.f32.mrb[0].mxu0
        %4993 = vmatprep.mubr.bf16.mxu0 %v2176
        %4994 = vmatmul.mubr.bf16.gmra.mrb[0].mxu0 %v2175
        %v4995 = vpop.f32.mrb[0].mxu0
        %v4996 = vadd.f32 %v4860, %v4995
        %v4997 = vpop.f32.mrb[0].mxu0
        %v4998 = vpop.f32.mrb[0].mxu0
        %v4999 = vadd.f32 %v4863, %v4998
        %v5000 = vpop.f32.mrb[0].mxu0
        %5001 = vmatprep.mubr.bf16.mxu0 %v2201
        %5002 = vmatmul.mubr.bf16.gmra.mrb[0].mxu0 %v2200
        %v5003 = vpop.f32.mrb[0].mxu0
        %v5004 = vadd.f32 %v4868, %v5003
        %v5005 = vpop.f32.mrb[0].mxu0
        %v5006 = vpop.f32.mrb[0].mxu0
        %v5007 = vadd.f32 %v4871, %v5006
        %v5008 = vpop.f32.mrb[0].mxu0
        %5009 = vmatprep.mubr.bf16.mxu0 %v2226
        %5010 = vmatmul.mubr.bf16.gmra.mrb[0].mxu0 %v2225
        %v5011 = vpop.f32.mrb[0].mxu0
        %v5012 = vadd.f32 %v4876, %v5011
        %v5013 = vpop.f32.mrb[0].mxu0
        %v5014 = vpop.f32.mrb[0].mxu0
        %v5015 = vadd.f32 %v4879, %v5014
        %v5016 = vpop.f32.mrb[0].mxu0
        %5017 = vmatprep.mubr.bf16.mxu0 %v2251
        %5018 = vmatmul.mubr.bf16.gmra.mrb[0].mxu0 %v2250
        %v5019 = vpop.f32.mrb[0].mxu0
        %v5020 = vadd.f32 %v4884, %v5019
        %v5021 = vpop.f32.mrb[0].mxu0
        %v5022 = vpop.f32.mrb[0].mxu0
        %v5023 = vadd.f32 %v4887, %v5022
        %v5024 = vpop.f32.mrb[0].mxu0
        %5025 = vmatprep.mubr.bf16.mxu0 %v2276
        %5026 = vmatmul.mubr.bf16.gmra.mrb[0].mxu0 %v2275
        %v5027 = vpop.f32.mrb[0].mxu0
        %v5028 = vadd.f32 %v4892, %v5027
        %v5029 = vpop.f32.mrb[0].mxu0
        %v5030 = vpop.f32.mrb[0].mxu0
        %v5031 = vpop.f32.mrb[0].mxu0
        %5032 = vdwg.mxu0
        %5033 = vmatprep.subr.bf16.mxu0 0
        %5034 = vmatpush1.bf16.msra.mxu0 %v3553
        %5035 = vmatprep.subr.bf16.mxu0 0
        %5036 = vmatpush1.bf16.msra.mxu0 %v3554
        %5037 = vmatprep.subr.bf16.mxu0 0
        %5038 = vmatpush1.bf16.msra.mxu0 %v3555
        %5039 = vmatprep.subr.bf16.mxu0 0
        %5040 = vmatpush1.bf16.msra.mxu0 %v3556
        %5041 = vmatprep.subr.bf16.mxu0 0
        %5042 = vmatpush1.bf16.msra.mxu0 %v3557
        %5043 = vmatprep.subr.bf16.mxu0 0
        %5044 = vmatpush1.bf16.msra.mxu0 %v3558
        %5045 = vmatprep.subr.bf16.mxu0 0
        %5046 = vmatpush1.bf16.msra.mxu0 %v3559
        %5047 = vmatprep.subr.bf16.mxu0 0
        %5048 = vmatpush1.bf16.msra.mxu0 %v3560
        %5049 = vmatprep.subr.bf16.mxu0 0
        %5050 = vmatpush1.bf16.msra.mxu0 %v3561
        %5051 = vmatprep.subr.bf16.mxu0 0
        %5052 = vmatpush1.bf16.msra.mxu0 %v3562
        %5053 = vmatprep.subr.bf16.mxu0 0
        %5054 = vmatpush1.bf16.msra.mxu0 %v3563
        %5055 = vmatprep.subr.bf16.mxu0 0
        %5056 = vmatpush1.bf16.msra.mxu0 %v3564
        %5057 = vmatprep.subr.bf16.mxu0 0
        %5058 = vmatpush1.bf16.msra.mxu0 %v3565
        %5059 = vmatprep.subr.bf16.mxu0 0
        %5060 = vmatpush1.bf16.msra.mxu0 %v3566
        %5061 = vmatprep.subr.bf16.mxu0 0
        %5062 = vmatpush1.bf16.msra.mxu0 %v3567
        %5063 = vmatprep.subr.bf16.mxu0 0
        %5064 = vmatpush1.bf16.msra.mxu0 %v3568
        %5065 = vmatprep.mubr.bf16.mxu0 %v1978
        %5066 = vmatmul.mubr.bf16.gmra.mrb[0].mxu0 %v1977
        %v5067 = vpop.f32.mrb[0].mxu0
        %v5068 = vadd.f32 %v4932, %v5067
        %v5069 = vpop.f32.mrb[0].mxu0
        %v5070 = vpop.f32.mrb[0].mxu0
        %v5071 = vadd.f32 %v4935, %v5070
        %v5072 = vpop.f32.mrb[0].mxu0
        %5073 = vmatprep.mubr.bf16.mxu0 %v2003
        %5074 = vmatmul.mubr.bf16.gmra.mrb[0].mxu0 %v2002
        %v5075 = vpop.f32.mrb[0].mxu0
        %v5076 = vadd.f32 %v4940, %v5075
        %v5077 = vpop.f32.mrb[0].mxu0
        %v5078 = vpop.f32.mrb[0].mxu0
        %v5079 = vadd.f32 %v4943, %v5078
        %v5080 = vpop.f32.mrb[0].mxu0
        %5081 = vmatprep.mubr.bf16.mxu0 %v2028
        %5082 = vmatmul.mubr.bf16.gmra.mrb[0].mxu0 %v2027
        %v5083 = vpop.f32.mrb[0].mxu0
        %v5084 = vadd.f32 %v4948, %v5083
        %v5085 = vpop.f32.mrb[0].mxu0
        %v5086 = vpop.f32.mrb[0].mxu0
        %v5087 = vadd.f32 %v4951, %v5086
        %v5088 = vpop.f32.mrb[0].mxu0
        %5089 = vmatprep.mubr.bf16.mxu0 %v2053
        %5090 = vmatmul.mubr.bf16.gmra.mrb[0].mxu0 %v2052
        %v5091 = vpop.f32.mrb[0].mxu0
        %v5092 = vadd.f32 %v4956, %v5091
        %v5093 = vpop.f32.mrb[0].mxu0
        %v5094 = vpop.f32.mrb[0].mxu0
        %v5095 = vadd.f32 %v4959, %v5094
        %v5096 = vpop.f32.mrb[0].mxu0
        %5097 = vmatprep.mubr.bf16.mxu0 %v2078
        %5098 = vmatmul.mubr.bf16.gmra.mrb[0].mxu0 %v2077
        %v5099 = vpop.f32.mrb[0].mxu0
        %v5100 = vadd.f32 %v4964, %v5099
        %v5101 = vpop.f32.mrb[0].mxu0
        %v5102 = vpop.f32.mrb[0].mxu0
        %v5103 = vadd.f32 %v4967, %v5102
        %v5104 = vpop.f32.mrb[0].mxu0
        %5105 = vmatprep.mubr.bf16.mxu0 %v2103
        %5106 = vmatmul.mubr.bf16.gmra.mrb[0].mxu0 %v2102
        %v5107 = vpop.f32.mrb[0].mxu0
        %v5108 = vadd.f32 %v4972, %v5107
        %v5109 = vpop.f32.mrb[0].mxu0
        %v5110 = vpop.f32.mrb[0].mxu0
        %v5111 = vadd.f32 %v4975, %v5110
        %v5112 = vpop.f32.mrb[0].mxu0
        %5113 = vmatprep.mubr.bf16.mxu0 %v2128
        %5114 = vmatmul.mubr.bf16.gmra.mrb[0].mxu0 %v2127
        %v5115 = vpop.f32.mrb[0].mxu0
        %v5116 = vadd.f32 %v4980, %v5115
        %v5117 = vpop.f32.mrb[0].mxu0
        %v5118 = vpop.f32.mrb[0].mxu0
        %v5119 = vadd.f32 %v4983, %v5118
        %v5120 = vpop.f32.mrb[0].mxu0
        %5121 = vmatprep.mubr.bf16.mxu0 %v2153
        %5122 = vmatmul.mubr.bf16.gmra.mrb[0].mxu0 %v2152
        %v5123 = vpop.f32.mrb[0].mxu0
        %v5124 = vadd.f32 %v4988, %v5123
        %v5125 = vpop.f32.mrb[0].mxu0
        %v5126 = vpop.f32.mrb[0].mxu0
        %v5127 = vadd.f32 %v4991, %v5126
        %v5128 = vpop.f32.mrb[0].mxu0
        %5129 = vmatprep.mubr.bf16.mxu0 %v2178
        %5130 = vmatmul.mubr.bf16.gmra.mrb[0].mxu0 %v2177
        %v5131 = vpop.f32.mrb[0].mxu0
        %v5132 = vadd.f32 %v4996, %v5131
        %v5133 = vpop.f32.mrb[0].mxu0
        %v5134 = vpop.f32.mrb[0].mxu0
        %v5135 = vadd.f32 %v4999, %v5134
        %v5136 = vpop.f32.mrb[0].mxu0
        %5137 = vmatprep.mubr.bf16.mxu0 %v2203
        %5138 = vmatmul.mubr.bf16.gmra.mrb[0].mxu0 %v2202
        %v5139 = vpop.f32.mrb[0].mxu0
        %v5140 = vadd.f32 %v5004, %v5139
        %v5141 = vpop.f32.mrb[0].mxu0
        %v5142 = vpop.f32.mrb[0].mxu0
        %v5143 = vadd.f32 %v5007, %v5142
        %v5144 = vpop.f32.mrb[0].mxu0
        %5145 = vmatprep.mubr.bf16.mxu0 %v2228
        %5146 = vmatmul.mubr.bf16.gmra.mrb[0].mxu0 %v2227
        %v5147 = vpop.f32.mrb[0].mxu0
        %v5148 = vadd.f32 %v5012, %v5147
        %v5149 = vpop.f32.mrb[0].mxu0
        %v5150 = vpop.f32.mrb[0].mxu0
        %v5151 = vadd.f32 %v5015, %v5150
        %v5152 = vpop.f32.mrb[0].mxu0
        %5153 = vmatprep.mubr.bf16.mxu0 %v2253
        %5154 = vmatmul.mubr.bf16.gmra.mrb[0].mxu0 %v2252
        %v5155 = vpop.f32.mrb[0].mxu0
        %v5156 = vadd.f32 %v5020, %v5155
        %v5157 = vpop.f32.mrb[0].mxu0
        %v5158 = vpop.f32.mrb[0].mxu0
        %v5159 = vadd.f32 %v5023, %v5158
        %v5160 = vpop.f32.mrb[0].mxu0
        %5161 = vmatprep.mubr.bf16.mxu0 %v2278
        %5162 = vmatmul.mubr.bf16.gmra.mrb[0].mxu0 %v2277
        %v5163 = vpop.f32.mrb[0].mxu0
        %v5164 = vadd.f32 %v5028, %v5163
        %v5165 = vpop.f32.mrb[0].mxu0
        %v5166 = vpop.f32.mrb[0].mxu0
        %v5167 = vpop.f32.mrb[0].mxu0
        %5168 = vdwg.mxu0
        %5169 = vmatprep.subr.bf16.mxu0 0
        %5170 = vmatpush1.bf16.msra.mxu0 %v3569
        %5171 = vmatprep.subr.bf16.mxu0 0
        %5172 = vmatpush1.bf16.msra.mxu0 %v3570
        %5173 = vmatprep.subr.bf16.mxu0 0
        %5174 = vmatpush1.bf16.msra.mxu0 %v3571
        %5175 = vmatprep.subr.bf16.mxu0 0
        %5176 = vmatpush1.bf16.msra.mxu0 %v3572
        %5177 = vmatprep.subr.bf16.mxu0 0
        %5178 = vmatpush1.bf16.msra.mxu0 %v3573
        %5179 = vmatprep.subr.bf16.mxu0 0
        %5180 = vmatpush1.bf16.msra.mxu0 %v3574
        %5181 = vmatprep.subr.bf16.mxu0 0
        %5182 = vmatpush1.bf16.msra.mxu0 %v3575
        %5183 = vmatprep.subr.bf16.mxu0 0
        %5184 = vmatpush1.bf16.msra.mxu0 %v3576
        %5185 = vmatprep.subr.bf16.mxu0 0
        %5186 = vmatpush1.bf16.msra.mxu0 %v3577
        %5187 = vmatprep.subr.bf16.mxu0 0
        %5188 = vmatpush1.bf16.msra.mxu0 %v3578
        %5189 = vmatprep.subr.bf16.mxu0 0
        %5190 = vmatpush1.bf16.msra.mxu0 %v3579
        %5191 = vmatprep.subr.bf16.mxu0 0
        %5192 = vmatpush1.bf16.msra.mxu0 %v3580
        %5193 = vmatprep.subr.bf16.mxu0 0
        %5194 = vmatpush1.bf16.msra.mxu0 %v3581
        %5195 = vmatprep.subr.bf16.mxu0 0
        %5196 = vmatpush1.bf16.msra.mxu0 %v3582
        %5197 = vmatprep.subr.bf16.mxu0 0
        %5198 = vmatpush1.bf16.msra.mxu0 %v3583
        %5199 = vmatprep.subr.bf16.mxu0 0
        %5200 = vmatpush1.bf16.msra.mxu0 %v3584
        %5201 = vmatprep.mubr.bf16.mxu0 %v1980
        %5202 = vmatmul.mubr.bf16.gmra.mrb[0].mxu0 %v1979
        %v5203 = vpop.f32.mrb[0].mxu0
        %v5204 = vadd.f32 %v5068, %v5203
        %v5205 = vpop.f32.mrb[0].mxu0
        %v5206 = vpop.f32.mrb[0].mxu0
        %v5207 = vadd.f32 %v5071, %v5206
        %v5208 = vpop.f32.mrb[0].mxu0
        %5209 = vmatprep.mubr.bf16.mxu0 %v2005
        %5210 = vmatmul.mubr.bf16.gmra.mrb[0].mxu0 %v2004
        %v5211 = vpop.f32.mrb[0].mxu0
        %v5212 = vadd.f32 %v5076, %v5211
        %v5213 = vpop.f32.mrb[0].mxu0
        %v5214 = vpop.f32.mrb[0].mxu0
        %v5215 = vadd.f32 %v5079, %v5214
        %v5216 = vpop.f32.mrb[0].mxu0
        %5217 = vmatprep.mubr.bf16.mxu0 %v2030
        %5218 = vmatmul.mubr.bf16.gmra.mrb[0].mxu0 %v2029
        %v5219 = vpop.f32.mrb[0].mxu0
        %v5220 = vadd.f32 %v5084, %v5219
        %v5221 = vpop.f32.mrb[0].mxu0
        %v5222 = vpop.f32.mrb[0].mxu0
        %v5223 = vadd.f32 %v5087, %v5222
        %v5224 = vpop.f32.mrb[0].mxu0
        %5225 = vmatprep.mubr.bf16.mxu0 %v2055
        %5226 = vmatmul.mubr.bf16.gmra.mrb[0].mxu0 %v2054
        %v5227 = vpop.f32.mrb[0].mxu0
        %v5228 = vadd.f32 %v5092, %v5227
        %v5229 = vpop.f32.mrb[0].mxu0
        %v5230 = vpop.f32.mrb[0].mxu0
        %v5231 = vadd.f32 %v5095, %v5230
        %v5232 = vpop.f32.mrb[0].mxu0
        %5233 = vmatprep.mubr.bf16.mxu0 %v2080
        %5234 = vmatmul.mubr.bf16.gmra.mrb[0].mxu0 %v2079
        %v5235 = vpop.f32.mrb[0].mxu0
        %v5236 = vadd.f32 %v5100, %v5235
        %v5237 = vpop.f32.mrb[0].mxu0
        %v5238 = vpop.f32.mrb[0].mxu0
        %v5239 = vadd.f32 %v5103, %v5238
        %v5240 = vpop.f32.mrb[0].mxu0
        %5241 = vmatprep.mubr.bf16.mxu0 %v2105
        %5242 = vmatmul.mubr.bf16.gmra.mrb[0].mxu0 %v2104
        %v5243 = vpop.f32.mrb[0].mxu0
        %v5244 = vadd.f32 %v5108, %v5243
        %v5245 = vpop.f32.mrb[0].mxu0
        %v5246 = vpop.f32.mrb[0].mxu0
        %v5247 = vadd.f32 %v5111, %v5246
        %v5248 = vpop.f32.mrb[0].mxu0
        %5249 = vmatprep.mubr.bf16.mxu0 %v2130
        %5250 = vmatmul.mubr.bf16.gmra.mrb[0].mxu0 %v2129
        %v5251 = vpop.f32.mrb[0].mxu0
        %v5252 = vadd.f32 %v5116, %v5251
        %v5253 = vpop.f32.mrb[0].mxu0
        %v5254 = vpop.f32.mrb[0].mxu0
        %v5255 = vadd.f32 %v5119, %v5254
        %v5256 = vpop.f32.mrb[0].mxu0
        %5257 = vmatprep.mubr.bf16.mxu0 %v2155
        %5258 = vmatmul.mubr.bf16.gmra.mrb[0].mxu0 %v2154
        %v5259 = vpop.f32.mrb[0].mxu0
        %v5260 = vadd.f32 %v5124, %v5259
        %v5261 = vpop.f32.mrb[0].mxu0
        %v5262 = vpop.f32.mrb[0].mxu0
        %v5263 = vadd.f32 %v5127, %v5262
        %v5264 = vpop.f32.mrb[0].mxu0
        %5265 = vmatprep.mubr.bf16.mxu0 %v2180
        %5266 = vmatmul.mubr.bf16.gmra.mrb[0].mxu0 %v2179
        %v5267 = vpop.f32.mrb[0].mxu0
        %v5268 = vadd.f32 %v5132, %v5267
        %v5269 = vpop.f32.mrb[0].mxu0
        %v5270 = vpop.f32.mrb[0].mxu0
        %v5271 = vadd.f32 %v5135, %v5270
        %v5272 = vpop.f32.mrb[0].mxu0
        %5273 = vmatprep.mubr.bf16.mxu0 %v2205
        %5274 = vmatmul.mubr.bf16.gmra.mrb[0].mxu0 %v2204
        %v5275 = vpop.f32.mrb[0].mxu0
        %v5276 = vadd.f32 %v5140, %v5275
        %v5277 = vpop.f32.mrb[0].mxu0
        %v5278 = vpop.f32.mrb[0].mxu0
        %v5279 = vadd.f32 %v5143, %v5278
        %v5280 = vpop.f32.mrb[0].mxu0
        %5281 = vmatprep.mubr.bf16.mxu0 %v2230
        %5282 = vmatmul.mubr.bf16.gmra.mrb[0].mxu0 %v2229
        %v5283 = vpop.f32.mrb[0].mxu0
        %v5284 = vadd.f32 %v5148, %v5283
        %v5285 = vpop.f32.mrb[0].mxu0
        %v5286 = vpop.f32.mrb[0].mxu0
        %v5287 = vadd.f32 %v5151, %v5286
        %v5288 = vpop.f32.mrb[0].mxu0
        %5289 = vmatprep.mubr.bf16.mxu0 %v2255
        %5290 = vmatmul.mubr.bf16.gmra.mrb[0].mxu0 %v2254
        %v5291 = vpop.f32.mrb[0].mxu0
        %v5292 = vadd.f32 %v5156, %v5291
        %v5293 = vpop.f32.mrb[0].mxu0
        %v5294 = vpop.f32.mrb[0].mxu0
        %v5295 = vadd.f32 %v5159, %v5294
        %v5296 = vpop.f32.mrb[0].mxu0
        %5297 = vmatprep.mubr.bf16.mxu0 %v2280
        %5298 = vmatmul.mubr.bf16.gmra.mrb[0].mxu0 %v2279
        %v5299 = vpop.f32.mrb[0].mxu0
        %v5300 = vadd.f32 %v5164, %v5299
        %v5301 = vpop.f32.mrb[0].mxu0
        %v5302 = vpop.f32.mrb[0].mxu0
        %v5303 = vpop.f32.mrb[0].mxu0
        %5304 = vdwg.mxu0
        %5305 = vmatprep.subr.bf16.mxu0 0
        %5306 = vmatpush1.bf16.msra.mxu0 %v3585
        %5307 = vmatprep.subr.bf16.mxu0 0
        %5308 = vmatpush1.bf16.msra.mxu0 %v3586
        %5309 = vmatprep.subr.bf16.mxu0 0
        %5310 = vmatpush1.bf16.msra.mxu0 %v3587
        %5311 = vmatprep.subr.bf16.mxu0 0
        %5312 = vmatpush1.bf16.msra.mxu0 %v3588
        %5313 = vmatprep.subr.bf16.mxu0 0
        %5314 = vmatpush1.bf16.msra.mxu0 %v3589
        %5315 = vmatprep.subr.bf16.mxu0 0
        %5316 = vmatpush1.bf16.msra.mxu0 %v3590
        %5317 = vmatprep.subr.bf16.mxu0 0
        %5318 = vmatpush1.bf16.msra.mxu0 %v3591
        %5319 = vmatprep.subr.bf16.mxu0 0
        %5320 = vmatpush1.bf16.msra.mxu0 %v3592
        %5321 = vmatprep.subr.bf16.mxu0 0
        %5322 = vmatpush1.bf16.msra.mxu0 %v3593
        %5323 = vmatprep.subr.bf16.mxu0 0
        %5324 = vmatpush1.bf16.msra.mxu0 %v3594
        %5325 = vmatprep.subr.bf16.mxu0 0
        %5326 = vmatpush1.bf16.msra.mxu0 %v3595
        %5327 = vmatprep.subr.bf16.mxu0 0
        %5328 = vmatpush1.bf16.msra.mxu0 %v3596
        %5329 = vmatprep.subr.bf16.mxu0 0
        %5330 = vmatpush1.bf16.msra.mxu0 %v3597
        %5331 = vmatprep.subr.bf16.mxu0 0
        %5332 = vmatpush1.bf16.msra.mxu0 %v3598
        %5333 = vmatprep.subr.bf16.mxu0 0
        %5334 = vmatpush1.bf16.msra.mxu0 %v3599
        %5335 = vmatprep.subr.bf16.mxu0 0
        %5336 = vmatpush1.bf16.msra.mxu0 %v3600
        %5337 = vmatprep.mubr.bf16.mxu0 %v1982
        %5338 = vmatmul.mubr.bf16.gmra.mrb[0].mxu0 %v1981
        %v5339 = vpop.f32.mrb[0].mxu0
        %v5340 = vadd.f32 %v5204, %v5339
        %v5341 = vpop.f32.mrb[0].mxu0
        %v5342 = vpop.f32.mrb[0].mxu0
        %v5343 = vadd.f32 %v5207, %v5342
        %v5344 = vpop.f32.mrb[0].mxu0
        %5345 = vmatprep.mubr.bf16.mxu0 %v2007
        %5346 = vmatmul.mubr.bf16.gmra.mrb[0].mxu0 %v2006
        %v5347 = vpop.f32.mrb[0].mxu0
        %v5348 = vadd.f32 %v5212, %v5347
        %v5349 = vpop.f32.mrb[0].mxu0
        %v5350 = vpop.f32.mrb[0].mxu0
        %v5351 = vadd.f32 %v5215, %v5350
        %v5352 = vpop.f32.mrb[0].mxu0
        %5353 = vmatprep.mubr.bf16.mxu0 %v2032
        %5354 = vmatmul.mubr.bf16.gmra.mrb[0].mxu0 %v2031
        %v5355 = vpop.f32.mrb[0].mxu0
        %v5356 = vadd.f32 %v5220, %v5355
        %v5357 = vpop.f32.mrb[0].mxu0
        %v5358 = vpop.f32.mrb[0].mxu0
        %v5359 = vadd.f32 %v5223, %v5358
        %v5360 = vpop.f32.mrb[0].mxu0
        %5361 = vmatprep.mubr.bf16.mxu0 %v2057
        %5362 = vmatmul.mubr.bf16.gmra.mrb[0].mxu0 %v2056
        %v5363 = vpop.f32.mrb[0].mxu0
        %v5364 = vadd.f32 %v5228, %v5363
        %v5365 = vpop.f32.mrb[0].mxu0
        %v5366 = vpop.f32.mrb[0].mxu0
        %v5367 = vadd.f32 %v5231, %v5366
        %v5368 = vpop.f32.mrb[0].mxu0
        %5369 = vmatprep.mubr.bf16.mxu0 %v2082
        %5370 = vmatmul.mubr.bf16.gmra.mrb[0].mxu0 %v2081
        %v5371 = vpop.f32.mrb[0].mxu0
        %v5372 = vadd.f32 %v5236, %v5371
        %v5373 = vpop.f32.mrb[0].mxu0
        %v5374 = vpop.f32.mrb[0].mxu0
        %v5375 = vadd.f32 %v5239, %v5374
        %v5376 = vpop.f32.mrb[0].mxu0
        %5377 = vmatprep.mubr.bf16.mxu0 %v2107
        %5378 = vmatmul.mubr.bf16.gmra.mrb[0].mxu0 %v2106
        %v5379 = vpop.f32.mrb[0].mxu0
        %v5380 = vadd.f32 %v5244, %v5379
        %v5381 = vpop.f32.mrb[0].mxu0
        %v5382 = vpop.f32.mrb[0].mxu0
        %v5383 = vadd.f32 %v5247, %v5382
        %v5384 = vpop.f32.mrb[0].mxu0
        %5385 = vmatprep.mubr.bf16.mxu0 %v2132
        %5386 = vmatmul.mubr.bf16.gmra.mrb[0].mxu0 %v2131
        %v5387 = vpop.f32.mrb[0].mxu0
        %v5388 = vadd.f32 %v5252, %v5387
        %v5389 = vpop.f32.mrb[0].mxu0
        %v5390 = vpop.f32.mrb[0].mxu0
        %v5391 = vadd.f32 %v5255, %v5390
        %v5392 = vpop.f32.mrb[0].mxu0
        %5393 = vmatprep.mubr.bf16.mxu0 %v2157
        %5394 = vmatmul.mubr.bf16.gmra.mrb[0].mxu0 %v2156
        %v5395 = vpop.f32.mrb[0].mxu0
        %v5396 = vadd.f32 %v5260, %v5395
        %v5397 = vpop.f32.mrb[0].mxu0
        %v5398 = vpop.f32.mrb[0].mxu0
        %v5399 = vadd.f32 %v5263, %v5398
        %v5400 = vpop.f32.mrb[0].mxu0
        %5401 = vmatprep.mubr.bf16.mxu0 %v2182
        %5402 = vmatmul.mubr.bf16.gmra.mrb[0].mxu0 %v2181
        %v5403 = vpop.f32.mrb[0].mxu0
        %v5404 = vadd.f32 %v5268, %v5403
        %v5405 = vpop.f32.mrb[0].mxu0
        %v5406 = vpop.f32.mrb[0].mxu0
        %v5407 = vadd.f32 %v5271, %v5406
        %v5408 = vpop.f32.mrb[0].mxu0
        %5409 = vmatprep.mubr.bf16.mxu0 %v2207
        %5410 = vmatmul.mubr.bf16.gmra.mrb[0].mxu0 %v2206
        %v5411 = vpop.f32.mrb[0].mxu0
        %v5412 = vadd.f32 %v5276, %v5411
        %v5413 = vpop.f32.mrb[0].mxu0
        %v5414 = vpop.f32.mrb[0].mxu0
        %v5415 = vadd.f32 %v5279, %v5414
        %v5416 = vpop.f32.mrb[0].mxu0
        %5417 = vmatprep.mubr.bf16.mxu0 %v2232
        %5418 = vmatmul.mubr.bf16.gmra.mrb[0].mxu0 %v2231
        %v5419 = vpop.f32.mrb[0].mxu0
        %v5420 = vadd.f32 %v5284, %v5419
        %v5421 = vpop.f32.mrb[0].mxu0
        %v5422 = vpop.f32.mrb[0].mxu0
        %v5423 = vadd.f32 %v5287, %v5422
        %v5424 = vpop.f32.mrb[0].mxu0
        %5425 = vmatprep.mubr.bf16.mxu0 %v2257
        %5426 = vmatmul.mubr.bf16.gmra.mrb[0].mxu0 %v2256
        %v5427 = vpop.f32.mrb[0].mxu0
        %v5428 = vadd.f32 %v5292, %v5427
        %v5429 = vpop.f32.mrb[0].mxu0
        %v5430 = vpop.f32.mrb[0].mxu0
        %v5431 = vadd.f32 %v5295, %v5430
        %v5432 = vpop.f32.mrb[0].mxu0
        %5433 = vmatprep.mubr.bf16.mxu0 %v2282
        %5434 = vmatmul.mubr.bf16.gmra.mrb[0].mxu0 %v2281
        %v5435 = vpop.f32.mrb[0].mxu0
        %v5436 = vadd.f32 %v5300, %v5435
        %v5437 = vpop.f32.mrb[0].mxu0
        %v5438 = vpop.f32.mrb[0].mxu0
        %v5439 = vpop.f32.mrb[0].mxu0
        %5440 = vdwg.mxu0
        %5441 = vmatprep.subr.bf16.mxu0 0
        %5442 = vmatpush1.bf16.msra.mxu0 %v3601
        %5443 = vmatprep.subr.bf16.mxu0 0
        %5444 = vmatpush1.bf16.msra.mxu0 %v3602
        %5445 = vmatprep.subr.bf16.mxu0 0
        %5446 = vmatpush1.bf16.msra.mxu0 %v3603
        %5447 = vmatprep.subr.bf16.mxu0 0
        %5448 = vmatpush1.bf16.msra.mxu0 %v3604
        %5449 = vmatprep.subr.bf16.mxu0 0
        %5450 = vmatpush1.bf16.msra.mxu0 %v3605
        %5451 = vmatprep.subr.bf16.mxu0 0
        %5452 = vmatpush1.bf16.msra.mxu0 %v3606
        %5453 = vmatprep.subr.bf16.mxu0 0
        %5454 = vmatpush1.bf16.msra.mxu0 %v3607
        %5455 = vmatprep.subr.bf16.mxu0 0
        %5456 = vmatpush1.bf16.msra.mxu0 %v3608
        %5457 = vmatprep.subr.bf16.mxu0 0
        %5458 = vmatpush1.bf16.msra.mxu0 0
        %5459 = vmatprep.subr.bf16.mxu0 0
        %5460 = vmatpush1.bf16.msra.mxu0 0
        %5461 = vmatprep.subr.bf16.mxu0 0
        %5462 = vmatpush1.bf16.msra.mxu0 0
        %5463 = vmatprep.subr.bf16.mxu0 0
        %5464 = vmatpush1.bf16.msra.mxu0 0
        %5465 = vmatprep.subr.bf16.mxu0 0
        %5466 = vmatpush1.bf16.msra.mxu0 0
        %5467 = vmatprep.subr.bf16.mxu0 0
        %5468 = vmatpush1.bf16.msra.mxu0 0
        %5469 = vmatprep.subr.bf16.mxu0 0
        %5470 = vmatpush1.bf16.msra.mxu0 0
        %5471 = vmatprep.subr.bf16.mxu0 0
        %5472 = vmatpush1.bf16.msra.mxu0 0
        %5473 = vmatprep.mubr.bf16.mxu0 0
        %5474 = vmatmul.mubr.bf16.gmra.mrb[0].mxu0 %v1983
        %v5475 = vpop.f32.mrb[0].mxu0
        %v5476 = vadd.f32 %v5340, %v5475
        %v5477 = vpop.f32.mrb[0].mxu0
        %v5478 = vpop.f32.mrb[0].mxu0
        %v5479 = vadd.f32 %v5343, %v5478
        %v5480 = vpop.f32.mrb[0].mxu0
        %5481 = vmatprep.mubr.bf16.mxu0 0
        %5482 = vmatmul.mubr.bf16.gmra.mrb[0].mxu0 %v2008
        %v5483 = vpop.f32.mrb[0].mxu0
        %v5484 = vadd.f32 %v5348, %v5483
        %v5485 = vpop.f32.mrb[0].mxu0
        %v5486 = vpop.f32.mrb[0].mxu0
        %v5487 = vadd.f32 %v5351, %v5486
        %v5488 = vpop.f32.mrb[0].mxu0
        %5489 = vmatprep.mubr.bf16.mxu0 0
        %5490 = vmatmul.mubr.bf16.gmra.mrb[0].mxu0 %v2033
        %v5491 = vpop.f32.mrb[0].mxu0
        %v5492 = vadd.f32 %v5356, %v5491
        %v5493 = vpop.f32.mrb[0].mxu0
        %v5494 = vpop.f32.mrb[0].mxu0
        %v5495 = vadd.f32 %v5359, %v5494
        %v5496 = vpop.f32.mrb[0].mxu0
        %5497 = vmatprep.mubr.bf16.mxu0 0
        %5498 = vmatmul.mubr.bf16.gmra.mrb[0].mxu0 %v2058
        %v5499 = vpop.f32.mrb[0].mxu0
        %v5500 = vadd.f32 %v5364, %v5499
        %v5501 = vpop.f32.mrb[0].mxu0
        %v5502 = vpop.f32.mrb[0].mxu0
        %v5503 = vadd.f32 %v5367, %v5502
        %v5504 = vpop.f32.mrb[0].mxu0
        %5505 = vmatprep.mubr.bf16.mxu0 0
        %5506 = vmatmul.mubr.bf16.gmra.mrb[0].mxu0 %v2083
        %v5507 = vpop.f32.mrb[0].mxu0
        %v5508 = vadd.f32 %v5372, %v5507
        %v5509 = vpop.f32.mrb[0].mxu0
        %v5510 = vpop.f32.mrb[0].mxu0
        %v5511 = vadd.f32 %v5375, %v5510
        %v5512 = vpop.f32.mrb[0].mxu0
        %5513 = vmatprep.mubr.bf16.mxu0 0
        %5514 = vmatmul.mubr.bf16.gmra.mrb[0].mxu0 %v2108
        %v5515 = vpop.f32.mrb[0].mxu0
        %v5516 = vadd.f32 %v5380, %v5515
        %v5517 = vpop.f32.mrb[0].mxu0
        %v5518 = vpop.f32.mrb[0].mxu0
        %v5519 = vadd.f32 %v5383, %v5518
        %v5520 = vpop.f32.mrb[0].mxu0
        %5521 = vmatprep.mubr.bf16.mxu0 0
        %5522 = vmatmul.mubr.bf16.gmra.mrb[0].mxu0 %v2133
        %v5523 = vpop.f32.mrb[0].mxu0
        %v5524 = vadd.f32 %v5388, %v5523
        %v5525 = vpop.f32.mrb[0].mxu0
        %v5526 = vpop.f32.mrb[0].mxu0
        %v5527 = vadd.f32 %v5391, %v5526
        %v5528 = vpop.f32.mrb[0].mxu0
        %5529 = vmatprep.mubr.bf16.mxu0 0
        %5530 = vmatmul.mubr.bf16.gmra.mrb[0].mxu0 %v2158
        %v5531 = vpop.f32.mrb[0].mxu0
        %v5532 = vadd.f32 %v5396, %v5531
        %v5533 = vpop.f32.mrb[0].mxu0
        %v5534 = vpop.f32.mrb[0].mxu0
        %v5535 = vadd.f32 %v5399, %v5534
        %v5536 = vpop.f32.mrb[0].mxu0
        %5537 = vmatprep.mubr.bf16.mxu0 0
        %5538 = vmatmul.mubr.bf16.gmra.mrb[0].mxu0 %v2183
        %v5539 = vpop.f32.mrb[0].mxu0
        %v5540 = vadd.f32 %v5404, %v5539
        %v5541 = vpop.f32.mrb[0].mxu0
        %v5542 = vpop.f32.mrb[0].mxu0
        %v5543 = vadd.f32 %v5407, %v5542
        %v5544 = vpop.f32.mrb[0].mxu0
        %5545 = vmatprep.mubr.bf16.mxu0 0
        %5546 = vmatmul.mubr.bf16.gmra.mrb[0].mxu0 %v2208
        %v5547 = vpop.f32.mrb[0].mxu0
        %v5548 = vadd.f32 %v5412, %v5547
        %v5549 = vpop.f32.mrb[0].mxu0
        %v5550 = vpop.f32.mrb[0].mxu0
        %v5551 = vadd.f32 %v5415, %v5550
        %v5552 = vpop.f32.mrb[0].mxu0
        %5553 = vmatprep.mubr.bf16.mxu0 0
        %5554 = vmatmul.mubr.bf16.gmra.mrb[0].mxu0 %v2233
        %v5555 = vpop.f32.mrb[0].mxu0
        %v5556 = vadd.f32 %v5420, %v5555
        %v5557 = vpop.f32.mrb[0].mxu0
        %v5558 = vpop.f32.mrb[0].mxu0
        %v5559 = vadd.f32 %v5423, %v5558
        %v5560 = vpop.f32.mrb[0].mxu0
        %5561 = vmatprep.mubr.bf16.mxu0 0
        %5562 = vmatmul.mubr.bf16.gmra.mrb[0].mxu0 %v2258
        %v5563 = vpop.f32.mrb[0].mxu0
        %v5564 = vadd.f32 %v5428, %v5563
        %v5565 = vpop.f32.mrb[0].mxu0
        %v5566 = vpop.f32.mrb[0].mxu0
        %v5567 = vadd.f32 %v5431, %v5566
        %v5568 = vpop.f32.mrb[0].mxu0
        %5569 = vmatprep.mubr.bf16.mxu0 0
        %5570 = vmatmul.mubr.bf16.gmra.mrb[0].mxu0 %v2283
        %v5571 = vpop.f32.mrb[0].mxu0
        %v5572 = vadd.f32 %v5436, %v5571
        %v5573 = vpop.f32.mrb[0].mxu0
        %v5574 = vpop.f32.mrb[0].mxu0
        %v5575 = vpop.f32.mrb[0].mxu0
        %5576 = vdwg.mxu0
        %v5577 = vmax.f32 %v5476, 0.0
        %v5578 = vmax.f32 %v5479, 0.0
        %v5579 = vmax.f32 %v5484, 0.0
        %v5580 = vmax.f32 %v5487, 0.0
        %v5581 = vmax.f32 %v5492, 0.0
        %v5582 = vmax.f32 %v5495, 0.0
        %v5583 = vmax.f32 %v5500, 0.0
        %v5584 = vmax.f32 %v5503, 0.0
        %v5585 = vmax.f32 %v5508, 0.0
        %v5586 = vmax.f32 %v5511, 0.0
        %v5587 = vmax.f32 %v5516, 0.0
        %v5588 = vmax.f32 %v5519, 0.0
        %v5589 = vmax.f32 %v5524, 0.0
        %v5590 = vmax.f32 %v5527, 0.0
        %v5591 = vmax.f32 %v5532, 0.0
        %v5592 = vmax.f32 %v5535, 0.0
        %v5593 = vmax.f32 %v5540, 0.0
        %v5594 = vmax.f32 %v5543, 0.0
        %v5595 = vmax.f32 %v5548, 0.0
        %v5596 = vmax.f32 %v5551, 0.0
        %v5597 = vmax.f32 %v5556, 0.0
        %v5598 = vmax.f32 %v5559, 0.0
        %v5599 = vmax.f32 %v5564, 0.0
        %v5600 = vmax.f32 %v5567, 0.0
        %v5601 = vmax.f32 %v5572, 0.0
        %vm5609 = vcmask 1046528
        %v5610 = vrot.slane %v5583, 1
        %v5611 = vrot.slane %v5584, 1
        %v5612 = vsel %vm5609, %v5610, %v5611
        %v5613 = vrot.slane %v5585, 1
        %v5614 = vsel %vm5609, %v5611, %v5613
        %v5615 = vrot.slane %v5586, 1
        %v5616 = vsel %vm5609, %v5613, %v5615
        %v5617 = vrot.slane %v5587, 1
        %v5618 = vsel %vm5609, %v5615, %v5617
        %v5619 = vrot.slane %v5588, 1
        %v5620 = vsel %vm5609, %v5617, %v5619
        %v5621 = vrot.slane %v5589, 1
        %v5622 = vsel %vm5609, %v5619, %v5621
        %v5630 = vmax.f32 %v5577, %v5612
        %v5631 = vmax.f32 %v5578, %v5614
        %v5632 = vmax.f32 %v5579, %v5616
        %v5633 = vmax.f32 %v5580, %v5618
        %v5634 = vmax.f32 %v5581, %v5620
        %v5635 = vmax.f32 %v5582, %v5622
        %v5636 = vmax.f32 %v5583, %v5621
        %v5644 = vrot.slane %v5595, 1
        %v5645 = vrot.slane %v5596, 1
        %v5646 = vsel %vm5609, %v5644, %v5645
        %v5647 = vrot.slane %v5597, 1
        %v5648 = vsel %vm5609, %v5645, %v5647
        %v5649 = vrot.slane %v5598, 1
        %v5650 = vsel %vm5609, %v5647, %v5649
        %v5651 = vrot.slane %v5599, 1
        %v5652 = vsel %vm5609, %v5649, %v5651
        %v5653 = vrot.slane %v5600, 1
        %v5654 = vsel %vm5609, %v5651, %v5653
        %v5655 = vrot.slane %v5601, 1
        %v5656 = vsel %vm5609, %v5653, %v5655
        %v5664 = vmax.f32 %v5589, %v5646
        %v5665 = vmax.f32 %v5590, %v5648
        %v5666 = vmax.f32 %v5591, %v5650
        %v5667 = vmax.f32 %v5592, %v5652
        %v5668 = vmax.f32 %v5593, %v5654
        %v5669 = vmax.f32 %v5594, %v5656
        %v5670 = vmax.f32 %v5595, %v5655
        %vm5678 = vcmask 1045504
        %v5679 = vrot.slane %v5664, 2
        %v5680 = vrot.slane %v5665, 2
        %v5681 = vsel %vm5678, %v5679, %v5680
        %v5682 = vrot.slane %v5666, 2
        %v5683 = vsel %vm5678, %v5680, %v5682
        %v5684 = vrot.slane %v5667, 2
        %v5685 = vsel %vm5678, %v5682, %v5684
        %v5686 = vrot.slane %v5668, 2
        %v5687 = vsel %vm5678, %v5684, %v5686
        %v5688 = vrot.slane %v5669, 2
        %v5689 = vsel %vm5678, %v5686, %v5688
        %v5690 = vrot.slane %v5670, 2
        %v5691 = vsel %vm5678, %v5688, %v5690
        %v5699 = vmax.f32 %v5630, %v5681
        %v5700 = vmax.f32 %v5631, %v5683
        %v5701 = vmax.f32 %v5632, %v5685
        %v5702 = vmax.f32 %v5633, %v5687
        %v5703 = vmax.f32 %v5634, %v5689
        %v5704 = vmax.f32 %v5635, %v5691
        %v5705 = vmax.f32 %v5636, %v5690
        %v5706 = vld [vmem:[%s3] sm:$0xff]
        %v5707 = vld [vmem:[%s3 + $0x8] sm:$0xff]
        %v5708 = vld [vmem:[%s3 + $0x10] sm:$0xff]
        %v5709 = vld [vmem:[%s3 + $0x18] sm:$0xff]
        %v5710 = vld [vmem:[%s3 + $0x20] sm:$0xff]
        %v5711 = vld [vmem:[%s3 + $0x28] sm:$0xff]
        %v5712 = vld [vmem:[%s3 + $0x30] sm:$0x1]
        %v5713 = vld [vmem:[%s3 + $0x38] sm:$0xff]
        %v5714 = vld [vmem:[%s3 + $0x40] sm:$0xff]
        %v5715 = vld [vmem:[%s3 + $0x48] sm:$0xff]
        %v5716 = vld [vmem:[%s3 + $0x50] sm:$0xff]
        %v5717 = vld [vmem:[%s3 + $0x58] sm:$0xff]
        %v5718 = vld [vmem:[%s3 + $0x60] sm:$0xff]
        %v5719 = vld [vmem:[%s3 + $0x68] sm:$0x1]
        %v5720 = vld [vmem:[%s3 + $0x70] sm:$0xff]
        %v5721 = vld [vmem:[%s3 + $0x78] sm:$0xff]
        %v5722 = vld [vmem:[%s3 + $0x80] sm:$0xff]
        %v5723 = vld [vmem:[%s3 + $0x88] sm:$0xff]
        %v5724 = vld [vmem:[%s3 + $0x90] sm:$0xff]
        %v5725 = vld [vmem:[%s3 + $0x98] sm:$0xff]
        %v5726 = vld [vmem:[%s3 + $0xa0] sm:$0x1]
        %v5727 = vld [vmem:[%s3 + $0xa8] sm:$0xff]
        %v5728 = vld [vmem:[%s3 + $0xb0] sm:$0xff]
        %v5729 = vld [vmem:[%s3 + $0xb8] sm:$0xff]
        %v5730 = vld [vmem:[%s3 + $0xc0] sm:$0xff]
        %v5731 = vld [vmem:[%s3 + $0xc8] sm:$0xff]
        %v5732 = vld [vmem:[%s3 + $0xd0] sm:$0xff]
        %v5733 = vld [vmem:[%s3 + $0xd8] sm:$0x1]
        %v5734 = vld [vmem:[%s3 + $0xe0] sm:$0xff]
        %v5735 = vld [vmem:[%s3 + $0xe8] sm:$0xff]
        %v5736 = vld [vmem:[%s3 + $0xf0] sm:$0xff]
        %v5737 = vld [vmem:[%s3 + $0xf8] sm:$0xff]
        %v5738 = vld [vmem:[%s3 + $0x100] sm:$0xff]
        %v5739 = vld [vmem:[%s3 + $0x108] sm:$0xff]
        %v5740 = vld [vmem:[%s3 + $0x110] sm:$0x1]
        %v5741 = vld [vmem:[%s3 + $0x118] sm:$0xff]
        %v5742 = vld [vmem:[%s3 + $0x120] sm:$0xff]
        %v5743 = vld [vmem:[%s3 + $0x128] sm:$0xff]
        %v5744 = vld [vmem:[%s3 + $0x130] sm:$0xff]
        %v5745 = vld [vmem:[%s3 + $0x138] sm:$0xff]
        %v5746 = vld [vmem:[%s3 + $0x140] sm:$0xff]
        %v5747 = vld [vmem:[%s3 + $0x148] sm:$0x1]
        %v5748 = vld [vmem:[%s3 + $0x150] sm:$0xff]
        %v5749 = vld [vmem:[%s3 + $0x158] sm:$0xff]
        %v5750 = vld [vmem:[%s3 + $0x160] sm:$0xff]
        %v5751 = vld [vmem:[%s3 + $0x168] sm:$0xff]
        %v5752 = vld [vmem:[%s3 + $0x170] sm:$0xff]
        %v5753 = vld [vmem:[%s3 + $0x178] sm:$0xff]
        %v5754 = vld [vmem:[%s3 + $0x180] sm:$0x1]
        %v5755 = vld [vmem:[%s3 + $0x188] sm:$0xff]
        %v5756 = vld [vmem:[%s3 + $0x190] sm:$0xff]
        %v5757 = vld [vmem:[%s3 + $0x198] sm:$0xff]
        %v5758 = vld [vmem:[%s3 + $0x1a0] sm:$0xff]
        %v5759 = vld [vmem:[%s3 + $0x1a8] sm:$0xff]
        %v5760 = vld [vmem:[%s3 + $0x1b0] sm:$0xff]
        %v5761 = vld [vmem:[%s3 + $0x1b8] sm:$0x1]
        %v5762 = vld [vmem:[%s3 + $0x1c0] sm:$0xff]
        %v5763 = vld [vmem:[%s3 + $0x1c8] sm:$0xff]
        %v5764 = vld [vmem:[%s3 + $0x1d0] sm:$0xff]
        %v5765 = vld [vmem:[%s3 + $0x1d8] sm:$0xff]
        %v5766 = vld [vmem:[%s3 + $0x1e0] sm:$0xff]
        %v5767 = vld [vmem:[%s3 + $0x1e8] sm:$0xff]
        %v5768 = vld [vmem:[%s3 + $0x1f0] sm:$0x1]
        %v5769 = vld [vmem:[%s3 + $0x1f8] sm:$0xff]
        %v5770 = vld [vmem:[%s3 + $0x200] sm:$0xff]
        %v5771 = vld [vmem:[%s3 + $0x208] sm:$0xff]
        %v5772 = vld [vmem:[%s3 + $0x210] sm:$0xff]
        %v5773 = vld [vmem:[%s3 + $0x218] sm:$0xff]
        %v5774 = vld [vmem:[%s3 + $0x220] sm:$0xff]
        %v5775 = vld [vmem:[%s3 + $0x228] sm:$0x1]
        %v5776 = vld [vmem:[%s3 + $0x230] sm:$0xff]
        %v5777 = vld [vmem:[%s3 + $0x238] sm:$0xff]
        %v5778 = vld [vmem:[%s3 + $0x240] sm:$0xff]
        %v5779 = vld [vmem:[%s3 + $0x248] sm:$0xff]
        %v5780 = vld [vmem:[%s3 + $0x250] sm:$0xff]
        %v5781 = vld [vmem:[%s3 + $0x258] sm:$0xff]
        %v5782 = vld [vmem:[%s3 + $0x260] sm:$0x1]
        %v5783 = vld [vmem:[%s3 + $0x268] sm:$0xff]
        %v5784 = vld [vmem:[%s3 + $0x270] sm:$0xff]
        %v5785 = vld [vmem:[%s3 + $0x278] sm:$0xff]
        %v5786 = vld [vmem:[%s3 + $0x280] sm:$0xff]
        %v5787 = vld [vmem:[%s3 + $0x288] sm:$0xff]
        %v5788 = vld [vmem:[%s3 + $0x290] sm:$0xff]
        %v5789 = vld [vmem:[%s3 + $0x298] sm:$0x1]
        %v5790 = vld [vmem:[%s3 + $0x2a0] sm:$0xff]
        %v5791 = vld [vmem:[%s3 + $0x2a8] sm:$0xff]
        %v5792 = vld [vmem:[%s3 + $0x2b0] sm:$0xff]
        %v5793 = vld [vmem:[%s3 + $0x2b8] sm:$0xff]
        %v5794 = vld [vmem:[%s3 + $0x2c0] sm:$0xff]
        %v5795 = vld [vmem:[%s3 + $0x2c8] sm:$0xff]
        %v5796 = vld [vmem:[%s3 + $0x2d0] sm:$0x1]
        %v5797 = vld [vmem:[%s3 + $0x2d8] sm:$0xff]
        %v5798 = vld [vmem:[%s3 + $0x2e0] sm:$0xff]
        %v5799 = vld [vmem:[%s3 + $0x2e8] sm:$0xff]
        %v5800 = vld [vmem:[%s3 + $0x2f0] sm:$0xff]
        %v5801 = vld [vmem:[%s3 + $0x2f8] sm:$0xff]
        %v5802 = vld [vmem:[%s3 + $0x300] sm:$0xff]
        %v5803 = vld [vmem:[%s3 + $0x308] sm:$0x1]
        %v5804 = vld [vmem:[%s3 + $0x310] sm:$0xff]
        %v5805 = vld [vmem:[%s3 + $0x318] sm:$0xff]
        %v5806 = vld [vmem:[%s3 + $0x320] sm:$0xff]
        %v5807 = vld [vmem:[%s3 + $0x328] sm:$0xff]
        %v5808 = vld [vmem:[%s3 + $0x330] sm:$0xff]
        %v5809 = vld [vmem:[%s3 + $0x338] sm:$0xff]
        %v5810 = vld [vmem:[%s3 + $0x340] sm:$0x1]
        %v5811 = vld [vmem:[%s3 + $0x348] sm:$0xff]
        %v5812 = vld [vmem:[%s3 + $0x350] sm:$0xff]
        %v5813 = vld [vmem:[%s3 + $0x358] sm:$0xff]
        %v5814 = vld [vmem:[%s3 + $0x360] sm:$0xff]
        %v5815 = vld [vmem:[%s3 + $0x368] sm:$0xff]
        %v5816 = vld [vmem:[%s3 + $0x370] sm:$0xff]
        %v5817 = vld [vmem:[%s3 + $0x378] sm:$0x1]
        %v5818 = vld [vmem:[%s3 + $0x380] sm:$0xff]
        %v5819 = vld [vmem:[%s3 + $0x388] sm:$0xff]
        %v5820 = vld [vmem:[%s3 + $0x390] sm:$0xff]
        %v5821 = vld [vmem:[%s3 + $0x398] sm:$0xff]
        %v5822 = vld [vmem:[%s3 + $0x3a0] sm:$0xff]
        %v5823 = vld [vmem:[%s3 + $0x3a8] sm:$0xff]
        %v5824 = vld [vmem:[%s3 + $0x3b0] sm:$0x1]
        %v5825 = vld [vmem:[%s3 + $0x3b8] sm:$0xff]
        %v5826 = vld [vmem:[%s3 + $0x3c0] sm:$0xff]
        %v5827 = vld [vmem:[%s3 + $0x3c8] sm:$0xff]
        %v5828 = vld [vmem:[%s3 + $0x3d0] sm:$0xff]
        %v5829 = vld [vmem:[%s3 + $0x3d8] sm:$0xff]
        %v5830 = vld [vmem:[%s3 + $0x3e0] sm:$0xff]
        %v5831 = vld [vmem:[%s3 + $0x3e8] sm:$0x1]
        %v5832 = vld [vmem:[%s3 + $0x3f0] sm:$0xff]
        %v5833 = vld [vmem:[%s3 + $0x3f8] sm:$0xff]
        %v5834 = vld [vmem:[%s3 + $0x400] sm:$0xff]
        %v5835 = vld [vmem:[%s3 + $0x408] sm:$0xff]
        %v5836 = vld [vmem:[%s3 + $0x410] sm:$0xff]
        %v5837 = vld [vmem:[%s3 + $0x418] sm:$0xff]
        %v5838 = vld [vmem:[%s3 + $0x420] sm:$0x1]
        %v5839 = vld [vmem:[%s3 + $0x428] sm:$0xff]
        %v5840 = vld [vmem:[%s3 + $0x430] sm:$0xff]
        %v5841 = vld [vmem:[%s3 + $0x438] sm:$0xff]
        %v5842 = vld [vmem:[%s3 + $0x440] sm:$0xff]
        %v5843 = vld [vmem:[%s3 + $0x448] sm:$0xff]
        %v5844 = vld [vmem:[%s3 + $0x450] sm:$0xff]
        %v5845 = vld [vmem:[%s3 + $0x458] sm:$0x1]
        %v5846 = vld [vmem:[%s3 + $0x460] sm:$0xff]
        %v5847 = vld [vmem:[%s3 + $0x468] sm:$0xff]
        %v5848 = vld [vmem:[%s3 + $0x470] sm:$0xff]
        %v5849 = vld [vmem:[%s3 + $0x478] sm:$0xff]
        %v5850 = vld [vmem:[%s3 + $0x480] sm:$0xff]
        %v5851 = vld [vmem:[%s3 + $0x488] sm:$0xff]
        %v5852 = vld [vmem:[%s3 + $0x490] sm:$0x1]
        %v5853 = vld [vmem:[%s3 + $0x498] sm:$0xff]
        %v5854 = vld [vmem:[%s3 + $0x4a0] sm:$0xff]
        %v5855 = vld [vmem:[%s3 + $0x4a8] sm:$0xff]
        %v5856 = vld [vmem:[%s3 + $0x4b0] sm:$0xff]
        %v5857 = vld [vmem:[%s3 + $0x4b8] sm:$0xff]
        %v5858 = vld [vmem:[%s3 + $0x4c0] sm:$0xff]
        %v5859 = vld [vmem:[%s3 + $0x4c8] sm:$0x1]
        %v5860 = vld [vmem:[%s3 + $0x4d0] sm:$0xff]
        %v5861 = vld [vmem:[%s3 + $0x4d8] sm:$0xff]
        %v5862 = vld [vmem:[%s3 + $0x4e0] sm:$0xff]
        %v5863 = vld [vmem:[%s3 + $0x4e8] sm:$0xff]
        %v5864 = vld [vmem:[%s3 + $0x4f0] sm:$0xff]
        %v5865 = vld [vmem:[%s3 + $0x4f8] sm:$0xff]
        %v5866 = vld [vmem:[%s3 + $0x500] sm:$0x1]
        %v5867 = vld [vmem:[%s3 + $0x508] sm:$0xff]
        %v5868 = vld [vmem:[%s3 + $0x510] sm:$0xff]
        %v5869 = vld [vmem:[%s3 + $0x518] sm:$0xff]
        %v5870 = vld [vmem:[%s3 + $0x520] sm:$0xff]
        %v5871 = vld [vmem:[%s3 + $0x528] sm:$0xff]
        %v5872 = vld [vmem:[%s3 + $0x530] sm:$0xff]
        %v5873 = vld [vmem:[%s3 + $0x538] sm:$0x1]
        %v5874 = vld [vmem:[%s3 + $0x540] sm:$0xff]
        %v5875 = vld [vmem:[%s3 + $0x548] sm:$0xff]
        %v5876 = vld [vmem:[%s3 + $0x550] sm:$0xff]
        %v5877 = vld [vmem:[%s3 + $0x558] sm:$0xff]
        %v5878 = vld [vmem:[%s3 + $0x560] sm:$0xff]
        %v5879 = vld [vmem:[%s3 + $0x568] sm:$0xff]
        %v5880 = vld [vmem:[%s3 + $0x570] sm:$0x1]
        %v5881 = vld [vmem:[%s3 + $0x578] sm:$0xff]
        %v5882 = vld [vmem:[%s3 + $0x580] sm:$0xff]
        %v5883 = vld [vmem:[%s3 + $0x588] sm:$0xff]
        %v5884 = vld [vmem:[%s3 + $0x590] sm:$0xff]
        %v5885 = vld [vmem:[%s3 + $0x598] sm:$0xff]
        %v5886 = vld [vmem:[%s3 + $0x5a0] sm:$0xff]
        %v5887 = vld [vmem:[%s3 + $0x5a8] sm:$0x1]
        %v5888 = vld [vmem:[%s3 + $0x5b0] sm:$0xff]
        %v5889 = vld [vmem:[%s3 + $0x5b8] sm:$0xff]
        %v5890 = vld [vmem:[%s3 + $0x5c0] sm:$0xff]
        %v5891 = vld [vmem:[%s3 + $0x5c8] sm:$0xff]
        %v5892 = vld [vmem:[%s3 + $0x5d0] sm:$0xff]
        %v5893 = vld [vmem:[%s3 + $0x5d8] sm:$0xff]
        %v5894 = vld [vmem:[%s3 + $0x5e0] sm:$0x1]
        %v5895 = vld [vmem:[%s3 + $0x5e8] sm:$0xff]
        %v5896 = vld [vmem:[%s3 + $0x5f0] sm:$0xff]
        %v5897 = vld [vmem:[%s3 + $0x5f8] sm:$0xff]
        %v5898 = vld [vmem:[%s3 + $0x600] sm:$0xff]
        %v5899 = vld [vmem:[%s3 + $0x608] sm:$0xff]
        %v5900 = vld [vmem:[%s3 + $0x610] sm:$0xff]
        %v5901 = vld [vmem:[%s3 + $0x618] sm:$0x1]
        %v5902 = vld [vmem:[%s3 + $0x620] sm:$0xff]
        %v5903 = vld [vmem:[%s3 + $0x628] sm:$0xff]
        %v5904 = vld [vmem:[%s3 + $0x630] sm:$0xff]
        %v5905 = vld [vmem:[%s3 + $0x638] sm:$0xff]
        %v5906 = vld [vmem:[%s3 + $0x640] sm:$0xff]
        %v5907 = vld [vmem:[%s3 + $0x648] sm:$0xff]
        %v5908 = vld [vmem:[%s3 + $0x650] sm:$0x1]
        %v5909 = vld [vmem:[%s3 + $0x658] sm:$0xff]
        %v5910 = vld [vmem:[%s3 + $0x660] sm:$0xff]
        %v5911 = vld [vmem:[%s3 + $0x668] sm:$0xff]
        %v5912 = vld [vmem:[%s3 + $0x670] sm:$0xff]
        %v5913 = vld [vmem:[%s3 + $0x678] sm:$0xff]
        %v5914 = vld [vmem:[%s3 + $0x680] sm:$0xff]
        %v5915 = vld [vmem:[%s3 + $0x688] sm:$0x1]
        %v5916 = vld [vmem:[%s3 + $0x690] sm:$0xff]
        %v5917 = vld [vmem:[%s3 + $0x698] sm:$0xff]
        %v5918 = vld [vmem:[%s3 + $0x6a0] sm:$0xff]
        %v5919 = vld [vmem:[%s3 + $0x6a8] sm:$0xff]
        %v5920 = vld [vmem:[%s3 + $0x6b0] sm:$0xff]
        %v5921 = vld [vmem:[%s3 + $0x6b8] sm:$0xff]
        %v5922 = vld [vmem:[%s3 + $0x6c0] sm:$0x1]
        %v5923 = vld [vmem:[%s3 + $0x6c8] sm:$0xff]
        %v5924 = vld [vmem:[%s3 + $0x6d0] sm:$0xff]
        %v5925 = vld [vmem:[%s3 + $0x6d8] sm:$0xff]
        %v5926 = vld [vmem:[%s3 + $0x6e0] sm:$0xff]
        %v5927 = vld [vmem:[%s3 + $0x6e8] sm:$0xff]
        %v5928 = vld [vmem:[%s3 + $0x6f0] sm:$0xff]
        %v5929 = vld [vmem:[%s3 + $0x6f8] sm:$0x1]
        %v5930 = vmul.f32 %v5699, %v5706
        %v5931 = vmul.f32 %v5700, %v5707
        %v5932 = vmul.f32 %v5701, %v5708
        %v5933 = vmul.f32 %v5702, %v5709
        %v5934 = vmul.f32 %v5703, %v5710
        %v5935 = vmul.f32 %v5704, %v5711
        %v5936 = vmul.f32 %v5705, %v5712
        %v5937 = vmul.f32 %v5699, %v5713
        %v5938 = vmul.f32 %v5700, %v5714
        %v5939 = vmul.f32 %v5701, %v5715
        %v5940 = vmul.f32 %v5702, %v5716
        %v5941 = vmul.f32 %v5703, %v5717
        %v5942 = vmul.f32 %v5704, %v5718
        %v5943 = vmul.f32 %v5705, %v5719
        %v5944 = vmul.f32 %v5699, %v5720
        %v5945 = vmul.f32 %v5700, %v5721
        %v5946 = vmul.f32 %v5701, %v5722
        %v5947 = vmul.f32 %v5702, %v5723
        %v5948 = vmul.f32 %v5703, %v5724
        %v5949 = vmul.f32 %v5704, %v5725
        %v5950 = vmul.f32 %v5705, %v5726
        %v5951 = vmul.f32 %v5699, %v5727
        %v5952 = vmul.f32 %v5700, %v5728
        %v5953 = vmul.f32 %v5701, %v5729
        %v5954 = vmul.f32 %v5702, %v5730
        %v5955 = vmul.f32 %v5703, %v5731
        %v5956 = vmul.f32 %v5704, %v5732
        %v5957 = vmul.f32 %v5705, %v5733
        %v5958 = vmul.f32 %v5699, %v5734
        %v5959 = vmul.f32 %v5700, %v5735
        %v5960 = vmul.f32 %v5701, %v5736
        %v5961 = vmul.f32 %v5702, %v5737
        %v5962 = vmul.f32 %v5703, %v5738
        %v5963 = vmul.f32 %v5704, %v5739
        %v5964 = vmul.f32 %v5705, %v5740
        %v5965 = vmul.f32 %v5699, %v5741
        %v5966 = vmul.f32 %v5700, %v5742
        %v5967 = vmul.f32 %v5701, %v5743
        %v5968 = vmul.f32 %v5702, %v5744
        %v5969 = vmul.f32 %v5703, %v5745
        %v5970 = vmul.f32 %v5704, %v5746
        %v5971 = vmul.f32 %v5705, %v5747
        %v5972 = vmul.f32 %v5699, %v5748
        %v5973 = vmul.f32 %v5700, %v5749
        %v5974 = vmul.f32 %v5701, %v5750
        %v5975 = vmul.f32 %v5702, %v5751
        %v5976 = vmul.f32 %v5703, %v5752
        %v5977 = vmul.f32 %v5704, %v5753
        %v5978 = vmul.f32 %v5705, %v5754
        %v5979 = vmul.f32 %v5699, %v5755
        %v5980 = vmul.f32 %v5700, %v5756
        %v5981 = vmul.f32 %v5701, %v5757
        %v5982 = vmul.f32 %v5702, %v5758
        %v5983 = vmul.f32 %v5703, %v5759
        %v5984 = vmul.f32 %v5704, %v5760
        %v5985 = vmul.f32 %v5705, %v5761
        %v5986 = vmul.f32 %v5699, %v5762
        %v5987 = vmul.f32 %v5700, %v5763
        %v5988 = vmul.f32 %v5701, %v5764
        %v5989 = vmul.f32 %v5702, %v5765
        %v5990 = vmul.f32 %v5703, %v5766
        %v5991 = vmul.f32 %v5704, %v5767
        %v5992 = vmul.f32 %v5705, %v5768
        %v5993 = vmul.f32 %v5699, %v5769
        %v5994 = vmul.f32 %v5700, %v5770
        %v5995 = vmul.f32 %v5701, %v5771
        %v5996 = vmul.f32 %v5702, %v5772
        %v5997 = vmul.f32 %v5703, %v5773
        %v5998 = vmul.f32 %v5704, %v5774
        %v5999 = vmul.f32 %v5705, %v5775
        %v6000 = vmul.f32 %v5699, %v5776
        %v6001 = vmul.f32 %v5700, %v5777
        %v6002 = vmul.f32 %v5701, %v5778
        %v6003 = vmul.f32 %v5702, %v5779
        %v6004 = vmul.f32 %v5703, %v5780
        %v6005 = vmul.f32 %v5704, %v5781
        %v6006 = vmul.f32 %v5705, %v5782
        %v6007 = vmul.f32 %v5699, %v5783
        %v6008 = vmul.f32 %v5700, %v5784
        %v6009 = vmul.f32 %v5701, %v5785
        %v6010 = vmul.f32 %v5702, %v5786
        %v6011 = vmul.f32 %v5703, %v5787
        %v6012 = vmul.f32 %v5704, %v5788
        %v6013 = vmul.f32 %v5705, %v5789
        %v6014 = vmul.f32 %v5699, %v5790
        %v6015 = vmul.f32 %v5700, %v5791
        %v6016 = vmul.f32 %v5701, %v5792
        %v6017 = vmul.f32 %v5702, %v5793
        %v6018 = vmul.f32 %v5703, %v5794
        %v6019 = vmul.f32 %v5704, %v5795
        %v6020 = vmul.f32 %v5705, %v5796
        %v6021 = vmul.f32 %v5699, %v5797
        %v6022 = vmul.f32 %v5700, %v5798
        %v6023 = vmul.f32 %v5701, %v5799
        %v6024 = vmul.f32 %v5702, %v5800
        %v6025 = vmul.f32 %v5703, %v5801
        %v6026 = vmul.f32 %v5704, %v5802
        %v6027 = vmul.f32 %v5705, %v5803
        %v6028 = vmul.f32 %v5699, %v5804
        %v6029 = vmul.f32 %v5700, %v5805
        %v6030 = vmul.f32 %v5701, %v5806
        %v6031 = vmul.f32 %v5702, %v5807
        %v6032 = vmul.f32 %v5703, %v5808
        %v6033 = vmul.f32 %v5704, %v5809
        %v6034 = vmul.f32 %v5705, %v5810
        %v6035 = vmul.f32 %v5699, %v5811
        %v6036 = vmul.f32 %v5700, %v5812
        %v6037 = vmul.f32 %v5701, %v5813
        %v6038 = vmul.f32 %v5702, %v5814
        %v6039 = vmul.f32 %v5703, %v5815
        %v6040 = vmul.f32 %v5704, %v5816
        %v6041 = vmul.f32 %v5705, %v5817
        %v6042 = vmul.f32 %v5699, %v5818
        %v6043 = vmul.f32 %v5700, %v5819
        %v6044 = vmul.f32 %v5701, %v5820
        %v6045 = vmul.f32 %v5702, %v5821
        %v6046 = vmul.f32 %v5703, %v5822
        %v6047 = vmul.f32 %v5704, %v5823
        %v6048 = vmul.f32 %v5705, %v5824
        %v6049 = vmul.f32 %v5699, %v5825
        %v6050 = vmul.f32 %v5700, %v5826
        %v6051 = vmul.f32 %v5701, %v5827
        %v6052 = vmul.f32 %v5702, %v5828
        %v6053 = vmul.f32 %v5703, %v5829
        %v6054 = vmul.f32 %v5704, %v5830
        %v6055 = vmul.f32 %v5705, %v5831
        %v6056 = vmul.f32 %v5699, %v5832
        %v6057 = vmul.f32 %v5700, %v5833
        %v6058 = vmul.f32 %v5701, %v5834
        %v6059 = vmul.f32 %v5702, %v5835
        %v6060 = vmul.f32 %v5703, %v5836
        %v6061 = vmul.f32 %v5704, %v5837
        %v6062 = vmul.f32 %v5705, %v5838
        %v6063 = vmul.f32 %v5699, %v5839
        %v6064 = vmul.f32 %v5700, %v5840
        %v6065 = vmul.f32 %v5701, %v5841
        %v6066 = vmul.f32 %v5702, %v5842
        %v6067 = vmul.f32 %v5703, %v5843
        %v6068 = vmul.f32 %v5704, %v5844
        %v6069 = vmul.f32 %v5705, %v5845
        %v6070 = vmul.f32 %v5699, %v5846
        %v6071 = vmul.f32 %v5700, %v5847
        %v6072 = vmul.f32 %v5701, %v5848
        %v6073 = vmul.f32 %v5702, %v5849
        %v6074 = vmul.f32 %v5703, %v5850
        %v6075 = vmul.f32 %v5704, %v5851
        %v6076 = vmul.f32 %v5705, %v5852
        %v6077 = vmul.f32 %v5699, %v5853
        %v6078 = vmul.f32 %v5700, %v5854
        %v6079 = vmul.f32 %v5701, %v5855
        %v6080 = vmul.f32 %v5702, %v5856
        %v6081 = vmul.f32 %v5703, %v5857
        %v6082 = vmul.f32 %v5704, %v5858
        %v6083 = vmul.f32 %v5705, %v5859
        %v6084 = vmul.f32 %v5699, %v5860
        %v6085 = vmul.f32 %v5700, %v5861
        %v6086 = vmul.f32 %v5701, %v5862
        %v6087 = vmul.f32 %v5702, %v5863
        %v6088 = vmul.f32 %v5703, %v5864
        %v6089 = vmul.f32 %v5704, %v5865
        %v6090 = vmul.f32 %v5705, %v5866
        %v6091 = vmul.f32 %v5699, %v5867
        %v6092 = vmul.f32 %v5700, %v5868
        %v6093 = vmul.f32 %v5701, %v5869
        %v6094 = vmul.f32 %v5702, %v5870
        %v6095 = vmul.f32 %v5703, %v5871
        %v6096 = vmul.f32 %v5704, %v5872
        %v6097 = vmul.f32 %v5705, %v5873
        %v6098 = vmul.f32 %v5699, %v5874
        %v6099 = vmul.f32 %v5700, %v5875
        %v6100 = vmul.f32 %v5701, %v5876
        %v6101 = vmul.f32 %v5702, %v5877
        %v6102 = vmul.f32 %v5703, %v5878
        %v6103 = vmul.f32 %v5704, %v5879
        %v6104 = vmul.f32 %v5705, %v5880
        %v6105 = vmul.f32 %v5699, %v5881
        %v6106 = vmul.f32 %v5700, %v5882
        %v6107 = vmul.f32 %v5701, %v5883
        %v6108 = vmul.f32 %v5702, %v5884
        %v6109 = vmul.f32 %v5703, %v5885
        %v6110 = vmul.f32 %v5704, %v5886
        %v6111 = vmul.f32 %v5705, %v5887
        %v6112 = vmul.f32 %v5699, %v5888
        %v6113 = vmul.f32 %v5700, %v5889
        %v6114 = vmul.f32 %v5701, %v5890
        %v6115 = vmul.f32 %v5702, %v5891
        %v6116 = vmul.f32 %v5703, %v5892
        %v6117 = vmul.f32 %v5704, %v5893
        %v6118 = vmul.f32 %v5705, %v5894
        %v6119 = vmul.f32 %v5699, %v5895
        %v6120 = vmul.f32 %v5700, %v5896
        %v6121 = vmul.f32 %v5701, %v5897
        %v6122 = vmul.f32 %v5702, %v5898
        %v6123 = vmul.f32 %v5703, %v5899
        %v6124 = vmul.f32 %v5704, %v5900
        %v6125 = vmul.f32 %v5705, %v5901
        %v6126 = vmul.f32 %v5699, %v5902
        %v6127 = vmul.f32 %v5700, %v5903
        %v6128 = vmul.f32 %v5701, %v5904
        %v6129 = vmul.f32 %v5702, %v5905
        %v6130 = vmul.f32 %v5703, %v5906
        %v6131 = vmul.f32 %v5704, %v5907
        %v6132 = vmul.f32 %v5705, %v5908
        %v6133 = vmul.f32 %v5699, %v5909
        %v6134 = vmul.f32 %v5700, %v5910
        %v6135 = vmul.f32 %v5701, %v5911
        %v6136 = vmul.f32 %v5702, %v5912
        %v6137 = vmul.f32 %v5703, %v5913
        %v6138 = vmul.f32 %v5704, %v5914
        %v6139 = vmul.f32 %v5705, %v5915
        %v6140 = vmul.f32 %v5699, %v5916
        %v6141 = vmul.f32 %v5700, %v5917
        %v6142 = vmul.f32 %v5701, %v5918
        %v6143 = vmul.f32 %v5702, %v5919
        %v6144 = vmul.f32 %v5703, %v5920
        %v6145 = vmul.f32 %v5704, %v5921
        %v6146 = vmul.f32 %v5705, %v5922
        %v6147 = vmul.f32 %v5699, %v5923
        %v6148 = vmul.f32 %v5700, %v5924
        %v6149 = vmul.f32 %v5701, %v5925
        %v6150 = vmul.f32 %v5702, %v5926
        %v6151 = vmul.f32 %v5703, %v5927
        %v6152 = vmul.f32 %v5704, %v5928
        %v6153 = vmul.f32 %v5705, %v5929
        %6154 = vadd.xlane.f32.xlu0 %v5930
        %v6155 = vpop.xlane.xlu0 %6154
        %6156 = vadd.xlane.f32.xlu0 %v5931
        %v6157 = vpop.xlane.xlu0 %6156
        %6158 = vadd.xlane.f32.xlu0 %v5932
        %v6159 = vpop.xlane.xlu0 %6158
        %6160 = vadd.xlane.f32.xlu0 %v5933
        %v6161 = vpop.xlane.xlu0 %6160
        %6162 = vadd.xlane.f32.xlu0 %v5934
        %v6163 = vpop.xlane.xlu0 %6162
        %6164 = vadd.xlane.f32.xlu0 %v5935
        %v6165 = vpop.xlane.xlu0 %6164
        %vm6166 = vcmask 1040384
        %v6167 = vsel %vm6166, %v5936, 0.0
        %6168 = vadd.xlane.f32.xlu0 %v6167
        %v6169 = vpop.xlane.xlu0 %6168
        %6170 = vadd.xlane.f32.xlu0 %v5937
        %v6171 = vpop.xlane.xlu0 %6170
        %6172 = vadd.xlane.f32.xlu0 %v5938
        %v6173 = vpop.xlane.xlu0 %6172
        %6174 = vadd.xlane.f32.xlu0 %v5939
        %v6175 = vpop.xlane.xlu0 %6174
        %6176 = vadd.xlane.f32.xlu0 %v5940
        %v6177 = vpop.xlane.xlu0 %6176
        %6178 = vadd.xlane.f32.xlu0 %v5941
        %v6179 = vpop.xlane.xlu0 %6178
        %6180 = vadd.xlane.f32.xlu0 %v5942
        %v6181 = vpop.xlane.xlu0 %6180
        %v6182 = vsel %vm6166, %v5943, 0.0
        %6183 = vadd.xlane.f32.xlu0 %v6182
        %v6184 = vpop.xlane.xlu0 %6183
        %6185 = vadd.xlane.f32.xlu0 %v5944
        %v6186 = vpop.xlane.xlu0 %6185
        %6187 = vadd.xlane.f32.xlu0 %v5945
        %v6188 = vpop.xlane.xlu0 %6187
        %6189 = vadd.xlane.f32.xlu0 %v5946
        %v6190 = vpop.xlane.xlu0 %6189
        %6191 = vadd.xlane.f32.xlu0 %v5947
        %v6192 = vpop.xlane.xlu0 %6191
        %6193 = vadd.xlane.f32.xlu0 %v5948
        %v6194 = vpop.xlane.xlu0 %6193
        %6195 = vadd.xlane.f32.xlu0 %v5949
        %v6196 = vpop.xlane.xlu0 %6195
        %v6197 = vsel %vm6166, %v5950, 0.0
        %6198 = vadd.xlane.f32.xlu0 %v6197
        %v6199 = vpop.xlane.xlu0 %6198
        %6200 = vadd.xlane.f32.xlu0 %v5951
        %v6201 = vpop.xlane.xlu0 %6200
        %6202 = vadd.xlane.f32.xlu0 %v5952
        %v6203 = vpop.xlane.xlu0 %6202
        %6204 = vadd.xlane.f32.xlu0 %v5953
        %v6205 = vpop.xlane.xlu0 %6204
        %6206 = vadd.xlane.f32.xlu0 %v5954
        %v6207 = vpop.xlane.xlu0 %6206
        %6208 = vadd.xlane.f32.xlu0 %v5955
        %v6209 = vpop.xlane.xlu0 %6208
        %6210 = vadd.xlane.f32.xlu0 %v5956
        %v6211 = vpop.xlane.xlu0 %6210
        %v6212 = vsel %vm6166, %v5957, 0.0
        %6213 = vadd.xlane.f32.xlu0 %v6212
        %v6214 = vpop.xlane.xlu0 %6213
        %6215 = vadd.xlane.f32.xlu0 %v5958
        %v6216 = vpop.xlane.xlu0 %6215
        %6217 = vadd.xlane.f32.xlu0 %v5959
        %v6218 = vpop.xlane.xlu0 %6217
        %6219 = vadd.xlane.f32.xlu0 %v5960
        %v6220 = vpop.xlane.xlu0 %6219
        %6221 = vadd.xlane.f32.xlu0 %v5961
        %v6222 = vpop.xlane.xlu0 %6221
        %6223 = vadd.xlane.f32.xlu0 %v5962
        %v6224 = vpop.xlane.xlu0 %6223
        %6225 = vadd.xlane.f32.xlu0 %v5963
        %v6226 = vpop.xlane.xlu0 %6225
        %v6227 = vsel %vm6166, %v5964, 0.0
        %6228 = vadd.xlane.f32.xlu0 %v6227
        %v6229 = vpop.xlane.xlu0 %6228
        %6230 = vadd.xlane.f32.xlu0 %v5965
        %v6231 = vpop.xlane.xlu0 %6230
        %6232 = vadd.xlane.f32.xlu0 %v5966
        %v6233 = vpop.xlane.xlu0 %6232
        %6234 = vadd.xlane.f32.xlu0 %v5967
        %v6235 = vpop.xlane.xlu0 %6234
        %6236 = vadd.xlane.f32.xlu0 %v5968
        %v6237 = vpop.xlane.xlu0 %6236
        %6238 = vadd.xlane.f32.xlu0 %v5969
        %v6239 = vpop.xlane.xlu0 %6238
        %6240 = vadd.xlane.f32.xlu0 %v5970
        %v6241 = vpop.xlane.xlu0 %6240
        %v6242 = vsel %vm6166, %v5971, 0.0
        %6243 = vadd.xlane.f32.xlu0 %v6242
        %v6244 = vpop.xlane.xlu0 %6243
        %6245 = vadd.xlane.f32.xlu0 %v5972
        %v6246 = vpop.xlane.xlu0 %6245
        %6247 = vadd.xlane.f32.xlu0 %v5973
        %v6248 = vpop.xlane.xlu0 %6247
        %6249 = vadd.xlane.f32.xlu0 %v5974
        %v6250 = vpop.xlane.xlu0 %6249
        %6251 = vadd.xlane.f32.xlu0 %v5975
        %v6252 = vpop.xlane.xlu0 %6251
        %6253 = vadd.xlane.f32.xlu0 %v5976
        %v6254 = vpop.xlane.xlu0 %6253
        %6255 = vadd.xlane.f32.xlu0 %v5977
        %v6256 = vpop.xlane.xlu0 %6255
        %v6257 = vsel %vm6166, %v5978, 0.0
        %6258 = vadd.xlane.f32.xlu0 %v6257
        %v6259 = vpop.xlane.xlu0 %6258
        %6260 = vadd.xlane.f32.xlu0 %v5979
        %v6261 = vpop.xlane.xlu0 %6260
        %6262 = vadd.xlane.f32.xlu0 %v5980
        %v6263 = vpop.xlane.xlu0 %6262
        %6264 = vadd.xlane.f32.xlu0 %v5981
        %v6265 = vpop.xlane.xlu0 %6264
        %6266 = vadd.xlane.f32.xlu0 %v5982
        %v6267 = vpop.xlane.xlu0 %6266
        %6268 = vadd.xlane.f32.xlu0 %v5983
        %v6269 = vpop.xlane.xlu0 %6268
        %6270 = vadd.xlane.f32.xlu0 %v5984
        %v6271 = vpop.xlane.xlu0 %6270
        %v6272 = vsel %vm6166, %v5985, 0.0
        %6273 = vadd.xlane.f32.xlu0 %v6272
        %v6274 = vpop.xlane.xlu0 %6273
        %6275 = vadd.xlane.f32.xlu0 %v5986
        %v6276 = vpop.xlane.xlu0 %6275
        %6277 = vadd.xlane.f32.xlu0 %v5987
        %v6278 = vpop.xlane.xlu0 %6277
        %6279 = vadd.xlane.f32.xlu0 %v5988
        %v6280 = vpop.xlane.xlu0 %6279
        %6281 = vadd.xlane.f32.xlu0 %v5989
        %v6282 = vpop.xlane.xlu0 %6281
        %6283 = vadd.xlane.f32.xlu0 %v5990
        %v6284 = vpop.xlane.xlu0 %6283
        %6285 = vadd.xlane.f32.xlu0 %v5991
        %v6286 = vpop.xlane.xlu0 %6285
        %v6287 = vsel %vm6166, %v5992, 0.0
        %6288 = vadd.xlane.f32.xlu0 %v6287
        %v6289 = vpop.xlane.xlu0 %6288
        %6290 = vadd.xlane.f32.xlu0 %v5993
        %v6291 = vpop.xlane.xlu0 %6290
        %6292 = vadd.xlane.f32.xlu0 %v5994
        %v6293 = vpop.xlane.xlu0 %6292
        %6294 = vadd.xlane.f32.xlu0 %v5995
        %v6295 = vpop.xlane.xlu0 %6294
        %6296 = vadd.xlane.f32.xlu0 %v5996
        %v6297 = vpop.xlane.xlu0 %6296
        %6298 = vadd.xlane.f32.xlu0 %v5997
        %v6299 = vpop.xlane.xlu0 %6298
        %6300 = vadd.xlane.f32.xlu0 %v5998
        %v6301 = vpop.xlane.xlu0 %6300
        %v6302 = vsel %vm6166, %v5999, 0.0
        %6303 = vadd.xlane.f32.xlu0 %v6302
        %v6304 = vpop.xlane.xlu0 %6303
        %6305 = vadd.xlane.f32.xlu0 %v6000
        %v6306 = vpop.xlane.xlu0 %6305
        %6307 = vadd.xlane.f32.xlu0 %v6001
        %v6308 = vpop.xlane.xlu0 %6307
        %6309 = vadd.xlane.f32.xlu0 %v6002
        %v6310 = vpop.xlane.xlu0 %6309
        %6311 = vadd.xlane.f32.xlu0 %v6003
        %v6312 = vpop.xlane.xlu0 %6311
        %6313 = vadd.xlane.f32.xlu0 %v6004
        %v6314 = vpop.xlane.xlu0 %6313
        %6315 = vadd.xlane.f32.xlu0 %v6005
        %v6316 = vpop.xlane.xlu0 %6315
        %v6317 = vsel %vm6166, %v6006, 0.0
        %6318 = vadd.xlane.f32.xlu0 %v6317
        %v6319 = vpop.xlane.xlu0 %6318
        %6320 = vadd.xlane.f32.xlu0 %v6007
        %v6321 = vpop.xlane.xlu0 %6320
        %6322 = vadd.xlane.f32.xlu0 %v6008
        %v6323 = vpop.xlane.xlu0 %6322
        %6324 = vadd.xlane.f32.xlu0 %v6009
        %v6325 = vpop.xlane.xlu0 %6324
        %6326 = vadd.xlane.f32.xlu0 %v6010
        %v6327 = vpop.xlane.xlu0 %6326
        %6328 = vadd.xlane.f32.xlu0 %v6011
        %v6329 = vpop.xlane.xlu0 %6328
        %6330 = vadd.xlane.f32.xlu0 %v6012
        %v6331 = vpop.xlane.xlu0 %6330
        %v6332 = vsel %vm6166, %v6013, 0.0
        %6333 = vadd.xlane.f32.xlu0 %v6332
        %v6334 = vpop.xlane.xlu0 %6333
        %6335 = vadd.xlane.f32.xlu0 %v6014
        %v6336 = vpop.xlane.xlu0 %6335
        %6337 = vadd.xlane.f32.xlu0 %v6015
        %v6338 = vpop.xlane.xlu0 %6337
        %6339 = vadd.xlane.f32.xlu0 %v6016
        %v6340 = vpop.xlane.xlu0 %6339
        %6341 = vadd.xlane.f32.xlu0 %v6017
        %v6342 = vpop.xlane.xlu0 %6341
        %6343 = vadd.xlane.f32.xlu0 %v6018
        %v6344 = vpop.xlane.xlu0 %6343
        %6345 = vadd.xlane.f32.xlu0 %v6019
        %v6346 = vpop.xlane.xlu0 %6345
        %v6347 = vsel %vm6166, %v6020, 0.0
        %6348 = vadd.xlane.f32.xlu0 %v6347
        %v6349 = vpop.xlane.xlu0 %6348
        %6350 = vadd.xlane.f32.xlu0 %v6021
        %v6351 = vpop.xlane.xlu0 %6350
        %6352 = vadd.xlane.f32.xlu0 %v6022
        %v6353 = vpop.xlane.xlu0 %6352
        %6354 = vadd.xlane.f32.xlu0 %v6023
        %v6355 = vpop.xlane.xlu0 %6354
        %6356 = vadd.xlane.f32.xlu0 %v6024
        %v6357 = vpop.xlane.xlu0 %6356
        %6358 = vadd.xlane.f32.xlu0 %v6025
        %v6359 = vpop.xlane.xlu0 %6358
        %6360 = vadd.xlane.f32.xlu0 %v6026
        %v6361 = vpop.xlane.xlu0 %6360
        %v6362 = vsel %vm6166, %v6027, 0.0
        %6363 = vadd.xlane.f32.xlu0 %v6362
        %v6364 = vpop.xlane.xlu0 %6363
        %6365 = vadd.xlane.f32.xlu0 %v6028
        %v6366 = vpop.xlane.xlu0 %6365
        %6367 = vadd.xlane.f32.xlu0 %v6029
        %v6368 = vpop.xlane.xlu0 %6367
        %6369 = vadd.xlane.f32.xlu0 %v6030
        %v6370 = vpop.xlane.xlu0 %6369
        %6371 = vadd.xlane.f32.xlu0 %v6031
        %v6372 = vpop.xlane.xlu0 %6371
        %6373 = vadd.xlane.f32.xlu0 %v6032
        %v6374 = vpop.xlane.xlu0 %6373
        %6375 = vadd.xlane.f32.xlu0 %v6033
        %v6376 = vpop.xlane.xlu0 %6375
        %v6377 = vsel %vm6166, %v6034, 0.0
        %6378 = vadd.xlane.f32.xlu0 %v6377
        %v6379 = vpop.xlane.xlu0 %6378
        %6380 = vadd.xlane.f32.xlu0 %v6035
        %v6381 = vpop.xlane.xlu0 %6380
        %6382 = vadd.xlane.f32.xlu0 %v6036
        %v6383 = vpop.xlane.xlu0 %6382
        %6384 = vadd.xlane.f32.xlu0 %v6037
        %v6385 = vpop.xlane.xlu0 %6384
        %6386 = vadd.xlane.f32.xlu0 %v6038
        %v6387 = vpop.xlane.xlu0 %6386
        %6388 = vadd.xlane.f32.xlu0 %v6039
        %v6389 = vpop.xlane.xlu0 %6388
        %6390 = vadd.xlane.f32.xlu0 %v6040
        %v6391 = vpop.xlane.xlu0 %6390
        %v6392 = vsel %vm6166, %v6041, 0.0
        %6393 = vadd.xlane.f32.xlu0 %v6392
        %v6394 = vpop.xlane.xlu0 %6393
        %6395 = vadd.xlane.f32.xlu0 %v6042
        %v6396 = vpop.xlane.xlu0 %6395
        %6397 = vadd.xlane.f32.xlu0 %v6043
        %v6398 = vpop.xlane.xlu0 %6397
        %6399 = vadd.xlane.f32.xlu0 %v6044
        %v6400 = vpop.xlane.xlu0 %6399
        %6401 = vadd.xlane.f32.xlu0 %v6045
        %v6402 = vpop.xlane.xlu0 %6401
        %6403 = vadd.xlane.f32.xlu0 %v6046
        %v6404 = vpop.xlane.xlu0 %6403
        %6405 = vadd.xlane.f32.xlu0 %v6047
        %v6406 = vpop.xlane.xlu0 %6405
        %v6407 = vsel %vm6166, %v6048, 0.0
        %6408 = vadd.xlane.f32.xlu0 %v6407
        %v6409 = vpop.xlane.xlu0 %6408
        %6410 = vadd.xlane.f32.xlu0 %v6049
        %v6411 = vpop.xlane.xlu0 %6410
        %6412 = vadd.xlane.f32.xlu0 %v6050
        %v6413 = vpop.xlane.xlu0 %6412
        %6414 = vadd.xlane.f32.xlu0 %v6051
        %v6415 = vpop.xlane.xlu0 %6414
        %6416 = vadd.xlane.f32.xlu0 %v6052
        %v6417 = vpop.xlane.xlu0 %6416
        %6418 = vadd.xlane.f32.xlu0 %v6053
        %v6419 = vpop.xlane.xlu0 %6418
        %6420 = vadd.xlane.f32.xlu0 %v6054
        %v6421 = vpop.xlane.xlu0 %6420
        %v6422 = vsel %vm6166, %v6055, 0.0
        %6423 = vadd.xlane.f32.xlu0 %v6422
        %v6424 = vpop.xlane.xlu0 %6423
        %6425 = vadd.xlane.f32.xlu0 %v6056
        %v6426 = vpop.xlane.xlu0 %6425
        %6427 = vadd.xlane.f32.xlu0 %v6057
        %v6428 = vpop.xlane.xlu0 %6427
        %6429 = vadd.xlane.f32.xlu0 %v6058
        %v6430 = vpop.xlane.xlu0 %6429
        %6431 = vadd.xlane.f32.xlu0 %v6059
        %v6432 = vpop.xlane.xlu0 %6431
        %6433 = vadd.xlane.f32.xlu0 %v6060
        %v6434 = vpop.xlane.xlu0 %6433
        %6435 = vadd.xlane.f32.xlu0 %v6061
        %v6436 = vpop.xlane.xlu0 %6435
        %v6437 = vsel %vm6166, %v6062, 0.0
        %6438 = vadd.xlane.f32.xlu0 %v6437
        %v6439 = vpop.xlane.xlu0 %6438
        %6440 = vadd.xlane.f32.xlu0 %v6063
        %v6441 = vpop.xlane.xlu0 %6440
        %6442 = vadd.xlane.f32.xlu0 %v6064
        %v6443 = vpop.xlane.xlu0 %6442
        %6444 = vadd.xlane.f32.xlu0 %v6065
        %v6445 = vpop.xlane.xlu0 %6444
        %6446 = vadd.xlane.f32.xlu0 %v6066
        %v6447 = vpop.xlane.xlu0 %6446
        %6448 = vadd.xlane.f32.xlu0 %v6067
        %v6449 = vpop.xlane.xlu0 %6448
        %6450 = vadd.xlane.f32.xlu0 %v6068
        %v6451 = vpop.xlane.xlu0 %6450
        %v6452 = vsel %vm6166, %v6069, 0.0
        %6453 = vadd.xlane.f32.xlu0 %v6452
        %v6454 = vpop.xlane.xlu0 %6453
        %6455 = vadd.xlane.f32.xlu0 %v6070
        %v6456 = vpop.xlane.xlu0 %6455
        %6457 = vadd.xlane.f32.xlu0 %v6071
        %v6458 = vpop.xlane.xlu0 %6457
        %6459 = vadd.xlane.f32.xlu0 %v6072
        %v6460 = vpop.xlane.xlu0 %6459
        %6461 = vadd.xlane.f32.xlu0 %v6073
        %v6462 = vpop.xlane.xlu0 %6461
        %6463 = vadd.xlane.f32.xlu0 %v6074
        %v6464 = vpop.xlane.xlu0 %6463
        %6465 = vadd.xlane.f32.xlu0 %v6075
        %v6466 = vpop.xlane.xlu0 %6465
        %v6467 = vsel %vm6166, %v6076, 0.0
        %6468 = vadd.xlane.f32.xlu0 %v6467
        %v6469 = vpop.xlane.xlu0 %6468
        %6470 = vadd.xlane.f32.xlu0 %v6077
        %v6471 = vpop.xlane.xlu0 %6470
        %6472 = vadd.xlane.f32.xlu0 %v6078
        %v6473 = vpop.xlane.xlu0 %6472
        %6474 = vadd.xlane.f32.xlu0 %v6079
        %v6475 = vpop.xlane.xlu0 %6474
        %6476 = vadd.xlane.f32.xlu0 %v6080
        %v6477 = vpop.xlane.xlu0 %6476
        %6478 = vadd.xlane.f32.xlu0 %v6081
        %v6479 = vpop.xlane.xlu0 %6478
        %6480 = vadd.xlane.f32.xlu0 %v6082
        %v6481 = vpop.xlane.xlu0 %6480
        %v6482 = vsel %vm6166, %v6083, 0.0
        %6483 = vadd.xlane.f32.xlu0 %v6482
        %v6484 = vpop.xlane.xlu0 %6483
        %6485 = vadd.xlane.f32.xlu0 %v6084
        %v6486 = vpop.xlane.xlu0 %6485
        %6487 = vadd.xlane.f32.xlu0 %v6085
        %v6488 = vpop.xlane.xlu0 %6487
        %6489 = vadd.xlane.f32.xlu0 %v6086
        %v6490 = vpop.xlane.xlu0 %6489
        %6491 = vadd.xlane.f32.xlu0 %v6087
        %v6492 = vpop.xlane.xlu0 %6491
        %6493 = vadd.xlane.f32.xlu0 %v6088
        %v6494 = vpop.xlane.xlu0 %6493
        %6495 = vadd.xlane.f32.xlu0 %v6089
        %v6496 = vpop.xlane.xlu0 %6495
        %v6497 = vsel %vm6166, %v6090, 0.0
        %6498 = vadd.xlane.f32.xlu0 %v6497
        %v6499 = vpop.xlane.xlu0 %6498
        %6500 = vadd.xlane.f32.xlu0 %v6091
        %v6501 = vpop.xlane.xlu0 %6500
        %6502 = vadd.xlane.f32.xlu0 %v6092
        %v6503 = vpop.xlane.xlu0 %6502
        %6504 = vadd.xlane.f32.xlu0 %v6093
        %v6505 = vpop.xlane.xlu0 %6504
        %6506 = vadd.xlane.f32.xlu0 %v6094
        %v6507 = vpop.xlane.xlu0 %6506
        %6508 = vadd.xlane.f32.xlu0 %v6095
        %v6509 = vpop.xlane.xlu0 %6508
        %6510 = vadd.xlane.f32.xlu0 %v6096
        %v6511 = vpop.xlane.xlu0 %6510
        %v6512 = vsel %vm6166, %v6097, 0.0
        %6513 = vadd.xlane.f32.xlu0 %v6512
        %v6514 = vpop.xlane.xlu0 %6513
        %6515 = vadd.xlane.f32.xlu0 %v6098
        %v6516 = vpop.xlane.xlu0 %6515
        %6517 = vadd.xlane.f32.xlu0 %v6099
        %v6518 = vpop.xlane.xlu0 %6517
        %6519 = vadd.xlane.f32.xlu0 %v6100
        %v6520 = vpop.xlane.xlu0 %6519
        %6521 = vadd.xlane.f32.xlu0 %v6101
        %v6522 = vpop.xlane.xlu0 %6521
        %6523 = vadd.xlane.f32.xlu0 %v6102
        %v6524 = vpop.xlane.xlu0 %6523
        %6525 = vadd.xlane.f32.xlu0 %v6103
        %v6526 = vpop.xlane.xlu0 %6525
        %v6527 = vsel %vm6166, %v6104, 0.0
        %6528 = vadd.xlane.f32.xlu0 %v6527
        %v6529 = vpop.xlane.xlu0 %6528
        %6530 = vadd.xlane.f32.xlu0 %v6105
        %v6531 = vpop.xlane.xlu0 %6530
        %6532 = vadd.xlane.f32.xlu0 %v6106
        %v6533 = vpop.xlane.xlu0 %6532
        %6534 = vadd.xlane.f32.xlu0 %v6107
        %v6535 = vpop.xlane.xlu0 %6534
        %6536 = vadd.xlane.f32.xlu0 %v6108
        %v6537 = vpop.xlane.xlu0 %6536
        %6538 = vadd.xlane.f32.xlu0 %v6109
        %v6539 = vpop.xlane.xlu0 %6538
        %6540 = vadd.xlane.f32.xlu0 %v6110
        %v6541 = vpop.xlane.xlu0 %6540
        %v6542 = vsel %vm6166, %v6111, 0.0
        %6543 = vadd.xlane.f32.xlu0 %v6542
        %v6544 = vpop.xlane.xlu0 %6543
        %6545 = vadd.xlane.f32.xlu0 %v6112
        %v6546 = vpop.xlane.xlu0 %6545
        %6547 = vadd.xlane.f32.xlu0 %v6113
        %v6548 = vpop.xlane.xlu0 %6547
        %6549 = vadd.xlane.f32.xlu0 %v6114
        %v6550 = vpop.xlane.xlu0 %6549
        %6551 = vadd.xlane.f32.xlu0 %v6115
        %v6552 = vpop.xlane.xlu0 %6551
        %6553 = vadd.xlane.f32.xlu0 %v6116
        %v6554 = vpop.xlane.xlu0 %6553
        %6555 = vadd.xlane.f32.xlu0 %v6117
        %v6556 = vpop.xlane.xlu0 %6555
        %v6557 = vsel %vm6166, %v6118, 0.0
        %6558 = vadd.xlane.f32.xlu0 %v6557
        %v6559 = vpop.xlane.xlu0 %6558
        %6560 = vadd.xlane.f32.xlu0 %v6119
        %v6561 = vpop.xlane.xlu0 %6560
        %6562 = vadd.xlane.f32.xlu0 %v6120
        %v6563 = vpop.xlane.xlu0 %6562
        %6564 = vadd.xlane.f32.xlu0 %v6121
        %v6565 = vpop.xlane.xlu0 %6564
        %6566 = vadd.xlane.f32.xlu0 %v6122
        %v6567 = vpop.xlane.xlu0 %6566
        %6568 = vadd.xlane.f32.xlu0 %v6123
        %v6569 = vpop.xlane.xlu0 %6568
        %6570 = vadd.xlane.f32.xlu0 %v6124
        %v6571 = vpop.xlane.xlu0 %6570
        %v6572 = vsel %vm6166, %v6125, 0.0
        %6573 = vadd.xlane.f32.xlu0 %v6572
        %v6574 = vpop.xlane.xlu0 %6573
        %6575 = vadd.xlane.f32.xlu0 %v6126
        %v6576 = vpop.xlane.xlu0 %6575
        %6577 = vadd.xlane.f32.xlu0 %v6127
        %v6578 = vpop.xlane.xlu0 %6577
        %6579 = vadd.xlane.f32.xlu0 %v6128
        %v6580 = vpop.xlane.xlu0 %6579
        %6581 = vadd.xlane.f32.xlu0 %v6129
        %v6582 = vpop.xlane.xlu0 %6581
        %6583 = vadd.xlane.f32.xlu0 %v6130
        %v6584 = vpop.xlane.xlu0 %6583
        %6585 = vadd.xlane.f32.xlu0 %v6131
        %v6586 = vpop.xlane.xlu0 %6585
        %v6587 = vsel %vm6166, %v6132, 0.0
        %6588 = vadd.xlane.f32.xlu0 %v6587
        %v6589 = vpop.xlane.xlu0 %6588
        %6590 = vadd.xlane.f32.xlu0 %v6133
        %v6591 = vpop.xlane.xlu0 %6590
        %6592 = vadd.xlane.f32.xlu0 %v6134
        %v6593 = vpop.xlane.xlu0 %6592
        %6594 = vadd.xlane.f32.xlu0 %v6135
        %v6595 = vpop.xlane.xlu0 %6594
        %6596 = vadd.xlane.f32.xlu0 %v6136
        %v6597 = vpop.xlane.xlu0 %6596
        %6598 = vadd.xlane.f32.xlu0 %v6137
        %v6599 = vpop.xlane.xlu0 %6598
        %6600 = vadd.xlane.f32.xlu0 %v6138
        %v6601 = vpop.xlane.xlu0 %6600
        %v6602 = vsel %vm6166, %v6139, 0.0
        %6603 = vadd.xlane.f32.xlu0 %v6602
        %v6604 = vpop.xlane.xlu0 %6603
        %6605 = vadd.xlane.f32.xlu0 %v6140
        %v6606 = vpop.xlane.xlu0 %6605
        %6607 = vadd.xlane.f32.xlu0 %v6141
        %v6608 = vpop.xlane.xlu0 %6607
        %6609 = vadd.xlane.f32.xlu0 %v6142
        %v6610 = vpop.xlane.xlu0 %6609
        %6611 = vadd.xlane.f32.xlu0 %v6143
        %v6612 = vpop.xlane.xlu0 %6611
        %6613 = vadd.xlane.f32.xlu0 %v6144
        %v6614 = vpop.xlane.xlu0 %6613
        %6615 = vadd.xlane.f32.xlu0 %v6145
        %v6616 = vpop.xlane.xlu0 %6615
        %v6617 = vsel %vm6166, %v6146, 0.0
        %6618 = vadd.xlane.f32.xlu0 %v6617
        %v6619 = vpop.xlane.xlu0 %6618
        %6620 = vadd.xlane.f32.xlu0 %v6147
        %v6621 = vpop.xlane.xlu0 %6620
        %6622 = vadd.xlane.f32.xlu0 %v6148
        %v6623 = vpop.xlane.xlu0 %6622
        %6624 = vadd.xlane.f32.xlu0 %v6149
        %v6625 = vpop.xlane.xlu0 %6624
        %6626 = vadd.xlane.f32.xlu0 %v6150
        %v6627 = vpop.xlane.xlu0 %6626
        %6628 = vadd.xlane.f32.xlu0 %v6151
        %v6629 = vpop.xlane.xlu0 %6628
        %6630 = vadd.xlane.f32.xlu0 %v6152
        %v6631 = vpop.xlane.xlu0 %6630
        %v6632 = vsel %vm6166, %v6153, 0.0
        %6633 = vadd.xlane.f32.xlu0 %v6632
        %v6634 = vpop.xlane.xlu0 %6633
        %v6859 = vlaneseq
        %v6860 = vand.u32 %v6859, 127
        %v6861 = vlaneseq
        %v6862 = vshrl.u32 %v6861, 7
        %v6863 = vsub.s32 %v6860, %v6862
        %v6864 = vrot.slane %v6155, %v6863
        %v6865 = vadd.s32 %v6860, 4294967288
        %v6866 = vlaneseq
        %v6867 = vshrl.u32 %v6866, 7
        %v6868 = vsub.s32 %v6865, %v6867
        %v6869 = vrot.slane %v6157, %v6868
        %vm6870 = vcmask 130112
        %v6871 = vsel %vm6870, %v6869, %v6864
        %v6872 = vadd.s32 %v6860, 4294967280
        %v6873 = vlaneseq
        %v6874 = vshrl.u32 %v6873, 7
        %v6875 = vsub.s32 %v6872, %v6874
        %v6876 = vrot.slane %v6159, %v6875
        %vm6877 = vcmask 195712
        %v6878 = vsel %vm6877, %v6876, %v6871
        %v6879 = vadd.s32 %v6860, 4294967272
        %v6880 = vlaneseq
        %v6881 = vshrl.u32 %v6880, 7
        %v6882 = vsub.s32 %v6879, %v6881
        %v6883 = vrot.slane %v6161, %v6882
        %vm6884 = vcmask 261312
        %v6885 = vsel %vm6884, %v6883, %v6878
        %v6886 = vadd.s32 %v6860, 4294967264
        %v6887 = vlaneseq
        %v6888 = vshrl.u32 %v6887, 7
        %v6889 = vsub.s32 %v6886, %v6888
        %v6890 = vrot.slane %v6163, %v6889
        %vm6891 = vcmask 326912
        %v6892 = vsel %vm6891, %v6890, %v6885
        %v6893 = vadd.s32 %v6860, 4294967256
        %v6894 = vlaneseq
        %v6895 = vshrl.u32 %v6894, 7
        %v6896 = vsub.s32 %v6893, %v6895
        %v6897 = vrot.slane %v6165, %v6896
        %vm6898 = vcmask 392512
        %v6899 = vsel %vm6898, %v6897, %v6892
        %v6900 = vadd.s32 %v6860, 4294967248
        %v6901 = vlaneseq
        %v6902 = vshrl.u32 %v6901, 7
        %v6903 = vsub.s32 %v6900, %v6902
        %v6904 = vrot.slane %v6169, %v6903
        %vm6905 = vcmask 458112
        %v6906 = vsel %vm6905, %v6904, %v6899
        %v6907 = vlaneseq
        %v6908 = vshrl.u32 %v6907, 7
        %v6909 = vsub.s32 %v6860, %v6908
        %v6910 = vrot.slane %v6171, %v6909
        %v6911 = vlaneseq
        %v6912 = vshrl.u32 %v6911, 7
        %v6913 = vsub.s32 %v6865, %v6912
        %v6914 = vrot.slane %v6173, %v6913
        %v6915 = vsel %vm6870, %v6914, %v6910
        %v6916 = vlaneseq
        %v6917 = vshrl.u32 %v6916, 7
        %v6918 = vsub.s32 %v6872, %v6917
        %v6919 = vrot.slane %v6175, %v6918
        %v6920 = vsel %vm6877, %v6919, %v6915
        %v6921 = vlaneseq
        %v6922 = vshrl.u32 %v6921, 7
        %v6923 = vsub.s32 %v6879, %v6922
        %v6924 = vrot.slane %v6177, %v6923
        %v6925 = vsel %vm6884, %v6924, %v6920
        %v6926 = vlaneseq
        %v6927 = vshrl.u32 %v6926, 7
        %v6928 = vsub.s32 %v6886, %v6927
        %v6929 = vrot.slane %v6179, %v6928
        %v6930 = vsel %vm6891, %v6929, %v6925
        %v6931 = vlaneseq
        %v6932 = vshrl.u32 %v6931, 7
        %v6933 = vsub.s32 %v6893, %v6932
        %v6934 = vrot.slane %v6181, %v6933
        %v6935 = vsel %vm6898, %v6934, %v6930
        %v6936 = vlaneseq
        %v6937 = vshrl.u32 %v6936, 7
        %v6938 = vsub.s32 %v6900, %v6937
        %v6939 = vrot.slane %v6184, %v6938
        %v6940 = vsel %vm6905, %v6939, %v6935
        %v6941 = vlaneseq
        %v6942 = vshrl.u32 %v6941, 7
        %v6943 = vsub.s32 %v6860, %v6942
        %v6944 = vrot.slane %v6186, %v6943
        %v6945 = vlaneseq
        %v6946 = vshrl.u32 %v6945, 7
        %v6947 = vsub.s32 %v6865, %v6946
        %v6948 = vrot.slane %v6188, %v6947
        %v6949 = vsel %vm6870, %v6948, %v6944
        %v6950 = vlaneseq
        %v6951 = vshrl.u32 %v6950, 7
        %v6952 = vsub.s32 %v6872, %v6951
        %v6953 = vrot.slane %v6190, %v6952
        %v6954 = vsel %vm6877, %v6953, %v6949
        %v6955 = vlaneseq
        %v6956 = vshrl.u32 %v6955, 7
        %v6957 = vsub.s32 %v6879, %v6956
        %v6958 = vrot.slane %v6192, %v6957
        %v6959 = vsel %vm6884, %v6958, %v6954
        %v6960 = vlaneseq
        %v6961 = vshrl.u32 %v6960, 7
        %v6962 = vsub.s32 %v6886, %v6961
        %v6963 = vrot.slane %v6194, %v6962
        %v6964 = vsel %vm6891, %v6963, %v6959
        %v6965 = vlaneseq
        %v6966 = vshrl.u32 %v6965, 7
        %v6967 = vsub.s32 %v6893, %v6966
        %v6968 = vrot.slane %v6196, %v6967
        %v6969 = vsel %vm6898, %v6968, %v6964
        %v6970 = vlaneseq
        %v6971 = vshrl.u32 %v6970, 7
        %v6972 = vsub.s32 %v6900, %v6971
        %v6973 = vrot.slane %v6199, %v6972
        %v6974 = vsel %vm6905, %v6973, %v6969
        %v6975 = vlaneseq
        %v6976 = vshrl.u32 %v6975, 7
        %v6977 = vsub.s32 %v6860, %v6976
        %v6978 = vrot.slane %v6201, %v6977
        %v6979 = vlaneseq
        %v6980 = vshrl.u32 %v6979, 7
        %v6981 = vsub.s32 %v6865, %v6980
        %v6982 = vrot.slane %v6203, %v6981
        %v6983 = vsel %vm6870, %v6982, %v6978
        %v6984 = vlaneseq
        %v6985 = vshrl.u32 %v6984, 7
        %v6986 = vsub.s32 %v6872, %v6985
        %v6987 = vrot.slane %v6205, %v6986
        %v6988 = vsel %vm6877, %v6987, %v6983
        %v6989 = vlaneseq
        %v6990 = vshrl.u32 %v6989, 7
        %v6991 = vsub.s32 %v6879, %v6990
        %v6992 = vrot.slane %v6207, %v6991
        %v6993 = vsel %vm6884, %v6992, %v6988
        %v6994 = vlaneseq
        %v6995 = vshrl.u32 %v6994, 7
        %v6996 = vsub.s32 %v6886, %v6995
        %v6997 = vrot.slane %v6209, %v6996
        %v6998 = vsel %vm6891, %v6997, %v6993
        %v6999 = vlaneseq
        %v7000 = vshrl.u32 %v6999, 7
        %v7001 = vsub.s32 %v6893, %v7000
        %v7002 = vrot.slane %v6211, %v7001
        %v7003 = vsel %vm6898, %v7002, %v6998
        %v7004 = vlaneseq
        %v7005 = vshrl.u32 %v7004, 7
        %v7006 = vsub.s32 %v6900, %v7005
        %v7007 = vrot.slane %v6214, %v7006
        %v7008 = vsel %vm6905, %v7007, %v7003
        %v7009 = vlaneseq
        %v7010 = vshrl.u32 %v7009, 7
        %v7011 = vsub.s32 %v6860, %v7010
        %v7012 = vrot.slane %v6216, %v7011
        %v7013 = vlaneseq
        %v7014 = vshrl.u32 %v7013, 7
        %v7015 = vsub.s32 %v6865, %v7014
        %v7016 = vrot.slane %v6218, %v7015
        %v7017 = vsel %vm6870, %v7016, %v7012
        %v7018 = vlaneseq
        %v7019 = vshrl.u32 %v7018, 7
        %v7020 = vsub.s32 %v6872, %v7019
        %v7021 = vrot.slane %v6220, %v7020
        %v7022 = vsel %vm6877, %v7021, %v7017
        %v7023 = vlaneseq
        %v7024 = vshrl.u32 %v7023, 7
        %v7025 = vsub.s32 %v6879, %v7024
        %v7026 = vrot.slane %v6222, %v7025
        %v7027 = vsel %vm6884, %v7026, %v7022
        %v7028 = vlaneseq
        %v7029 = vshrl.u32 %v7028, 7
        %v7030 = vsub.s32 %v6886, %v7029
        %v7031 = vrot.slane %v6224, %v7030
        %v7032 = vsel %vm6891, %v7031, %v7027
        %v7033 = vlaneseq
        %v7034 = vshrl.u32 %v7033, 7
        %v7035 = vsub.s32 %v6893, %v7034
        %v7036 = vrot.slane %v6226, %v7035
        %v7037 = vsel %vm6898, %v7036, %v7032
        %v7038 = vlaneseq
        %v7039 = vshrl.u32 %v7038, 7
        %v7040 = vsub.s32 %v6900, %v7039
        %v7041 = vrot.slane %v6229, %v7040
        %v7042 = vsel %vm6905, %v7041, %v7037
        %v7043 = vlaneseq
        %v7044 = vshrl.u32 %v7043, 7
        %v7045 = vsub.s32 %v6860, %v7044
        %v7046 = vrot.slane %v6231, %v7045
        %v7047 = vlaneseq
        %v7048 = vshrl.u32 %v7047, 7
        %v7049 = vsub.s32 %v6865, %v7048
        %v7050 = vrot.slane %v6233, %v7049
        %v7051 = vsel %vm6870, %v7050, %v7046
        %v7052 = vlaneseq
        %v7053 = vshrl.u32 %v7052, 7
        %v7054 = vsub.s32 %v6872, %v7053
        %v7055 = vrot.slane %v6235, %v7054
        %v7056 = vsel %vm6877, %v7055, %v7051
        %v7057 = vlaneseq
        %v7058 = vshrl.u32 %v7057, 7
        %v7059 = vsub.s32 %v6879, %v7058
        %v7060 = vrot.slane %v6237, %v7059
        %v7061 = vsel %vm6884, %v7060, %v7056
        %v7062 = vlaneseq
        %v7063 = vshrl.u32 %v7062, 7
        %v7064 = vsub.s32 %v6886, %v7063
        %v7065 = vrot.slane %v6239, %v7064
        %v7066 = vsel %vm6891, %v7065, %v7061
        %v7067 = vlaneseq
        %v7068 = vshrl.u32 %v7067, 7
        %v7069 = vsub.s32 %v6893, %v7068
        %v7070 = vrot.slane %v6241, %v7069
        %v7071 = vsel %vm6898, %v7070, %v7066
        %v7072 = vlaneseq
        %v7073 = vshrl.u32 %v7072, 7
        %v7074 = vsub.s32 %v6900, %v7073
        %v7075 = vrot.slane %v6244, %v7074
        %v7076 = vsel %vm6905, %v7075, %v7071
        %v7077 = vlaneseq
        %v7078 = vshrl.u32 %v7077, 7
        %v7079 = vsub.s32 %v6860, %v7078
        %v7080 = vrot.slane %v6246, %v7079
        %v7081 = vlaneseq
        %v7082 = vshrl.u32 %v7081, 7
        %v7083 = vsub.s32 %v6865, %v7082
        %v7084 = vrot.slane %v6248, %v7083
        %v7085 = vsel %vm6870, %v7084, %v7080
        %v7086 = vlaneseq
        %v7087 = vshrl.u32 %v7086, 7
        %v7088 = vsub.s32 %v6872, %v7087
        %v7089 = vrot.slane %v6250, %v7088
        %v7090 = vsel %vm6877, %v7089, %v7085
        %v7091 = vlaneseq
        %v7092 = vshrl.u32 %v7091, 7
        %v7093 = vsub.s32 %v6879, %v7092
        %v7094 = vrot.slane %v6252, %v7093
        %v7095 = vsel %vm6884, %v7094, %v7090
        %v7096 = vlaneseq
        %v7097 = vshrl.u32 %v7096, 7
        %v7098 = vsub.s32 %v6886, %v7097
        %v7099 = vrot.slane %v6254, %v7098
        %v7100 = vsel %vm6891, %v7099, %v7095
        %v7101 = vlaneseq
        %v7102 = vshrl.u32 %v7101, 7
        %v7103 = vsub.s32 %v6893, %v7102
        %v7104 = vrot.slane %v6256, %v7103
        %v7105 = vsel %vm6898, %v7104, %v7100
        %v7106 = vlaneseq
        %v7107 = vshrl.u32 %v7106, 7
        %v7108 = vsub.s32 %v6900, %v7107
        %v7109 = vrot.slane %v6259, %v7108
        %v7110 = vsel %vm6905, %v7109, %v7105
        %v7111 = vlaneseq
        %v7112 = vshrl.u32 %v7111, 7
        %v7113 = vsub.s32 %v6860, %v7112
        %v7114 = vrot.slane %v6261, %v7113
        %v7115 = vlaneseq
        %v7116 = vshrl.u32 %v7115, 7
        %v7117 = vsub.s32 %v6865, %v7116
        %v7118 = vrot.slane %v6263, %v7117
        %v7119 = vsel %vm6870, %v7118, %v7114
        %v7120 = vlaneseq
        %v7121 = vshrl.u32 %v7120, 7
        %v7122 = vsub.s32 %v6872, %v7121
        %v7123 = vrot.slane %v6265, %v7122
        %v7124 = vsel %vm6877, %v7123, %v7119
        %v7125 = vlaneseq
        %v7126 = vshrl.u32 %v7125, 7
        %v7127 = vsub.s32 %v6879, %v7126
        %v7128 = vrot.slane %v6267, %v7127
        %v7129 = vsel %vm6884, %v7128, %v7124
        %v7130 = vlaneseq
        %v7131 = vshrl.u32 %v7130, 7
        %v7132 = vsub.s32 %v6886, %v7131
        %v7133 = vrot.slane %v6269, %v7132
        %v7134 = vsel %vm6891, %v7133, %v7129
        %v7135 = vlaneseq
        %v7136 = vshrl.u32 %v7135, 7
        %v7137 = vsub.s32 %v6893, %v7136
        %v7138 = vrot.slane %v6271, %v7137
        %v7139 = vsel %vm6898, %v7138, %v7134
        %v7140 = vlaneseq
        %v7141 = vshrl.u32 %v7140, 7
        %v7142 = vsub.s32 %v6900, %v7141
        %v7143 = vrot.slane %v6274, %v7142
        %v7144 = vsel %vm6905, %v7143, %v7139
        %v7145 = vlaneseq
        %v7146 = vshrl.u32 %v7145, 7
        %v7147 = vsub.s32 %v6860, %v7146
        %v7148 = vrot.slane %v6276, %v7147
        %v7149 = vlaneseq
        %v7150 = vshrl.u32 %v7149, 7
        %v7151 = vsub.s32 %v6865, %v7150
        %v7152 = vrot.slane %v6278, %v7151
        %v7153 = vsel %vm6870, %v7152, %v7148
        %v7154 = vlaneseq
        %v7155 = vshrl.u32 %v7154, 7
        %v7156 = vsub.s32 %v6872, %v7155
        %v7157 = vrot.slane %v6280, %v7156
        %v7158 = vsel %vm6877, %v7157, %v7153
        %v7159 = vlaneseq
        %v7160 = vshrl.u32 %v7159, 7
        %v7161 = vsub.s32 %v6879, %v7160
        %v7162 = vrot.slane %v6282, %v7161
        %v7163 = vsel %vm6884, %v7162, %v7158
        %v7164 = vlaneseq
        %v7165 = vshrl.u32 %v7164, 7
        %v7166 = vsub.s32 %v6886, %v7165
        %v7167 = vrot.slane %v6284, %v7166
        %v7168 = vsel %vm6891, %v7167, %v7163
        %v7169 = vlaneseq
        %v7170 = vshrl.u32 %v7169, 7
        %v7171 = vsub.s32 %v6893, %v7170
        %v7172 = vrot.slane %v6286, %v7171
        %v7173 = vsel %vm6898, %v7172, %v7168
        %v7174 = vlaneseq
        %v7175 = vshrl.u32 %v7174, 7
        %v7176 = vsub.s32 %v6900, %v7175
        %v7177 = vrot.slane %v6289, %v7176
        %v7178 = vsel %vm6905, %v7177, %v7173
        %v7179 = vlaneseq
        %v7180 = vshrl.u32 %v7179, 7
        %v7181 = vsub.s32 %v6860, %v7180
        %v7182 = vrot.slane %v6291, %v7181
        %v7183 = vlaneseq
        %v7184 = vshrl.u32 %v7183, 7
        %v7185 = vsub.s32 %v6865, %v7184
        %v7186 = vrot.slane %v6293, %v7185
        %v7187 = vsel %vm6870, %v7186, %v7182
        %v7188 = vlaneseq
        %v7189 = vshrl.u32 %v7188, 7
        %v7190 = vsub.s32 %v6872, %v7189
        %v7191 = vrot.slane %v6295, %v7190
        %v7192 = vsel %vm6877, %v7191, %v7187
        %v7193 = vlaneseq
        %v7194 = vshrl.u32 %v7193, 7
        %v7195 = vsub.s32 %v6879, %v7194
        %v7196 = vrot.slane %v6297, %v7195
        %v7197 = vsel %vm6884, %v7196, %v7192
        %v7198 = vlaneseq
        %v7199 = vshrl.u32 %v7198, 7
        %v7200 = vsub.s32 %v6886, %v7199
        %v7201 = vrot.slane %v6299, %v7200
        %v7202 = vsel %vm6891, %v7201, %v7197
        %v7203 = vlaneseq
        %v7204 = vshrl.u32 %v7203, 7
        %v7205 = vsub.s32 %v6893, %v7204
        %v7206 = vrot.slane %v6301, %v7205
        %v7207 = vsel %vm6898, %v7206, %v7202
        %v7208 = vlaneseq
        %v7209 = vshrl.u32 %v7208, 7
        %v7210 = vsub.s32 %v6900, %v7209
        %v7211 = vrot.slane %v6304, %v7210
        %v7212 = vsel %vm6905, %v7211, %v7207
        %v7213 = vlaneseq
        %v7214 = vshrl.u32 %v7213, 7
        %v7215 = vsub.s32 %v6860, %v7214
        %v7216 = vrot.slane %v6306, %v7215
        %v7217 = vlaneseq
        %v7218 = vshrl.u32 %v7217, 7
        %v7219 = vsub.s32 %v6865, %v7218
        %v7220 = vrot.slane %v6308, %v7219
        %v7221 = vsel %vm6870, %v7220, %v7216
        %v7222 = vlaneseq
        %v7223 = vshrl.u32 %v7222, 7
        %v7224 = vsub.s32 %v6872, %v7223
        %v7225 = vrot.slane %v6310, %v7224
        %v7226 = vsel %vm6877, %v7225, %v7221
        %v7227 = vlaneseq
        %v7228 = vshrl.u32 %v7227, 7
        %v7229 = vsub.s32 %v6879, %v7228
        %v7230 = vrot.slane %v6312, %v7229
        %v7231 = vsel %vm6884, %v7230, %v7226
        %v7232 = vlaneseq
        %v7233 = vshrl.u32 %v7232, 7
        %v7234 = vsub.s32 %v6886, %v7233
        %v7235 = vrot.slane %v6314, %v7234
        %v7236 = vsel %vm6891, %v7235, %v7231
        %v7237 = vlaneseq
        %v7238 = vshrl.u32 %v7237, 7
        %v7239 = vsub.s32 %v6893, %v7238
        %v7240 = vrot.slane %v6316, %v7239
        %v7241 = vsel %vm6898, %v7240, %v7236
        %v7242 = vlaneseq
        %v7243 = vshrl.u32 %v7242, 7
        %v7244 = vsub.s32 %v6900, %v7243
        %v7245 = vrot.slane %v6319, %v7244
        %v7246 = vsel %vm6905, %v7245, %v7241
        %v7247 = vlaneseq
        %v7248 = vshrl.u32 %v7247, 7
        %v7249 = vsub.s32 %v6860, %v7248
        %v7250 = vrot.slane %v6321, %v7249
        %v7251 = vlaneseq
        %v7252 = vshrl.u32 %v7251, 7
        %v7253 = vsub.s32 %v6865, %v7252
        %v7254 = vrot.slane %v6323, %v7253
        %v7255 = vsel %vm6870, %v7254, %v7250
        %v7256 = vlaneseq
        %v7257 = vshrl.u32 %v7256, 7
        %v7258 = vsub.s32 %v6872, %v7257
        %v7259 = vrot.slane %v6325, %v7258
        %v7260 = vsel %vm6877, %v7259, %v7255
        %v7261 = vlaneseq
        %v7262 = vshrl.u32 %v7261, 7
        %v7263 = vsub.s32 %v6879, %v7262
        %v7264 = vrot.slane %v6327, %v7263
        %v7265 = vsel %vm6884, %v7264, %v7260
        %v7266 = vlaneseq
        %v7267 = vshrl.u32 %v7266, 7
        %v7268 = vsub.s32 %v6886, %v7267
        %v7269 = vrot.slane %v6329, %v7268
        %v7270 = vsel %vm6891, %v7269, %v7265
        %v7271 = vlaneseq
        %v7272 = vshrl.u32 %v7271, 7
        %v7273 = vsub.s32 %v6893, %v7272
        %v7274 = vrot.slane %v6331, %v7273
        %v7275 = vsel %vm6898, %v7274, %v7270
        %v7276 = vlaneseq
        %v7277 = vshrl.u32 %v7276, 7
        %v7278 = vsub.s32 %v6900, %v7277
        %v7279 = vrot.slane %v6334, %v7278
        %v7280 = vsel %vm6905, %v7279, %v7275
        %v7281 = vlaneseq
        %v7282 = vshrl.u32 %v7281, 7
        %v7283 = vsub.s32 %v6860, %v7282
        %v7284 = vrot.slane %v6336, %v7283
        %v7285 = vlaneseq
        %v7286 = vshrl.u32 %v7285, 7
        %v7287 = vsub.s32 %v6865, %v7286
        %v7288 = vrot.slane %v6338, %v7287
        %v7289 = vsel %vm6870, %v7288, %v7284
        %v7290 = vlaneseq
        %v7291 = vshrl.u32 %v7290, 7
        %v7292 = vsub.s32 %v6872, %v7291
        %v7293 = vrot.slane %v6340, %v7292
        %v7294 = vsel %vm6877, %v7293, %v7289
        %v7295 = vlaneseq
        %v7296 = vshrl.u32 %v7295, 7
        %v7297 = vsub.s32 %v6879, %v7296
        %v7298 = vrot.slane %v6342, %v7297
        %v7299 = vsel %vm6884, %v7298, %v7294
        %v7300 = vlaneseq
        %v7301 = vshrl.u32 %v7300, 7
        %v7302 = vsub.s32 %v6886, %v7301
        %v7303 = vrot.slane %v6344, %v7302
        %v7304 = vsel %vm6891, %v7303, %v7299
        %v7305 = vlaneseq
        %v7306 = vshrl.u32 %v7305, 7
        %v7307 = vsub.s32 %v6893, %v7306
        %v7308 = vrot.slane %v6346, %v7307
        %v7309 = vsel %vm6898, %v7308, %v7304
        %v7310 = vlaneseq
        %v7311 = vshrl.u32 %v7310, 7
        %v7312 = vsub.s32 %v6900, %v7311
        %v7313 = vrot.slane %v6349, %v7312
        %v7314 = vsel %vm6905, %v7313, %v7309
        %v7315 = vlaneseq
        %v7316 = vshrl.u32 %v7315, 7
        %v7317 = vsub.s32 %v6860, %v7316
        %v7318 = vrot.slane %v6351, %v7317
        %v7319 = vlaneseq
        %v7320 = vshrl.u32 %v7319, 7
        %v7321 = vsub.s32 %v6865, %v7320
        %v7322 = vrot.slane %v6353, %v7321
        %v7323 = vsel %vm6870, %v7322, %v7318
        %v7324 = vlaneseq
        %v7325 = vshrl.u32 %v7324, 7
        %v7326 = vsub.s32 %v6872, %v7325
        %v7327 = vrot.slane %v6355, %v7326
        %v7328 = vsel %vm6877, %v7327, %v7323
        %v7329 = vlaneseq
        %v7330 = vshrl.u32 %v7329, 7
        %v7331 = vsub.s32 %v6879, %v7330
        %v7332 = vrot.slane %v6357, %v7331
        %v7333 = vsel %vm6884, %v7332, %v7328
        %v7334 = vlaneseq
        %v7335 = vshrl.u32 %v7334, 7
        %v7336 = vsub.s32 %v6886, %v7335
        %v7337 = vrot.slane %v6359, %v7336
        %v7338 = vsel %vm6891, %v7337, %v7333
        %v7339 = vlaneseq
        %v7340 = vshrl.u32 %v7339, 7
        %v7341 = vsub.s32 %v6893, %v7340
        %v7342 = vrot.slane %v6361, %v7341
        %v7343 = vsel %vm6898, %v7342, %v7338
        %v7344 = vlaneseq
        %v7345 = vshrl.u32 %v7344, 7
        %v7346 = vsub.s32 %v6900, %v7345
        %v7347 = vrot.slane %v6364, %v7346
        %v7348 = vsel %vm6905, %v7347, %v7343
        %v7349 = vlaneseq
        %v7350 = vshrl.u32 %v7349, 7
        %v7351 = vsub.s32 %v6860, %v7350
        %v7352 = vrot.slane %v6366, %v7351
        %v7353 = vlaneseq
        %v7354 = vshrl.u32 %v7353, 7
        %v7355 = vsub.s32 %v6865, %v7354
        %v7356 = vrot.slane %v6368, %v7355
        %v7357 = vsel %vm6870, %v7356, %v7352
        %v7358 = vlaneseq
        %v7359 = vshrl.u32 %v7358, 7
        %v7360 = vsub.s32 %v6872, %v7359
        %v7361 = vrot.slane %v6370, %v7360
        %v7362 = vsel %vm6877, %v7361, %v7357
        %v7363 = vlaneseq
        %v7364 = vshrl.u32 %v7363, 7
        %v7365 = vsub.s32 %v6879, %v7364
        %v7366 = vrot.slane %v6372, %v7365
        %v7367 = vsel %vm6884, %v7366, %v7362
        %v7368 = vlaneseq
        %v7369 = vshrl.u32 %v7368, 7
        %v7370 = vsub.s32 %v6886, %v7369
        %v7371 = vrot.slane %v6374, %v7370
        %v7372 = vsel %vm6891, %v7371, %v7367
        %v7373 = vlaneseq
        %v7374 = vshrl.u32 %v7373, 7
        %v7375 = vsub.s32 %v6893, %v7374
        %v7376 = vrot.slane %v6376, %v7375
        %v7377 = vsel %vm6898, %v7376, %v7372
        %v7378 = vlaneseq
        %v7379 = vshrl.u32 %v7378, 7
        %v7380 = vsub.s32 %v6900, %v7379
        %v7381 = vrot.slane %v6379, %v7380
        %v7382 = vsel %vm6905, %v7381, %v7377
        %v7383 = vlaneseq
        %v7384 = vshrl.u32 %v7383, 7
        %v7385 = vsub.s32 %v6860, %v7384
        %v7386 = vrot.slane %v6381, %v7385
        %v7387 = vlaneseq
        %v7388 = vshrl.u32 %v7387, 7
        %v7389 = vsub.s32 %v6865, %v7388
        %v7390 = vrot.slane %v6383, %v7389
        %v7391 = vsel %vm6870, %v7390, %v7386
        %v7392 = vlaneseq
        %v7393 = vshrl.u32 %v7392, 7
        %v7394 = vsub.s32 %v6872, %v7393
        %v7395 = vrot.slane %v6385, %v7394
        %v7396 = vsel %vm6877, %v7395, %v7391
        %v7397 = vlaneseq
        %v7398 = vshrl.u32 %v7397, 7
        %v7399 = vsub.s32 %v6879, %v7398
        %v7400 = vrot.slane %v6387, %v7399
        %v7401 = vsel %vm6884, %v7400, %v7396
        %v7402 = vlaneseq
        %v7403 = vshrl.u32 %v7402, 7
        %v7404 = vsub.s32 %v6886, %v7403
        %v7405 = vrot.slane %v6389, %v7404
        %v7406 = vsel %vm6891, %v7405, %v7401
        %v7407 = vlaneseq
        %v7408 = vshrl.u32 %v7407, 7
        %v7409 = vsub.s32 %v6893, %v7408
        %v7410 = vrot.slane %v6391, %v7409
        %v7411 = vsel %vm6898, %v7410, %v7406
        %v7412 = vlaneseq
        %v7413 = vshrl.u32 %v7412, 7
        %v7414 = vsub.s32 %v6900, %v7413
        %v7415 = vrot.slane %v6394, %v7414
        %v7416 = vsel %vm6905, %v7415, %v7411
        %v7417 = vlaneseq
        %v7418 = vshrl.u32 %v7417, 7
        %v7419 = vsub.s32 %v6860, %v7418
        %v7420 = vrot.slane %v6396, %v7419
        %v7421 = vlaneseq
        %v7422 = vshrl.u32 %v7421, 7
        %v7423 = vsub.s32 %v6865, %v7422
        %v7424 = vrot.slane %v6398, %v7423
        %v7425 = vsel %vm6870, %v7424, %v7420
        %v7426 = vlaneseq
        %v7427 = vshrl.u32 %v7426, 7
        %v7428 = vsub.s32 %v6872, %v7427
        %v7429 = vrot.slane %v6400, %v7428
        %v7430 = vsel %vm6877, %v7429, %v7425
        %v7431 = vlaneseq
        %v7432 = vshrl.u32 %v7431, 7
        %v7433 = vsub.s32 %v6879, %v7432
        %v7434 = vrot.slane %v6402, %v7433
        %v7435 = vsel %vm6884, %v7434, %v7430
        %v7436 = vlaneseq
        %v7437 = vshrl.u32 %v7436, 7
        %v7438 = vsub.s32 %v6886, %v7437
        %v7439 = vrot.slane %v6404, %v7438
        %v7440 = vsel %vm6891, %v7439, %v7435
        %v7441 = vlaneseq
        %v7442 = vshrl.u32 %v7441, 7
        %v7443 = vsub.s32 %v6893, %v7442
        %v7444 = vrot.slane %v6406, %v7443
        %v7445 = vsel %vm6898, %v7444, %v7440
        %v7446 = vlaneseq
        %v7447 = vshrl.u32 %v7446, 7
        %v7448 = vsub.s32 %v6900, %v7447
        %v7449 = vrot.slane %v6409, %v7448
        %v7450 = vsel %vm6905, %v7449, %v7445
        %v7451 = vlaneseq
        %v7452 = vshrl.u32 %v7451, 7
        %v7453 = vsub.s32 %v6860, %v7452
        %v7454 = vrot.slane %v6411, %v7453
        %v7455 = vlaneseq
        %v7456 = vshrl.u32 %v7455, 7
        %v7457 = vsub.s32 %v6865, %v7456
        %v7458 = vrot.slane %v6413, %v7457
        %v7459 = vsel %vm6870, %v7458, %v7454
        %v7460 = vlaneseq
        %v7461 = vshrl.u32 %v7460, 7
        %v7462 = vsub.s32 %v6872, %v7461
        %v7463 = vrot.slane %v6415, %v7462
        %v7464 = vsel %vm6877, %v7463, %v7459
        %v7465 = vlaneseq
        %v7466 = vshrl.u32 %v7465, 7
        %v7467 = vsub.s32 %v6879, %v7466
        %v7468 = vrot.slane %v6417, %v7467
        %v7469 = vsel %vm6884, %v7468, %v7464
        %v7470 = vlaneseq
        %v7471 = vshrl.u32 %v7470, 7
        %v7472 = vsub.s32 %v6886, %v7471
        %v7473 = vrot.slane %v6419, %v7472
        %v7474 = vsel %vm6891, %v7473, %v7469
        %v7475 = vlaneseq
        %v7476 = vshrl.u32 %v7475, 7
        %v7477 = vsub.s32 %v6893, %v7476
        %v7478 = vrot.slane %v6421, %v7477
        %v7479 = vsel %vm6898, %v7478, %v7474
        %v7480 = vlaneseq
        %v7481 = vshrl.u32 %v7480, 7
        %v7482 = vsub.s32 %v6900, %v7481
        %v7483 = vrot.slane %v6424, %v7482
        %v7484 = vsel %vm6905, %v7483, %v7479
        %v7485 = vlaneseq
        %v7486 = vshrl.u32 %v7485, 7
        %v7487 = vsub.s32 %v6860, %v7486
        %v7488 = vrot.slane %v6426, %v7487
        %v7489 = vlaneseq
        %v7490 = vshrl.u32 %v7489, 7
        %v7491 = vsub.s32 %v6865, %v7490
        %v7492 = vrot.slane %v6428, %v7491
        %v7493 = vsel %vm6870, %v7492, %v7488
        %v7494 = vlaneseq
        %v7495 = vshrl.u32 %v7494, 7
        %v7496 = vsub.s32 %v6872, %v7495
        %v7497 = vrot.slane %v6430, %v7496
        %v7498 = vsel %vm6877, %v7497, %v7493
        %v7499 = vlaneseq
        %v7500 = vshrl.u32 %v7499, 7
        %v7501 = vsub.s32 %v6879, %v7500
        %v7502 = vrot.slane %v6432, %v7501
        %v7503 = vsel %vm6884, %v7502, %v7498
        %v7504 = vlaneseq
        %v7505 = vshrl.u32 %v7504, 7
        %v7506 = vsub.s32 %v6886, %v7505
        %v7507 = vrot.slane %v6434, %v7506
        %v7508 = vsel %vm6891, %v7507, %v7503
        %v7509 = vlaneseq
        %v7510 = vshrl.u32 %v7509, 7
        %v7511 = vsub.s32 %v6893, %v7510
        %v7512 = vrot.slane %v6436, %v7511
        %v7513 = vsel %vm6898, %v7512, %v7508
        %v7514 = vlaneseq
        %v7515 = vshrl.u32 %v7514, 7
        %v7516 = vsub.s32 %v6900, %v7515
        %v7517 = vrot.slane %v6439, %v7516
        %v7518 = vsel %vm6905, %v7517, %v7513
        %v7519 = vlaneseq
        %v7520 = vshrl.u32 %v7519, 7
        %v7521 = vsub.s32 %v6860, %v7520
        %v7522 = vrot.slane %v6441, %v7521
        %v7523 = vlaneseq
        %v7524 = vshrl.u32 %v7523, 7
        %v7525 = vsub.s32 %v6865, %v7524
        %v7526 = vrot.slane %v6443, %v7525
        %v7527 = vsel %vm6870, %v7526, %v7522
        %v7528 = vlaneseq
        %v7529 = vshrl.u32 %v7528, 7
        %v7530 = vsub.s32 %v6872, %v7529
        %v7531 = vrot.slane %v6445, %v7530
        %v7532 = vsel %vm6877, %v7531, %v7527
        %v7533 = vlaneseq
        %v7534 = vshrl.u32 %v7533, 7
        %v7535 = vsub.s32 %v6879, %v7534
        %v7536 = vrot.slane %v6447, %v7535
        %v7537 = vsel %vm6884, %v7536, %v7532
        %v7538 = vlaneseq
        %v7539 = vshrl.u32 %v7538, 7
        %v7540 = vsub.s32 %v6886, %v7539
        %v7541 = vrot.slane %v6449, %v7540
        %v7542 = vsel %vm6891, %v7541, %v7537
        %v7543 = vlaneseq
        %v7544 = vshrl.u32 %v7543, 7
        %v7545 = vsub.s32 %v6893, %v7544
        %v7546 = vrot.slane %v6451, %v7545
        %v7547 = vsel %vm6898, %v7546, %v7542
        %v7548 = vlaneseq
        %v7549 = vshrl.u32 %v7548, 7
        %v7550 = vsub.s32 %v6900, %v7549
        %v7551 = vrot.slane %v6454, %v7550
        %v7552 = vsel %vm6905, %v7551, %v7547
        %v7553 = vlaneseq
        %v7554 = vshrl.u32 %v7553, 7
        %v7555 = vsub.s32 %v6860, %v7554
        %v7556 = vrot.slane %v6456, %v7555
        %v7557 = vlaneseq
        %v7558 = vshrl.u32 %v7557, 7
        %v7559 = vsub.s32 %v6865, %v7558
        %v7560 = vrot.slane %v6458, %v7559
        %v7561 = vsel %vm6870, %v7560, %v7556
        %v7562 = vlaneseq
        %v7563 = vshrl.u32 %v7562, 7
        %v7564 = vsub.s32 %v6872, %v7563
        %v7565 = vrot.slane %v6460, %v7564
        %v7566 = vsel %vm6877, %v7565, %v7561
        %v7567 = vlaneseq
        %v7568 = vshrl.u32 %v7567, 7
        %v7569 = vsub.s32 %v6879, %v7568
        %v7570 = vrot.slane %v6462, %v7569
        %v7571 = vsel %vm6884, %v7570, %v7566
        %v7572 = vlaneseq
        %v7573 = vshrl.u32 %v7572, 7
        %v7574 = vsub.s32 %v6886, %v7573
        %v7575 = vrot.slane %v6464, %v7574
        %v7576 = vsel %vm6891, %v7575, %v7571
        %v7577 = vlaneseq
        %v7578 = vshrl.u32 %v7577, 7
        %v7579 = vsub.s32 %v6893, %v7578
        %v7580 = vrot.slane %v6466, %v7579
        %v7581 = vsel %vm6898, %v7580, %v7576
        %v7582 = vlaneseq
        %v7583 = vshrl.u32 %v7582, 7
        %v7584 = vsub.s32 %v6900, %v7583
        %v7585 = vrot.slane %v6469, %v7584
        %v7586 = vsel %vm6905, %v7585, %v7581
        %v7587 = vlaneseq
        %v7588 = vshrl.u32 %v7587, 7
        %v7589 = vsub.s32 %v6860, %v7588
        %v7590 = vrot.slane %v6471, %v7589
        %v7591 = vlaneseq
        %v7592 = vshrl.u32 %v7591, 7
        %v7593 = vsub.s32 %v6865, %v7592
        %v7594 = vrot.slane %v6473, %v7593
        %v7595 = vsel %vm6870, %v7594, %v7590
        %v7596 = vlaneseq
        %v7597 = vshrl.u32 %v7596, 7
        %v7598 = vsub.s32 %v6872, %v7597
        %v7599 = vrot.slane %v6475, %v7598
        %v7600 = vsel %vm6877, %v7599, %v7595
        %v7601 = vlaneseq
        %v7602 = vshrl.u32 %v7601, 7
        %v7603 = vsub.s32 %v6879, %v7602
        %v7604 = vrot.slane %v6477, %v7603
        %v7605 = vsel %vm6884, %v7604, %v7600
        %v7606 = vlaneseq
        %v7607 = vshrl.u32 %v7606, 7
        %v7608 = vsub.s32 %v6886, %v7607
        %v7609 = vrot.slane %v6479, %v7608
        %v7610 = vsel %vm6891, %v7609, %v7605
        %v7611 = vlaneseq
        %v7612 = vshrl.u32 %v7611, 7
        %v7613 = vsub.s32 %v6893, %v7612
        %v7614 = vrot.slane %v6481, %v7613
        %v7615 = vsel %vm6898, %v7614, %v7610
        %v7616 = vlaneseq
        %v7617 = vshrl.u32 %v7616, 7
        %v7618 = vsub.s32 %v6900, %v7617
        %v7619 = vrot.slane %v6484, %v7618
        %v7620 = vsel %vm6905, %v7619, %v7615
        %v7621 = vlaneseq
        %v7622 = vshrl.u32 %v7621, 7
        %v7623 = vsub.s32 %v6860, %v7622
        %v7624 = vrot.slane %v6486, %v7623
        %v7625 = vlaneseq
        %v7626 = vshrl.u32 %v7625, 7
        %v7627 = vsub.s32 %v6865, %v7626
        %v7628 = vrot.slane %v6488, %v7627
        %v7629 = vsel %vm6870, %v7628, %v7624
        %v7630 = vlaneseq
        %v7631 = vshrl.u32 %v7630, 7
        %v7632 = vsub.s32 %v6872, %v7631
        %v7633 = vrot.slane %v6490, %v7632
        %v7634 = vsel %vm6877, %v7633, %v7629
        %v7635 = vlaneseq
        %v7636 = vshrl.u32 %v7635, 7
        %v7637 = vsub.s32 %v6879, %v7636
        %v7638 = vrot.slane %v6492, %v7637
        %v7639 = vsel %vm6884, %v7638, %v7634
        %v7640 = vlaneseq
        %v7641 = vshrl.u32 %v7640, 7
        %v7642 = vsub.s32 %v6886, %v7641
        %v7643 = vrot.slane %v6494, %v7642
        %v7644 = vsel %vm6891, %v7643, %v7639
        %v7645 = vlaneseq
        %v7646 = vshrl.u32 %v7645, 7
        %v7647 = vsub.s32 %v6893, %v7646
        %v7648 = vrot.slane %v6496, %v7647
        %v7649 = vsel %vm6898, %v7648, %v7644
        %v7650 = vlaneseq
        %v7651 = vshrl.u32 %v7650, 7
        %v7652 = vsub.s32 %v6900, %v7651
        %v7653 = vrot.slane %v6499, %v7652
        %v7654 = vsel %vm6905, %v7653, %v7649
        %v7655 = vlaneseq
        %v7656 = vshrl.u32 %v7655, 7
        %v7657 = vsub.s32 %v6860, %v7656
        %v7658 = vrot.slane %v6501, %v7657
        %v7659 = vlaneseq
        %v7660 = vshrl.u32 %v7659, 7
        %v7661 = vsub.s32 %v6865, %v7660
        %v7662 = vrot.slane %v6503, %v7661
        %v7663 = vsel %vm6870, %v7662, %v7658
        %v7664 = vlaneseq
        %v7665 = vshrl.u32 %v7664, 7
        %v7666 = vsub.s32 %v6872, %v7665
        %v7667 = vrot.slane %v6505, %v7666
        %v7668 = vsel %vm6877, %v7667, %v7663
        %v7669 = vlaneseq
        %v7670 = vshrl.u32 %v7669, 7
        %v7671 = vsub.s32 %v6879, %v7670
        %v7672 = vrot.slane %v6507, %v7671
        %v7673 = vsel %vm6884, %v7672, %v7668
        %v7674 = vlaneseq
        %v7675 = vshrl.u32 %v7674, 7
        %v7676 = vsub.s32 %v6886, %v7675
        %v7677 = vrot.slane %v6509, %v7676
        %v7678 = vsel %vm6891, %v7677, %v7673
        %v7679 = vlaneseq
        %v7680 = vshrl.u32 %v7679, 7
        %v7681 = vsub.s32 %v6893, %v7680
        %v7682 = vrot.slane %v6511, %v7681
        %v7683 = vsel %vm6898, %v7682, %v7678
        %v7684 = vlaneseq
        %v7685 = vshrl.u32 %v7684, 7
        %v7686 = vsub.s32 %v6900, %v7685
        %v7687 = vrot.slane %v6514, %v7686
        %v7688 = vsel %vm6905, %v7687, %v7683
        %v7689 = vlaneseq
        %v7690 = vshrl.u32 %v7689, 7
        %v7691 = vsub.s32 %v6860, %v7690
        %v7692 = vrot.slane %v6516, %v7691
        %v7693 = vlaneseq
        %v7694 = vshrl.u32 %v7693, 7
        %v7695 = vsub.s32 %v6865, %v7694
        %v7696 = vrot.slane %v6518, %v7695
        %v7697 = vsel %vm6870, %v7696, %v7692
        %v7698 = vlaneseq
        %v7699 = vshrl.u32 %v7698, 7
        %v7700 = vsub.s32 %v6872, %v7699
        %v7701 = vrot.slane %v6520, %v7700
        %v7702 = vsel %vm6877, %v7701, %v7697
        %v7703 = vlaneseq
        %v7704 = vshrl.u32 %v7703, 7
        %v7705 = vsub.s32 %v6879, %v7704
        %v7706 = vrot.slane %v6522, %v7705
        %v7707 = vsel %vm6884, %v7706, %v7702
        %v7708 = vlaneseq
        %v7709 = vshrl.u32 %v7708, 7
        %v7710 = vsub.s32 %v6886, %v7709
        %v7711 = vrot.slane %v6524, %v7710
        %v7712 = vsel %vm6891, %v7711, %v7707
        %v7713 = vlaneseq
        %v7714 = vshrl.u32 %v7713, 7
        %v7715 = vsub.s32 %v6893, %v7714
        %v7716 = vrot.slane %v6526, %v7715
        %v7717 = vsel %vm6898, %v7716, %v7712
        %v7718 = vlaneseq
        %v7719 = vshrl.u32 %v7718, 7
        %v7720 = vsub.s32 %v6900, %v7719
        %v7721 = vrot.slane %v6529, %v7720
        %v7722 = vsel %vm6905, %v7721, %v7717
        %v7723 = vlaneseq
        %v7724 = vshrl.u32 %v7723, 7
        %v7725 = vsub.s32 %v6860, %v7724
        %v7726 = vrot.slane %v6531, %v7725
        %v7727 = vlaneseq
        %v7728 = vshrl.u32 %v7727, 7
        %v7729 = vsub.s32 %v6865, %v7728
        %v7730 = vrot.slane %v6533, %v7729
        %v7731 = vsel %vm6870, %v7730, %v7726
        %v7732 = vlaneseq
        %v7733 = vshrl.u32 %v7732, 7
        %v7734 = vsub.s32 %v6872, %v7733
        %v7735 = vrot.slane %v6535, %v7734
        %v7736 = vsel %vm6877, %v7735, %v7731
        %v7737 = vlaneseq
        %v7738 = vshrl.u32 %v7737, 7
        %v7739 = vsub.s32 %v6879, %v7738
        %v7740 = vrot.slane %v6537, %v7739
        %v7741 = vsel %vm6884, %v7740, %v7736
        %v7742 = vlaneseq
        %v7743 = vshrl.u32 %v7742, 7
        %v7744 = vsub.s32 %v6886, %v7743
        %v7745 = vrot.slane %v6539, %v7744
        %v7746 = vsel %vm6891, %v7745, %v7741
        %v7747 = vlaneseq
        %v7748 = vshrl.u32 %v7747, 7
        %v7749 = vsub.s32 %v6893, %v7748
        %v7750 = vrot.slane %v6541, %v7749
        %v7751 = vsel %vm6898, %v7750, %v7746
        %v7752 = vlaneseq
        %v7753 = vshrl.u32 %v7752, 7
        %v7754 = vsub.s32 %v6900, %v7753
        %v7755 = vrot.slane %v6544, %v7754
        %v7756 = vsel %vm6905, %v7755, %v7751
        %v7757 = vlaneseq
        %v7758 = vshrl.u32 %v7757, 7
        %v7759 = vsub.s32 %v6860, %v7758
        %v7760 = vrot.slane %v6546, %v7759
        %v7761 = vlaneseq
        %v7762 = vshrl.u32 %v7761, 7
        %v7763 = vsub.s32 %v6865, %v7762
        %v7764 = vrot.slane %v6548, %v7763
        %v7765 = vsel %vm6870, %v7764, %v7760
        %v7766 = vlaneseq
        %v7767 = vshrl.u32 %v7766, 7
        %v7768 = vsub.s32 %v6872, %v7767
        %v7769 = vrot.slane %v6550, %v7768
        %v7770 = vsel %vm6877, %v7769, %v7765
        %v7771 = vlaneseq
        %v7772 = vshrl.u32 %v7771, 7
        %v7773 = vsub.s32 %v6879, %v7772
        %v7774 = vrot.slane %v6552, %v7773
        %v7775 = vsel %vm6884, %v7774, %v7770
        %v7776 = vlaneseq
        %v7777 = vshrl.u32 %v7776, 7
        %v7778 = vsub.s32 %v6886, %v7777
        %v7779 = vrot.slane %v6554, %v7778
        %v7780 = vsel %vm6891, %v7779, %v7775
        %v7781 = vlaneseq
        %v7782 = vshrl.u32 %v7781, 7
        %v7783 = vsub.s32 %v6893, %v7782
        %v7784 = vrot.slane %v6556, %v7783
        %v7785 = vsel %vm6898, %v7784, %v7780
        %v7786 = vlaneseq
        %v7787 = vshrl.u32 %v7786, 7
        %v7788 = vsub.s32 %v6900, %v7787
        %v7789 = vrot.slane %v6559, %v7788
        %v7790 = vsel %vm6905, %v7789, %v7785
        %v7791 = vlaneseq
        %v7792 = vshrl.u32 %v7791, 7
        %v7793 = vsub.s32 %v6860, %v7792
        %v7794 = vrot.slane %v6561, %v7793
        %v7795 = vlaneseq
        %v7796 = vshrl.u32 %v7795, 7
        %v7797 = vsub.s32 %v6865, %v7796
        %v7798 = vrot.slane %v6563, %v7797
        %v7799 = vsel %vm6870, %v7798, %v7794
        %v7800 = vlaneseq
        %v7801 = vshrl.u32 %v7800, 7
        %v7802 = vsub.s32 %v6872, %v7801
        %v7803 = vrot.slane %v6565, %v7802
        %v7804 = vsel %vm6877, %v7803, %v7799
        %v7805 = vlaneseq
        %v7806 = vshrl.u32 %v7805, 7
        %v7807 = vsub.s32 %v6879, %v7806
        %v7808 = vrot.slane %v6567, %v7807
        %v7809 = vsel %vm6884, %v7808, %v7804
        %v7810 = vlaneseq
        %v7811 = vshrl.u32 %v7810, 7
        %v7812 = vsub.s32 %v6886, %v7811
        %v7813 = vrot.slane %v6569, %v7812
        %v7814 = vsel %vm6891, %v7813, %v7809
        %v7815 = vlaneseq
        %v7816 = vshrl.u32 %v7815, 7
        %v7817 = vsub.s32 %v6893, %v7816
        %v7818 = vrot.slane %v6571, %v7817
        %v7819 = vsel %vm6898, %v7818, %v7814
        %v7820 = vlaneseq
        %v7821 = vshrl.u32 %v7820, 7
        %v7822 = vsub.s32 %v6900, %v7821
        %v7823 = vrot.slane %v6574, %v7822
        %v7824 = vsel %vm6905, %v7823, %v7819
        %v7825 = vlaneseq
        %v7826 = vshrl.u32 %v7825, 7
        %v7827 = vsub.s32 %v6860, %v7826
        %v7828 = vrot.slane %v6576, %v7827
        %v7829 = vlaneseq
        %v7830 = vshrl.u32 %v7829, 7
        %v7831 = vsub.s32 %v6865, %v7830
        %v7832 = vrot.slane %v6578, %v7831
        %v7833 = vsel %vm6870, %v7832, %v7828
        %v7834 = vlaneseq
        %v7835 = vshrl.u32 %v7834, 7
        %v7836 = vsub.s32 %v6872, %v7835
        %v7837 = vrot.slane %v6580, %v7836
        %v7838 = vsel %vm6877, %v7837, %v7833
        %v7839 = vlaneseq
        %v7840 = vshrl.u32 %v7839, 7
        %v7841 = vsub.s32 %v6879, %v7840
        %v7842 = vrot.slane %v6582, %v7841
        %v7843 = vsel %vm6884, %v7842, %v7838
        %v7844 = vlaneseq
        %v7845 = vshrl.u32 %v7844, 7
        %v7846 = vsub.s32 %v6886, %v7845
        %v7847 = vrot.slane %v6584, %v7846
        %v7848 = vsel %vm6891, %v7847, %v7843
        %v7849 = vlaneseq
        %v7850 = vshrl.u32 %v7849, 7
        %v7851 = vsub.s32 %v6893, %v7850
        %v7852 = vrot.slane %v6586, %v7851
        %v7853 = vsel %vm6898, %v7852, %v7848
        %v7854 = vlaneseq
        %v7855 = vshrl.u32 %v7854, 7
        %v7856 = vsub.s32 %v6900, %v7855
        %v7857 = vrot.slane %v6589, %v7856
        %v7858 = vsel %vm6905, %v7857, %v7853
        %v7859 = vlaneseq
        %v7860 = vshrl.u32 %v7859, 7
        %v7861 = vsub.s32 %v6860, %v7860
        %v7862 = vrot.slane %v6591, %v7861
        %v7863 = vlaneseq
        %v7864 = vshrl.u32 %v7863, 7
        %v7865 = vsub.s32 %v6865, %v7864
        %v7866 = vrot.slane %v6593, %v7865
        %v7867 = vsel %vm6870, %v7866, %v7862
        %v7868 = vlaneseq
        %v7869 = vshrl.u32 %v7868, 7
        %v7870 = vsub.s32 %v6872, %v7869
        %v7871 = vrot.slane %v6595, %v7870
        %v7872 = vsel %vm6877, %v7871, %v7867
        %v7873 = vlaneseq
        %v7874 = vshrl.u32 %v7873, 7
        %v7875 = vsub.s32 %v6879, %v7874
        %v7876 = vrot.slane %v6597, %v7875
        %v7877 = vsel %vm6884, %v7876, %v7872
        %v7878 = vlaneseq
        %v7879 = vshrl.u32 %v7878, 7
        %v7880 = vsub.s32 %v6886, %v7879
        %v7881 = vrot.slane %v6599, %v7880
        %v7882 = vsel %vm6891, %v7881, %v7877
        %v7883 = vlaneseq
        %v7884 = vshrl.u32 %v7883, 7
        %v7885 = vsub.s32 %v6893, %v7884
        %v7886 = vrot.slane %v6601, %v7885
        %v7887 = vsel %vm6898, %v7886, %v7882
        %v7888 = vlaneseq
        %v7889 = vshrl.u32 %v7888, 7
        %v7890 = vsub.s32 %v6900, %v7889
        %v7891 = vrot.slane %v6604, %v7890
        %v7892 = vsel %vm6905, %v7891, %v7887
        %v7893 = vlaneseq
        %v7894 = vshrl.u32 %v7893, 7
        %v7895 = vsub.s32 %v6860, %v7894
        %v7896 = vrot.slane %v6606, %v7895
        %v7897 = vlaneseq
        %v7898 = vshrl.u32 %v7897, 7
        %v7899 = vsub.s32 %v6865, %v7898
        %v7900 = vrot.slane %v6608, %v7899
        %v7901 = vsel %vm6870, %v7900, %v7896
        %v7902 = vlaneseq
        %v7903 = vshrl.u32 %v7902, 7
        %v7904 = vsub.s32 %v6872, %v7903
        %v7905 = vrot.slane %v6610, %v7904
        %v7906 = vsel %vm6877, %v7905, %v7901
        %v7907 = vlaneseq
        %v7908 = vshrl.u32 %v7907, 7
        %v7909 = vsub.s32 %v6879, %v7908
        %v7910 = vrot.slane %v6612, %v7909
        %v7911 = vsel %vm6884, %v7910, %v7906
        %v7912 = vlaneseq
        %v7913 = vshrl.u32 %v7912, 7
        %v7914 = vsub.s32 %v6886, %v7913
        %v7915 = vrot.slane %v6614, %v7914
        %v7916 = vsel %vm6891, %v7915, %v7911
        %v7917 = vlaneseq
        %v7918 = vshrl.u32 %v7917, 7
        %v7919 = vsub.s32 %v6893, %v7918
        %v7920 = vrot.slane %v6616, %v7919
        %v7921 = vsel %vm6898, %v7920, %v7916
        %v7922 = vlaneseq
        %v7923 = vshrl.u32 %v7922, 7
        %v7924 = vsub.s32 %v6900, %v7923
        %v7925 = vrot.slane %v6619, %v7924
        %v7926 = vsel %vm6905, %v7925, %v7921
        %v7927 = vlaneseq
        %v7928 = vshrl.u32 %v7927, 7
        %v7929 = vsub.s32 %v6860, %v7928
        %v7930 = vrot.slane %v6621, %v7929
        %v7931 = vlaneseq
        %v7932 = vshrl.u32 %v7931, 7
        %v7933 = vsub.s32 %v6865, %v7932
        %v7934 = vrot.slane %v6623, %v7933
        %v7935 = vsel %vm6870, %v7934, %v7930
        %v7936 = vlaneseq
        %v7937 = vshrl.u32 %v7936, 7
        %v7938 = vsub.s32 %v6872, %v7937
        %v7939 = vrot.slane %v6625, %v7938
        %v7940 = vsel %vm6877, %v7939, %v7935
        %v7941 = vlaneseq
        %v7942 = vshrl.u32 %v7941, 7
        %v7943 = vsub.s32 %v6879, %v7942
        %v7944 = vrot.slane %v6627, %v7943
        %v7945 = vsel %vm6884, %v7944, %v7940
        %v7946 = vlaneseq
        %v7947 = vshrl.u32 %v7946, 7
        %v7948 = vsub.s32 %v6886, %v7947
        %v7949 = vrot.slane %v6629, %v7948
        %v7950 = vsel %vm6891, %v7949, %v7945
        %v7951 = vlaneseq
        %v7952 = vshrl.u32 %v7951, 7
        %v7953 = vsub.s32 %v6893, %v7952
        %v7954 = vrot.slane %v6631, %v7953
        %v7955 = vsel %vm6898, %v7954, %v7950
        %v7956 = vlaneseq
        %v7957 = vshrl.u32 %v7956, 7
        %v7958 = vsub.s32 %v6900, %v7957
        %v7959 = vrot.slane %v6634, %v7958
        %v7960 = vsel %vm6905, %v7959, %v7955
        %vm7961 = vcmask 1041409
        %v7962 = vsel %vm7961, %v6940, %v6906
        %vm7963 = vcmask 1042434
        %v7964 = vsel %vm7963, %v6974, %v7962
        %vm7965 = vcmask 1043459
        %v7966 = vsel %vm7965, %v7008, %v7964
        %vm7967 = vcmask 1044484
        %v7968 = vsel %vm7967, %v7042, %v7966
        %vm7969 = vcmask 1045509
        %v7970 = vsel %vm7969, %v7076, %v7968
        %vm7971 = vcmask 1046534
        %v7972 = vsel %vm7971, %v7110, %v7970
        %vm7973 = vcmask 1047559
        %v7974 = vsel %vm7973, %v7144, %v7972
        %v7975 = vsel %vm7961, %v7212, %v7178
        %v7976 = vsel %vm7963, %v7246, %v7975
        %v7977 = vsel %vm7965, %v7280, %v7976
        %v7978 = vsel %vm7967, %v7314, %v7977
        %v7979 = vsel %vm7969, %v7348, %v7978
        %v7980 = vsel %vm7971, %v7382, %v7979
        %v7981 = vsel %vm7973, %v7416, %v7980
        %v7982 = vsel %vm7961, %v7484, %v7450
        %v7983 = vsel %vm7963, %v7518, %v7982
        %v7984 = vsel %vm7965, %v7552, %v7983
        %v7985 = vsel %vm7967, %v7586, %v7984
        %v7986 = vsel %vm7969, %v7620, %v7985
        %v7987 = vsel %vm7971, %v7654, %v7986
        %v7988 = vsel %vm7973, %v7688, %v7987
        %v7989 = vsel %vm7961, %v7756, %v7722
        %v7990 = vsel %vm7963, %v7790, %v7989
        %v7991 = vsel %vm7965, %v7824, %v7990
        %v7992 = vsel %vm7967, %v7858, %v7991
        %v7993 = vsel %vm7969, %v7892, %v7992
        %v7994 = vsel %vm7971, %v7926, %v7993
        %v7995 = vsel %vm7973, %v7960, %v7994
        %vm8000 = vcmask 400384
        %v8001 = vsel %vm8000, %v7974, 0.0
        %8002 = vadd.xlane.f32.xlu0 %v8001
        %v8003 = vpop.xlane.xlu0 %8002
        %v8004 = vsel %vm8000, %v7981, 0.0
        %8005 = vadd.xlane.f32.xlu0 %v8004
        %v8006 = vpop.xlane.xlu0 %8005
        %v8007 = vsel %vm8000, %v7988, 0.0
        %8008 = vadd.xlane.f32.xlu0 %v8007
        %v8009 = vpop.xlane.xlu0 %8008
        %v8010 = vsel %vm8000, %v7995, 0.0
        %8011 = vadd.xlane.f32.xlu0 %v8010
        %v8012 = vpop.xlane.xlu0 %8011
        %v8013 = vld [vmem:[%s4] sm:$0xff]
        %v8014 = vld [vmem:[%s4 + $0x8] sm:$0xff]
        %v8015 = vld [vmem:[%s4 + $0x10] sm:$0xff]
        %v8016 = vld [vmem:[%s4 + $0x18] sm:$0xff]
        %v8017 = vadd.f32 %v8003, %v8013
        %v8018 = vadd.f32 %v8006, %v8014
        %v8019 = vadd.f32 %v8009, %v8015
        %v8020 = vadd.f32 %v8012, %v8016
        %v8021 = vxor.u32 %v8017, 2147483648
        %v8022 = vxor.u32 %v8018, 2147483648
        %v8023 = vxor.u32 %v8019, 2147483648
        %v8024 = vxor.u32 %v8020, 2147483648
        %v8025 = vmul.f32 %v8021, 1.442695
        %v8026 = vpow.pop %v8025
        %v8027 = vmul.f32 %v8022, 1.442695
        %v8028 = vpow.pop %v8027
        %v8029 = vmul.f32 %v8023, 1.442695
        %v8030 = vpow.pop %v8029
        %v8031 = vmul.f32 %v8024, 1.442695
        %v8032 = vpow.pop %v8031
        %v8033 = vadd.f32 %v8026, 1.0
        %v8034 = vadd.f32 %v8028, 1.0
        %v8035 = vadd.f32 %v8030, 1.0
        %v8036 = vadd.f32 %v8032, 1.0
        %v8037 = vrcp.pop %v8033
        %v8038 = vmul.f32 1.0, %v8037
        %v8039 = vrcp.pop %v8034
        %v8040 = vmul.f32 1.0, %v8039
        %v8041 = vrcp.pop %v8035
        %v8042 = vmul.f32 1.0, %v8041
        %v8043 = vrcp.pop %v8036
        %v8044 = vmul.f32 1.0, %v8043
        %v8045 = vld [vmem:[%s5] sm:$0xff]
        %v8046 = vld [vmem:[%s5 + $0x8] sm:$0xff]
        %v8047 = vld [vmem:[%s5 + $0x10] sm:$0xff]
        %v8048 = vld [vmem:[%s5 + $0x18] sm:$0xff]
        %8050 = vset.pattern.permute.xlu0 0
        %8051 = vperm.xlu0 %8050, %v8038
        %v8052 = vpop.permute.xlu0 %8051
        %8055 = vset.pattern.permute.xlu0 0
        %8056 = vperm.xlu0 %8055, %v8040
        %v8057 = vpop.permute.xlu0 %8056
        %8060 = vset.pattern.permute.xlu0 0
        %8061 = vperm.xlu0 %8060, %v8042
        %v8062 = vpop.permute.xlu0 %8061
        %8065 = vset.pattern.permute.xlu0 0
        %8066 = vperm.xlu0 %8065, %v8044
        %v8067 = vpop.permute.xlu0 %8066
        %v8069 = vmul.f32 %v8052, %v8045
        %v8070 = vmul.f32 %v8057, %v8046
        %v8071 = vmul.f32 %v8062, %v8047
        %v8072 = vmul.f32 %v8067, %v8048
        %vm8073 = vcmask 80896
        %v8074 = vsel %vm8073, %v8069, 0.0
        %v8075 = vsel %vm8073, %v8070, 0.0
        %v8076 = vadd.f32 %v8074, %v8075
        %v8077 = vsel %vm8073, %v8071, 0.0
        %v8078 = vadd.f32 %v8076, %v8077
        %v8079 = vsel %vm8073, %v8072, 0.0
        %v8080 = vadd.f32 %v8078, %v8079
        %v8081 = vrot.slane %v8080, 4
        %v8082 = vadd.f32 %v8080, %v8081
        %v8083 = vrot.slane %v8082, 2
        %v8084 = vadd.f32 %v8082, %v8083
        %v8085 = vrot.slane %v8084, 1
        %v8086 = vadd.f32 %v8084, %v8085
        %v8087 = vld [vmem:[%s6] sm:$0x1]
        %v8088 = vadd.f32 %v8086, %v8087
        %vm8089 = vcmask 73728
        %8090 = vst.msk [vmem:[%s270] sm:$0x1] %vm8089, %v8088
        %s8091 = sand.u32 %s181, 1
        %s8092 = scalar_lea.sflag [#allocation3], %s8091
        %s8093 = sand.u32 %s181, 1
        %s8094 = scalar_lea.vmem [#allocation2], %s8093
        // Predicated region
        $region49: #{model2_forward.3} parent=47 // pred_check
          %p8095 = pneg %p191
        $region50: #{model2_forward.3} parent=47 // pred_check_branch
          %8097 = sbr.rel (%p8095) target = $region52
        $region51: #{model2_forward.3} parent=47 // pred_region
          %s8099 = ssub.s32 16, 16
          %8100 = vsyncadd %s8092, %s8099
          %s8101 = smul.addr %s21, 16
          %s8102 = scalar_lea.hbm %s7, %s8101
          %s8104 = sshll.u32 %s8094, 4
          %s8105 = int_to_ptr.vmem [resolvable:$true] %s8104
          %8107 = dma.vmem_to_hbm [thread:$0]  %s8105, 16, %s8102, %s8092
        $region52: #{model2_forward.3} parent=47 // pred_fallthru
          _
      $region48: #{model2_forward.3} parent=5 // pred_fallthru
        _
      %p8108 = scmp.le.s32.totalorder 2, %s16
      // Predicated region
      $region53: #{model2_forward.3} parent=5 // pred_check
        %p8109 = pneg %p8108
      $region54: #{model2_forward.3} parent=5 // pred_check_branch
        %8111 = sbr.rel (%p8109) target = $region56
      $region55: #{model2_forward.3} parent=5 // pred_region
        %s8112 = ssub.s32 %s16, 2
        // Predicated region
        $region57: #{model2_forward.3} parent=55 // pred_check
          %p8113 = pneg %p197
        $region58: #{model2_forward.3} parent=55 // pred_check_branch
          %8115 = sbr.rel (%p8113) target = $region60
        $region59: #{model2_forward.3} parent=55 // pred_region
          %s8116 = sand.u32 %s182, 1
          %s8117 = scalar_lea.sflag [#allocation3], %s8116
          %s8118 = sand.u32 %s182, 1
          %s8119 = scalar_lea.vmem [#allocation2], %s8118
          %8120 = dma.done %s8117, 16
        $region60: #{model2_forward.3} parent=55 // pred_fallthru
          _
      $region56: #{model2_forward.3} parent=5 // pred_fallthru
        _
    $region6: #{model2_forward.3} parent=1 // loop_footer
      %s20 = sadd.s32 1, %s16
    $region7: #{model2_forward.3} parent=1 // loop_footer_branch
      %15 = sbr.rel target = $region3
    $region8: #{model2_forward.3} parent=1 // loop_exit
      _
    %8121 = vsyncpa [#allocation3], 1
    %s8122 = scalar_lea.sflag [#allocation3], 1
    %8123 = vsyncpa %s8122, 1

</llo_original>
